<compile_context>
chip_gen: v7x
topology: tpu7x:2x2x1
jax: 0.10.0
libtpu: 0.0.40
codegen_flags: <defaults>
</compile_context>

<pallas_src>
import functools

import jax
import jax.numpy as jnp
import numpy as np
from jax.experimental import pallas as pl
from jax.experimental.pallas import tpu as pltpu


# ----------------------------- in-kernel helpers ----------------------------

def _reflect_pad_hw(a):
    # nn.ReflectionPad2d(1) on a [H, W, C] tensor.
    H, W = a.shape[0], a.shape[1]
    a = jnp.concatenate([a[1:2], a, a[H - 2:H - 1]], axis=0)
    a = jnp.concatenate([a[:, 1:2], a, a[:, W - 2:W - 1]], axis=1)
    return a


def _conv3x3_refl(a, w):
    # a: [H, W, Cin] bf16, w: [3, 3, Cin, Cout] bf16  ->  [H*W, Cout] f32.
    # 9 shifted-tap MXU matmuls, f32 accumulation; each tap patch is
    # extracted exactly once per padded tensor (weights are pre-fused so
    # gates sharing an input share these patches).
    H, W, Cin = a.shape
    Cout = w.shape[-1]
    ap = _reflect_pad_hw(a)                              # [H+2, W+2, Cin]
    acc = jnp.zeros((H * W, Cout), jnp.float32)
    for dy in range(3):
        for dx in range(3):
            patch = ap[dy:dy + H, dx:dx + W, :].reshape(H * W, Cin)
            acc = acc + jnp.dot(patch, w[dy, dx],
                                preferred_element_type=jnp.float32)
    return acc


# ----------------------------- Pallas kernels --------------------------------

def _x_contrib_kernel(x_ref, wx_ref, bx_ref, xc_ref):
    # x_ref : [1, 1, H, W, C]  f32   one (b, t) slice of xt
    # wx_ref: [3, 3, C, 3C]    bf16  fused x-halves of (wz | wr | wo), resident
    # bx_ref: [1, 3C]          f32   fused (bz | br | bo)
    # xc_ref: [1, 1, H*W, 3C]  f32   x contributions to z|r|o pre-activations
    x = x_ref[...][0, 0].astype(jnp.bfloat16)            # [H, W, C]
    acc = _conv3x3_refl(x, wx_ref[...]) + bx_ref[...]    # [H*W, 3C] f32
    xc_ref[...] = acc.reshape(xc_ref.shape)


def _gru_recurrent_kernel(xc_ref, h0_ref, wzr_ref, wo_ref, out_ref, h_state):
    # xc_ref : [1, 1, H*W, 3C] f32   precomputed x contributions (+ biases)
    # h0_ref : [1, H, W, C]    f32   initial hidden state for this batch elem
    # wzr_ref: [3, 3, C, 2C]   bf16  fused h-halves of (wz | wr), resident
    # wo_ref : [3, 3, C, C]    bf16  h-half of wo, resident
    # out_ref: [1, 1, H*W, C]  f32   h_t
    # h_state: [H, W, C]       f32   VMEM carry across the (sequential) t axis
    t = pl.program_id(1)
    C = out_ref.shape[-1]
    H, W = h_state.shape[0], h_state.shape[1]
    HW = H * W

    @pl.when(t == 0)
    def _():
        h_state[...] = h0_ref[...][0]

    h = h_state[...]                                     # [H, W, C] f32
    xc = xc_ref[...][0, 0]                               # [HW, 3C]  f32

    # Fused update/reset gates: one lane-dense 128-wide conv on h.
    zr = _conv3x3_refl(h.astype(jnp.bfloat16), wzr_ref[...]) + xc[:, :2 * C]
    z = jax.nn.sigmoid(zr[:, :C])                        # [HW, C]
    r = jax.nn.sigmoid(zr[:, C:])                        # [HW, C]

    h_flat = h.reshape(HW, C)
    rh = (r * h_flat).astype(jnp.bfloat16).reshape(H, W, C)
    o = _conv3x3_refl(rh, wo_ref[...]) + xc[:, 2 * C:]   # [HW, C] f32

    h_new = z * h_flat + (1.0 - z) * jnp.tanh(o)         # [HW, C] f32
    h_state[...] = h_new.reshape(H, W, C)
    out_ref[...] = h_new.reshape(out_ref.shape)


# ----------------------------- wrapper ---------------------------------------

@functools.partial(jax.jit, static_argnames=("return_sequences",))
def gen_gate_gru(xt, h, params, return_sequences=True):
    # xt: [B, T, H, W, C], h: [B, H, W, C]
    B, T, H, W, C = xt.shape
    HW = H * W

    wz, wr, wo = params["wz"], params["wr"], params["wo"]
    bz, br, bo = params["bz"], params["br"], params["bo"]

    # Fused weights: x-halves (input channels 0:C act on x), h-halves (C:2C).
    wx = jnp.concatenate([wz[:, :, :C, :], wr[:, :, :C, :], wo[:, :, :C, :]],
                         axis=-1).astype(jnp.bfloat16)              # [3,3,C,3C]
    bx = jnp.concatenate([bz, br, bo], axis=-1).astype(jnp.float32)  # [1,3C]
    wzr_h = jnp.concatenate([wz[:, :, C:, :], wr[:, :, C:, :]],
                            axis=-1).astype(jnp.bfloat16)            # [3,3,C,2C]
    wo_h = wo[:, :, C:, :].astype(jnp.bfloat16)                      # [3,3,C,C]

    # Phase 1: x-dependent gate contributions for all (b, t), fully parallel.
    xc = pl.pallas_call(
        _x_contrib_kernel,
        out_shape=jax.ShapeDtypeStruct((B, T, HW, 3 * C), jnp.float32),
        grid_spec=pltpu.PrefetchScalarGridSpec(
            num_scalar_prefetch=0,
            grid=(B, T),
            in_specs=[
                pl.BlockSpec((1, 1, H, W, C), lambda b, t: (b, t, 0, 0, 0)),
                pl.BlockSpec((3, 3, C, 3 * C), lambda b, t: (0, 0, 0, 0)),
                pl.BlockSpec((1, 3 * C), lambda b, t: (0, 0)),
            ],
            out_specs=pl.BlockSpec((1, 1, HW, 3 * C),
                                   lambda b, t: (b, t, 0, 0)),
        ),
        compiler_params=pltpu.CompilerParams(
            dimension_semantics=("parallel", "parallel")),
    )(xt, wx, bx)

    # Phase 2: sequential recurrence over t (t axis "arbitrary", h in scratch);
    # batch axis is "parallel" so v7x megacore can split it across TensorCores.
    h_all = pl.pallas_call(
        _gru_recurrent_kernel,
        out_shape=jax.ShapeDtypeStruct((B, T, HW, C), jnp.float32),
        grid_spec=pltpu.PrefetchScalarGridSpec(
            num_scalar_prefetch=0,
            grid=(B, T),
            in_specs=[
                pl.BlockSpec((1, 1, HW, 3 * C), lambda b, t: (b, t, 0, 0)),
                pl.BlockSpec((1, H, W, C), lambda b, t: (b, 0, 0, 0)),
                pl.BlockSpec((3, 3, C, 2 * C), lambda b, t: (0, 0, 0, 0)),
                pl.BlockSpec((3, 3, C, C), lambda b, t: (0, 0, 0, 0)),
            ],
            out_specs=pl.BlockSpec((1, 1, HW, C), lambda b, t: (b, t, 0, 0)),
            scratch_shapes=[pltpu.VMEM((H, W, C), jnp.float32)],
        ),
        compiler_params=pltpu.CompilerParams(
            dimension_semantics=("parallel", "arbitrary")),
    )(xc, h, wzr_h, wo_h)

    h_seq = h_all.reshape(B, T, H, W, C)
    return h_seq if return_sequences else h_seq[:, -1]


# ----------------------------- pure-JAX reference ---------------------------

def _conv_ref(x_nhwc, w_hwio, b):
    xp = jnp.pad(x_nhwc, ((0, 0), (1, 1), (1, 1), (0, 0)), mode="reflect")
    y = jax.lax.conv_general_dilated(
        xp, w_hwio, window_strides=(1, 1), padding="VALID",
        dimension_numbers=("NHWC", "HWIO", "NHWC"),
        precision=jax.lax.Precision.HIGHEST)
    return y + b


def gen_gate_gru_ref(xt, h, params, return_sequences=True):
    T = xt.shape[1]
    h_all = []
    for t in range(T):
        x = xt[:, t]
        xh = jnp.concatenate([x, h], axis=-1)
        z = jax.nn.sigmoid(_conv_ref(xh, params["wz"], params["bz"]))
        r = jax.nn.sigmoid(_conv_ref(xh, params["wr"], params["br"]))
        o = _conv_ref(jnp.concatenate([x, r * h], axis=-1),
                      params["wo"], params["bo"])
        h = z * h + (1.0 - z) * jnp.tanh(o)
        if return_sequences:
            h_all.append(h)
    return jnp.stack(h_all, axis=1) if return_sequences else h


# ----------------------------- driver ----------------------------------------

if __name__ == "__main__":
    B, T, H, W, C = 2, 3, 16, 16, 64      # time_steps=3 as in the module
    CIN, COUT = 2 * C, C                  # gates see concat(x, h) -> 128 channels

    key = jax.random.PRNGKey(0)
    kx, kh, kwz, kbz, kwr, kbr, kwo, kbo = jax.random.split(key, 8)

    xt = jax.random.normal(kx, (B, T, H, W, C), jnp.float32)
    h0 = jax.random.normal(kh, (B, H, W, C), jnp.float32)

    wscale = 0.05
    params = {
        "wz": wscale * jax.random.normal(kwz, (3, 3, CIN, COUT), jnp.float32),
        "bz": 0.01 * jax.random.normal(kbz, (1, COUT), jnp.float32),
        "wr": wscale * jax.random.normal(kwr, (3, 3, CIN, COUT), jnp.float32),
        "br": 0.01 * jax.random.normal(kbr, (1, COUT), jnp.float32),
        "wo": wscale * jax.random.normal(kwo, (3, 3, CIN, COUT), jnp.float32),
        "bo": 0.01 * jax.random.normal(kbo, (1, COUT), jnp.float32),
    }

    out = gen_gate_gru(xt, h0, params, return_sequences=True)
    out = jax.block_until_ready(out)
    assert out.shape == (B, T, H, W, C), out.shape

    ref = jax.block_until_ready(
        gen_gate_gru_ref(xt, h0, params, return_sequences=True))
    np.testing.assert_allclose(np.asarray(out), np.asarray(ref),
                               rtol=5e-2, atol=5e-2)

    print("KERNEL_OK")
</pallas_src>

<mosaic_0001>
module attributes {stable_mosaic.version = 11 : i64} {
  func.func @_x_contrib_kernel(%arg0: i32, %arg1: i32, %arg2: memref<1x1x16x16x64xf32, #tpu.memory_space<vmem>>, %arg3: memref<3x3x64x192xbf16, #tpu.memory_space<vmem>>, %arg4: memref<1x192xf32, #tpu.memory_space<vmem>>, %arg5: memref<1x1x256x192xf32, #tpu.memory_space<vmem>>) attributes {dimension_semantics = [#tpu.dimension_semantics<parallel>, #tpu.dimension_semantics<parallel>], iteration_bounds = array<i64: 2, 3>, scalar_prefetch = 0 : i64, scratch_operands = 0 : i64, tpu.core_type = #tpu.core_type<tc>, window_params = [{transform_indices = @transform_0, window_bounds = array<i64: 1, 1, 16, 16, 64>}, {pipeline_mode = #tpu.pipeline_mode<synchronous>, transform_indices = @transform_1, window_bounds = array<i64: 3, 3, 64, 192>}, {pipeline_mode = #tpu.pipeline_mode<synchronous>, transform_indices = @transform_2, window_bounds = array<i64: 1, 192>}, {transform_indices = @transform_3, window_bounds = array<i64: 1, 1, 256, 192>}]} {
    %c0 = arith.constant 0 : index
    %c0_0 = arith.constant 0 : index
    %c0_1 = arith.constant 0 : index
    %c0_2 = arith.constant 0 : index
    %c0_3 = arith.constant 0 : index
    %0 = vector.load %arg2[%c0, %c0_0, %c0_1, %c0_2, %c0_3] : memref<1x1x16x16x64xf32, #tpu.memory_space<vmem>>, vector<1x1x16x16x64xf32>
    %1 = vector.shape_cast %0 : vector<1x1x16x16x64xf32> to vector<16x16x64xf32>
    %2 = arith.truncf %1 : vector<16x16x64xf32> to vector<16x16x64xbf16>
    %c0_4 = arith.constant 0 : index
    %c0_5 = arith.constant 0 : index
    %c0_6 = arith.constant 0 : index
    %c0_7 = arith.constant 0 : index
    %3 = vector.load %arg3[%c0_4, %c0_5, %c0_6, %c0_7] : memref<3x3x64x192xbf16, #tpu.memory_space<vmem>>, vector<3x3x64x192xbf16>
    %4 = vector.extract_strided_slice %2 {offsets = [1, 0, 0], sizes = [1, 16, 64], strides = [1, 1, 1]} : vector<16x16x64xbf16> to vector<1x16x64xbf16>
    %5 = vector.extract_strided_slice %2 {offsets = [14, 0, 0], sizes = [1, 16, 64], strides = [1, 1, 1]} : vector<16x16x64xbf16> to vector<1x16x64xbf16>
    %6 = tpu.concatenate %4, %2, %5 in 0 : vector<1x16x64xbf16>, vector<16x16x64xbf16>, vector<1x16x64xbf16> -> vector<18x16x64xbf16>
    %7 = vector.extract_strided_slice %6 {offsets = [0, 1, 0], sizes = [18, 1, 64], strides = [1, 1, 1]} : vector<18x16x64xbf16> to vector<18x1x64xbf16>
    %8 = vector.extract_strided_slice %6 {offsets = [0, 14, 0], sizes = [18, 1, 64], strides = [1, 1, 1]} : vector<18x16x64xbf16> to vector<18x1x64xbf16>
    %9 = tpu.concatenate %7, %6, %8 in 1 : vector<18x1x64xbf16>, vector<18x16x64xbf16>, vector<18x1x64xbf16> -> vector<18x18x64xbf16>
    %cst = arith.constant 0.000000e+00 : f32
    %10 = vector.broadcast %cst : f32 to vector<256x192xf32>
    %11 = vector.extract_strided_slice %9 {offsets = [0, 0, 0], sizes = [16, 16, 64], strides = [1, 1, 1]} : vector<18x18x64xbf16> to vector<16x16x64xbf16>
    %12 = vector.shape_cast %11 : vector<16x16x64xbf16> to vector<256x64xbf16>
    %13 = vector.extract_strided_slice %3 {offsets = [0, 0, 0, 0], sizes = [1, 1, 64, 192], strides = [1, 1, 1, 1]} : vector<3x3x64x192xbf16> to vector<1x1x64x192xbf16>
    %14 = vector.shape_cast %13 : vector<1x1x64x192xbf16> to vector<64x192xbf16>
    %cst_8 = arith.constant dense<0.000000e+00> : vector<256x192xf32>
    %15 = tpu.matmul %12, %14, %cst_8 {dimension_numbers = #tpu.dot_dimension_numbers<[1], [0], [0], [1], [0, 0, 1, 1], [], []>} : vector<256x64xbf16>, vector<64x192xbf16>, vector<256x192xf32> -> vector<256x192xf32>
    %16 = arith.addf %10, %15 : vector<256x192xf32>
    %17 = vector.extract_strided_slice %9 {offsets = [0, 1, 0], sizes = [16, 16, 64], strides = [1, 1, 1]} : vector<18x18x64xbf16> to vector<16x16x64xbf16>
    %18 = vector.shape_cast %17 : vector<16x16x64xbf16> to vector<256x64xbf16>
    %19 = vector.extract_strided_slice %3 {offsets = [0, 1, 0, 0], sizes = [1, 1, 64, 192], strides = [1, 1, 1, 1]} : vector<3x3x64x192xbf16> to vector<1x1x64x192xbf16>
    %20 = vector.shape_cast %19 : vector<1x1x64x192xbf16> to vector<64x192xbf16>
    %cst_9 = arith.constant dense<0.000000e+00> : vector<256x192xf32>
    %21 = tpu.matmul %18, %20, %cst_9 {dimension_numbers = #tpu.dot_dimension_numbers<[1], [0], [0], [1], [0, 0, 1, 1], [], []>} : vector<256x64xbf16>, vector<64x192xbf16>, vector<256x192xf32> -> vector<256x192xf32>
    %22 = arith.addf %16, %21 : vector<256x192xf32>
    %23 = vector.extract_strided_slice %9 {offsets = [0, 2, 0], sizes = [16, 16, 64], strides = [1, 1, 1]} : vector<18x18x64xbf16> to vector<16x16x64xbf16>
    %24 = vector.shape_cast %23 : vector<16x16x64xbf16> to vector<256x64xbf16>
    %25 = vector.extract_strided_slice %3 {offsets = [0, 2, 0, 0], sizes = [1, 1, 64, 192], strides = [1, 1, 1, 1]} : vector<3x3x64x192xbf16> to vector<1x1x64x192xbf16>
    %26 = vector.shape_cast %25 : vector<1x1x64x192xbf16> to vector<64x192xbf16>
    %cst_10 = arith.constant dense<0.000000e+00> : vector<256x192xf32>
    %27 = tpu.matmul %24, %26, %cst_10 {dimension_numbers = #tpu.dot_dimension_numbers<[1], [0], [0], [1], [0, 0, 1, 1], [], []>} : vector<256x64xbf16>, vector<64x192xbf16>, vector<256x192xf32> -> vector<256x192xf32>
    %28 = arith.addf %22, %27 : vector<256x192xf32>
    %29 = vector.extract_strided_slice %9 {offsets = [1, 0, 0], sizes = [16, 16, 64], strides = [1, 1, 1]} : vector<18x18x64xbf16> to vector<16x16x64xbf16>
    %30 = vector.shape_cast %29 : vector<16x16x64xbf16> to vector<256x64xbf16>
    %31 = vector.extract_strided_slice %3 {offsets = [1, 0, 0, 0], sizes = [1, 1, 64, 192], strides = [1, 1, 1, 1]} : vector<3x3x64x192xbf16> to vector<1x1x64x192xbf16>
    %32 = vector.shape_cast %31 : vector<1x1x64x192xbf16> to vector<64x192xbf16>
    %cst_11 = arith.constant dense<0.000000e+00> : vector<256x192xf32>
    %33 = tpu.matmul %30, %32, %cst_11 {dimension_numbers = #tpu.dot_dimension_numbers<[1], [0], [0], [1], [0, 0, 1, 1], [], []>} : vector<256x64xbf16>, vector<64x192xbf16>, vector<256x192xf32> -> vector<256x192xf32>
    %34 = arith.addf %28, %33 : vector<256x192xf32>
    %35 = vector.extract_strided_slice %9 {offsets = [1, 1, 0], sizes = [16, 16, 64], strides = [1, 1, 1]} : vector<18x18x64xbf16> to vector<16x16x64xbf16>
    %36 = vector.shape_cast %35 : vector<16x16x64xbf16> to vector<256x64xbf16>
    %37 = vector.extract_strided_slice %3 {offsets = [1, 1, 0, 0], sizes = [1, 1, 64, 192], strides = [1, 1, 1, 1]} : vector<3x3x64x192xbf16> to vector<1x1x64x192xbf16>
    %38 = vector.shape_cast %37 : vector<1x1x64x192xbf16> to vector<64x192xbf16>
    %cst_12 = arith.constant dense<0.000000e+00> : vector<256x192xf32>
    %39 = tpu.matmul %36, %38, %cst_12 {dimension_numbers = #tpu.dot_dimension_numbers<[1], [0], [0], [1], [0, 0, 1, 1], [], []>} : vector<256x64xbf16>, vector<64x192xbf16>, vector<256x192xf32> -> vector<256x192xf32>
    %40 = arith.addf %34, %39 : vector<256x192xf32>
    %41 = vector.extract_strided_slice %9 {offsets = [1, 2, 0], sizes = [16, 16, 64], strides = [1, 1, 1]} : vector<18x18x64xbf16> to vector<16x16x64xbf16>
    %42 = vector.shape_cast %41 : vector<16x16x64xbf16> to vector<256x64xbf16>
    %43 = vector.extract_strided_slice %3 {offsets = [1, 2, 0, 0], sizes = [1, 1, 64, 192], strides = [1, 1, 1, 1]} : vector<3x3x64x192xbf16> to vector<1x1x64x192xbf16>
    %44 = vector.shape_cast %43 : vector<1x1x64x192xbf16> to vector<64x192xbf16>
    %cst_13 = arith.constant dense<0.000000e+00> : vector<256x192xf32>
    %45 = tpu.matmul %42, %44, %cst_13 {dimension_numbers = #tpu.dot_dimension_numbers<[1], [0], [0], [1], [0, 0, 1, 1], [], []>} : vector<256x64xbf16>, vector<64x192xbf16>, vector<256x192xf32> -> vector<256x192xf32>
    %46 = arith.addf %40, %45 : vector<256x192xf32>
    %47 = vector.extract_strided_slice %9 {offsets = [2, 0, 0], sizes = [16, 16, 64], strides = [1, 1, 1]} : vector<18x18x64xbf16> to vector<16x16x64xbf16>
    %48 = vector.shape_cast %47 : vector<16x16x64xbf16> to vector<256x64xbf16>
    %49 = vector.extract_strided_slice %3 {offsets = [2, 0, 0, 0], sizes = [1, 1, 64, 192], strides = [1, 1, 1, 1]} : vector<3x3x64x192xbf16> to vector<1x1x64x192xbf16>
    %50 = vector.shape_cast %49 : vector<1x1x64x192xbf16> to vector<64x192xbf16>
    %cst_14 = arith.constant dense<0.000000e+00> : vector<256x192xf32>
    %51 = tpu.matmul %48, %50, %cst_14 {dimension_numbers = #tpu.dot_dimension_numbers<[1], [0], [0], [1], [0, 0, 1, 1], [], []>} : vector<256x64xbf16>, vector<64x192xbf16>, vector<256x192xf32> -> vector<256x192xf32>
    %52 = arith.addf %46, %51 : vector<256x192xf32>
    %53 = vector.extract_strided_slice %9 {offsets = [2, 1, 0], sizes = [16, 16, 64], strides = [1, 1, 1]} : vector<18x18x64xbf16> to vector<16x16x64xbf16>
    %54 = vector.shape_cast %53 : vector<16x16x64xbf16> to vector<256x64xbf16>
    %55 = vector.extract_strided_slice %3 {offsets = [2, 1, 0, 0], sizes = [1, 1, 64, 192], strides = [1, 1, 1, 1]} : vector<3x3x64x192xbf16> to vector<1x1x64x192xbf16>
    %56 = vector.shape_cast %55 : vector<1x1x64x192xbf16> to vector<64x192xbf16>
    %cst_15 = arith.constant dense<0.000000e+00> : vector<256x192xf32>
    %57 = tpu.matmul %54, %56, %cst_15 {dimension_numbers = #tpu.dot_dimension_numbers<[1], [0], [0], [1], [0, 0, 1, 1], [], []>} : vector<256x64xbf16>, vector<64x192xbf16>, vector<256x192xf32> -> vector<256x192xf32>
    %58 = arith.addf %52, %57 : vector<256x192xf32>
    %59 = vector.extract_strided_slice %9 {offsets = [2, 2, 0], sizes = [16, 16, 64], strides = [1, 1, 1]} : vector<18x18x64xbf16> to vector<16x16x64xbf16>
    %60 = vector.shape_cast %59 : vector<16x16x64xbf16> to vector<256x64xbf16>
    %61 = vector.extract_strided_slice %3 {offsets = [2, 2, 0, 0], sizes = [1, 1, 64, 192], strides = [1, 1, 1, 1]} : vector<3x3x64x192xbf16> to vector<1x1x64x192xbf16>
    %62 = vector.shape_cast %61 : vector<1x1x64x192xbf16> to vector<64x192xbf16>
    %cst_16 = arith.constant dense<0.000000e+00> : vector<256x192xf32>
    %63 = tpu.matmul %60, %62, %cst_16 {dimension_numbers = #tpu.dot_dimension_numbers<[1], [0], [0], [1], [0, 0, 1, 1], [], []>} : vector<256x64xbf16>, vector<64x192xbf16>, vector<256x192xf32> -> vector<256x192xf32>
    %64 = arith.addf %58, %63 : vector<256x192xf32>
    %c0_17 = arith.constant 0 : index
    %c0_18 = arith.constant 0 : index
    %65 = vector.load %arg4[%c0_17, %c0_18] : memref<1x192xf32, #tpu.memory_space<vmem>>, vector<1x192xf32>
    %66 = vector.broadcast %65 : vector<1x192xf32> to vector<256x192xf32>
    %67 = arith.addf %64, %66 : vector<256x192xf32>
    %68 = vector.shape_cast %67 : vector<256x192xf32> to vector<1x1x256x192xf32>
    %c0_19 = arith.constant 0 : index
    %c0_20 = arith.constant 0 : index
    %c0_21 = arith.constant 0 : index
    %c0_22 = arith.constant 0 : index
    %69 = vector.load %arg5[%c0_19, %c0_20, %c0_21, %c0_22] : memref<1x1x256x192xf32, #tpu.memory_space<vmem>>, vector<1x1x256x192xf32>
    tpu.vector_store %arg5[%c0_19, %c0_20, %c0_21, %c0_22], %68 {strides = array<i32>} : memref<1x1x256x192xf32, #tpu.memory_space<vmem>>, vector<1x1x256x192xf32>,
    return
  }
  func.func @transform_0(%arg0: i32, %arg1: i32) -> (i32, i32, i32, i32, i32) {
    %c0_i32 = arith.constant 0 : i32
    %c0_i32_0 = arith.constant 0 : i32
    %c0_i32_1 = arith.constant 0 : i32
    %c0_i32_2 = arith.constant 0 : i32
    return %arg0, %arg1, %c0_i32, %c0_i32_0, %c0_i32_1 : i32, i32, i32, i32, i32
  }
  func.func @transform_1(%arg0: i32, %arg1: i32) -> (i32, i32, i32, i32) {
    %c0_i32 = arith.constant 0 : i32
    %c0_i32_0 = arith.constant 0 : i32
    %c0_i32_1 = arith.constant 0 : i32
    %c0_i32_2 = arith.constant 0 : i32
    %c0_i32_3 = arith.constant 0 : i32
    return %c0_i32, %c0_i32_0, %c0_i32_1, %c0_i32_2 : i32, i32, i32, i32
  }
  func.func @transform_2(%arg0: i32, %arg1: i32) -> (i32, i32) {
    %c0_i32 = arith.constant 0 : i32
    %c0_i32_0 = arith.constant 0 : i32
    %c0_i32_1 = arith.constant 0 : i32
    return %c0_i32, %c0_i32_0 : i32, i32
  }
  func.func @transform_3(%arg0: i32, %arg1: i32) -> (i32, i32, i32, i32) {
    %c0_i32 = arith.constant 0 : i32
    %c0_i32_0 = arith.constant 0 : i32
    %c0_i32_1 = arith.constant 0 : i32
    return %arg0, %arg1, %c0_i32, %c0_i32_0 : i32, i32, i32, i32
  }
}

module attributes {stable_mosaic.version = 11 : i64} {
  func.func @_gru_recurrent_kernel(%arg0: i32, %arg1: i32, %arg2: memref<1x1x256x192xf32, #tpu.memory_space<vmem>>, %arg3: memref<1x16x16x64xf32, #tpu.memory_space<vmem>>, %arg4: memref<3x3x64x128xbf16, #tpu.memory_space<vmem>>, %arg5: memref<3x3x64x64xbf16, #tpu.memory_space<vmem>>, %arg6: memref<1x1x256x64xf32, #tpu.memory_space<vmem>>, %arg7: memref<16x16x64xf32, #tpu.memory_space<vmem>>) attributes {dimension_semantics = [#tpu.dimension_semantics<parallel>, #tpu.dimension_semantics<arbitrary>], iteration_bounds = array<i64: 2, 3>, scalar_prefetch = 0 : i64, scratch_operands = 1 : i64, tpu.core_type = #tpu.core_type<tc>, window_params = [{transform_indices = @transform_0, window_bounds = array<i64: 1, 1, 256, 192>}, {transform_indices = @transform_1, window_bounds = array<i64: 1, 16, 16, 64>}, {pipeline_mode = #tpu.pipeline_mode<synchronous>, transform_indices = @transform_2, window_bounds = array<i64: 3, 3, 64, 128>}, {pipeline_mode = #tpu.pipeline_mode<synchronous>, transform_indices = @transform_3, window_bounds = array<i64: 3, 3, 64, 64>}, {transform_indices = @transform_4, window_bounds = array<i64: 1, 1, 256, 64>}]} {
    %c0_i32 = arith.constant 0 : i32
    %0 = arith.cmpi eq, %arg1, %c0_i32 : i32
    %1 = arith.extui %0 : i1 to i32
    %c0_i32_0 = arith.constant 0 : i32
    %2 = arith.cmpi ne, %1, %c0_i32_0 : i32
    scf.if %2 {
      %c0_44 = arith.constant 0 : index
      %c0_45 = arith.constant 0 : index
      %c0_46 = arith.constant 0 : index
      %c0_47 = arith.constant 0 : index
      %161 = vector.load %arg3[%c0_44, %c0_45, %c0_46, %c0_47] : memref<1x16x16x64xf32, #tpu.memory_space<vmem>>, vector<1x16x16x64xf32>
      %162 = vector.shape_cast %161 : vector<1x16x16x64xf32> to vector<16x16x64xf32>
      %c0_48 = arith.constant 0 : index
      %c0_49 = arith.constant 0 : index
      %c0_50 = arith.constant 0 : index
      %163 = vector.load %arg7[%c0_48, %c0_49, %c0_50] : memref<16x16x64xf32, #tpu.memory_space<vmem>>, vector<16x16x64xf32>
      tpu.vector_store %arg7[%c0_48, %c0_49, %c0_50], %162 {strides = array<i32>} : memref<16x16x64xf32, #tpu.memory_space<vmem>>, vector<16x16x64xf32>,
    } else {
    }
    %c0 = arith.constant 0 : index
    %c0_1 = arith.constant 0 : index
    %c0_2 = arith.constant 0 : index
    %3 = vector.load %arg7[%c0, %c0_1, %c0_2] : memref<16x16x64xf32, #tpu.memory_space<vmem>>, vector<16x16x64xf32>
    %c0_3 = arith.constant 0 : index
    %c0_4 = arith.constant 0 : index
    %c0_5 = arith.constant 0 : index
    %c0_6 = arith.constant 0 : index
    %4 = vector.load %arg2[%c0_3, %c0_4, %c0_5, %c0_6] : memref<1x1x256x192xf32, #tpu.memory_space<vmem>>, vector<1x1x256x192xf32>
    %5 = vector.shape_cast %4 : vector<1x1x256x192xf32> to vector<256x192xf32>
    %6 = arith.truncf %3 : vector<16x16x64xf32> to vector<16x16x64xbf16>
    %c0_7 = arith.constant 0 : index
    %c0_8 = arith.constant 0 : index
    %c0_9 = arith.constant 0 : index
    %c0_10 = arith.constant 0 : index
    %7 = vector.load %arg4[%c0_7, %c0_8, %c0_9, %c0_10] : memref<3x3x64x128xbf16, #tpu.memory_space<vmem>>, vector<3x3x64x128xbf16>
    %8 = vector.extract_strided_slice %6 {offsets = [1, 0, 0], sizes = [1, 16, 64], strides = [1, 1, 1]} : vector<16x16x64xbf16> to vector<1x16x64xbf16>
    %9 = vector.extract_strided_slice %6 {offsets = [14, 0, 0], sizes = [1, 16, 64], strides = [1, 1, 1]} : vector<16x16x64xbf16> to vector<1x16x64xbf16>
    %10 = tpu.concatenate %8, %6, %9 in 0 : vector<1x16x64xbf16>, vector<16x16x64xbf16>, vector<1x16x64xbf16> -> vector<18x16x64xbf16>
    %11 = vector.extract_strided_slice %10 {offsets = [0, 1, 0], sizes = [18, 1, 64], strides = [1, 1, 1]} : vector<18x16x64xbf16> to vector<18x1x64xbf16>
    %12 = vector.extract_strided_slice %10 {offsets = [0, 14, 0], sizes = [18, 1, 64], strides = [1, 1, 1]} : vector<18x16x64xbf16> to vector<18x1x64xbf16>
    %13 = tpu.concatenate %11, %10, %12 in 1 : vector<18x1x64xbf16>, vector<18x16x64xbf16>, vector<18x1x64xbf16> -> vector<18x18x64xbf16>
    %cst = arith.constant 0.000000e+00 : f32
    %14 = vector.broadcast %cst : f32 to vector<256x128xf32>
    %15 = vector.extract_strided_slice %13 {offsets = [0, 0, 0], sizes = [16, 16, 64], strides = [1, 1, 1]} : vector<18x18x64xbf16> to vector<16x16x64xbf16>
    %16 = vector.shape_cast %15 : vector<16x16x64xbf16> to vector<256x64xbf16>
    %17 = vector.extract_strided_slice %7 {offsets = [0, 0, 0, 0], sizes = [1, 1, 64, 128], strides = [1, 1, 1, 1]} : vector<3x3x64x128xbf16> to vector<1x1x64x128xbf16>
    %18 = vector.shape_cast %17 : vector<1x1x64x128xbf16> to vector<64x128xbf16>
    %cst_11 = arith.constant dense<0.000000e+00> : vector<256x128xf32>
    %19 = tpu.matmul %16, %18, %cst_11 {dimension_numbers = #tpu.dot_dimension_numbers<[1], [0], [0], [1], [0, 0, 1, 1], [], []>} : vector<256x64xbf16>, vector<64x128xbf16>, vector<256x128xf32> -> vector<256x128xf32>
    %20 = arith.addf %14, %19 : vector<256x128xf32>
    %21 = vector.extract_strided_slice %13 {offsets = [0, 1, 0], sizes = [16, 16, 64], strides = [1, 1, 1]} : vector<18x18x64xbf16> to vector<16x16x64xbf16>
    %22 = vector.shape_cast %21 : vector<16x16x64xbf16> to vector<256x64xbf16>
    %23 = vector.extract_strided_slice %7 {offsets = [0, 1, 0, 0], sizes = [1, 1, 64, 128], strides = [1, 1, 1, 1]} : vector<3x3x64x128xbf16> to vector<1x1x64x128xbf16>
    %24 = vector.shape_cast %23 : vector<1x1x64x128xbf16> to vector<64x128xbf16>
    %cst_12 = arith.constant dense<0.000000e+00> : vector<256x128xf32>
    %25 = tpu.matmul %22, %24, %cst_12 {dimension_numbers = #tpu.dot_dimension_numbers<[1], [0], [0], [1], [0, 0, 1, 1], [], []>} : vector<256x64xbf16>, vector<64x128xbf16>, vector<256x128xf32> -> vector<256x128xf32>
    %26 = arith.addf %20, %25 : vector<256x128xf32>
    %27 = vector.extract_strided_slice %13 {offsets = [0, 2, 0], sizes = [16, 16, 64], strides = [1, 1, 1]} : vector<18x18x64xbf16> to vector<16x16x64xbf16>
    %28 = vector.shape_cast %27 : vector<16x16x64xbf16> to vector<256x64xbf16>
    %29 = vector.extract_strided_slice %7 {offsets = [0, 2, 0, 0], sizes = [1, 1, 64, 128], strides = [1, 1, 1, 1]} : vector<3x3x64x128xbf16> to vector<1x1x64x128xbf16>
    %30 = vector.shape_cast %29 : vector<1x1x64x128xbf16> to vector<64x128xbf16>
    %cst_13 = arith.constant dense<0.000000e+00> : vector<256x128xf32>
    %31 = tpu.matmul %28, %30, %cst_13 {dimension_numbers = #tpu.dot_dimension_numbers<[1], [0], [0], [1], [0, 0, 1, 1], [], []>} : vector<256x64xbf16>, vector<64x128xbf16>, vector<256x128xf32> -> vector<256x128xf32>
    %32 = arith.addf %26, %31 : vector<256x128xf32>
    %33 = vector.extract_strided_slice %13 {offsets = [1, 0, 0], sizes = [16, 16, 64], strides = [1, 1, 1]} : vector<18x18x64xbf16> to vector<16x16x64xbf16>
    %34 = vector.shape_cast %33 : vector<16x16x64xbf16> to vector<256x64xbf16>
    %35 = vector.extract_strided_slice %7 {offsets = [1, 0, 0, 0], sizes = [1, 1, 64, 128], strides = [1, 1, 1, 1]} : vector<3x3x64x128xbf16> to vector<1x1x64x128xbf16>
    %36 = vector.shape_cast %35 : vector<1x1x64x128xbf16> to vector<64x128xbf16>
    %cst_14 = arith.constant dense<0.000000e+00> : vector<256x128xf32>
    %37 = tpu.matmul %34, %36, %cst_14 {dimension_numbers = #tpu.dot_dimension_numbers<[1], [0], [0], [1], [0, 0, 1, 1], [], []>} : vector<256x64xbf16>, vector<64x128xbf16>, vector<256x128xf32> -> vector<256x128xf32>
    %38 = arith.addf %32, %37 : vector<256x128xf32>
    %39 = vector.extract_strided_slice %13 {offsets = [1, 1, 0], sizes = [16, 16, 64], strides = [1, 1, 1]} : vector<18x18x64xbf16> to vector<16x16x64xbf16>
    %40 = vector.shape_cast %39 : vector<16x16x64xbf16> to vector<256x64xbf16>
    %41 = vector.extract_strided_slice %7 {offsets = [1, 1, 0, 0], sizes = [1, 1, 64, 128], strides = [1, 1, 1, 1]} : vector<3x3x64x128xbf16> to vector<1x1x64x128xbf16>
    %42 = vector.shape_cast %41 : vector<1x1x64x128xbf16> to vector<64x128xbf16>
    %cst_15 = arith.constant dense<0.000000e+00> : vector<256x128xf32>
    %43 = tpu.matmul %40, %42, %cst_15 {dimension_numbers = #tpu.dot_dimension_numbers<[1], [0], [0], [1], [0, 0, 1, 1], [], []>} : vector<256x64xbf16>, vector<64x128xbf16>, vector<256x128xf32> -> vector<256x128xf32>
    %44 = arith.addf %38, %43 : vector<256x128xf32>
    %45 = vector.extract_strided_slice %13 {offsets = [1, 2, 0], sizes = [16, 16, 64], strides = [1, 1, 1]} : vector<18x18x64xbf16> to vector<16x16x64xbf16>
    %46 = vector.shape_cast %45 : vector<16x16x64xbf16> to vector<256x64xbf16>
    %47 = vector.extract_strided_slice %7 {offsets = [1, 2, 0, 0], sizes = [1, 1, 64, 128], strides = [1, 1, 1, 1]} : vector<3x3x64x128xbf16> to vector<1x1x64x128xbf16>
    %48 = vector.shape_cast %47 : vector<1x1x64x128xbf16> to vector<64x128xbf16>
    %cst_16 = arith.constant dense<0.000000e+00> : vector<256x128xf32>
    %49 = tpu.matmul %46, %48, %cst_16 {dimension_numbers = #tpu.dot_dimension_numbers<[1], [0], [0], [1], [0, 0, 1, 1], [], []>} : vector<256x64xbf16>, vector<64x128xbf16>, vector<256x128xf32> -> vector<256x128xf32>
    %50 = arith.addf %44, %49 : vector<256x128xf32>
    %51 = vector.extract_strided_slice %13 {offsets = [2, 0, 0], sizes = [16, 16, 64], strides = [1, 1, 1]} : vector<18x18x64xbf16> to vector<16x16x64xbf16>
    %52 = vector.shape_cast %51 : vector<16x16x64xbf16> to vector<256x64xbf16>
    %53 = vector.extract_strided_slice %7 {offsets = [2, 0, 0, 0], sizes = [1, 1, 64, 128], strides = [1, 1, 1, 1]} : vector<3x3x64x128xbf16> to vector<1x1x64x128xbf16>
    %54 = vector.shape_cast %53 : vector<1x1x64x128xbf16> to vector<64x128xbf16>
    %cst_17 = arith.constant dense<0.000000e+00> : vector<256x128xf32>
    %55 = tpu.matmul %52, %54, %cst_17 {dimension_numbers = #tpu.dot_dimension_numbers<[1], [0], [0], [1], [0, 0, 1, 1], [], []>} : vector<256x64xbf16>, vector<64x128xbf16>, vector<256x128xf32> -> vector<256x128xf32>
    %56 = arith.addf %50, %55 : vector<256x128xf32>
    %57 = vector.extract_strided_slice %13 {offsets = [2, 1, 0], sizes = [16, 16, 64], strides = [1, 1, 1]} : vector<18x18x64xbf16> to vector<16x16x64xbf16>
    %58 = vector.shape_cast %57 : vector<16x16x64xbf16> to vector<256x64xbf16>
    %59 = vector.extract_strided_slice %7 {offsets = [2, 1, 0, 0], sizes = [1, 1, 64, 128], strides = [1, 1, 1, 1]} : vector<3x3x64x128xbf16> to vector<1x1x64x128xbf16>
    %60 = vector.shape_cast %59 : vector<1x1x64x128xbf16> to vector<64x128xbf16>
    %cst_18 = arith.constant dense<0.000000e+00> : vector<256x128xf32>
    %61 = tpu.matmul %58, %60, %cst_18 {dimension_numbers = #tpu.dot_dimension_numbers<[1], [0], [0], [1], [0, 0, 1, 1], [], []>} : vector<256x64xbf16>, vector<64x128xbf16>, vector<256x128xf32> -> vector<256x128xf32>
    %62 = arith.addf %56, %61 : vector<256x128xf32>
    %63 = vector.extract_strided_slice %13 {offsets = [2, 2, 0], sizes = [16, 16, 64], strides = [1, 1, 1]} : vector<18x18x64xbf16> to vector<16x16x64xbf16>
    %64 = vector.shape_cast %63 : vector<16x16x64xbf16> to vector<256x64xbf16>
    %65 = vector.extract_strided_slice %7 {offsets = [2, 2, 0, 0], sizes = [1, 1, 64, 128], strides = [1, 1, 1, 1]} : vector<3x3x64x128xbf16> to vector<1x1x64x128xbf16>
    %66 = vector.shape_cast %65 : vector<1x1x64x128xbf16> to vector<64x128xbf16>
    %cst_19 = arith.constant dense<0.000000e+00> : vector<256x128xf32>
    %67 = tpu.matmul %64, %66, %cst_19 {dimension_numbers = #tpu.dot_dimension_numbers<[1], [0], [0], [1], [0, 0, 1, 1], [], []>} : vector<256x64xbf16>, vector<64x128xbf16>, vector<256x128xf32> -> vector<256x128xf32>
    %68 = arith.addf %62, %67 : vector<256x128xf32>
    %69 = vector.extract_strided_slice %5 {offsets = [0, 0], sizes = [256, 128], strides = [1, 1]} : vector<256x192xf32> to vector<256x128xf32>
    %70 = arith.addf %68, %69 : vector<256x128xf32>
    %71 = vector.extract_strided_slice %70 {offsets = [0, 0], sizes = [256, 64], strides = [1, 1]} : vector<256x128xf32> to vector<256x64xf32>
    %72 = arith.negf %71 : vector<256x64xf32>
    %73 = math.exp %72 : vector<256x64xf32>
    %cst_20 = arith.constant 1.000000e+00 : f32
    %74 = vector.broadcast %cst_20 : f32 to vector<256x64xf32>
    %75 = arith.addf %74, %73 : vector<256x64xf32>
    %76 = arith.divf %74, %75 : vector<256x64xf32>
    %77 = vector.extract_strided_slice %70 {offsets = [0, 64], sizes = [256, 64], strides = [1, 1]} : vector<256x128xf32> to vector<256x64xf32>
    %78 = arith.negf %77 : vector<256x64xf32>
    %79 = math.exp %78 : vector<256x64xf32>
    %cst_21 = arith.constant 1.000000e+00 : f32
    %80 = vector.broadcast %cst_21 : f32 to vector<256x64xf32>
    %81 = arith.addf %80, %79 : vector<256x64xf32>
    %82 = arith.divf %80, %81 : vector<256x64xf32>
    %83 = vector.shape_cast %3 : vector<16x16x64xf32> to vector<256x64xf32>
    %84 = arith.mulf %82, %83 : vector<256x64xf32>
    %85 = arith.truncf %84 : vector<256x64xf32> to vector<256x64xbf16>
    %86 = vector.shape_cast %85 : vector<256x64xbf16> to vector<16x16x64xbf16>
    %c0_22 = arith.constant 0 : index
    %c0_23 = arith.constant 0 : index
    %c0_24 = arith.constant 0 : index
    %c0_25 = arith.constant 0 : index
    %87 = vector.load %arg5[%c0_22, %c0_23, %c0_24, %c0_25] : memref<3x3x64x64xbf16, #tpu.memory_space<vmem>>, vector<3x3x64x64xbf16>
    %88 = vector.extract_strided_slice %86 {offsets = [1, 0, 0], sizes = [1, 16, 64], strides = [1, 1, 1]} : vector<16x16x64xbf16> to vector<1x16x64xbf16>
    %89 = vector.extract_strided_slice %86 {offsets = [14, 0, 0], sizes = [1, 16, 64], strides = [1, 1, 1]} : vector<16x16x64xbf16> to vector<1x16x64xbf16>
    %90 = tpu.concatenate %88, %86, %89 in 0 : vector<1x16x64xbf16>, vector<16x16x64xbf16>, vector<1x16x64xbf16> -> vector<18x16x64xbf16>
    %91 = vector.extract_strided_slice %90 {offsets = [0, 1, 0], sizes = [18, 1, 64], strides = [1, 1, 1]} : vector<18x16x64xbf16> to vector<18x1x64xbf16>
    %92 = vector.extract_strided_slice %90 {offsets = [0, 14, 0], sizes = [18, 1, 64], strides = [1, 1, 1]} : vector<18x16x64xbf16> to vector<18x1x64xbf16>
    %93 = tpu.concatenate %91, %90, %92 in 1 : vector<18x1x64xbf16>, vector<18x16x64xbf16>, vector<18x1x64xbf16> -> vector<18x18x64xbf16>
    %cst_26 = arith.constant 0.000000e+00 : f32
    %94 = vector.broadcast %cst_26 : f32 to vector<256x64xf32>
    %95 = vector.extract_strided_slice %93 {offsets = [0, 0, 0], sizes = [16, 16, 64], strides = [1, 1, 1]} : vector<18x18x64xbf16> to vector<16x16x64xbf16>
    %96 = vector.shape_cast %95 : vector<16x16x64xbf16> to vector<256x64xbf16>
    %97 = vector.extract_strided_slice %87 {offsets = [0, 0, 0, 0], sizes = [1, 1, 64, 64], strides = [1, 1, 1, 1]} : vector<3x3x64x64xbf16> to vector<1x1x64x64xbf16>
    %98 = vector.shape_cast %97 : vector<1x1x64x64xbf16> to vector<64x64xbf16>
    %cst_27 = arith.constant dense<0.000000e+00> : vector<256x64xf32>
    %99 = tpu.matmul %96, %98, %cst_27 {dimension_numbers = #tpu.dot_dimension_numbers<[1], [0], [0], [1], [0, 0, 1, 1], [], []>} : vector<256x64xbf16>, vector<64x64xbf16>, vector<256x64xf32> -> vector<256x64xf32>
    %100 = arith.addf %94, %99 : vector<256x64xf32>
    %101 = vector.extract_strided_slice %93 {offsets = [0, 1, 0], sizes = [16, 16, 64], strides = [1, 1, 1]} : vector<18x18x64xbf16> to vector<16x16x64xbf16>
    %102 = vector.shape_cast %101 : vector<16x16x64xbf16> to vector<256x64xbf16>
    %103 = vector.extract_strided_slice %87 {offsets = [0, 1, 0, 0], sizes = [1, 1, 64, 64], strides = [1, 1, 1, 1]} : vector<3x3x64x64xbf16> to vector<1x1x64x64xbf16>
    %104 = vector.shape_cast %103 : vector<1x1x64x64xbf16> to vector<64x64xbf16>
    %cst_28 = arith.constant dense<0.000000e+00> : vector<256x64xf32>
    %105 = tpu.matmul %102, %104, %cst_28 {dimension_numbers = #tpu.dot_dimension_numbers<[1], [0], [0], [1], [0, 0, 1, 1], [], []>} : vector<256x64xbf16>, vector<64x64xbf16>, vector<256x64xf32> -> vector<256x64xf32>
    %106 = arith.addf %100, %105 : vector<256x64xf32>
    %107 = vector.extract_strided_slice %93 {offsets = [0, 2, 0], sizes = [16, 16, 64], strides = [1, 1, 1]} : vector<18x18x64xbf16> to vector<16x16x64xbf16>
    %108 = vector.shape_cast %107 : vector<16x16x64xbf16> to vector<256x64xbf16>
    %109 = vector.extract_strided_slice %87 {offsets = [0, 2, 0, 0], sizes = [1, 1, 64, 64], strides = [1, 1, 1, 1]} : vector<3x3x64x64xbf16> to vector<1x1x64x64xbf16>
    %110 = vector.shape_cast %109 : vector<1x1x64x64xbf16> to vector<64x64xbf16>
    %cst_29 = arith.constant dense<0.000000e+00> : vector<256x64xf32>
    %111 = tpu.matmul %108, %110, %cst_29 {dimension_numbers = #tpu.dot_dimension_numbers<[1], [0], [0], [1], [0, 0, 1, 1], [], []>} : vector<256x64xbf16>, vector<64x64xbf16>, vector<256x64xf32> -> vector<256x64xf32>
    %112 = arith.addf %106, %111 : vector<256x64xf32>
    %113 = vector.extract_strided_slice %93 {offsets = [1, 0, 0], sizes = [16, 16, 64], strides = [1, 1, 1]} : vector<18x18x64xbf16> to vector<16x16x64xbf16>
    %114 = vector.shape_cast %113 : vector<16x16x64xbf16> to vector<256x64xbf16>
    %115 = vector.extract_strided_slice %87 {offsets = [1, 0, 0, 0], sizes = [1, 1, 64, 64], strides = [1, 1, 1, 1]} : vector<3x3x64x64xbf16> to vector<1x1x64x64xbf16>
    %116 = vector.shape_cast %115 : vector<1x1x64x64xbf16> to vector<64x64xbf16>
    %cst_30 = arith.constant dense<0.000000e+00> : vector<256x64xf32>
    %117 = tpu.matmul %114, %116, %cst_30 {dimension_numbers = #tpu.dot_dimension_numbers<[1], [0], [0], [1], [0, 0, 1, 1], [], []>} : vector<256x64xbf16>, vector<64x64xbf16>, vector<256x64xf32> -> vector<256x64xf32>
    %118 = arith.addf %112, %117 : vector<256x64xf32>
    %119 = vector.extract_strided_slice %93 {offsets = [1, 1, 0], sizes = [16, 16, 64], strides = [1, 1, 1]} : vector<18x18x64xbf16> to vector<16x16x64xbf16>
    %120 = vector.shape_cast %119 : vector<16x16x64xbf16> to vector<256x64xbf16>
    %121 = vector.extract_strided_slice %87 {offsets = [1, 1, 0, 0], sizes = [1, 1, 64, 64], strides = [1, 1, 1, 1]} : vector<3x3x64x64xbf16> to vector<1x1x64x64xbf16>
    %122 = vector.shape_cast %121 : vector<1x1x64x64xbf16> to vector<64x64xbf16>
    %cst_31 = arith.constant dense<0.000000e+00> : vector<256x64xf32>
    %123 = tpu.matmul %120, %122, %cst_31 {dimension_numbers = #tpu.dot_dimension_numbers<[1], [0], [0], [1], [0, 0, 1, 1], [], []>} : vector<256x64xbf16>, vector<64x64xbf16>, vector<256x64xf32> -> vector<256x64xf32>
    %124 = arith.addf %118, %123 : vector<256x64xf32>
    %125 = vector.extract_strided_slice %93 {offsets = [1, 2, 0], sizes = [16, 16, 64], strides = [1, 1, 1]} : vector<18x18x64xbf16> to vector<16x16x64xbf16>
    %126 = vector.shape_cast %125 : vector<16x16x64xbf16> to vector<256x64xbf16>
    %127 = vector.extract_strided_slice %87 {offsets = [1, 2, 0, 0], sizes = [1, 1, 64, 64], strides = [1, 1, 1, 1]} : vector<3x3x64x64xbf16> to vector<1x1x64x64xbf16>
    %128 = vector.shape_cast %127 : vector<1x1x64x64xbf16> to vector<64x64xbf16>
    %cst_32 = arith.constant dense<0.000000e+00> : vector<256x64xf32>
    %129 = tpu.matmul %126, %128, %cst_32 {dimension_numbers = #tpu.dot_dimension_numbers<[1], [0], [0], [1], [0, 0, 1, 1], [], []>} : vector<256x64xbf16>, vector<64x64xbf16>, vector<256x64xf32> -> vector<256x64xf32>
    %130 = arith.addf %124, %129 : vector<256x64xf32>
    %131 = vector.extract_strided_slice %93 {offsets = [2, 0, 0], sizes = [16, 16, 64], strides = [1, 1, 1]} : vector<18x18x64xbf16> to vector<16x16x64xbf16>
    %132 = vector.shape_cast %131 : vector<16x16x64xbf16> to vector<256x64xbf16>
    %133 = vector.extract_strided_slice %87 {offsets = [2, 0, 0, 0], sizes = [1, 1, 64, 64], strides = [1, 1, 1, 1]} : vector<3x3x64x64xbf16> to vector<1x1x64x64xbf16>
    %134 = vector.shape_cast %133 : vector<1x1x64x64xbf16> to vector<64x64xbf16>
    %cst_33 = arith.constant dense<0.000000e+00> : vector<256x64xf32>
    %135 = tpu.matmul %132, %134, %cst_33 {dimension_numbers = #tpu.dot_dimension_numbers<[1], [0], [0], [1], [0, 0, 1, 1], [], []>} : vector<256x64xbf16>, vector<64x64xbf16>, vector<256x64xf32> -> vector<256x64xf32>
    %136 = arith.addf %130, %135 : vector<256x64xf32>
    %137 = vector.extract_strided_slice %93 {offsets = [2, 1, 0], sizes = [16, 16, 64], strides = [1, 1, 1]} : vector<18x18x64xbf16> to vector<16x16x64xbf16>
    %138 = vector.shape_cast %137 : vector<16x16x64xbf16> to vector<256x64xbf16>
    %139 = vector.extract_strided_slice %87 {offsets = [2, 1, 0, 0], sizes = [1, 1, 64, 64], strides = [1, 1, 1, 1]} : vector<3x3x64x64xbf16> to vector<1x1x64x64xbf16>
    %140 = vector.shape_cast %139 : vector<1x1x64x64xbf16> to vector<64x64xbf16>
    %cst_34 = arith.constant dense<0.000000e+00> : vector<256x64xf32>
    %141 = tpu.matmul %138, %140, %cst_34 {dimension_numbers = #tpu.dot_dimension_numbers<[1], [0], [0], [1], [0, 0, 1, 1], [], []>} : vector<256x64xbf16>, vector<64x64xbf16>, vector<256x64xf32> -> vector<256x64xf32>
    %142 = arith.addf %136, %141 : vector<256x64xf32>
    %143 = vector.extract_strided_slice %93 {offsets = [2, 2, 0], sizes = [16, 16, 64], strides = [1, 1, 1]} : vector<18x18x64xbf16> to vector<16x16x64xbf16>
    %144 = vector.shape_cast %143 : vector<16x16x64xbf16> to vector<256x64xbf16>
    %145 = vector.extract_strided_slice %87 {offsets = [2, 2, 0, 0], sizes = [1, 1, 64, 64], strides = [1, 1, 1, 1]} : vector<3x3x64x64xbf16> to vector<1x1x64x64xbf16>
    %146 = vector.shape_cast %145 : vector<1x1x64x64xbf16> to vector<64x64xbf16>
    %cst_35 = arith.constant dense<0.000000e+00> : vector<256x64xf32>
    %147 = tpu.matmul %144, %146, %cst_35 {dimension_numbers = #tpu.dot_dimension_numbers<[1], [0], [0], [1], [0, 0, 1, 1], [], []>} : vector<256x64xbf16>, vector<64x64xbf16>, vector<256x64xf32> -> vector<256x64xf32>
    %148 = arith.addf %142, %147 : vector<256x64xf32>
    %149 = vector.extract_strided_slice %5 {offsets = [0, 128], sizes = [256, 64], strides = [1, 1]} : vector<256x192xf32> to vector<256x64xf32>
    %150 = arith.addf %148, %149 : vector<256x64xf32>
    %151 = arith.mulf %76, %83 : vector<256x64xf32>
    %cst_36 = arith.constant 1.000000e+00 : f32
    %152 = vector.broadcast %cst_36 : f32 to vector<256x64xf32>
    %153 = arith.subf %152, %76 : vector<256x64xf32>
    %154 = math.tanh %150 : vector<256x64xf32>
    %155 = arith.mulf %153, %154 : vector<256x64xf32>
    %156 = arith.addf %151, %155 : vector<256x64xf32>
    %157 = vector.shape_cast %156 : vector<256x64xf32> to vector<16x16x64xf32>
    %c0_37 = arith.constant 0 : index
    %c0_38 = arith.constant 0 : index
    %c0_39 = arith.constant 0 : index
    %158 = vector.load %arg7[%c0_37, %c0_38, %c0_39] : memref<16x16x64xf32, #tpu.memory_space<vmem>>, vector<16x16x64xf32>
    tpu.vector_store %arg7[%c0_37, %c0_38, %c0_39], %157 {strides = array<i32>} : memref<16x16x64xf32, #tpu.memory_space<vmem>>, vector<16x16x64xf32>,
    %159 = vector.shape_cast %156 : vector<256x64xf32> to vector<1x1x256x64xf32>
    %c0_40 = arith.constant 0 : index
    %c0_41 = arith.constant 0 : index
    %c0_42 = arith.constant 0 : index
    %c0_43 = arith.constant 0 : index
    %160 = vector.load %arg6[%c0_40, %c0_41, %c0_42, %c0_43] : memref<1x1x256x64xf32, #tpu.memory_space<vmem>>, vector<1x1x256x64xf32>
    tpu.vector_store %arg6[%c0_40, %c0_41, %c0_42, %c0_43], %159 {strides = array<i32>} : memref<1x1x256x64xf32, #tpu.memory_space<vmem>>, vector<1x1x256x64xf32>,
    return
  }
  func.func @transform_0(%arg0: i32, %arg1: i32) -> (i32, i32, i32, i32) {
    %c0_i32 = arith.constant 0 : i32
    %c0_i32_0 = arith.constant 0 : i32
    %c0_i32_1 = arith.constant 0 : i32
    return %arg0, %arg1, %c0_i32, %c0_i32_0 : i32, i32, i32, i32
  }
  func.func @transform_1(%arg0: i32, %arg1: i32) -> (i32, i32, i32, i32) {
    %c0_i32 = arith.constant 0 : i32
    %c0_i32_0 = arith.constant 0 : i32
    %c0_i32_1 = arith.constant 0 : i32
    %c0_i32_2 = arith.constant 0 : i32
    return %arg0, %c0_i32, %c0_i32_0, %c0_i32_1 : i32, i32, i32, i32
  }
  func.func @transform_2(%arg0: i32, %arg1: i32) -> (i32, i32, i32, i32) {
    %c0_i32 = arith.constant 0 : i32
    %c0_i32_0 = arith.constant 0 : i32
    %c0_i32_1 = arith.constant 0 : i32
    %c0_i32_2 = arith.constant 0 : i32
    %c0_i32_3 = arith.constant 0 : i32
    return %c0_i32, %c0_i32_0, %c0_i32_1, %c0_i32_2 : i32, i32, i32, i32
  }
  func.func @transform_3(%arg0: i32, %arg1: i32) -> (i32, i32, i32, i32) {
    %c0_i32 = arith.constant 0 : i32
    %c0_i32_0 = arith.constant 0 : i32
    %c0_i32_1 = arith.constant 0 : i32
    %c0_i32_2 = arith.constant 0 : i32
    %c0_i32_3 = arith.constant 0 : i32
    return %c0_i32, %c0_i32_0, %c0_i32_1, %c0_i32_2 : i32, i32, i32, i32
  }
  func.func @transform_4(%arg0: i32, %arg1: i32) -> (i32, i32, i32, i32) {
    %c0_i32 = arith.constant 0 : i32
    %c0_i32_0 = arith.constant 0 : i32
    %c0_i32_1 = arith.constant 0 : i32
    return %arg0, %arg1, %c0_i32, %c0_i32_0 : i32, i32, i32, i32
  }
}

</mosaic_0001>

<llo_original>
// kernel: gen_gate_gru.2
$region0: #{gen_gate_gru.2}
  #allocation0 [shape = 'u32[]', space=smem, size = 0x4, offset = 0x4, fixed_abs, tag = 'smem constant byte address 0x4 - core index']
  #allocation1 [shape = 'u32[144,128]{1,0:T(1,128)}', space=vmem, size = 0x12000, scoped, tag = 'internal scratch']
  %s0 = inlined_call_operand.vmem [shape: f32[2,3,16,16,64], index: 0, kind: input, shape index: {}]
  %s1 = inlined_call_operand.vmem [shape: bf16[3,3,64,192], index: 1, kind: input, shape index: {}]
  %s2 = inlined_call_operand.vmem [shape: f32[1,192], index: 2, kind: input, shape index: {}]
  %s3 = inlined_call_operand.vmem [shape: f32[2,3,256,192], index: 3, kind: output, shape index: {}]
  %s4 = sld [smem:[#allocation0]]
  $region45: #{gen_gate_gru.2} parent=0
    _
  %s6 = ssub.s32 1, %s4
  %s7 = scalar_select 0, %s6, %s4
  loop: start=0, step=1, limit=8
  $region2: #{gen_gate_gru.2} parent=0 // loop_pre_header
    _
  $region3: #{gen_gate_gru.2} parent=0 // loop_header
    %s9 = sphi 0, %s13
    %p10 = scmp.ge.s32.totalorder %s9, 8
    %s16 = sphi 0, %s28
    %s17 = sphi 0, %s24
    %s18 = sphi 0, %s16
    %s19 = sphi 0, %s17
    %s20 = sphi 0, %s18
    %s21 = sphi 0, %s19
    %s33 = sphi 0, %s35
    %s36 = sphi 0, %s33
    %s37 = sphi 0, %s36
    %s53 = sphi 0, %s37
    %s57 = sphi 0, %s57
    %s59 = sphi 0, %s57
    %s60 = sphi 0, %s59
    %s74 = sphi 0, %s60
    %s78 = sphi 0, %s78
    %s80 = sphi 0, %s78
    %s81 = sphi 0, %s80
    %s95 = sphi 0, %s81
    %s103 = sphi 0, %s105
    %s106 = sphi 0, %s103
    %s107 = sphi 0, %s106
    %s123 = sphi 0, %s107
  $region4: #{gen_gate_gru.2} parent=0 // loop_header_branch
    %12 = sbr.rel (%p10) target = $region8
  $region5: #{gen_gate_gru.2} parent=0 // loop_body
    %s14 = ssub.s32 %s9, 1
    %s15 = ssub.s32 %s9, 2
    %s22 = sadd.s32 1, %s17
    %p23 = scmp.ge.s32.totalorder %s22, 3
    %s24 = scalar_select %p23, 0, %s22
    %s25 = sadd.s32 1, %s16
    %s26 = scalar_select %p23, %s25, %s16
    %p27 = scmp.ge.s32.totalorder %s26, 2
    %s28 = scalar_select %p27, 0, %s26
    %s29 = ssub.s32 %s16, %s28
    %s30 = ssub.s32 %s17, %s24
    %s31 = sor.u32 %s29, %s30
    %p32 = scmp.eq.s32.totalorder %s31, 0
    %s34 = sadd.s32 %s33, 1
    %s35 = scalar_select %p32, %s33, %s34
    %p38 = pneg %p32
    %p39 = scmp.eq.s32.totalorder %s9, 5
    %p40 = por %p38, %p39
    %p41 = scmp.ne.s32.totalorder %s33, %s36
    %p42 = scmp.eq.s32.totalorder %s9, 0
    %p43 = por %p41, %p42
    %p44 = scmp.ne.s32.totalorder %s33, %s36
    %p45 = scmp.eq.s32.totalorder %s14, 5
    %p46 = por %p44, %p45
    %p47 = scmp.ne.s32.totalorder %s36, %s37
    %p48 = scmp.eq.s32.totalorder %s14, 0
    %p49 = por %p47, %p48
    %p50 = scmp.ne.s32.totalorder %s36, %s37
    %p51 = scmp.eq.s32.totalorder %s15, 5
    %p52 = por %p50, %p51
    %p54 = scmp.ne.s32.totalorder %s37, %s53
    %p55 = scmp.eq.s32.totalorder %s15, 0
    %p56 = por %p54, %p55
    %s58 = sadd.s32 %s57, 1
    %p61 = scmp.eq.s32.totalorder %s9, 5
    %p62 = scmp.ne.s32.totalorder %s57, %s59
    %p63 = scmp.eq.s32.totalorder %s9, 0
    %p64 = por %p62, %p63
    %p65 = scmp.ne.s32.totalorder %s57, %s59
    %p66 = scmp.eq.s32.totalorder %s14, 5
    %p67 = por %p65, %p66
    %p68 = scmp.ne.s32.totalorder %s59, %s60
    %p69 = scmp.eq.s32.totalorder %s14, 0
    %p70 = por %p68, %p69
    %p71 = scmp.ne.s32.totalorder %s59, %s60
    %p72 = scmp.eq.s32.totalorder %s15, 5
    %p73 = por %p71, %p72
    %p75 = scmp.ne.s32.totalorder %s60, %s74
    %p76 = scmp.eq.s32.totalorder %s15, 0
    %p77 = por %p75, %p76
    %s79 = sadd.s32 %s78, 1
    %p82 = scmp.eq.s32.totalorder %s9, 5
    %p83 = scmp.ne.s32.totalorder %s78, %s80
    %p84 = scmp.eq.s32.totalorder %s9, 0
    %p85 = por %p83, %p84
    %p86 = scmp.ne.s32.totalorder %s78, %s80
    %p87 = scmp.eq.s32.totalorder %s14, 5
    %p88 = por %p86, %p87
    %p89 = scmp.ne.s32.totalorder %s80, %s81
    %p90 = scmp.eq.s32.totalorder %s14, 0
    %p91 = por %p89, %p90
    %p92 = scmp.ne.s32.totalorder %s80, %s81
    %p93 = scmp.eq.s32.totalorder %s15, 5
    %p94 = por %p92, %p93
    %p96 = scmp.ne.s32.totalorder %s81, %s95
    %p97 = scmp.eq.s32.totalorder %s15, 0
    %p98 = por %p96, %p97
    %s99 = ssub.s32 %s16, %s28
    %s100 = ssub.s32 %s17, %s24
    %s101 = sor.u32 %s99, %s100
    %p102 = scmp.eq.s32.totalorder %s101, 0
    %s104 = sadd.s32 %s103, 1
    %s105 = scalar_select %p102, %s103, %s104
    %p108 = pneg %p102
    %p109 = scmp.eq.s32.totalorder %s9, 5
    %p110 = por %p108, %p109
    %p111 = scmp.ne.s32.totalorder %s103, %s106
    %p112 = scmp.eq.s32.totalorder %s9, 0
    %p113 = por %p111, %p112
    %p114 = scmp.ne.s32.totalorder %s103, %s106
    %p115 = scmp.eq.s32.totalorder %s14, 5
    %p116 = por %p114, %p115
    %p117 = scmp.ne.s32.totalorder %s106, %s107
    %p118 = scmp.eq.s32.totalorder %s14, 0
    %p119 = por %p117, %p118
    %p120 = scmp.ne.s32.totalorder %s106, %s107
    %p121 = scmp.eq.s32.totalorder %s15, 5
    %p122 = por %p120, %p121
    %p124 = scmp.ne.s32.totalorder %s107, %s123
    %p125 = scmp.eq.s32.totalorder %s15, 0
    %p126 = por %p124, %p125
    %p127 = scmp.le.s32.totalorder 1, %s9
    %p128 = scmp.lt.s32.totalorder %s9, 7
    %p129 = pnand %p127, %p128
    %p130 = pneg %p129
    // Predicated region
    $region9: #{gen_gate_gru.2} parent=5 // pred_check
      _
    $region10: #{gen_gate_gru.2} parent=5 // pred_check_branch
      %132 = sbr.rel (%p129) target = $region12
    $region11: #{gen_gate_gru.2} parent=5 // pred_region
      %s133 = ssub.s32 %s9, 1
      // Predicated region
      $region13: #{gen_gate_gru.2} parent=11 // pred_check
        %p134 = pneg %p70
      $region14: #{gen_gate_gru.2} parent=11 // pred_check_branch
        %136 = sbr.rel (%p134) target = $region16
      $region15: #{gen_gate_gru.2} parent=11 // pred_region
        _
      $region16: #{gen_gate_gru.2} parent=11 // pred_fallthru
        _
      // Predicated region
      $region17: #{gen_gate_gru.2} parent=11 // pred_check
        %p137 = pneg %p91
      $region18: #{gen_gate_gru.2} parent=11 // pred_check_branch
        %139 = sbr.rel (%p137) target = $region20
      $region19: #{gen_gate_gru.2} parent=11 // pred_region
        _
      $region20: #{gen_gate_gru.2} parent=11 // pred_fallthru
        _
    $region12: #{gen_gate_gru.2} parent=5 // pred_fallthru
      _
    %p140 = scmp.lt.s32.totalorder %s9, 6
    // Predicated region
    $region21: #{gen_gate_gru.2} parent=5 // pred_check
      %p141 = pneg %p140
    $region22: #{gen_gate_gru.2} parent=5 // pred_check_branch
      %143 = sbr.rel (%p141) target = $region24
    $region23: #{gen_gate_gru.2} parent=5 // pred_region
      // Predicated region
      $region25: #{gen_gate_gru.2} parent=23 // pred_check
        %p144 = pneg %p43
      $region26: #{gen_gate_gru.2} parent=23 // pred_check_branch
        %146 = sbr.rel (%p144) target = $region28
      $region27: #{gen_gate_gru.2} parent=23 // pred_region
        %p147 = scmp.lt.s32.totalorder %s16, 1
        %s148 = scalar_select %p147, %s16, 1
        %p149 = scmp.lt.s32.totalorder %s17, 2
        %s150 = scalar_select %p149, %s17, 2
        %s151 = smul.addr %s150, 32
        %s152 = smul.addr %s148, 96
        %s153 = sadd.s32 %s151, %s152
        %s154 = smul.addr %s153, 8
        %s155 = scalar_lea.vmem %s0, %s154
      $region28: #{gen_gate_gru.2} parent=23 // pred_fallthru
        _
    $region24: #{gen_gate_gru.2} parent=5 // pred_fallthru
      _
    %p156 = scmp.le.s32.totalorder 1, %s9
    %p157 = scmp.lt.s32.totalorder %s9, 7
    %p158 = pnand %p156, %p157
    %p159 = pneg %p158
    // Predicated region
    $region29: #{gen_gate_gru.2} parent=5 // pred_check
      _
    $region30: #{gen_gate_gru.2} parent=5 // pred_check_branch
      %161 = sbr.rel (%p158) target = $region32
    $region31: #{gen_gate_gru.2} parent=5 // pred_region
      %s162 = ssub.s32 %s9, 1
      %p163 = scmp.lt.s32.totalorder %s18, 1
      %s164 = scalar_select %p163, %s18, 1
      %p165 = scmp.lt.s32.totalorder %s19, 2
      %s166 = scalar_select %p165, %s19, 2
      %s167 = smul.addr %s166, 32
      %s168 = smul.addr %s164, 96
      %s169 = sadd.s32 %s167, %s168
      %s170 = smul.addr %s169, 8
      %s171 = scalar_lea.vmem %s0, %s170
      %p172 = pneg %p49
      %p173 = pneg %p46
      %p174 = pneg %p70
      %p175 = pneg %p67
      %p176 = pneg %p91
      %p177 = pneg %p88
      %p178 = pneg %p119
      %p179 = pneg %p116
      %p180 = scmp.lt.s32.totalorder %s18, 1
      %s181 = scalar_select %p180, %s18, 1
      %p182 = scmp.lt.s32.totalorder %s19, 2
      %s183 = scalar_select %p182, %s19, 2
      %s184 = smul.addr %s183, 64
      %s185 = smul.addr %s181, 192
      %s186 = sadd.s32 %s184, %s185
      %s187 = smul.addr %s186, 8
      %s188 = scalar_lea.vmem %s3, %s187
      %p189 = scmp.lt.s32.totalorder %s18, 1
      %s190 = scalar_select %p189, %s18, 1
      %p191 = scmp.lt.s32.totalorder %s19, 2
      %s192 = scalar_select %p191, %s19, 2
      %s193 = smul.addr %s192, 32
      %s194 = smul.addr %s190, 96
      %s195 = sadd.s32 %s193, %s194
      %s196 = smul.addr %s195, 8
      %s197 = scalar_lea.vmem %s0, %s196
      %p198 = scmp.lt.s32.totalorder %s18, 1
      %s199 = scalar_select %p198, %s18, 1
      %p200 = scmp.lt.s32.totalorder %s19, 2
      %s201 = scalar_select %p200, %s19, 2
      %s202 = smul.addr %s201, 64
      %s203 = smul.addr %s199, 192
      %s204 = sadd.s32 %s202, %s203
      %s205 = smul.addr %s204, 8
      %s206 = scalar_lea.vmem %s3, %s205
      %v208 = vld [vmem:[%s197] sm:$0xff]
      %v209 = vld [vmem:[%s197 + $0x8] sm:$0xff]
      %v210 = vld [vmem:[%s197 + $0x10] sm:$0xff]
      %v211 = vld [vmem:[%s197 + $0x18] sm:$0xff]
      %v212 = vld [vmem:[%s197 + $0x20] sm:$0xff]
      %v213 = vld [vmem:[%s197 + $0x28] sm:$0xff]
      %v214 = vld [vmem:[%s197 + $0x30] sm:$0xff]
      %v215 = vld [vmem:[%s197 + $0x38] sm:$0xff]
      %v216 = vld [vmem:[%s197 + $0x40] sm:$0xff]
      %v217 = vld [vmem:[%s197 + $0x48] sm:$0xff]
      %v218 = vld [vmem:[%s197 + $0x50] sm:$0xff]
      %v219 = vld [vmem:[%s197 + $0x58] sm:$0xff]
      %v220 = vld [vmem:[%s197 + $0x60] sm:$0xff]
      %v221 = vld [vmem:[%s197 + $0x68] sm:$0xff]
      %v222 = vld [vmem:[%s197 + $0x70] sm:$0xff]
      %v223 = vld [vmem:[%s197 + $0x78] sm:$0xff]
      %v224 = vld [vmem:[%s197 + $0x80] sm:$0xff]
      %v225 = vld [vmem:[%s197 + $0x88] sm:$0xff]
      %v226 = vld [vmem:[%s197 + $0x90] sm:$0xff]
      %v227 = vld [vmem:[%s197 + $0x98] sm:$0xff]
      %v228 = vld [vmem:[%s197 + $0xa0] sm:$0xff]
      %v229 = vld [vmem:[%s197 + $0xa8] sm:$0xff]
      %v230 = vld [vmem:[%s197 + $0xb0] sm:$0xff]
      %v231 = vld [vmem:[%s197 + $0xb8] sm:$0xff]
      %v232 = vld [vmem:[%s197 + $0xc0] sm:$0xff]
      %v233 = vld [vmem:[%s197 + $0xc8] sm:$0xff]
      %v234 = vld [vmem:[%s197 + $0xd0] sm:$0xff]
      %v235 = vld [vmem:[%s197 + $0xd8] sm:$0xff]
      %v236 = vld [vmem:[%s197 + $0xe0] sm:$0xff]
      %v237 = vld [vmem:[%s197 + $0xe8] sm:$0xff]
      %v238 = vld [vmem:[%s197 + $0xf0] sm:$0xff]
      %v239 = vld [vmem:[%s197 + $0xf8] sm:$0xff]
      %v240 = vpack.c.bf16 %v209, %v208
      %v241 = vpack.c.bf16 %v211, %v210
      %v242 = vpack.c.bf16 %v213, %v212
      %v243 = vpack.c.bf16 %v215, %v214
      %v244 = vpack.c.bf16 %v217, %v216
      %v245 = vpack.c.bf16 %v219, %v218
      %v246 = vpack.c.bf16 %v221, %v220
      %v247 = vpack.c.bf16 %v223, %v222
      %v248 = vpack.c.bf16 %v225, %v224
      %v249 = vpack.c.bf16 %v227, %v226
      %v250 = vpack.c.bf16 %v229, %v228
      %v251 = vpack.c.bf16 %v231, %v230
      %v252 = vpack.c.bf16 %v233, %v232
      %v253 = vpack.c.bf16 %v235, %v234
      %v254 = vpack.c.bf16 %v237, %v236
      %v255 = vpack.c.bf16 %v239, %v238
      %v256 = vld [vmem:[%s1] sm:$0xff]
      %v257 = vld [vmem:[%s1 + $0x8] sm:$0xff]
      %v258 = vld [vmem:[%s1 + $0x10] sm:$0xff]
      %v259 = vld [vmem:[%s1 + $0x18] sm:$0xff]
      %v260 = vld [vmem:[%s1 + $0x20] sm:$0xff]
      %v261 = vld [vmem:[%s1 + $0x28] sm:$0xff]
      %v262 = vld [vmem:[%s1 + $0x30] sm:$0xff]
      %v263 = vld [vmem:[%s1 + $0x38] sm:$0xff]
      %v264 = vld [vmem:[%s1 + $0x40] sm:$0xff]
      %v265 = vld [vmem:[%s1 + $0x48] sm:$0xff]
      %v266 = vld [vmem:[%s1 + $0x50] sm:$0xff]
      %v267 = vld [vmem:[%s1 + $0x58] sm:$0xff]
      %v268 = vld [vmem:[%s1 + $0x60] sm:$0xff]
      %v269 = vld [vmem:[%s1 + $0x68] sm:$0xff]
      %v270 = vld [vmem:[%s1 + $0x70] sm:$0xff]
      %v271 = vld [vmem:[%s1 + $0x78] sm:$0xff]
      %v272 = vld [vmem:[%s1 + $0x80] sm:$0xff]
      %v273 = vld [vmem:[%s1 + $0x88] sm:$0xff]
      %v274 = vld [vmem:[%s1 + $0x90] sm:$0xff]
      %v275 = vld [vmem:[%s1 + $0x98] sm:$0xff]
      %v276 = vld [vmem:[%s1 + $0xa0] sm:$0xff]
      %v277 = vld [vmem:[%s1 + $0xa8] sm:$0xff]
      %v278 = vld [vmem:[%s1 + $0xb0] sm:$0xff]
      %v279 = vld [vmem:[%s1 + $0xb8] sm:$0xff]
      %v280 = vld [vmem:[%s1 + $0xc0] sm:$0xff]
      %v281 = vld [vmem:[%s1 + $0xc8] sm:$0xff]
      %v282 = vld [vmem:[%s1 + $0xd0] sm:$0xff]
      %v283 = vld [vmem:[%s1 + $0xd8] sm:$0xff]
      %v284 = vld [vmem:[%s1 + $0xe0] sm:$0xff]
      %v285 = vld [vmem:[%s1 + $0xe8] sm:$0xff]
      %v286 = vld [vmem:[%s1 + $0xf0] sm:$0xff]
      %v287 = vld [vmem:[%s1 + $0xf8] sm:$0xff]
      %v288 = vld [vmem:[%s1 + $0x100] sm:$0xff]
      %v289 = vld [vmem:[%s1 + $0x108] sm:$0xff]
      %v290 = vld [vmem:[%s1 + $0x110] sm:$0xff]
      %v291 = vld [vmem:[%s1 + $0x118] sm:$0xff]
      %v292 = vld [vmem:[%s1 + $0x120] sm:$0xff]
      %v293 = vld [vmem:[%s1 + $0x128] sm:$0xff]
      %v294 = vld [vmem:[%s1 + $0x130] sm:$0xff]
      %v295 = vld [vmem:[%s1 + $0x138] sm:$0xff]
      %v296 = vld [vmem:[%s1 + $0x140] sm:$0xff]
      %v297 = vld [vmem:[%s1 + $0x148] sm:$0xff]
      %v298 = vld [vmem:[%s1 + $0x150] sm:$0xff]
      %v299 = vld [vmem:[%s1 + $0x158] sm:$0xff]
      %v300 = vld [vmem:[%s1 + $0x160] sm:$0xff]
      %v301 = vld [vmem:[%s1 + $0x168] sm:$0xff]
      %v302 = vld [vmem:[%s1 + $0x170] sm:$0xff]
      %v303 = vld [vmem:[%s1 + $0x178] sm:$0xff]
      %v304 = vld [vmem:[%s1 + $0x180] sm:$0xff]
      %v305 = vld [vmem:[%s1 + $0x188] sm:$0xff]
      %v306 = vld [vmem:[%s1 + $0x190] sm:$0xff]
      %v307 = vld [vmem:[%s1 + $0x198] sm:$0xff]
      %v308 = vld [vmem:[%s1 + $0x1a0] sm:$0xff]
      %v309 = vld [vmem:[%s1 + $0x1a8] sm:$0xff]
      %v310 = vld [vmem:[%s1 + $0x1b0] sm:$0xff]
      %v311 = vld [vmem:[%s1 + $0x1b8] sm:$0xff]
      %v312 = vld [vmem:[%s1 + $0x1c0] sm:$0xff]
      %v313 = vld [vmem:[%s1 + $0x1c8] sm:$0xff]
      %v314 = vld [vmem:[%s1 + $0x1d0] sm:$0xff]
      %v315 = vld [vmem:[%s1 + $0x1d8] sm:$0xff]
      %v316 = vld [vmem:[%s1 + $0x1e0] sm:$0xff]
      %v317 = vld [vmem:[%s1 + $0x1e8] sm:$0xff]
      %v318 = vld [vmem:[%s1 + $0x1f0] sm:$0xff]
      %v319 = vld [vmem:[%s1 + $0x1f8] sm:$0xff]
      %v320 = vld [vmem:[%s1 + $0x200] sm:$0xff]
      %v321 = vld [vmem:[%s1 + $0x208] sm:$0xff]
      %v322 = vld [vmem:[%s1 + $0x210] sm:$0xff]
      %v323 = vld [vmem:[%s1 + $0x218] sm:$0xff]
      %v324 = vld [vmem:[%s1 + $0x220] sm:$0xff]
      %v325 = vld [vmem:[%s1 + $0x228] sm:$0xff]
      %v326 = vld [vmem:[%s1 + $0x230] sm:$0xff]
      %v327 = vld [vmem:[%s1 + $0x238] sm:$0xff]
      %v329 = vshrl.u32 %v241, 16
      %v332 = vshrl.u32 %v240, 16
      %v335 = vshrl.u32 %v242, 16
      %v338 = vshrl.u32 %v243, 16
      %v341 = vshrl.u32 %v244, 16
      %v344 = vshrl.u32 %v245, 16
      %v347 = vshrl.u32 %v246, 16
      %v350 = vshrl.u32 %v247, 16
      %v353 = vshrl.u32 %v248, 16
      %v356 = vshrl.u32 %v249, 16
      %v359 = vshrl.u32 %v250, 16
      %v362 = vshrl.u32 %v251, 16
      %v365 = vshrl.u32 %v252, 16
      %v368 = vshrl.u32 %v253, 16
      %v371 = vshrl.u32 %v254, 16
      %v374 = vshrl.u32 %v255, 16
      %v392 = vrot.slane %v329, 7
      %v393 = vshll.u32 %v241, 16
      %v395 = vor.u32 %v392, %v393
      %v396 = vrot.slane %v332, 7
      %v397 = vshll.u32 %v240, 16
      %v399 = vor.u32 %v396, %v397
      %v400 = vrot.slane %v335, 7
      %v401 = vshll.u32 %v242, 16
      %v403 = vor.u32 %v400, %v401
      %v404 = vrot.slane %v338, 7
      %v405 = vshll.u32 %v243, 16
      %v407 = vor.u32 %v404, %v405
      %v408 = vrot.slane %v341, 7
      %v409 = vshll.u32 %v244, 16
      %v411 = vor.u32 %v408, %v409
      %v412 = vrot.slane %v344, 7
      %v413 = vshll.u32 %v245, 16
      %v415 = vor.u32 %v412, %v413
      %v416 = vrot.slane %v347, 7
      %v417 = vshll.u32 %v246, 16
      %v419 = vor.u32 %v416, %v417
      %v420 = vrot.slane %v350, 7
      %v421 = vshll.u32 %v247, 16
      %v423 = vor.u32 %v420, %v421
      %v424 = vrot.slane %v353, 7
      %v425 = vshll.u32 %v248, 16
      %v427 = vor.u32 %v424, %v425
      %v428 = vrot.slane %v356, 7
      %v429 = vshll.u32 %v249, 16
      %v431 = vor.u32 %v428, %v429
      %v432 = vrot.slane %v359, 7
      %v433 = vshll.u32 %v250, 16
      %v435 = vor.u32 %v432, %v433
      %v436 = vrot.slane %v362, 7
      %v437 = vshll.u32 %v251, 16
      %v439 = vor.u32 %v436, %v437
      %v440 = vrot.slane %v365, 7
      %v441 = vshll.u32 %v252, 16
      %v443 = vor.u32 %v440, %v441
      %v444 = vrot.slane %v368, 7
      %v445 = vshll.u32 %v253, 16
      %v447 = vor.u32 %v444, %v445
      %v448 = vrot.slane %v371, 7
      %v449 = vshll.u32 %v254, 16
      %v451 = vor.u32 %v448, %v449
      %v452 = vrot.slane %v374, 7
      %v453 = vshll.u32 %v255, 16
      %v455 = vor.u32 %v452, %v453
      %v488 = vrot.slane %v393, 7
      %v489 = vrot.slane %v397, 7
      %v490 = vrot.slane %v401, 7
      %v491 = vrot.slane %v405, 7
      %v492 = vrot.slane %v409, 7
      %v493 = vrot.slane %v413, 7
      %v494 = vrot.slane %v417, 7
      %v495 = vrot.slane %v421, 7
      %v496 = vrot.slane %v425, 7
      %v497 = vrot.slane %v429, 7
      %v498 = vrot.slane %v433, 7
      %v499 = vrot.slane %v437, 7
      %v500 = vrot.slane %v441, 7
      %v501 = vrot.slane %v445, 7
      %v502 = vrot.slane %v449, 7
      %v503 = vrot.slane %v453, 7
      %vm520 = vcmask 1040384
      %vm521 = vsmask.f32 256
      %vm522 = vmand %vm520, %vm521
      %v523 = vsel %vm522, %v329, %v395
      %v524 = vsel %vm522, %v332, %v399
      %v525 = vsel %vm522, %v335, %v403
      %v526 = vsel %vm522, %v338, %v407
      %v527 = vsel %vm522, %v341, %v411
      %v528 = vsel %vm522, %v344, %v415
      %v529 = vsel %vm522, %v347, %v419
      %v530 = vsel %vm522, %v350, %v423
      %v531 = vsel %vm522, %v353, %v427
      %v532 = vsel %vm522, %v356, %v431
      %v533 = vsel %vm522, %v359, %v435
      %v534 = vsel %vm522, %v362, %v439
      %v535 = vsel %vm522, %v365, %v443
      %v536 = vsel %vm522, %v368, %v447
      %v537 = vsel %vm522, %v371, %v451
      %v538 = vsel %vm522, %v374, %v455
      %v539 = vsel %vm522, %v392, %v488
      %v540 = vsel %vm522, %v396, %v489
      %v541 = vsel %vm522, %v400, %v490
      %v542 = vsel %vm522, %v404, %v491
      %v543 = vsel %vm522, %v408, %v492
      %v544 = vsel %vm522, %v412, %v493
      %v545 = vsel %vm522, %v416, %v494
      %v546 = vsel %vm522, %v420, %v495
      %v547 = vsel %vm522, %v424, %v496
      %v548 = vsel %vm522, %v428, %v497
      %v549 = vsel %vm522, %v432, %v498
      %v550 = vsel %vm522, %v436, %v499
      %v551 = vsel %vm522, %v440, %v500
      %v552 = vsel %vm522, %v444, %v501
      %v553 = vsel %vm522, %v448, %v502
      %v554 = vsel %vm522, %v452, %v503
      %vm555 = vsmask.f32 7424
      %v557 = vshrl.u32 %v523, 16
      %v559 = vshll.u32 %v523, 16
      %v561 = vrot.slane %v559, 1
      %v562 = vor.u32 %v557, %v561
      %v564 = vshll.u32 %v539, 16
      %v566 = vrot.slane %v564, 1
      %v567 = vsel %vm555, %v562, %v566
      %v569 = vshrl.u32 %v524, 16
      %v571 = vshll.u32 %v524, 16
      %v573 = vrot.slane %v571, 1
      %v574 = vor.u32 %v569, %v573
      %v576 = vshll.u32 %v540, 16
      %v578 = vrot.slane %v576, 1
      %v579 = vsel %vm555, %v574, %v578
      %v581 = vshrl.u32 %v525, 16
      %v583 = vshll.u32 %v525, 16
      %v585 = vrot.slane %v583, 1
      %v586 = vor.u32 %v581, %v585
      %v588 = vshll.u32 %v541, 16
      %v590 = vrot.slane %v588, 1
      %v591 = vsel %vm555, %v586, %v590
      %v593 = vshrl.u32 %v526, 16
      %v595 = vshll.u32 %v526, 16
      %v597 = vrot.slane %v595, 1
      %v598 = vor.u32 %v593, %v597
      %v600 = vshll.u32 %v542, 16
      %v602 = vrot.slane %v600, 1
      %v603 = vsel %vm555, %v598, %v602
      %v605 = vshrl.u32 %v527, 16
      %v607 = vshll.u32 %v527, 16
      %v609 = vrot.slane %v607, 1
      %v610 = vor.u32 %v605, %v609
      %v612 = vshll.u32 %v543, 16
      %v614 = vrot.slane %v612, 1
      %v615 = vsel %vm555, %v610, %v614
      %v617 = vshrl.u32 %v528, 16
      %v619 = vshll.u32 %v528, 16
      %v621 = vrot.slane %v619, 1
      %v622 = vor.u32 %v617, %v621
      %v624 = vshll.u32 %v544, 16
      %v626 = vrot.slane %v624, 1
      %v627 = vsel %vm555, %v622, %v626
      %v629 = vshrl.u32 %v529, 16
      %v631 = vshll.u32 %v529, 16
      %v633 = vrot.slane %v631, 1
      %v634 = vor.u32 %v629, %v633
      %v636 = vshll.u32 %v545, 16
      %v638 = vrot.slane %v636, 1
      %v639 = vsel %vm555, %v634, %v638
      %v641 = vshrl.u32 %v530, 16
      %v643 = vshll.u32 %v530, 16
      %v645 = vrot.slane %v643, 1
      %v646 = vor.u32 %v641, %v645
      %v648 = vshll.u32 %v546, 16
      %v650 = vrot.slane %v648, 1
      %v651 = vsel %vm555, %v646, %v650
      %v653 = vshrl.u32 %v531, 16
      %v655 = vshll.u32 %v531, 16
      %v657 = vrot.slane %v655, 1
      %v658 = vor.u32 %v653, %v657
      %v660 = vshll.u32 %v547, 16
      %v662 = vrot.slane %v660, 1
      %v663 = vsel %vm555, %v658, %v662
      %v665 = vshrl.u32 %v532, 16
      %v667 = vshll.u32 %v532, 16
      %v669 = vrot.slane %v667, 1
      %v670 = vor.u32 %v665, %v669
      %v672 = vshll.u32 %v548, 16
      %v674 = vrot.slane %v672, 1
      %v675 = vsel %vm555, %v670, %v674
      %v677 = vshrl.u32 %v533, 16
      %v679 = vshll.u32 %v533, 16
      %v681 = vrot.slane %v679, 1
      %v682 = vor.u32 %v677, %v681
      %v684 = vshll.u32 %v549, 16
      %v686 = vrot.slane %v684, 1
      %v687 = vsel %vm555, %v682, %v686
      %v689 = vshrl.u32 %v534, 16
      %v691 = vshll.u32 %v534, 16
      %v693 = vrot.slane %v691, 1
      %v694 = vor.u32 %v689, %v693
      %v696 = vshll.u32 %v550, 16
      %v698 = vrot.slane %v696, 1
      %v699 = vsel %vm555, %v694, %v698
      %v701 = vshrl.u32 %v535, 16
      %v703 = vshll.u32 %v535, 16
      %v705 = vrot.slane %v703, 1
      %v706 = vor.u32 %v701, %v705
      %v708 = vshll.u32 %v551, 16
      %v710 = vrot.slane %v708, 1
      %v711 = vsel %vm555, %v706, %v710
      %v713 = vshrl.u32 %v536, 16
      %v715 = vshll.u32 %v536, 16
      %v717 = vrot.slane %v715, 1
      %v718 = vor.u32 %v713, %v717
      %v720 = vshll.u32 %v552, 16
      %v722 = vrot.slane %v720, 1
      %v723 = vsel %vm555, %v718, %v722
      %v725 = vshrl.u32 %v537, 16
      %v727 = vshll.u32 %v537, 16
      %v729 = vrot.slane %v727, 1
      %v730 = vor.u32 %v725, %v729
      %v732 = vshll.u32 %v553, 16
      %v734 = vrot.slane %v732, 1
      %v735 = vsel %vm555, %v730, %v734
      %v744 = vunpack.c.l.b16 %v264
      %v745 = vunpack.c.h.b16 %v264
      %v746 = vunpack.c.l.b16 %v265
      %v747 = vunpack.c.h.b16 %v265
      %v748 = vunpack.c.l.b16 %v266
      %v749 = vunpack.c.h.b16 %v266
      %v750 = vunpack.c.l.b16 %v267
      %v751 = vunpack.c.h.b16 %v267
      %v752 = vunpack.c.l.b16 %v268
      %v753 = vunpack.c.h.b16 %v268
      %v754 = vunpack.c.l.b16 %v269
      %v755 = vunpack.c.h.b16 %v269
      %v756 = vunpack.c.l.b16 %v270
      %v757 = vunpack.c.h.b16 %v270
      %v758 = vunpack.c.l.b16 %v271
      %v759 = vunpack.c.h.b16 %v271
      %v760 = vpack.c.b16 %v746, %v744
      %v761 = vpack.c.b16 %v747, %v745
      %v762 = vpack.c.b16 %v750, %v748
      %v763 = vpack.c.b16 %v751, %v749
      %v764 = vpack.c.b16 %v754, %v752
      %v765 = vpack.c.b16 %v755, %v753
      %v766 = vpack.c.b16 %v758, %v756
      %v767 = vpack.c.b16 %v759, %v757
      %vm776 = vcmask 523264
      %v778 = vsel %vm776, %v567, 0
      %v781 = vsel %vm776, %v579, 0
      %v784 = vsel %vm776, %v591, 0
      %v787 = vsel %vm776, %v603, 0
      %v790 = vsel %vm776, %v615, 0
      %v793 = vsel %vm776, %v627, 0
      %v796 = vsel %vm776, %v639, 0
      %v799 = vsel %vm776, %v651, 0
      %v802 = vsel %vm776, %v663, 0
      %v805 = vsel %vm776, %v675, 0
      %v808 = vsel %vm776, %v687, 0
      %v811 = vsel %vm776, %v699, 0
      %v814 = vsel %vm776, %v711, 0
      %v817 = vsel %vm776, %v723, 0
      %v820 = vsel %vm776, %v735, 0
      %822 = vmatprep.subr.bf16.mxu0 %v761
      %823 = vmatpush1.bf16.msra.mxu0 %v760
      %824 = vmatprep.subr.bf16.mxu0 %v763
      %825 = vmatpush1.bf16.msra.mxu0 %v762
      %826 = vmatprep.subr.bf16.mxu0 %v765
      %827 = vmatpush1.bf16.msra.mxu0 %v764
      %828 = vmatprep.subr.bf16.mxu0 %v767
      %829 = vmatpush1.bf16.msra.mxu0 %v766
      %830 = vmatprep.subr.bf16.mxu0 0
      %831 = vmatpush1.bf16.msra.mxu0 0
      %832 = vmatprep.subr.bf16.mxu0 0
      %833 = vmatpush1.bf16.msra.mxu0 0
      %834 = vmatprep.subr.bf16.mxu0 0
      %835 = vmatpush1.bf16.msra.mxu0 0
      %836 = vmatprep.subr.bf16.mxu0 0
      %837 = vmatpush1.bf16.msra.mxu0 0
      %838 = vmatprep.subr.bf16.mxu0 0
      %839 = vmatpush1.bf16.msra.mxu0 0
      %840 = vmatprep.subr.bf16.mxu0 0
      %841 = vmatpush1.bf16.msra.mxu0 0
      %842 = vmatprep.subr.bf16.mxu0 0
      %843 = vmatpush1.bf16.msra.mxu0 0
      %844 = vmatprep.subr.bf16.mxu0 0
      %845 = vmatpush1.bf16.msra.mxu0 0
      %846 = vmatprep.subr.bf16.mxu0 0
      %847 = vmatpush1.bf16.msra.mxu0 0
      %848 = vmatprep.subr.bf16.mxu0 0
      %849 = vmatpush1.bf16.msra.mxu0 0
      %850 = vmatprep.subr.bf16.mxu0 0
      %851 = vmatpush1.bf16.msra.mxu0 0
      %852 = vmatprep.subr.bf16.mxu0 0
      %853 = vmatpush1.bf16.msra.mxu0 0
      %854 = vmatprep.mubr.bf16.mxu0 0
      %855 = vmatmul.mubr.bf16.gmra.mrb[0].mxu0 %v778
      %v856 = vpop.f32.mrb[0].mxu0
      %v857 = vadd.f32 0.0, %v856
      %v858 = vpop.f32.mrb[0].mxu0
      %v859 = vadd.f32 0.0, %v858
      %v860 = vpop.f32.mrb[0].mxu0
      %v861 = vadd.f32 0.0, %v860
      %v862 = vpop.f32.mrb[0].mxu0
      %v863 = vadd.f32 0.0, %v862
      %864 = vmatprep.mubr.bf16.mxu0 0
      %865 = vmatmul.mubr.bf16.gmra.mrb[0].mxu0 %v781
      %v866 = vpop.f32.mrb[0].mxu0
      %v867 = vadd.f32 0.0, %v866
      %v868 = vpop.f32.mrb[0].mxu0
      %v869 = vadd.f32 0.0, %v868
      %v870 = vpop.f32.mrb[0].mxu0
      %v871 = vadd.f32 0.0, %v870
      %v872 = vpop.f32.mrb[0].mxu0
      %v873 = vadd.f32 0.0, %v872
      %874 = vmatprep.mubr.bf16.mxu0 0
      %875 = vmatmul.mubr.bf16.gmra.mrb[0].mxu0 %v778
      %v876 = vpop.f32.mrb[0].mxu0
      %v877 = vadd.f32 0.0, %v876
      %v878 = vpop.f32.mrb[0].mxu0
      %v879 = vadd.f32 0.0, %v878
      %v880 = vpop.f32.mrb[0].mxu0
      %v881 = vadd.f32 0.0, %v880
      %v882 = vpop.f32.mrb[0].mxu0
      %v883 = vadd.f32 0.0, %v882
      %884 = vmatprep.mubr.bf16.mxu0 0
      %885 = vmatmul.mubr.bf16.gmra.mrb[0].mxu0 %v784
      %v886 = vpop.f32.mrb[0].mxu0
      %v887 = vadd.f32 0.0, %v886
      %v888 = vpop.f32.mrb[0].mxu0
      %v889 = vadd.f32 0.0, %v888
      %v890 = vpop.f32.mrb[0].mxu0
      %v891 = vadd.f32 0.0, %v890
      %v892 = vpop.f32.mrb[0].mxu0
      %v893 = vadd.f32 0.0, %v892
      %894 = vmatprep.mubr.bf16.mxu0 0
      %895 = vmatmul.mubr.bf16.gmra.mrb[0].mxu0 %v787
      %v896 = vpop.f32.mrb[0].mxu0
      %v897 = vadd.f32 0.0, %v896
      %v898 = vpop.f32.mrb[0].mxu0
      %v899 = vadd.f32 0.0, %v898
      %v900 = vpop.f32.mrb[0].mxu0
      %v901 = vadd.f32 0.0, %v900
      %v902 = vpop.f32.mrb[0].mxu0
      %v903 = vadd.f32 0.0, %v902
      %904 = vmatprep.mubr.bf16.mxu0 0
      %905 = vmatmul.mubr.bf16.gmra.mrb[0].mxu0 %v790
      %v906 = vpop.f32.mrb[0].mxu0
      %v907 = vadd.f32 0.0, %v906
      %v908 = vpop.f32.mrb[0].mxu0
      %v909 = vadd.f32 0.0, %v908
      %v910 = vpop.f32.mrb[0].mxu0
      %v911 = vadd.f32 0.0, %v910
      %v912 = vpop.f32.mrb[0].mxu0
      %v913 = vadd.f32 0.0, %v912
      %914 = vmatprep.mubr.bf16.mxu0 0
      %915 = vmatmul.mubr.bf16.gmra.mrb[0].mxu0 %v793
      %v916 = vpop.f32.mrb[0].mxu0
      %v917 = vadd.f32 0.0, %v916
      %v918 = vpop.f32.mrb[0].mxu0
      %v919 = vadd.f32 0.0, %v918
      %v920 = vpop.f32.mrb[0].mxu0
      %v921 = vadd.f32 0.0, %v920
      %v922 = vpop.f32.mrb[0].mxu0
      %v923 = vadd.f32 0.0, %v922
      %924 = vmatprep.mubr.bf16.mxu0 0
      %925 = vmatmul.mubr.bf16.gmra.mrb[0].mxu0 %v796
      %v926 = vpop.f32.mrb[0].mxu0
      %v927 = vadd.f32 0.0, %v926
      %v928 = vpop.f32.mrb[0].mxu0
      %v929 = vadd.f32 0.0, %v928
      %v930 = vpop.f32.mrb[0].mxu0
      %v931 = vadd.f32 0.0, %v930
      %v932 = vpop.f32.mrb[0].mxu0
      %v933 = vadd.f32 0.0, %v932
      %934 = vmatprep.mubr.bf16.mxu0 0
      %935 = vmatmul.mubr.bf16.gmra.mrb[0].mxu0 %v799
      %v936 = vpop.f32.mrb[0].mxu0
      %v937 = vadd.f32 0.0, %v936
      %v938 = vpop.f32.mrb[0].mxu0
      %v939 = vadd.f32 0.0, %v938
      %v940 = vpop.f32.mrb[0].mxu0
      %v941 = vadd.f32 0.0, %v940
      %v942 = vpop.f32.mrb[0].mxu0
      %v943 = vadd.f32 0.0, %v942
      %944 = vmatprep.mubr.bf16.mxu0 0
      %945 = vmatmul.mubr.bf16.gmra.mrb[0].mxu0 %v802
      %v946 = vpop.f32.mrb[0].mxu0
      %v947 = vadd.f32 0.0, %v946
      %v948 = vpop.f32.mrb[0].mxu0
      %v949 = vadd.f32 0.0, %v948
      %v950 = vpop.f32.mrb[0].mxu0
      %v951 = vadd.f32 0.0, %v950
      %v952 = vpop.f32.mrb[0].mxu0
      %v953 = vadd.f32 0.0, %v952
      %954 = vmatprep.mubr.bf16.mxu0 0
      %955 = vmatmul.mubr.bf16.gmra.mrb[0].mxu0 %v805
      %v956 = vpop.f32.mrb[0].mxu0
      %v957 = vadd.f32 0.0, %v956
      %v958 = vpop.f32.mrb[0].mxu0
      %v959 = vadd.f32 0.0, %v958
      %v960 = vpop.f32.mrb[0].mxu0
      %v961 = vadd.f32 0.0, %v960
      %v962 = vpop.f32.mrb[0].mxu0
      %v963 = vadd.f32 0.0, %v962
      %964 = vmatprep.mubr.bf16.mxu0 0
      %965 = vmatmul.mubr.bf16.gmra.mrb[0].mxu0 %v808
      %v966 = vpop.f32.mrb[0].mxu0
      %v967 = vadd.f32 0.0, %v966
      %v968 = vpop.f32.mrb[0].mxu0
      %v969 = vadd.f32 0.0, %v968
      %v970 = vpop.f32.mrb[0].mxu0
      %v971 = vadd.f32 0.0, %v970
      %v972 = vpop.f32.mrb[0].mxu0
      %v973 = vadd.f32 0.0, %v972
      %974 = vmatprep.mubr.bf16.mxu0 0
      %975 = vmatmul.mubr.bf16.gmra.mrb[0].mxu0 %v811
      %v976 = vpop.f32.mrb[0].mxu0
      %v977 = vadd.f32 0.0, %v976
      %v978 = vpop.f32.mrb[0].mxu0
      %v979 = vadd.f32 0.0, %v978
      %v980 = vpop.f32.mrb[0].mxu0
      %v981 = vadd.f32 0.0, %v980
      %v982 = vpop.f32.mrb[0].mxu0
      %v983 = vadd.f32 0.0, %v982
      %984 = vmatprep.mubr.bf16.mxu0 0
      %985 = vmatmul.mubr.bf16.gmra.mrb[0].mxu0 %v814
      %v986 = vpop.f32.mrb[0].mxu0
      %v987 = vadd.f32 0.0, %v986
      %v988 = vpop.f32.mrb[0].mxu0
      %v989 = vadd.f32 0.0, %v988
      %v990 = vpop.f32.mrb[0].mxu0
      %v991 = vadd.f32 0.0, %v990
      %v992 = vpop.f32.mrb[0].mxu0
      %v993 = vadd.f32 0.0, %v992
      %994 = vmatprep.mubr.bf16.mxu0 0
      %995 = vmatmul.mubr.bf16.gmra.mrb[0].mxu0 %v817
      %v996 = vpop.f32.mrb[0].mxu0
      %v997 = vadd.f32 0.0, %v996
      %v998 = vpop.f32.mrb[0].mxu0
      %v999 = vadd.f32 0.0, %v998
      %v1000 = vpop.f32.mrb[0].mxu0
      %v1001 = vadd.f32 0.0, %v1000
      %v1002 = vpop.f32.mrb[0].mxu0
      %v1003 = vadd.f32 0.0, %v1002
      %1004 = vmatprep.mubr.bf16.mxu0 0
      %1005 = vmatmul.mubr.bf16.gmra.mrb[0].mxu0 %v820
      %v1006 = vpop.f32.mrb[0].mxu0
      %v1007 = vadd.f32 0.0, %v1006
      %v1008 = vpop.f32.mrb[0].mxu0
      %v1009 = vadd.f32 0.0, %v1008
      %v1010 = vpop.f32.mrb[0].mxu0
      %v1011 = vadd.f32 0.0, %v1010
      %v1012 = vpop.f32.mrb[0].mxu0
      %v1013 = vadd.f32 0.0, %v1012
      %1014 = vdwg.mxu0
      %v1023 = vunpack.c.l.b16 %v256
      %v1024 = vunpack.c.h.b16 %v256
      %v1025 = vunpack.c.l.b16 %v257
      %v1026 = vunpack.c.h.b16 %v257
      %v1027 = vunpack.c.l.b16 %v258
      %v1028 = vunpack.c.h.b16 %v258
      %v1029 = vunpack.c.l.b16 %v259
      %v1030 = vunpack.c.h.b16 %v259
      %v1031 = vunpack.c.l.b16 %v260
      %v1032 = vunpack.c.h.b16 %v260
      %v1033 = vunpack.c.l.b16 %v261
      %v1034 = vunpack.c.h.b16 %v261
      %v1035 = vunpack.c.l.b16 %v262
      %v1036 = vunpack.c.h.b16 %v262
      %v1037 = vunpack.c.l.b16 %v263
      %v1038 = vunpack.c.h.b16 %v263
      %v1039 = vpack.c.b16 %v1025, %v1023
      %v1040 = vpack.c.b16 %v1026, %v1024
      %v1041 = vpack.c.b16 %v1029, %v1027
      %v1042 = vpack.c.b16 %v1030, %v1028
      %v1043 = vpack.c.b16 %v1033, %v1031
      %v1044 = vpack.c.b16 %v1034, %v1032
      %v1045 = vpack.c.b16 %v1037, %v1035
      %v1046 = vpack.c.b16 %v1038, %v1036
      %v1055 = vsel %vm776, %v523, 0
      %v1057 = vsel %vm776, %v524, 0
      %v1059 = vsel %vm776, %v525, 0
      %v1061 = vsel %vm776, %v526, 0
      %v1063 = vsel %vm776, %v527, 0
      %v1065 = vsel %vm776, %v528, 0
      %v1067 = vsel %vm776, %v529, 0
      %v1069 = vsel %vm776, %v530, 0
      %v1071 = vsel %vm776, %v531, 0
      %v1073 = vsel %vm776, %v532, 0
      %v1075 = vsel %vm776, %v533, 0
      %v1077 = vsel %vm776, %v534, 0
      %v1079 = vsel %vm776, %v535, 0
      %v1081 = vsel %vm776, %v536, 0
      %v1083 = vsel %vm776, %v537, 0
      %1085 = vmatprep.subr.bf16.mxu0 %v1040
      %1086 = vmatpush1.bf16.msra.mxu0 %v1039
      %1087 = vmatprep.subr.bf16.mxu0 %v1042
      %1088 = vmatpush1.bf16.msra.mxu0 %v1041
      %1089 = vmatprep.subr.bf16.mxu0 %v1044
      %1090 = vmatpush1.bf16.msra.mxu0 %v1043
      %1091 = vmatprep.subr.bf16.mxu0 %v1046
      %1092 = vmatpush1.bf16.msra.mxu0 %v1045
      %1093 = vmatprep.subr.bf16.mxu0 0
      %1094 = vmatpush1.bf16.msra.mxu0 0
      %1095 = vmatprep.subr.bf16.mxu0 0
      %1096 = vmatpush1.bf16.msra.mxu0 0
      %1097 = vmatprep.subr.bf16.mxu0 0
      %1098 = vmatpush1.bf16.msra.mxu0 0
      %1099 = vmatprep.subr.bf16.mxu0 0
      %1100 = vmatpush1.bf16.msra.mxu0 0
      %1101 = vmatprep.subr.bf16.mxu0 0
      %1102 = vmatpush1.bf16.msra.mxu0 0
      %1103 = vmatprep.subr.bf16.mxu0 0
      %1104 = vmatpush1.bf16.msra.mxu0 0
      %1105 = vmatprep.subr.bf16.mxu0 0
      %1106 = vmatpush1.bf16.msra.mxu0 0
      %1107 = vmatprep.subr.bf16.mxu0 0
      %1108 = vmatpush1.bf16.msra.mxu0 0
      %1109 = vmatprep.subr.bf16.mxu0 0
      %1110 = vmatpush1.bf16.msra.mxu0 0
      %1111 = vmatprep.subr.bf16.mxu0 0
      %1112 = vmatpush1.bf16.msra.mxu0 0
      %1113 = vmatprep.subr.bf16.mxu0 0
      %1114 = vmatpush1.bf16.msra.mxu0 0
      %1115 = vmatprep.subr.bf16.mxu0 0
      %1116 = vmatpush1.bf16.msra.mxu0 0
      %1117 = vmatprep.mubr.bf16.mxu0 0
      %1118 = vmatmul.mubr.bf16.gmra.mrb[0].mxu0 %v1055
      %v1119 = vpop.f32.mrb[0].mxu0
      %v1120 = vadd.f32 %v857, %v1119
      %v1121 = vpop.f32.mrb[0].mxu0
      %v1122 = vadd.f32 %v859, %v1121
      %v1123 = vpop.f32.mrb[0].mxu0
      %v1124 = vadd.f32 %v861, %v1123
      %v1125 = vpop.f32.mrb[0].mxu0
      %v1126 = vadd.f32 %v863, %v1125
      %1127 = vmatprep.mubr.bf16.mxu0 0
      %1128 = vmatmul.mubr.bf16.gmra.mrb[0].mxu0 %v1057
      %v1129 = vpop.f32.mrb[0].mxu0
      %v1130 = vadd.f32 %v867, %v1129
      %v1131 = vpop.f32.mrb[0].mxu0
      %v1132 = vadd.f32 %v869, %v1131
      %v1133 = vpop.f32.mrb[0].mxu0
      %v1134 = vadd.f32 %v871, %v1133
      %v1135 = vpop.f32.mrb[0].mxu0
      %v1136 = vadd.f32 %v873, %v1135
      %1137 = vmatprep.mubr.bf16.mxu0 0
      %1138 = vmatmul.mubr.bf16.gmra.mrb[0].mxu0 %v1055
      %v1139 = vpop.f32.mrb[0].mxu0
      %v1140 = vadd.f32 %v877, %v1139
      %v1141 = vpop.f32.mrb[0].mxu0
      %v1142 = vadd.f32 %v879, %v1141
      %v1143 = vpop.f32.mrb[0].mxu0
      %v1144 = vadd.f32 %v881, %v1143
      %v1145 = vpop.f32.mrb[0].mxu0
      %v1146 = vadd.f32 %v883, %v1145
      %1147 = vmatprep.mubr.bf16.mxu0 0
      %1148 = vmatmul.mubr.bf16.gmra.mrb[0].mxu0 %v1059
      %v1149 = vpop.f32.mrb[0].mxu0
      %v1150 = vadd.f32 %v887, %v1149
      %v1151 = vpop.f32.mrb[0].mxu0
      %v1152 = vadd.f32 %v889, %v1151
      %v1153 = vpop.f32.mrb[0].mxu0
      %v1154 = vadd.f32 %v891, %v1153
      %v1155 = vpop.f32.mrb[0].mxu0
      %v1156 = vadd.f32 %v893, %v1155
      %1157 = vmatprep.mubr.bf16.mxu0 0
      %1158 = vmatmul.mubr.bf16.gmra.mrb[0].mxu0 %v1061
      %v1159 = vpop.f32.mrb[0].mxu0
      %v1160 = vadd.f32 %v897, %v1159
      %v1161 = vpop.f32.mrb[0].mxu0
      %v1162 = vadd.f32 %v899, %v1161
      %v1163 = vpop.f32.mrb[0].mxu0
      %v1164 = vadd.f32 %v901, %v1163
      %v1165 = vpop.f32.mrb[0].mxu0
      %v1166 = vadd.f32 %v903, %v1165
      %1167 = vmatprep.mubr.bf16.mxu0 0
      %1168 = vmatmul.mubr.bf16.gmra.mrb[0].mxu0 %v1063
      %v1169 = vpop.f32.mrb[0].mxu0
      %v1170 = vadd.f32 %v907, %v1169
      %v1171 = vpop.f32.mrb[0].mxu0
      %v1172 = vadd.f32 %v909, %v1171
      %v1173 = vpop.f32.mrb[0].mxu0
      %v1174 = vadd.f32 %v911, %v1173
      %v1175 = vpop.f32.mrb[0].mxu0
      %v1176 = vadd.f32 %v913, %v1175
      %1177 = vmatprep.mubr.bf16.mxu0 0
      %1178 = vmatmul.mubr.bf16.gmra.mrb[0].mxu0 %v1065
      %v1179 = vpop.f32.mrb[0].mxu0
      %v1180 = vadd.f32 %v917, %v1179
      %v1181 = vpop.f32.mrb[0].mxu0
      %v1182 = vadd.f32 %v919, %v1181
      %v1183 = vpop.f32.mrb[0].mxu0
      %v1184 = vadd.f32 %v921, %v1183
      %v1185 = vpop.f32.mrb[0].mxu0
      %v1186 = vadd.f32 %v923, %v1185
      %1187 = vmatprep.mubr.bf16.mxu0 0
      %1188 = vmatmul.mubr.bf16.gmra.mrb[0].mxu0 %v1067
      %v1189 = vpop.f32.mrb[0].mxu0
      %v1190 = vadd.f32 %v927, %v1189
      %v1191 = vpop.f32.mrb[0].mxu0
      %v1192 = vadd.f32 %v929, %v1191
      %v1193 = vpop.f32.mrb[0].mxu0
      %v1194 = vadd.f32 %v931, %v1193
      %v1195 = vpop.f32.mrb[0].mxu0
      %v1196 = vadd.f32 %v933, %v1195
      %1197 = vmatprep.mubr.bf16.mxu0 0
      %1198 = vmatmul.mubr.bf16.gmra.mrb[0].mxu0 %v1069
      %v1199 = vpop.f32.mrb[0].mxu0
      %v1200 = vadd.f32 %v937, %v1199
      %v1201 = vpop.f32.mrb[0].mxu0
      %v1202 = vadd.f32 %v939, %v1201
      %v1203 = vpop.f32.mrb[0].mxu0
      %v1204 = vadd.f32 %v941, %v1203
      %v1205 = vpop.f32.mrb[0].mxu0
      %v1206 = vadd.f32 %v943, %v1205
      %1207 = vmatprep.mubr.bf16.mxu0 0
      %1208 = vmatmul.mubr.bf16.gmra.mrb[0].mxu0 %v1071
      %v1209 = vpop.f32.mrb[0].mxu0
      %v1210 = vadd.f32 %v947, %v1209
      %v1211 = vpop.f32.mrb[0].mxu0
      %v1212 = vadd.f32 %v949, %v1211
      %v1213 = vpop.f32.mrb[0].mxu0
      %v1214 = vadd.f32 %v951, %v1213
      %v1215 = vpop.f32.mrb[0].mxu0
      %v1216 = vadd.f32 %v953, %v1215
      %1217 = vmatprep.mubr.bf16.mxu0 0
      %1218 = vmatmul.mubr.bf16.gmra.mrb[0].mxu0 %v1073
      %v1219 = vpop.f32.mrb[0].mxu0
      %v1220 = vadd.f32 %v957, %v1219
      %v1221 = vpop.f32.mrb[0].mxu0
      %v1222 = vadd.f32 %v959, %v1221
      %v1223 = vpop.f32.mrb[0].mxu0
      %v1224 = vadd.f32 %v961, %v1223
      %v1225 = vpop.f32.mrb[0].mxu0
      %v1226 = vadd.f32 %v963, %v1225
      %1227 = vmatprep.mubr.bf16.mxu0 0
      %1228 = vmatmul.mubr.bf16.gmra.mrb[0].mxu0 %v1075
      %v1229 = vpop.f32.mrb[0].mxu0
      %v1230 = vadd.f32 %v967, %v1229
      %v1231 = vpop.f32.mrb[0].mxu0
      %v1232 = vadd.f32 %v969, %v1231
      %v1233 = vpop.f32.mrb[0].mxu0
      %v1234 = vadd.f32 %v971, %v1233
      %v1235 = vpop.f32.mrb[0].mxu0
      %v1236 = vadd.f32 %v973, %v1235
      %1237 = vmatprep.mubr.bf16.mxu0 0
      %1238 = vmatmul.mubr.bf16.gmra.mrb[0].mxu0 %v1077
      %v1239 = vpop.f32.mrb[0].mxu0
      %v1240 = vadd.f32 %v977, %v1239
      %v1241 = vpop.f32.mrb[0].mxu0
      %v1242 = vadd.f32 %v979, %v1241
      %v1243 = vpop.f32.mrb[0].mxu0
      %v1244 = vadd.f32 %v981, %v1243
      %v1245 = vpop.f32.mrb[0].mxu0
      %v1246 = vadd.f32 %v983, %v1245
      %1247 = vmatprep.mubr.bf16.mxu0 0
      %1248 = vmatmul.mubr.bf16.gmra.mrb[0].mxu0 %v1079
      %v1249 = vpop.f32.mrb[0].mxu0
      %v1250 = vadd.f32 %v987, %v1249
      %v1251 = vpop.f32.mrb[0].mxu0
      %v1252 = vadd.f32 %v989, %v1251
      %v1253 = vpop.f32.mrb[0].mxu0
      %v1254 = vadd.f32 %v991, %v1253
      %v1255 = vpop.f32.mrb[0].mxu0
      %v1256 = vadd.f32 %v993, %v1255
      %1257 = vmatprep.mubr.bf16.mxu0 0
      %1258 = vmatmul.mubr.bf16.gmra.mrb[0].mxu0 %v1081
      %v1259 = vpop.f32.mrb[0].mxu0
      %v1260 = vadd.f32 %v997, %v1259
      %v1261 = vpop.f32.mrb[0].mxu0
      %v1262 = vadd.f32 %v999, %v1261
      %v1263 = vpop.f32.mrb[0].mxu0
      %v1264 = vadd.f32 %v1001, %v1263
      %v1265 = vpop.f32.mrb[0].mxu0
      %v1266 = vadd.f32 %v1003, %v1265
      %1267 = vmatprep.mubr.bf16.mxu0 0
      %1268 = vmatmul.mubr.bf16.gmra.mrb[0].mxu0 %v1083
      %v1269 = vpop.f32.mrb[0].mxu0
      %v1270 = vadd.f32 %v1007, %v1269
      %v1271 = vpop.f32.mrb[0].mxu0
      %v1272 = vadd.f32 %v1009, %v1271
      %v1273 = vpop.f32.mrb[0].mxu0
      %v1274 = vadd.f32 %v1011, %v1273
      %v1275 = vpop.f32.mrb[0].mxu0
      %v1276 = vadd.f32 %v1013, %v1275
      %1277 = vdwg.mxu0
      %vm1308 = vcmask 1046528
      %v1309 = vrot.slane %v523, 1
      %v1310 = vrot.slane %v539, 1
      %v1311 = vsel %vm1308, %v1309, %v1310
      %v1312 = vrot.slane %v524, 1
      %v1313 = vrot.slane %v540, 1
      %v1314 = vsel %vm1308, %v1312, %v1313
      %v1315 = vrot.slane %v525, 1
      %v1316 = vrot.slane %v541, 1
      %v1317 = vsel %vm1308, %v1315, %v1316
      %v1318 = vrot.slane %v526, 1
      %v1319 = vrot.slane %v542, 1
      %v1320 = vsel %vm1308, %v1318, %v1319
      %v1321 = vrot.slane %v527, 1
      %v1322 = vrot.slane %v543, 1
      %v1323 = vsel %vm1308, %v1321, %v1322
      %v1324 = vrot.slane %v528, 1
      %v1325 = vrot.slane %v544, 1
      %v1326 = vsel %vm1308, %v1324, %v1325
      %v1327 = vrot.slane %v529, 1
      %v1328 = vrot.slane %v545, 1
      %v1329 = vsel %vm1308, %v1327, %v1328
      %v1330 = vrot.slane %v530, 1
      %v1331 = vrot.slane %v546, 1
      %v1332 = vsel %vm1308, %v1330, %v1331
      %v1333 = vrot.slane %v531, 1
      %v1334 = vrot.slane %v547, 1
      %v1335 = vsel %vm1308, %v1333, %v1334
      %v1336 = vrot.slane %v532, 1
      %v1337 = vrot.slane %v548, 1
      %v1338 = vsel %vm1308, %v1336, %v1337
      %v1339 = vrot.slane %v533, 1
      %v1340 = vrot.slane %v549, 1
      %v1341 = vsel %vm1308, %v1339, %v1340
      %v1342 = vrot.slane %v534, 1
      %v1343 = vrot.slane %v550, 1
      %v1344 = vsel %vm1308, %v1342, %v1343
      %v1345 = vrot.slane %v535, 1
      %v1346 = vrot.slane %v551, 1
      %v1347 = vsel %vm1308, %v1345, %v1346
      %v1348 = vrot.slane %v536, 1
      %v1349 = vrot.slane %v552, 1
      %v1350 = vsel %vm1308, %v1348, %v1349
      %v1351 = vrot.slane %v537, 1
      %v1352 = vrot.slane %v553, 1
      %v1353 = vsel %vm1308, %v1351, %v1352
      %v1362 = vunpack.c.l.b16 %v272
      %v1363 = vunpack.c.h.b16 %v272
      %v1364 = vunpack.c.l.b16 %v273
      %v1365 = vunpack.c.h.b16 %v273
      %v1366 = vunpack.c.l.b16 %v274
      %v1367 = vunpack.c.h.b16 %v274
      %v1368 = vunpack.c.l.b16 %v275
      %v1369 = vunpack.c.h.b16 %v275
      %v1370 = vunpack.c.l.b16 %v276
      %v1371 = vunpack.c.h.b16 %v276
      %v1372 = vunpack.c.l.b16 %v277
      %v1373 = vunpack.c.h.b16 %v277
      %v1374 = vunpack.c.l.b16 %v278
      %v1375 = vunpack.c.h.b16 %v278
      %v1376 = vunpack.c.l.b16 %v279
      %v1377 = vunpack.c.h.b16 %v279
      %v1378 = vpack.c.b16 %v1364, %v1362
      %v1379 = vpack.c.b16 %v1365, %v1363
      %v1380 = vpack.c.b16 %v1368, %v1366
      %v1381 = vpack.c.b16 %v1369, %v1367
      %v1382 = vpack.c.b16 %v1372, %v1370
      %v1383 = vpack.c.b16 %v1373, %v1371
      %v1384 = vpack.c.b16 %v1376, %v1374
      %v1385 = vpack.c.b16 %v1377, %v1375
      %v1395 = vsel %vm776, %v1311, 0
      %v1398 = vsel %vm776, %v1314, 0
      %v1401 = vsel %vm776, %v1317, 0
      %v1404 = vsel %vm776, %v1320, 0
      %v1407 = vsel %vm776, %v1323, 0
      %v1410 = vsel %vm776, %v1326, 0
      %v1413 = vsel %vm776, %v1329, 0
      %v1416 = vsel %vm776, %v1332, 0
      %v1419 = vsel %vm776, %v1335, 0
      %v1422 = vsel %vm776, %v1338, 0
      %v1425 = vsel %vm776, %v1341, 0
      %v1428 = vsel %vm776, %v1344, 0
      %v1431 = vsel %vm776, %v1347, 0
      %v1434 = vsel %vm776, %v1350, 0
      %v1437 = vsel %vm776, %v1353, 0
      %1439 = vmatprep.subr.bf16.mxu0 %v1379
      %1440 = vmatpush1.bf16.msra.mxu0 %v1378
      %1441 = vmatprep.subr.bf16.mxu0 %v1381
      %1442 = vmatpush1.bf16.msra.mxu0 %v1380
      %1443 = vmatprep.subr.bf16.mxu0 %v1383
      %1444 = vmatpush1.bf16.msra.mxu0 %v1382
      %1445 = vmatprep.subr.bf16.mxu0 %v1385
      %1446 = vmatpush1.bf16.msra.mxu0 %v1384
      %1447 = vmatprep.subr.bf16.mxu0 0
      %1448 = vmatpush1.bf16.msra.mxu0 0
      %1449 = vmatprep.subr.bf16.mxu0 0
      %1450 = vmatpush1.bf16.msra.mxu0 0
      %1451 = vmatprep.subr.bf16.mxu0 0
      %1452 = vmatpush1.bf16.msra.mxu0 0
      %1453 = vmatprep.subr.bf16.mxu0 0
      %1454 = vmatpush1.bf16.msra.mxu0 0
      %1455 = vmatprep.subr.bf16.mxu0 0
      %1456 = vmatpush1.bf16.msra.mxu0 0
      %1457 = vmatprep.subr.bf16.mxu0 0
      %1458 = vmatpush1.bf16.msra.mxu0 0
      %1459 = vmatprep.subr.bf16.mxu0 0
      %1460 = vmatpush1.bf16.msra.mxu0 0
      %1461 = vmatprep.subr.bf16.mxu0 0
      %1462 = vmatpush1.bf16.msra.mxu0 0
      %1463 = vmatprep.subr.bf16.mxu0 0
      %1464 = vmatpush1.bf16.msra.mxu0 0
      %1465 = vmatprep.subr.bf16.mxu0 0
      %1466 = vmatpush1.bf16.msra.mxu0 0
      %1467 = vmatprep.subr.bf16.mxu0 0
      %1468 = vmatpush1.bf16.msra.mxu0 0
      %1469 = vmatprep.subr.bf16.mxu0 0
      %1470 = vmatpush1.bf16.msra.mxu0 0
      %1471 = vmatprep.mubr.bf16.mxu0 0
      %1472 = vmatmul.mubr.bf16.gmra.mrb[0].mxu0 %v1395
      %v1473 = vpop.f32.mrb[0].mxu0
      %v1474 = vadd.f32 0.0, %v1473
      %v1475 = vpop.f32.mrb[0].mxu0
      %v1476 = vadd.f32 0.0, %v1475
      %v1477 = vpop.f32.mrb[0].mxu0
      %v1478 = vadd.f32 0.0, %v1477
      %v1479 = vpop.f32.mrb[0].mxu0
      %v1480 = vadd.f32 0.0, %v1479
      %1481 = vmatprep.mubr.bf16.mxu0 0
      %1482 = vmatmul.mubr.bf16.gmra.mrb[0].mxu0 %v1398
      %v1483 = vpop.f32.mrb[0].mxu0
      %v1484 = vadd.f32 0.0, %v1483
      %v1485 = vpop.f32.mrb[0].mxu0
      %v1486 = vadd.f32 0.0, %v1485
      %v1487 = vpop.f32.mrb[0].mxu0
      %v1488 = vadd.f32 0.0, %v1487
      %v1489 = vpop.f32.mrb[0].mxu0
      %v1490 = vadd.f32 0.0, %v1489
      %1491 = vmatprep.mubr.bf16.mxu0 0
      %1492 = vmatmul.mubr.bf16.gmra.mrb[0].mxu0 %v1395
      %v1493 = vpop.f32.mrb[0].mxu0
      %v1494 = vadd.f32 0.0, %v1493
      %v1495 = vpop.f32.mrb[0].mxu0
      %v1496 = vadd.f32 0.0, %v1495
      %v1497 = vpop.f32.mrb[0].mxu0
      %v1498 = vadd.f32 0.0, %v1497
      %v1499 = vpop.f32.mrb[0].mxu0
      %v1500 = vadd.f32 0.0, %v1499
      %1501 = vmatprep.mubr.bf16.mxu0 0
      %1502 = vmatmul.mubr.bf16.gmra.mrb[0].mxu0 %v1401
      %v1503 = vpop.f32.mrb[0].mxu0
      %v1504 = vadd.f32 0.0, %v1503
      %v1505 = vpop.f32.mrb[0].mxu0
      %v1506 = vadd.f32 0.0, %v1505
      %v1507 = vpop.f32.mrb[0].mxu0
      %v1508 = vadd.f32 0.0, %v1507
      %v1509 = vpop.f32.mrb[0].mxu0
      %v1510 = vadd.f32 0.0, %v1509
      %1511 = vmatprep.mubr.bf16.mxu0 0
      %1512 = vmatmul.mubr.bf16.gmra.mrb[0].mxu0 %v1404
      %v1513 = vpop.f32.mrb[0].mxu0
      %v1514 = vadd.f32 0.0, %v1513
      %v1515 = vpop.f32.mrb[0].mxu0
      %v1516 = vadd.f32 0.0, %v1515
      %v1517 = vpop.f32.mrb[0].mxu0
      %v1518 = vadd.f32 0.0, %v1517
      %v1519 = vpop.f32.mrb[0].mxu0
      %v1520 = vadd.f32 0.0, %v1519
      %1521 = vmatprep.mubr.bf16.mxu0 0
      %1522 = vmatmul.mubr.bf16.gmra.mrb[0].mxu0 %v1407
      %v1523 = vpop.f32.mrb[0].mxu0
      %v1524 = vadd.f32 0.0, %v1523
      %v1525 = vpop.f32.mrb[0].mxu0
      %v1526 = vadd.f32 0.0, %v1525
      %v1527 = vpop.f32.mrb[0].mxu0
      %v1528 = vadd.f32 0.0, %v1527
      %v1529 = vpop.f32.mrb[0].mxu0
      %v1530 = vadd.f32 0.0, %v1529
      %1531 = vmatprep.mubr.bf16.mxu0 0
      %1532 = vmatmul.mubr.bf16.gmra.mrb[0].mxu0 %v1410
      %v1533 = vpop.f32.mrb[0].mxu0
      %v1534 = vadd.f32 0.0, %v1533
      %v1535 = vpop.f32.mrb[0].mxu0
      %v1536 = vadd.f32 0.0, %v1535
      %v1537 = vpop.f32.mrb[0].mxu0
      %v1538 = vadd.f32 0.0, %v1537
      %v1539 = vpop.f32.mrb[0].mxu0
      %v1540 = vadd.f32 0.0, %v1539
      %1541 = vmatprep.mubr.bf16.mxu0 0
      %1542 = vmatmul.mubr.bf16.gmra.mrb[0].mxu0 %v1413
      %v1543 = vpop.f32.mrb[0].mxu0
      %v1544 = vadd.f32 0.0, %v1543
      %v1545 = vpop.f32.mrb[0].mxu0
      %v1546 = vadd.f32 0.0, %v1545
      %v1547 = vpop.f32.mrb[0].mxu0
      %v1548 = vadd.f32 0.0, %v1547
      %v1549 = vpop.f32.mrb[0].mxu0
      %v1550 = vadd.f32 0.0, %v1549
      %1551 = vmatprep.mubr.bf16.mxu0 0
      %1552 = vmatmul.mubr.bf16.gmra.mrb[0].mxu0 %v1416
      %v1553 = vpop.f32.mrb[0].mxu0
      %v1554 = vadd.f32 0.0, %v1553
      %v1555 = vpop.f32.mrb[0].mxu0
      %v1556 = vadd.f32 0.0, %v1555
      %v1557 = vpop.f32.mrb[0].mxu0
      %v1558 = vadd.f32 0.0, %v1557
      %v1559 = vpop.f32.mrb[0].mxu0
      %v1560 = vadd.f32 0.0, %v1559
      %1561 = vmatprep.mubr.bf16.mxu0 0
      %1562 = vmatmul.mubr.bf16.gmra.mrb[0].mxu0 %v1419
      %v1563 = vpop.f32.mrb[0].mxu0
      %v1564 = vadd.f32 0.0, %v1563
      %v1565 = vpop.f32.mrb[0].mxu0
      %v1566 = vadd.f32 0.0, %v1565
      %v1567 = vpop.f32.mrb[0].mxu0
      %v1568 = vadd.f32 0.0, %v1567
      %v1569 = vpop.f32.mrb[0].mxu0
      %v1570 = vadd.f32 0.0, %v1569
      %1571 = vmatprep.mubr.bf16.mxu0 0
      %1572 = vmatmul.mubr.bf16.gmra.mrb[0].mxu0 %v1422
      %v1573 = vpop.f32.mrb[0].mxu0
      %v1574 = vadd.f32 0.0, %v1573
      %v1575 = vpop.f32.mrb[0].mxu0
      %v1576 = vadd.f32 0.0, %v1575
      %v1577 = vpop.f32.mrb[0].mxu0
      %v1578 = vadd.f32 0.0, %v1577
      %v1579 = vpop.f32.mrb[0].mxu0
      %v1580 = vadd.f32 0.0, %v1579
      %1581 = vmatprep.mubr.bf16.mxu0 0
      %1582 = vmatmul.mubr.bf16.gmra.mrb[0].mxu0 %v1425
      %v1583 = vpop.f32.mrb[0].mxu0
      %v1584 = vadd.f32 0.0, %v1583
      %v1585 = vpop.f32.mrb[0].mxu0
      %v1586 = vadd.f32 0.0, %v1585
      %v1587 = vpop.f32.mrb[0].mxu0
      %v1588 = vadd.f32 0.0, %v1587
      %v1589 = vpop.f32.mrb[0].mxu0
      %v1590 = vadd.f32 0.0, %v1589
      %1591 = vmatprep.mubr.bf16.mxu0 0
      %1592 = vmatmul.mubr.bf16.gmra.mrb[0].mxu0 %v1428
      %v1593 = vpop.f32.mrb[0].mxu0
      %v1594 = vadd.f32 0.0, %v1593
      %v1595 = vpop.f32.mrb[0].mxu0
      %v1596 = vadd.f32 0.0, %v1595
      %v1597 = vpop.f32.mrb[0].mxu0
      %v1598 = vadd.f32 0.0, %v1597
      %v1599 = vpop.f32.mrb[0].mxu0
      %v1600 = vadd.f32 0.0, %v1599
      %1601 = vmatprep.mubr.bf16.mxu0 0
      %1602 = vmatmul.mubr.bf16.gmra.mrb[0].mxu0 %v1431
      %v1603 = vpop.f32.mrb[0].mxu0
      %v1604 = vadd.f32 0.0, %v1603
      %v1605 = vpop.f32.mrb[0].mxu0
      %v1606 = vadd.f32 0.0, %v1605
      %v1607 = vpop.f32.mrb[0].mxu0
      %v1608 = vadd.f32 0.0, %v1607
      %v1609 = vpop.f32.mrb[0].mxu0
      %v1610 = vadd.f32 0.0, %v1609
      %1611 = vmatprep.mubr.bf16.mxu0 0
      %1612 = vmatmul.mubr.bf16.gmra.mrb[0].mxu0 %v1434
      %v1613 = vpop.f32.mrb[0].mxu0
      %v1614 = vadd.f32 0.0, %v1613
      %v1615 = vpop.f32.mrb[0].mxu0
      %v1616 = vadd.f32 0.0, %v1615
      %v1617 = vpop.f32.mrb[0].mxu0
      %v1618 = vadd.f32 0.0, %v1617
      %v1619 = vpop.f32.mrb[0].mxu0
      %v1620 = vadd.f32 0.0, %v1619
      %1621 = vmatprep.mubr.bf16.mxu0 0
      %1622 = vmatmul.mubr.bf16.gmra.mrb[0].mxu0 %v1437
      %v1623 = vpop.f32.mrb[0].mxu0
      %v1624 = vadd.f32 0.0, %v1623
      %v1625 = vpop.f32.mrb[0].mxu0
      %v1626 = vadd.f32 0.0, %v1625
      %v1627 = vpop.f32.mrb[0].mxu0
      %v1628 = vadd.f32 0.0, %v1627
      %v1629 = vpop.f32.mrb[0].mxu0
      %v1630 = vadd.f32 0.0, %v1629
      %1631 = vdwg.mxu0
      %v1632 = vadd.f32 %v1120, %v1474
      %v1633 = vadd.f32 %v1122, %v1476
      %v1634 = vadd.f32 %v1124, %v1478
      %v1635 = vadd.f32 %v1126, %v1480
      %v1636 = vadd.f32 %v1130, %v1484
      %v1637 = vadd.f32 %v1132, %v1486
      %v1638 = vadd.f32 %v1134, %v1488
      %v1639 = vadd.f32 %v1136, %v1490
      %v1640 = vadd.f32 %v1140, %v1494
      %v1641 = vadd.f32 %v1142, %v1496
      %v1642 = vadd.f32 %v1144, %v1498
      %v1643 = vadd.f32 %v1146, %v1500
      %v1644 = vadd.f32 %v1150, %v1504
      %v1645 = vadd.f32 %v1152, %v1506
      %v1646 = vadd.f32 %v1154, %v1508
      %v1647 = vadd.f32 %v1156, %v1510
      %v1648 = vadd.f32 %v1160, %v1514
      %v1649 = vadd.f32 %v1162, %v1516
      %v1650 = vadd.f32 %v1164, %v1518
      %v1651 = vadd.f32 %v1166, %v1520
      %v1652 = vadd.f32 %v1170, %v1524
      %v1653 = vadd.f32 %v1172, %v1526
      %v1654 = vadd.f32 %v1174, %v1528
      %v1655 = vadd.f32 %v1176, %v1530
      %v1656 = vadd.f32 %v1180, %v1534
      %v1657 = vadd.f32 %v1182, %v1536
      %v1658 = vadd.f32 %v1184, %v1538
      %v1659 = vadd.f32 %v1186, %v1540
      %v1660 = vadd.f32 %v1190, %v1544
      %v1661 = vadd.f32 %v1192, %v1546
      %v1662 = vadd.f32 %v1194, %v1548
      %v1663 = vadd.f32 %v1196, %v1550
      %v1664 = vadd.f32 %v1200, %v1554
      %v1665 = vadd.f32 %v1202, %v1556
      %v1666 = vadd.f32 %v1204, %v1558
      %v1667 = vadd.f32 %v1206, %v1560
      %v1668 = vadd.f32 %v1210, %v1564
      %v1669 = vadd.f32 %v1212, %v1566
      %v1670 = vadd.f32 %v1214, %v1568
      %v1671 = vadd.f32 %v1216, %v1570
      %v1672 = vadd.f32 %v1220, %v1574
      %v1673 = vadd.f32 %v1222, %v1576
      %v1674 = vadd.f32 %v1224, %v1578
      %v1675 = vadd.f32 %v1226, %v1580
      %v1676 = vadd.f32 %v1230, %v1584
      %v1677 = vadd.f32 %v1232, %v1586
      %v1678 = vadd.f32 %v1234, %v1588
      %v1679 = vadd.f32 %v1236, %v1590
      %v1680 = vadd.f32 %v1240, %v1594
      %v1681 = vadd.f32 %v1242, %v1596
      %v1682 = vadd.f32 %v1244, %v1598
      %v1683 = vadd.f32 %v1246, %v1600
      %v1684 = vadd.f32 %v1250, %v1604
      %v1685 = vadd.f32 %v1252, %v1606
      %v1686 = vadd.f32 %v1254, %v1608
      %v1687 = vadd.f32 %v1256, %v1610
      %v1688 = vadd.f32 %v1260, %v1614
      %v1689 = vadd.f32 %v1262, %v1616
      %v1690 = vadd.f32 %v1264, %v1618
      %v1691 = vadd.f32 %v1266, %v1620
      %v1692 = vadd.f32 %v1270, %v1624
      %v1693 = vadd.f32 %v1272, %v1626
      %v1694 = vadd.f32 %v1274, %v1628
      %v1695 = vadd.f32 %v1276, %v1630
      %v1704 = vunpack.c.l.b16 %v280
      %v1705 = vunpack.c.h.b16 %v280
      %v1706 = vunpack.c.l.b16 %v281
      %v1707 = vunpack.c.h.b16 %v281
      %v1708 = vunpack.c.l.b16 %v282
      %v1709 = vunpack.c.h.b16 %v282
      %v1710 = vunpack.c.l.b16 %v283
      %v1711 = vunpack.c.h.b16 %v283
      %v1712 = vunpack.c.l.b16 %v284
      %v1713 = vunpack.c.h.b16 %v284
      %v1714 = vunpack.c.l.b16 %v285
      %v1715 = vunpack.c.h.b16 %v285
      %v1716 = vunpack.c.l.b16 %v286
      %v1717 = vunpack.c.h.b16 %v286
      %v1718 = vunpack.c.l.b16 %v287
      %v1719 = vunpack.c.h.b16 %v287
      %v1720 = vpack.c.b16 %v1706, %v1704
      %v1721 = vpack.c.b16 %v1707, %v1705
      %v1722 = vpack.c.b16 %v1710, %v1708
      %v1723 = vpack.c.b16 %v1711, %v1709
      %v1724 = vpack.c.b16 %v1714, %v1712
      %v1725 = vpack.c.b16 %v1715, %v1713
      %v1726 = vpack.c.b16 %v1718, %v1716
      %v1727 = vpack.c.b16 %v1719, %v1717
      %v1737 = vsel %vm776, %v538, 0
      %1739 = vmatprep.subr.bf16.mxu0 %v1721
      %1740 = vmatpush1.bf16.msra.mxu0 %v1720
      %1741 = vmatprep.subr.bf16.mxu0 %v1723
      %1742 = vmatpush1.bf16.msra.mxu0 %v1722
      %1743 = vmatprep.subr.bf16.mxu0 %v1725
      %1744 = vmatpush1.bf16.msra.mxu0 %v1724
      %1745 = vmatprep.subr.bf16.mxu0 %v1727
      %1746 = vmatpush1.bf16.msra.mxu0 %v1726
      %1747 = vmatprep.subr.bf16.mxu0 0
      %1748 = vmatpush1.bf16.msra.mxu0 0
      %1749 = vmatprep.subr.bf16.mxu0 0
      %1750 = vmatpush1.bf16.msra.mxu0 0
      %1751 = vmatprep.subr.bf16.mxu0 0
      %1752 = vmatpush1.bf16.msra.mxu0 0
      %1753 = vmatprep.subr.bf16.mxu0 0
      %1754 = vmatpush1.bf16.msra.mxu0 0
      %1755 = vmatprep.subr.bf16.mxu0 0
      %1756 = vmatpush1.bf16.msra.mxu0 0
      %1757 = vmatprep.subr.bf16.mxu0 0
      %1758 = vmatpush1.bf16.msra.mxu0 0
      %1759 = vmatprep.subr.bf16.mxu0 0
      %1760 = vmatpush1.bf16.msra.mxu0 0
      %1761 = vmatprep.subr.bf16.mxu0 0
      %1762 = vmatpush1.bf16.msra.mxu0 0
      %1763 = vmatprep.subr.bf16.mxu0 0
      %1764 = vmatpush1.bf16.msra.mxu0 0
      %1765 = vmatprep.subr.bf16.mxu0 0
      %1766 = vmatpush1.bf16.msra.mxu0 0
      %1767 = vmatprep.subr.bf16.mxu0 0
      %1768 = vmatpush1.bf16.msra.mxu0 0
      %1769 = vmatprep.subr.bf16.mxu0 0
      %1770 = vmatpush1.bf16.msra.mxu0 0
      %1771 = vmatprep.mubr.bf16.mxu0 0
      %1772 = vmatmul.mubr.bf16.gmra.mrb[0].mxu0 %v1057
      %v1773 = vpop.f32.mrb[0].mxu0
      %v1774 = vadd.f32 0.0, %v1773
      %v1775 = vpop.f32.mrb[0].mxu0
      %v1776 = vadd.f32 0.0, %v1775
      %v1777 = vpop.f32.mrb[0].mxu0
      %v1778 = vadd.f32 0.0, %v1777
      %v1779 = vpop.f32.mrb[0].mxu0
      %v1780 = vadd.f32 0.0, %v1779
      %1781 = vmatprep.mubr.bf16.mxu0 0
      %1782 = vmatmul.mubr.bf16.gmra.mrb[0].mxu0 %v1055
      %v1783 = vpop.f32.mrb[0].mxu0
      %v1784 = vadd.f32 0.0, %v1783
      %v1785 = vpop.f32.mrb[0].mxu0
      %v1786 = vadd.f32 0.0, %v1785
      %v1787 = vpop.f32.mrb[0].mxu0
      %v1788 = vadd.f32 0.0, %v1787
      %v1789 = vpop.f32.mrb[0].mxu0
      %v1790 = vadd.f32 0.0, %v1789
      %1791 = vmatprep.mubr.bf16.mxu0 0
      %1792 = vmatmul.mubr.bf16.gmra.mrb[0].mxu0 %v1059
      %v1793 = vpop.f32.mrb[0].mxu0
      %v1794 = vadd.f32 0.0, %v1793
      %v1795 = vpop.f32.mrb[0].mxu0
      %v1796 = vadd.f32 0.0, %v1795
      %v1797 = vpop.f32.mrb[0].mxu0
      %v1798 = vadd.f32 0.0, %v1797
      %v1799 = vpop.f32.mrb[0].mxu0
      %v1800 = vadd.f32 0.0, %v1799
      %1801 = vmatprep.mubr.bf16.mxu0 0
      %1802 = vmatmul.mubr.bf16.gmra.mrb[0].mxu0 %v1061
      %v1803 = vpop.f32.mrb[0].mxu0
      %v1804 = vadd.f32 0.0, %v1803
      %v1805 = vpop.f32.mrb[0].mxu0
      %v1806 = vadd.f32 0.0, %v1805
      %v1807 = vpop.f32.mrb[0].mxu0
      %v1808 = vadd.f32 0.0, %v1807
      %v1809 = vpop.f32.mrb[0].mxu0
      %v1810 = vadd.f32 0.0, %v1809
      %1811 = vmatprep.mubr.bf16.mxu0 0
      %1812 = vmatmul.mubr.bf16.gmra.mrb[0].mxu0 %v1063
      %v1813 = vpop.f32.mrb[0].mxu0
      %v1814 = vadd.f32 0.0, %v1813
      %v1815 = vpop.f32.mrb[0].mxu0
      %v1816 = vadd.f32 0.0, %v1815
      %v1817 = vpop.f32.mrb[0].mxu0
      %v1818 = vadd.f32 0.0, %v1817
      %v1819 = vpop.f32.mrb[0].mxu0
      %v1820 = vadd.f32 0.0, %v1819
      %1821 = vmatprep.mubr.bf16.mxu0 0
      %1822 = vmatmul.mubr.bf16.gmra.mrb[0].mxu0 %v1065
      %v1823 = vpop.f32.mrb[0].mxu0
      %v1824 = vadd.f32 0.0, %v1823
      %v1825 = vpop.f32.mrb[0].mxu0
      %v1826 = vadd.f32 0.0, %v1825
      %v1827 = vpop.f32.mrb[0].mxu0
      %v1828 = vadd.f32 0.0, %v1827
      %v1829 = vpop.f32.mrb[0].mxu0
      %v1830 = vadd.f32 0.0, %v1829
      %1831 = vmatprep.mubr.bf16.mxu0 0
      %1832 = vmatmul.mubr.bf16.gmra.mrb[0].mxu0 %v1067
      %v1833 = vpop.f32.mrb[0].mxu0
      %v1834 = vadd.f32 0.0, %v1833
      %v1835 = vpop.f32.mrb[0].mxu0
      %v1836 = vadd.f32 0.0, %v1835
      %v1837 = vpop.f32.mrb[0].mxu0
      %v1838 = vadd.f32 0.0, %v1837
      %v1839 = vpop.f32.mrb[0].mxu0
      %v1840 = vadd.f32 0.0, %v1839
      %1841 = vmatprep.mubr.bf16.mxu0 0
      %1842 = vmatmul.mubr.bf16.gmra.mrb[0].mxu0 %v1069
      %v1843 = vpop.f32.mrb[0].mxu0
      %v1844 = vadd.f32 0.0, %v1843
      %v1845 = vpop.f32.mrb[0].mxu0
      %v1846 = vadd.f32 0.0, %v1845
      %v1847 = vpop.f32.mrb[0].mxu0
      %v1848 = vadd.f32 0.0, %v1847
      %v1849 = vpop.f32.mrb[0].mxu0
      %v1850 = vadd.f32 0.0, %v1849
      %1851 = vmatprep.mubr.bf16.mxu0 0
      %1852 = vmatmul.mubr.bf16.gmra.mrb[0].mxu0 %v1071
      %v1853 = vpop.f32.mrb[0].mxu0
      %v1854 = vadd.f32 0.0, %v1853
      %v1855 = vpop.f32.mrb[0].mxu0
      %v1856 = vadd.f32 0.0, %v1855
      %v1857 = vpop.f32.mrb[0].mxu0
      %v1858 = vadd.f32 0.0, %v1857
      %v1859 = vpop.f32.mrb[0].mxu0
      %v1860 = vadd.f32 0.0, %v1859
      %1861 = vmatprep.mubr.bf16.mxu0 0
      %1862 = vmatmul.mubr.bf16.gmra.mrb[0].mxu0 %v1073
      %v1863 = vpop.f32.mrb[0].mxu0
      %v1864 = vadd.f32 0.0, %v1863
      %v1865 = vpop.f32.mrb[0].mxu0
      %v1866 = vadd.f32 0.0, %v1865
      %v1867 = vpop.f32.mrb[0].mxu0
      %v1868 = vadd.f32 0.0, %v1867
      %v1869 = vpop.f32.mrb[0].mxu0
      %v1870 = vadd.f32 0.0, %v1869
      %1871 = vmatprep.mubr.bf16.mxu0 0
      %1872 = vmatmul.mubr.bf16.gmra.mrb[0].mxu0 %v1075
      %v1873 = vpop.f32.mrb[0].mxu0
      %v1874 = vadd.f32 0.0, %v1873
      %v1875 = vpop.f32.mrb[0].mxu0
      %v1876 = vadd.f32 0.0, %v1875
      %v1877 = vpop.f32.mrb[0].mxu0
      %v1878 = vadd.f32 0.0, %v1877
      %v1879 = vpop.f32.mrb[0].mxu0
      %v1880 = vadd.f32 0.0, %v1879
      %1881 = vmatprep.mubr.bf16.mxu0 0
      %1882 = vmatmul.mubr.bf16.gmra.mrb[0].mxu0 %v1077
      %v1883 = vpop.f32.mrb[0].mxu0
      %v1884 = vadd.f32 0.0, %v1883
      %v1885 = vpop.f32.mrb[0].mxu0
      %v1886 = vadd.f32 0.0, %v1885
      %v1887 = vpop.f32.mrb[0].mxu0
      %v1888 = vadd.f32 0.0, %v1887
      %v1889 = vpop.f32.mrb[0].mxu0
      %v1890 = vadd.f32 0.0, %v1889
      %1891 = vmatprep.mubr.bf16.mxu0 0
      %1892 = vmatmul.mubr.bf16.gmra.mrb[0].mxu0 %v1079
      %v1893 = vpop.f32.mrb[0].mxu0
      %v1894 = vadd.f32 0.0, %v1893
      %v1895 = vpop.f32.mrb[0].mxu0
      %v1896 = vadd.f32 0.0, %v1895
      %v1897 = vpop.f32.mrb[0].mxu0
      %v1898 = vadd.f32 0.0, %v1897
      %v1899 = vpop.f32.mrb[0].mxu0
      %v1900 = vadd.f32 0.0, %v1899
      %1901 = vmatprep.mubr.bf16.mxu0 0
      %1902 = vmatmul.mubr.bf16.gmra.mrb[0].mxu0 %v1081
      %v1903 = vpop.f32.mrb[0].mxu0
      %v1904 = vadd.f32 0.0, %v1903
      %v1905 = vpop.f32.mrb[0].mxu0
      %v1906 = vadd.f32 0.0, %v1905
      %v1907 = vpop.f32.mrb[0].mxu0
      %v1908 = vadd.f32 0.0, %v1907
      %v1909 = vpop.f32.mrb[0].mxu0
      %v1910 = vadd.f32 0.0, %v1909
      %1911 = vmatprep.mubr.bf16.mxu0 0
      %1912 = vmatmul.mubr.bf16.gmra.mrb[0].mxu0 %v1083
      %v1913 = vpop.f32.mrb[0].mxu0
      %v1914 = vadd.f32 0.0, %v1913
      %v1915 = vpop.f32.mrb[0].mxu0
      %v1916 = vadd.f32 0.0, %v1915
      %v1917 = vpop.f32.mrb[0].mxu0
      %v1918 = vadd.f32 0.0, %v1917
      %v1919 = vpop.f32.mrb[0].mxu0
      %v1920 = vadd.f32 0.0, %v1919
      %1921 = vmatprep.mubr.bf16.mxu0 0
      %1922 = vmatmul.mubr.bf16.gmra.mrb[0].mxu0 %v1737
      %v1923 = vpop.f32.mrb[0].mxu0
      %v1924 = vadd.f32 0.0, %v1923
      %v1925 = vpop.f32.mrb[0].mxu0
      %v1926 = vadd.f32 0.0, %v1925
      %v1927 = vpop.f32.mrb[0].mxu0
      %v1928 = vadd.f32 0.0, %v1927
      %v1929 = vpop.f32.mrb[0].mxu0
      %v1930 = vadd.f32 0.0, %v1929
      %1931 = vdwg.mxu0
      %v1932 = vadd.f32 %v1632, %v1774
      %v1933 = vadd.f32 %v1633, %v1776
      %v1934 = vadd.f32 %v1634, %v1778
      %v1935 = vadd.f32 %v1635, %v1780
      %v1936 = vadd.f32 %v1636, %v1784
      %v1937 = vadd.f32 %v1637, %v1786
      %v1938 = vadd.f32 %v1638, %v1788
      %v1939 = vadd.f32 %v1639, %v1790
      %v1940 = vadd.f32 %v1640, %v1794
      %v1941 = vadd.f32 %v1641, %v1796
      %v1942 = vadd.f32 %v1642, %v1798
      %v1943 = vadd.f32 %v1643, %v1800
      %v1944 = vadd.f32 %v1644, %v1804
      %v1945 = vadd.f32 %v1645, %v1806
      %v1946 = vadd.f32 %v1646, %v1808
      %v1947 = vadd.f32 %v1647, %v1810
      %v1948 = vadd.f32 %v1648, %v1814
      %v1949 = vadd.f32 %v1649, %v1816
      %v1950 = vadd.f32 %v1650, %v1818
      %v1951 = vadd.f32 %v1651, %v1820
      %v1952 = vadd.f32 %v1652, %v1824
      %v1953 = vadd.f32 %v1653, %v1826
      %v1954 = vadd.f32 %v1654, %v1828
      %v1955 = vadd.f32 %v1655, %v1830
      %v1956 = vadd.f32 %v1656, %v1834
      %v1957 = vadd.f32 %v1657, %v1836
      %v1958 = vadd.f32 %v1658, %v1838
      %v1959 = vadd.f32 %v1659, %v1840
      %v1960 = vadd.f32 %v1660, %v1844
      %v1961 = vadd.f32 %v1661, %v1846
      %v1962 = vadd.f32 %v1662, %v1848
      %v1963 = vadd.f32 %v1663, %v1850
      %v1964 = vadd.f32 %v1664, %v1854
      %v1965 = vadd.f32 %v1665, %v1856
      %v1966 = vadd.f32 %v1666, %v1858
      %v1967 = vadd.f32 %v1667, %v1860
      %v1968 = vadd.f32 %v1668, %v1864
      %v1969 = vadd.f32 %v1669, %v1866
      %v1970 = vadd.f32 %v1670, %v1868
      %v1971 = vadd.f32 %v1671, %v1870
      %v1972 = vadd.f32 %v1672, %v1874
      %v1973 = vadd.f32 %v1673, %v1876
      %v1974 = vadd.f32 %v1674, %v1878
      %v1975 = vadd.f32 %v1675, %v1880
      %v1976 = vadd.f32 %v1676, %v1884
      %v1977 = vadd.f32 %v1677, %v1886
      %v1978 = vadd.f32 %v1678, %v1888
      %v1979 = vadd.f32 %v1679, %v1890
      %v1980 = vadd.f32 %v1680, %v1894
      %v1981 = vadd.f32 %v1681, %v1896
      %v1982 = vadd.f32 %v1682, %v1898
      %v1983 = vadd.f32 %v1683, %v1900
      %v1984 = vadd.f32 %v1684, %v1904
      %v1985 = vadd.f32 %v1685, %v1906
      %v1986 = vadd.f32 %v1686, %v1908
      %v1987 = vadd.f32 %v1687, %v1910
      %v1988 = vadd.f32 %v1688, %v1914
      %v1989 = vadd.f32 %v1689, %v1916
      %v1990 = vadd.f32 %v1690, %v1918
      %v1991 = vadd.f32 %v1691, %v1920
      %v1992 = vadd.f32 %v1692, %v1924
      %v1993 = vadd.f32 %v1693, %v1926
      %v1994 = vadd.f32 %v1694, %v1928
      %v1995 = vadd.f32 %v1695, %v1930
      %v1996 = vshrl.u32 %v538, 16
      %v1998 = vshll.u32 %v538, 16
      %v2000 = vrot.slane %v1998, 1
      %v2001 = vor.u32 %v1996, %v2000
      %v2003 = vshll.u32 %v554, 16
      %v2005 = vrot.slane %v2003, 1
      %v2006 = vsel %vm555, %v2001, %v2005
      %v2015 = vunpack.c.l.b16 %v288
      %v2016 = vunpack.c.h.b16 %v288
      %v2017 = vunpack.c.l.b16 %v289
      %v2018 = vunpack.c.h.b16 %v289
      %v2019 = vunpack.c.l.b16 %v290
      %v2020 = vunpack.c.h.b16 %v290
      %v2021 = vunpack.c.l.b16 %v291
      %v2022 = vunpack.c.h.b16 %v291
      %v2023 = vunpack.c.l.b16 %v292
      %v2024 = vunpack.c.h.b16 %v292
      %v2025 = vunpack.c.l.b16 %v293
      %v2026 = vunpack.c.h.b16 %v293
      %v2027 = vunpack.c.l.b16 %v294
      %v2028 = vunpack.c.h.b16 %v294
      %v2029 = vunpack.c.l.b16 %v295
      %v2030 = vunpack.c.h.b16 %v295
      %v2031 = vpack.c.b16 %v2017, %v2015
      %v2032 = vpack.c.b16 %v2018, %v2016
      %v2033 = vpack.c.b16 %v2021, %v2019
      %v2034 = vpack.c.b16 %v2022, %v2020
      %v2035 = vpack.c.b16 %v2025, %v2023
      %v2036 = vpack.c.b16 %v2026, %v2024
      %v2037 = vpack.c.b16 %v2029, %v2027
      %v2038 = vpack.c.b16 %v2030, %v2028
      %v2048 = vsel %vm776, %v2006, 0
      %2050 = vmatprep.subr.bf16.mxu0 %v2032
      %2051 = vmatpush1.bf16.msra.mxu0 %v2031
      %2052 = vmatprep.subr.bf16.mxu0 %v2034
      %2053 = vmatpush1.bf16.msra.mxu0 %v2033
      %2054 = vmatprep.subr.bf16.mxu0 %v2036
      %2055 = vmatpush1.bf16.msra.mxu0 %v2035
      %2056 = vmatprep.subr.bf16.mxu0 %v2038
      %2057 = vmatpush1.bf16.msra.mxu0 %v2037
      %2058 = vmatprep.subr.bf16.mxu0 0
      %2059 = vmatpush1.bf16.msra.mxu0 0
      %2060 = vmatprep.subr.bf16.mxu0 0
      %2061 = vmatpush1.bf16.msra.mxu0 0
      %2062 = vmatprep.subr.bf16.mxu0 0
      %2063 = vmatpush1.bf16.msra.mxu0 0
      %2064 = vmatprep.subr.bf16.mxu0 0
      %2065 = vmatpush1.bf16.msra.mxu0 0
      %2066 = vmatprep.subr.bf16.mxu0 0
      %2067 = vmatpush1.bf16.msra.mxu0 0
      %2068 = vmatprep.subr.bf16.mxu0 0
      %2069 = vmatpush1.bf16.msra.mxu0 0
      %2070 = vmatprep.subr.bf16.mxu0 0
      %2071 = vmatpush1.bf16.msra.mxu0 0
      %2072 = vmatprep.subr.bf16.mxu0 0
      %2073 = vmatpush1.bf16.msra.mxu0 0
      %2074 = vmatprep.subr.bf16.mxu0 0
      %2075 = vmatpush1.bf16.msra.mxu0 0
      %2076 = vmatprep.subr.bf16.mxu0 0
      %2077 = vmatpush1.bf16.msra.mxu0 0
      %2078 = vmatprep.subr.bf16.mxu0 0
      %2079 = vmatpush1.bf16.msra.mxu0 0
      %2080 = vmatprep.subr.bf16.mxu0 0
      %2081 = vmatpush1.bf16.msra.mxu0 0
      %2082 = vmatprep.mubr.bf16.mxu0 0
      %2083 = vmatmul.mubr.bf16.gmra.mrb[0].mxu0 %v781
      %v2084 = vpop.f32.mrb[0].mxu0
      %v2085 = vadd.f32 0.0, %v2084
      %v2086 = vpop.f32.mrb[0].mxu0
      %v2087 = vadd.f32 0.0, %v2086
      %v2088 = vpop.f32.mrb[0].mxu0
      %v2089 = vadd.f32 0.0, %v2088
      %v2090 = vpop.f32.mrb[0].mxu0
      %v2091 = vadd.f32 0.0, %v2090
      %2092 = vmatprep.mubr.bf16.mxu0 0
      %2093 = vmatmul.mubr.bf16.gmra.mrb[0].mxu0 %v778
      %v2094 = vpop.f32.mrb[0].mxu0
      %v2095 = vadd.f32 0.0, %v2094
      %v2096 = vpop.f32.mrb[0].mxu0
      %v2097 = vadd.f32 0.0, %v2096
      %v2098 = vpop.f32.mrb[0].mxu0
      %v2099 = vadd.f32 0.0, %v2098
      %v2100 = vpop.f32.mrb[0].mxu0
      %v2101 = vadd.f32 0.0, %v2100
      %2102 = vmatprep.mubr.bf16.mxu0 0
      %2103 = vmatmul.mubr.bf16.gmra.mrb[0].mxu0 %v784
      %v2104 = vpop.f32.mrb[0].mxu0
      %v2105 = vadd.f32 0.0, %v2104
      %v2106 = vpop.f32.mrb[0].mxu0
      %v2107 = vadd.f32 0.0, %v2106
      %v2108 = vpop.f32.mrb[0].mxu0
      %v2109 = vadd.f32 0.0, %v2108
      %v2110 = vpop.f32.mrb[0].mxu0
      %v2111 = vadd.f32 0.0, %v2110
      %2112 = vmatprep.mubr.bf16.mxu0 0
      %2113 = vmatmul.mubr.bf16.gmra.mrb[0].mxu0 %v787
      %v2114 = vpop.f32.mrb[0].mxu0
      %v2115 = vadd.f32 0.0, %v2114
      %v2116 = vpop.f32.mrb[0].mxu0
      %v2117 = vadd.f32 0.0, %v2116
      %v2118 = vpop.f32.mrb[0].mxu0
      %v2119 = vadd.f32 0.0, %v2118
      %v2120 = vpop.f32.mrb[0].mxu0
      %v2121 = vadd.f32 0.0, %v2120
      %2122 = vmatprep.mubr.bf16.mxu0 0
      %2123 = vmatmul.mubr.bf16.gmra.mrb[0].mxu0 %v790
      %v2124 = vpop.f32.mrb[0].mxu0
      %v2125 = vadd.f32 0.0, %v2124
      %v2126 = vpop.f32.mrb[0].mxu0
      %v2127 = vadd.f32 0.0, %v2126
      %v2128 = vpop.f32.mrb[0].mxu0
      %v2129 = vadd.f32 0.0, %v2128
      %v2130 = vpop.f32.mrb[0].mxu0
      %v2131 = vadd.f32 0.0, %v2130
      %2132 = vmatprep.mubr.bf16.mxu0 0
      %2133 = vmatmul.mubr.bf16.gmra.mrb[0].mxu0 %v793
      %v2134 = vpop.f32.mrb[0].mxu0
      %v2135 = vadd.f32 0.0, %v2134
      %v2136 = vpop.f32.mrb[0].mxu0
      %v2137 = vadd.f32 0.0, %v2136
      %v2138 = vpop.f32.mrb[0].mxu0
      %v2139 = vadd.f32 0.0, %v2138
      %v2140 = vpop.f32.mrb[0].mxu0
      %v2141 = vadd.f32 0.0, %v2140
      %2142 = vmatprep.mubr.bf16.mxu0 0
      %2143 = vmatmul.mubr.bf16.gmra.mrb[0].mxu0 %v796
      %v2144 = vpop.f32.mrb[0].mxu0
      %v2145 = vadd.f32 0.0, %v2144
      %v2146 = vpop.f32.mrb[0].mxu0
      %v2147 = vadd.f32 0.0, %v2146
      %v2148 = vpop.f32.mrb[0].mxu0
      %v2149 = vadd.f32 0.0, %v2148
      %v2150 = vpop.f32.mrb[0].mxu0
      %v2151 = vadd.f32 0.0, %v2150
      %2152 = vmatprep.mubr.bf16.mxu0 0
      %2153 = vmatmul.mubr.bf16.gmra.mrb[0].mxu0 %v799
      %v2154 = vpop.f32.mrb[0].mxu0
      %v2155 = vadd.f32 0.0, %v2154
      %v2156 = vpop.f32.mrb[0].mxu0
      %v2157 = vadd.f32 0.0, %v2156
      %v2158 = vpop.f32.mrb[0].mxu0
      %v2159 = vadd.f32 0.0, %v2158
      %v2160 = vpop.f32.mrb[0].mxu0
      %v2161 = vadd.f32 0.0, %v2160
      %2162 = vmatprep.mubr.bf16.mxu0 0
      %2163 = vmatmul.mubr.bf16.gmra.mrb[0].mxu0 %v802
      %v2164 = vpop.f32.mrb[0].mxu0
      %v2165 = vadd.f32 0.0, %v2164
      %v2166 = vpop.f32.mrb[0].mxu0
      %v2167 = vadd.f32 0.0, %v2166
      %v2168 = vpop.f32.mrb[0].mxu0
      %v2169 = vadd.f32 0.0, %v2168
      %v2170 = vpop.f32.mrb[0].mxu0
      %v2171 = vadd.f32 0.0, %v2170
      %2172 = vmatprep.mubr.bf16.mxu0 0
      %2173 = vmatmul.mubr.bf16.gmra.mrb[0].mxu0 %v805
      %v2174 = vpop.f32.mrb[0].mxu0
      %v2175 = vadd.f32 0.0, %v2174
      %v2176 = vpop.f32.mrb[0].mxu0
      %v2177 = vadd.f32 0.0, %v2176
      %v2178 = vpop.f32.mrb[0].mxu0
      %v2179 = vadd.f32 0.0, %v2178
      %v2180 = vpop.f32.mrb[0].mxu0
      %v2181 = vadd.f32 0.0, %v2180
      %2182 = vmatprep.mubr.bf16.mxu0 0
      %2183 = vmatmul.mubr.bf16.gmra.mrb[0].mxu0 %v808
      %v2184 = vpop.f32.mrb[0].mxu0
      %v2185 = vadd.f32 0.0, %v2184
      %v2186 = vpop.f32.mrb[0].mxu0
      %v2187 = vadd.f32 0.0, %v2186
      %v2188 = vpop.f32.mrb[0].mxu0
      %v2189 = vadd.f32 0.0, %v2188
      %v2190 = vpop.f32.mrb[0].mxu0
      %v2191 = vadd.f32 0.0, %v2190
      %2192 = vmatprep.mubr.bf16.mxu0 0
      %2193 = vmatmul.mubr.bf16.gmra.mrb[0].mxu0 %v811
      %v2194 = vpop.f32.mrb[0].mxu0
      %v2195 = vadd.f32 0.0, %v2194
      %v2196 = vpop.f32.mrb[0].mxu0
      %v2197 = vadd.f32 0.0, %v2196
      %v2198 = vpop.f32.mrb[0].mxu0
      %v2199 = vadd.f32 0.0, %v2198
      %v2200 = vpop.f32.mrb[0].mxu0
      %v2201 = vadd.f32 0.0, %v2200
      %2202 = vmatprep.mubr.bf16.mxu0 0
      %2203 = vmatmul.mubr.bf16.gmra.mrb[0].mxu0 %v814
      %v2204 = vpop.f32.mrb[0].mxu0
      %v2205 = vadd.f32 0.0, %v2204
      %v2206 = vpop.f32.mrb[0].mxu0
      %v2207 = vadd.f32 0.0, %v2206
      %v2208 = vpop.f32.mrb[0].mxu0
      %v2209 = vadd.f32 0.0, %v2208
      %v2210 = vpop.f32.mrb[0].mxu0
      %v2211 = vadd.f32 0.0, %v2210
      %2212 = vmatprep.mubr.bf16.mxu0 0
      %2213 = vmatmul.mubr.bf16.gmra.mrb[0].mxu0 %v817
      %v2214 = vpop.f32.mrb[0].mxu0
      %v2215 = vadd.f32 0.0, %v2214
      %v2216 = vpop.f32.mrb[0].mxu0
      %v2217 = vadd.f32 0.0, %v2216
      %v2218 = vpop.f32.mrb[0].mxu0
      %v2219 = vadd.f32 0.0, %v2218
      %v2220 = vpop.f32.mrb[0].mxu0
      %v2221 = vadd.f32 0.0, %v2220
      %2222 = vmatprep.mubr.bf16.mxu0 0
      %2223 = vmatmul.mubr.bf16.gmra.mrb[0].mxu0 %v820
      %v2224 = vpop.f32.mrb[0].mxu0
      %v2225 = vadd.f32 0.0, %v2224
      %v2226 = vpop.f32.mrb[0].mxu0
      %v2227 = vadd.f32 0.0, %v2226
      %v2228 = vpop.f32.mrb[0].mxu0
      %v2229 = vadd.f32 0.0, %v2228
      %v2230 = vpop.f32.mrb[0].mxu0
      %v2231 = vadd.f32 0.0, %v2230
      %2232 = vmatprep.mubr.bf16.mxu0 0
      %2233 = vmatmul.mubr.bf16.gmra.mrb[0].mxu0 %v2048
      %v2234 = vpop.f32.mrb[0].mxu0
      %v2235 = vadd.f32 0.0, %v2234
      %v2236 = vpop.f32.mrb[0].mxu0
      %v2237 = vadd.f32 0.0, %v2236
      %v2238 = vpop.f32.mrb[0].mxu0
      %v2239 = vadd.f32 0.0, %v2238
      %v2240 = vpop.f32.mrb[0].mxu0
      %v2241 = vadd.f32 0.0, %v2240
      %2242 = vdwg.mxu0
      %v2243 = vadd.f32 %v1932, %v2085
      %v2244 = vadd.f32 %v1933, %v2087
      %v2245 = vadd.f32 %v1934, %v2089
      %v2246 = vadd.f32 %v1935, %v2091
      %v2247 = vadd.f32 %v1936, %v2095
      %v2248 = vadd.f32 %v1937, %v2097
      %v2249 = vadd.f32 %v1938, %v2099
      %v2250 = vadd.f32 %v1939, %v2101
      %v2251 = vadd.f32 %v1940, %v2105
      %v2252 = vadd.f32 %v1941, %v2107
      %v2253 = vadd.f32 %v1942, %v2109
      %v2254 = vadd.f32 %v1943, %v2111
      %v2255 = vadd.f32 %v1944, %v2115
      %v2256 = vadd.f32 %v1945, %v2117
      %v2257 = vadd.f32 %v1946, %v2119
      %v2258 = vadd.f32 %v1947, %v2121
      %v2259 = vadd.f32 %v1948, %v2125
      %v2260 = vadd.f32 %v1949, %v2127
      %v2261 = vadd.f32 %v1950, %v2129
      %v2262 = vadd.f32 %v1951, %v2131
      %v2263 = vadd.f32 %v1952, %v2135
      %v2264 = vadd.f32 %v1953, %v2137
      %v2265 = vadd.f32 %v1954, %v2139
      %v2266 = vadd.f32 %v1955, %v2141
      %v2267 = vadd.f32 %v1956, %v2145
      %v2268 = vadd.f32 %v1957, %v2147
      %v2269 = vadd.f32 %v1958, %v2149
      %v2270 = vadd.f32 %v1959, %v2151
      %v2271 = vadd.f32 %v1960, %v2155
      %v2272 = vadd.f32 %v1961, %v2157
      %v2273 = vadd.f32 %v1962, %v2159
      %v2274 = vadd.f32 %v1963, %v2161
      %v2275 = vadd.f32 %v1964, %v2165
      %v2276 = vadd.f32 %v1965, %v2167
      %v2277 = vadd.f32 %v1966, %v2169
      %v2278 = vadd.f32 %v1967, %v2171
      %v2279 = vadd.f32 %v1968, %v2175
      %v2280 = vadd.f32 %v1969, %v2177
      %v2281 = vadd.f32 %v1970, %v2179
      %v2282 = vadd.f32 %v1971, %v2181
      %v2283 = vadd.f32 %v1972, %v2185
      %v2284 = vadd.f32 %v1973, %v2187
      %v2285 = vadd.f32 %v1974, %v2189
      %v2286 = vadd.f32 %v1975, %v2191
      %v2287 = vadd.f32 %v1976, %v2195
      %v2288 = vadd.f32 %v1977, %v2197
      %v2289 = vadd.f32 %v1978, %v2199
      %v2290 = vadd.f32 %v1979, %v2201
      %v2291 = vadd.f32 %v1980, %v2205
      %v2292 = vadd.f32 %v1981, %v2207
      %v2293 = vadd.f32 %v1982, %v2209
      %v2294 = vadd.f32 %v1983, %v2211
      %v2295 = vadd.f32 %v1984, %v2215
      %v2296 = vadd.f32 %v1985, %v2217
      %v2297 = vadd.f32 %v1986, %v2219
      %v2298 = vadd.f32 %v1987, %v2221
      %v2299 = vadd.f32 %v1988, %v2225
      %v2300 = vadd.f32 %v1989, %v2227
      %v2301 = vadd.f32 %v1990, %v2229
      %v2302 = vadd.f32 %v1991, %v2231
      %v2303 = vadd.f32 %v1992, %v2235
      %v2304 = vadd.f32 %v1993, %v2237
      %v2305 = vadd.f32 %v1994, %v2239
      %v2306 = vadd.f32 %v1995, %v2241
      %v2309 = vrot.slane %v538, 1
      %v2310 = vrot.slane %v554, 1
      %v2311 = vsel %vm1308, %v2309, %v2310
      %v2320 = vunpack.c.l.b16 %v296
      %v2321 = vunpack.c.h.b16 %v296
      %v2322 = vunpack.c.l.b16 %v297
      %v2323 = vunpack.c.h.b16 %v297
      %v2324 = vunpack.c.l.b16 %v298
      %v2325 = vunpack.c.h.b16 %v298
      %v2326 = vunpack.c.l.b16 %v299
      %v2327 = vunpack.c.h.b16 %v299
      %v2328 = vunpack.c.l.b16 %v300
      %v2329 = vunpack.c.h.b16 %v300
      %v2330 = vunpack.c.l.b16 %v301
      %v2331 = vunpack.c.h.b16 %v301
      %v2332 = vunpack.c.l.b16 %v302
      %v2333 = vunpack.c.h.b16 %v302
      %v2334 = vunpack.c.l.b16 %v303
      %v2335 = vunpack.c.h.b16 %v303
      %v2336 = vpack.c.b16 %v2322, %v2320
      %v2337 = vpack.c.b16 %v2323, %v2321
      %v2338 = vpack.c.b16 %v2326, %v2324
      %v2339 = vpack.c.b16 %v2327, %v2325
      %v2340 = vpack.c.b16 %v2330, %v2328
      %v2341 = vpack.c.b16 %v2331, %v2329
      %v2342 = vpack.c.b16 %v2334, %v2332
      %v2343 = vpack.c.b16 %v2335, %v2333
      %v2353 = vsel %vm776, %v2311, 0
      %2355 = vmatprep.subr.bf16.mxu0 %v2337
      %2356 = vmatpush1.bf16.msra.mxu0 %v2336
      %2357 = vmatprep.subr.bf16.mxu0 %v2339
      %2358 = vmatpush1.bf16.msra.mxu0 %v2338
      %2359 = vmatprep.subr.bf16.mxu0 %v2341
      %2360 = vmatpush1.bf16.msra.mxu0 %v2340
      %2361 = vmatprep.subr.bf16.mxu0 %v2343
      %2362 = vmatpush1.bf16.msra.mxu0 %v2342
      %2363 = vmatprep.subr.bf16.mxu0 0
      %2364 = vmatpush1.bf16.msra.mxu0 0
      %2365 = vmatprep.subr.bf16.mxu0 0
      %2366 = vmatpush1.bf16.msra.mxu0 0
      %2367 = vmatprep.subr.bf16.mxu0 0
      %2368 = vmatpush1.bf16.msra.mxu0 0
      %2369 = vmatprep.subr.bf16.mxu0 0
      %2370 = vmatpush1.bf16.msra.mxu0 0
      %2371 = vmatprep.subr.bf16.mxu0 0
      %2372 = vmatpush1.bf16.msra.mxu0 0
      %2373 = vmatprep.subr.bf16.mxu0 0
      %2374 = vmatpush1.bf16.msra.mxu0 0
      %2375 = vmatprep.subr.bf16.mxu0 0
      %2376 = vmatpush1.bf16.msra.mxu0 0
      %2377 = vmatprep.subr.bf16.mxu0 0
      %2378 = vmatpush1.bf16.msra.mxu0 0
      %2379 = vmatprep.subr.bf16.mxu0 0
      %2380 = vmatpush1.bf16.msra.mxu0 0
      %2381 = vmatprep.subr.bf16.mxu0 0
      %2382 = vmatpush1.bf16.msra.mxu0 0
      %2383 = vmatprep.subr.bf16.mxu0 0
      %2384 = vmatpush1.bf16.msra.mxu0 0
      %2385 = vmatprep.subr.bf16.mxu0 0
      %2386 = vmatpush1.bf16.msra.mxu0 0
      %2387 = vmatprep.mubr.bf16.mxu0 0
      %2388 = vmatmul.mubr.bf16.gmra.mrb[0].mxu0 %v1398
      %v2389 = vpop.f32.mrb[0].mxu0
      %v2390 = vadd.f32 0.0, %v2389
      %v2391 = vpop.f32.mrb[0].mxu0
      %v2392 = vadd.f32 0.0, %v2391
      %v2393 = vpop.f32.mrb[0].mxu0
      %v2394 = vadd.f32 0.0, %v2393
      %v2395 = vpop.f32.mrb[0].mxu0
      %v2396 = vadd.f32 0.0, %v2395
      %2397 = vmatprep.mubr.bf16.mxu0 0
      %2398 = vmatmul.mubr.bf16.gmra.mrb[0].mxu0 %v1395
      %v2399 = vpop.f32.mrb[0].mxu0
      %v2400 = vadd.f32 0.0, %v2399
      %v2401 = vpop.f32.mrb[0].mxu0
      %v2402 = vadd.f32 0.0, %v2401
      %v2403 = vpop.f32.mrb[0].mxu0
      %v2404 = vadd.f32 0.0, %v2403
      %v2405 = vpop.f32.mrb[0].mxu0
      %v2406 = vadd.f32 0.0, %v2405
      %2407 = vmatprep.mubr.bf16.mxu0 0
      %2408 = vmatmul.mubr.bf16.gmra.mrb[0].mxu0 %v1401
      %v2409 = vpop.f32.mrb[0].mxu0
      %v2410 = vadd.f32 0.0, %v2409
      %v2411 = vpop.f32.mrb[0].mxu0
      %v2412 = vadd.f32 0.0, %v2411
      %v2413 = vpop.f32.mrb[0].mxu0
      %v2414 = vadd.f32 0.0, %v2413
      %v2415 = vpop.f32.mrb[0].mxu0
      %v2416 = vadd.f32 0.0, %v2415
      %2417 = vmatprep.mubr.bf16.mxu0 0
      %2418 = vmatmul.mubr.bf16.gmra.mrb[0].mxu0 %v1404
      %v2419 = vpop.f32.mrb[0].mxu0
      %v2420 = vadd.f32 0.0, %v2419
      %v2421 = vpop.f32.mrb[0].mxu0
      %v2422 = vadd.f32 0.0, %v2421
      %v2423 = vpop.f32.mrb[0].mxu0
      %v2424 = vadd.f32 0.0, %v2423
      %v2425 = vpop.f32.mrb[0].mxu0
      %v2426 = vadd.f32 0.0, %v2425
      %2427 = vmatprep.mubr.bf16.mxu0 0
      %2428 = vmatmul.mubr.bf16.gmra.mrb[0].mxu0 %v1407
      %v2429 = vpop.f32.mrb[0].mxu0
      %v2430 = vadd.f32 0.0, %v2429
      %v2431 = vpop.f32.mrb[0].mxu0
      %v2432 = vadd.f32 0.0, %v2431
      %v2433 = vpop.f32.mrb[0].mxu0
      %v2434 = vadd.f32 0.0, %v2433
      %v2435 = vpop.f32.mrb[0].mxu0
      %v2436 = vadd.f32 0.0, %v2435
      %2437 = vmatprep.mubr.bf16.mxu0 0
      %2438 = vmatmul.mubr.bf16.gmra.mrb[0].mxu0 %v1410
      %v2439 = vpop.f32.mrb[0].mxu0
      %v2440 = vadd.f32 0.0, %v2439
      %v2441 = vpop.f32.mrb[0].mxu0
      %v2442 = vadd.f32 0.0, %v2441
      %v2443 = vpop.f32.mrb[0].mxu0
      %v2444 = vadd.f32 0.0, %v2443
      %v2445 = vpop.f32.mrb[0].mxu0
      %v2446 = vadd.f32 0.0, %v2445
      %2447 = vmatprep.mubr.bf16.mxu0 0
      %2448 = vmatmul.mubr.bf16.gmra.mrb[0].mxu0 %v1413
      %v2449 = vpop.f32.mrb[0].mxu0
      %v2450 = vadd.f32 0.0, %v2449
      %v2451 = vpop.f32.mrb[0].mxu0
      %v2452 = vadd.f32 0.0, %v2451
      %v2453 = vpop.f32.mrb[0].mxu0
      %v2454 = vadd.f32 0.0, %v2453
      %v2455 = vpop.f32.mrb[0].mxu0
      %v2456 = vadd.f32 0.0, %v2455
      %2457 = vmatprep.mubr.bf16.mxu0 0
      %2458 = vmatmul.mubr.bf16.gmra.mrb[0].mxu0 %v1416
      %v2459 = vpop.f32.mrb[0].mxu0
      %v2460 = vadd.f32 0.0, %v2459
      %v2461 = vpop.f32.mrb[0].mxu0
      %v2462 = vadd.f32 0.0, %v2461
      %v2463 = vpop.f32.mrb[0].mxu0
      %v2464 = vadd.f32 0.0, %v2463
      %v2465 = vpop.f32.mrb[0].mxu0
      %v2466 = vadd.f32 0.0, %v2465
      %2467 = vmatprep.mubr.bf16.mxu0 0
      %2468 = vmatmul.mubr.bf16.gmra.mrb[0].mxu0 %v1419
      %v2469 = vpop.f32.mrb[0].mxu0
      %v2470 = vadd.f32 0.0, %v2469
      %v2471 = vpop.f32.mrb[0].mxu0
      %v2472 = vadd.f32 0.0, %v2471
      %v2473 = vpop.f32.mrb[0].mxu0
      %v2474 = vadd.f32 0.0, %v2473
      %v2475 = vpop.f32.mrb[0].mxu0
      %v2476 = vadd.f32 0.0, %v2475
      %2477 = vmatprep.mubr.bf16.mxu0 0
      %2478 = vmatmul.mubr.bf16.gmra.mrb[0].mxu0 %v1422
      %v2479 = vpop.f32.mrb[0].mxu0
      %v2480 = vadd.f32 0.0, %v2479
      %v2481 = vpop.f32.mrb[0].mxu0
      %v2482 = vadd.f32 0.0, %v2481
      %v2483 = vpop.f32.mrb[0].mxu0
      %v2484 = vadd.f32 0.0, %v2483
      %v2485 = vpop.f32.mrb[0].mxu0
      %v2486 = vadd.f32 0.0, %v2485
      %2487 = vmatprep.mubr.bf16.mxu0 0
      %2488 = vmatmul.mubr.bf16.gmra.mrb[0].mxu0 %v1425
      %v2489 = vpop.f32.mrb[0].mxu0
      %v2490 = vadd.f32 0.0, %v2489
      %v2491 = vpop.f32.mrb[0].mxu0
      %v2492 = vadd.f32 0.0, %v2491
      %v2493 = vpop.f32.mrb[0].mxu0
      %v2494 = vadd.f32 0.0, %v2493
      %v2495 = vpop.f32.mrb[0].mxu0
      %v2496 = vadd.f32 0.0, %v2495
      %2497 = vmatprep.mubr.bf16.mxu0 0
      %2498 = vmatmul.mubr.bf16.gmra.mrb[0].mxu0 %v1428
      %v2499 = vpop.f32.mrb[0].mxu0
      %v2500 = vadd.f32 0.0, %v2499
      %v2501 = vpop.f32.mrb[0].mxu0
      %v2502 = vadd.f32 0.0, %v2501
      %v2503 = vpop.f32.mrb[0].mxu0
      %v2504 = vadd.f32 0.0, %v2503
      %v2505 = vpop.f32.mrb[0].mxu0
      %v2506 = vadd.f32 0.0, %v2505
      %2507 = vmatprep.mubr.bf16.mxu0 0
      %2508 = vmatmul.mubr.bf16.gmra.mrb[0].mxu0 %v1431
      %v2509 = vpop.f32.mrb[0].mxu0
      %v2510 = vadd.f32 0.0, %v2509
      %v2511 = vpop.f32.mrb[0].mxu0
      %v2512 = vadd.f32 0.0, %v2511
      %v2513 = vpop.f32.mrb[0].mxu0
      %v2514 = vadd.f32 0.0, %v2513
      %v2515 = vpop.f32.mrb[0].mxu0
      %v2516 = vadd.f32 0.0, %v2515
      %2517 = vmatprep.mubr.bf16.mxu0 0
      %2518 = vmatmul.mubr.bf16.gmra.mrb[0].mxu0 %v1434
      %v2519 = vpop.f32.mrb[0].mxu0
      %v2520 = vadd.f32 0.0, %v2519
      %v2521 = vpop.f32.mrb[0].mxu0
      %v2522 = vadd.f32 0.0, %v2521
      %v2523 = vpop.f32.mrb[0].mxu0
      %v2524 = vadd.f32 0.0, %v2523
      %v2525 = vpop.f32.mrb[0].mxu0
      %v2526 = vadd.f32 0.0, %v2525
      %2527 = vmatprep.mubr.bf16.mxu0 0
      %2528 = vmatmul.mubr.bf16.gmra.mrb[0].mxu0 %v1437
      %v2529 = vpop.f32.mrb[0].mxu0
      %v2530 = vadd.f32 0.0, %v2529
      %v2531 = vpop.f32.mrb[0].mxu0
      %v2532 = vadd.f32 0.0, %v2531
      %v2533 = vpop.f32.mrb[0].mxu0
      %v2534 = vadd.f32 0.0, %v2533
      %v2535 = vpop.f32.mrb[0].mxu0
      %v2536 = vadd.f32 0.0, %v2535
      %2537 = vmatprep.mubr.bf16.mxu0 0
      %2538 = vmatmul.mubr.bf16.gmra.mrb[0].mxu0 %v2353
      %v2539 = vpop.f32.mrb[0].mxu0
      %v2540 = vadd.f32 0.0, %v2539
      %v2541 = vpop.f32.mrb[0].mxu0
      %v2542 = vadd.f32 0.0, %v2541
      %v2543 = vpop.f32.mrb[0].mxu0
      %v2544 = vadd.f32 0.0, %v2543
      %v2545 = vpop.f32.mrb[0].mxu0
      %v2546 = vadd.f32 0.0, %v2545
      %2547 = vdwg.mxu0
      %v2548 = vadd.f32 %v2243, %v2390
      %v2549 = vadd.f32 %v2244, %v2392
      %v2550 = vadd.f32 %v2245, %v2394
      %v2551 = vadd.f32 %v2246, %v2396
      %v2552 = vadd.f32 %v2247, %v2400
      %v2553 = vadd.f32 %v2248, %v2402
      %v2554 = vadd.f32 %v2249, %v2404
      %v2555 = vadd.f32 %v2250, %v2406
      %v2556 = vadd.f32 %v2251, %v2410
      %v2557 = vadd.f32 %v2252, %v2412
      %v2558 = vadd.f32 %v2253, %v2414
      %v2559 = vadd.f32 %v2254, %v2416
      %v2560 = vadd.f32 %v2255, %v2420
      %v2561 = vadd.f32 %v2256, %v2422
      %v2562 = vadd.f32 %v2257, %v2424
      %v2563 = vadd.f32 %v2258, %v2426
      %v2564 = vadd.f32 %v2259, %v2430
      %v2565 = vadd.f32 %v2260, %v2432
      %v2566 = vadd.f32 %v2261, %v2434
      %v2567 = vadd.f32 %v2262, %v2436
      %v2568 = vadd.f32 %v2263, %v2440
      %v2569 = vadd.f32 %v2264, %v2442
      %v2570 = vadd.f32 %v2265, %v2444
      %v2571 = vadd.f32 %v2266, %v2446
      %v2572 = vadd.f32 %v2267, %v2450
      %v2573 = vadd.f32 %v2268, %v2452
      %v2574 = vadd.f32 %v2269, %v2454
      %v2575 = vadd.f32 %v2270, %v2456
      %v2576 = vadd.f32 %v2271, %v2460
      %v2577 = vadd.f32 %v2272, %v2462
      %v2578 = vadd.f32 %v2273, %v2464
      %v2579 = vadd.f32 %v2274, %v2466
      %v2580 = vadd.f32 %v2275, %v2470
      %v2581 = vadd.f32 %v2276, %v2472
      %v2582 = vadd.f32 %v2277, %v2474
      %v2583 = vadd.f32 %v2278, %v2476
      %v2584 = vadd.f32 %v2279, %v2480
      %v2585 = vadd.f32 %v2280, %v2482
      %v2586 = vadd.f32 %v2281, %v2484
      %v2587 = vadd.f32 %v2282, %v2486
      %v2588 = vadd.f32 %v2283, %v2490
      %v2589 = vadd.f32 %v2284, %v2492
      %v2590 = vadd.f32 %v2285, %v2494
      %v2591 = vadd.f32 %v2286, %v2496
      %v2592 = vadd.f32 %v2287, %v2500
      %v2593 = vadd.f32 %v2288, %v2502
      %v2594 = vadd.f32 %v2289, %v2504
      %v2595 = vadd.f32 %v2290, %v2506
      %v2596 = vadd.f32 %v2291, %v2510
      %v2597 = vadd.f32 %v2292, %v2512
      %v2598 = vadd.f32 %v2293, %v2514
      %v2599 = vadd.f32 %v2294, %v2516
      %v2600 = vadd.f32 %v2295, %v2520
      %v2601 = vadd.f32 %v2296, %v2522
      %v2602 = vadd.f32 %v2297, %v2524
      %v2603 = vadd.f32 %v2298, %v2526
      %v2604 = vadd.f32 %v2299, %v2530
      %v2605 = vadd.f32 %v2300, %v2532
      %v2606 = vadd.f32 %v2301, %v2534
      %v2607 = vadd.f32 %v2302, %v2536
      %v2608 = vadd.f32 %v2303, %v2540
      %v2609 = vadd.f32 %v2304, %v2542
      %v2610 = vadd.f32 %v2305, %v2544
      %v2611 = vadd.f32 %v2306, %v2546
      %v2620 = vunpack.c.l.b16 %v304
      %v2621 = vunpack.c.h.b16 %v304
      %v2622 = vunpack.c.l.b16 %v305
      %v2623 = vunpack.c.h.b16 %v305
      %v2624 = vunpack.c.l.b16 %v306
      %v2625 = vunpack.c.h.b16 %v306
      %v2626 = vunpack.c.l.b16 %v307
      %v2627 = vunpack.c.h.b16 %v307
      %v2628 = vunpack.c.l.b16 %v308
      %v2629 = vunpack.c.h.b16 %v308
      %v2630 = vunpack.c.l.b16 %v309
      %v2631 = vunpack.c.h.b16 %v309
      %v2632 = vunpack.c.l.b16 %v310
      %v2633 = vunpack.c.h.b16 %v310
      %v2634 = vunpack.c.l.b16 %v311
      %v2635 = vunpack.c.h.b16 %v311
      %v2636 = vpack.c.b16 %v2622, %v2620
      %v2637 = vpack.c.b16 %v2623, %v2621
      %v2638 = vpack.c.b16 %v2626, %v2624
      %v2639 = vpack.c.b16 %v2627, %v2625
      %v2640 = vpack.c.b16 %v2630, %v2628
      %v2641 = vpack.c.b16 %v2631, %v2629
      %v2642 = vpack.c.b16 %v2634, %v2632
      %v2643 = vpack.c.b16 %v2635, %v2633
      %2652 = vmatprep.subr.bf16.mxu0 %v2637
      %2653 = vmatpush1.bf16.msra.mxu0 %v2636
      %2654 = vmatprep.subr.bf16.mxu0 %v2639
      %2655 = vmatpush1.bf16.msra.mxu0 %v2638
      %2656 = vmatprep.subr.bf16.mxu0 %v2641
      %2657 = vmatpush1.bf16.msra.mxu0 %v2640
      %2658 = vmatprep.subr.bf16.mxu0 %v2643
      %2659 = vmatpush1.bf16.msra.mxu0 %v2642
      %2660 = vmatprep.subr.bf16.mxu0 0
      %2661 = vmatpush1.bf16.msra.mxu0 0
      %2662 = vmatprep.subr.bf16.mxu0 0
      %2663 = vmatpush1.bf16.msra.mxu0 0
      %2664 = vmatprep.subr.bf16.mxu0 0
      %2665 = vmatpush1.bf16.msra.mxu0 0
      %2666 = vmatprep.subr.bf16.mxu0 0
      %2667 = vmatpush1.bf16.msra.mxu0 0
      %2668 = vmatprep.subr.bf16.mxu0 0
      %2669 = vmatpush1.bf16.msra.mxu0 0
      %2670 = vmatprep.subr.bf16.mxu0 0
      %2671 = vmatpush1.bf16.msra.mxu0 0
      %2672 = vmatprep.subr.bf16.mxu0 0
      %2673 = vmatpush1.bf16.msra.mxu0 0
      %2674 = vmatprep.subr.bf16.mxu0 0
      %2675 = vmatpush1.bf16.msra.mxu0 0
      %2676 = vmatprep.subr.bf16.mxu0 0
      %2677 = vmatpush1.bf16.msra.mxu0 0
      %2678 = vmatprep.subr.bf16.mxu0 0
      %2679 = vmatpush1.bf16.msra.mxu0 0
      %2680 = vmatprep.subr.bf16.mxu0 0
      %2681 = vmatpush1.bf16.msra.mxu0 0
      %2682 = vmatprep.subr.bf16.mxu0 0
      %2683 = vmatpush1.bf16.msra.mxu0 0
      %2684 = vmatprep.mubr.bf16.mxu0 0
      %2685 = vmatmul.mubr.bf16.gmra.mrb[0].mxu0 %v1055
      %v2686 = vpop.f32.mrb[0].mxu0
      %v2687 = vadd.f32 0.0, %v2686
      %v2688 = vpop.f32.mrb[0].mxu0
      %v2689 = vadd.f32 0.0, %v2688
      %v2690 = vpop.f32.mrb[0].mxu0
      %v2691 = vadd.f32 0.0, %v2690
      %v2692 = vpop.f32.mrb[0].mxu0
      %v2693 = vadd.f32 0.0, %v2692
      %2694 = vmatprep.mubr.bf16.mxu0 0
      %2695 = vmatmul.mubr.bf16.gmra.mrb[0].mxu0 %v1059
      %v2696 = vpop.f32.mrb[0].mxu0
      %v2697 = vadd.f32 0.0, %v2696
      %v2698 = vpop.f32.mrb[0].mxu0
      %v2699 = vadd.f32 0.0, %v2698
      %v2700 = vpop.f32.mrb[0].mxu0
      %v2701 = vadd.f32 0.0, %v2700
      %v2702 = vpop.f32.mrb[0].mxu0
      %v2703 = vadd.f32 0.0, %v2702
      %2704 = vmatprep.mubr.bf16.mxu0 0
      %2705 = vmatmul.mubr.bf16.gmra.mrb[0].mxu0 %v1061
      %v2706 = vpop.f32.mrb[0].mxu0
      %v2707 = vadd.f32 0.0, %v2706
      %v2708 = vpop.f32.mrb[0].mxu0
      %v2709 = vadd.f32 0.0, %v2708
      %v2710 = vpop.f32.mrb[0].mxu0
      %v2711 = vadd.f32 0.0, %v2710
      %v2712 = vpop.f32.mrb[0].mxu0
      %v2713 = vadd.f32 0.0, %v2712
      %2714 = vmatprep.mubr.bf16.mxu0 0
      %2715 = vmatmul.mubr.bf16.gmra.mrb[0].mxu0 %v1063
      %v2716 = vpop.f32.mrb[0].mxu0
      %v2717 = vadd.f32 0.0, %v2716
      %v2718 = vpop.f32.mrb[0].mxu0
      %v2719 = vadd.f32 0.0, %v2718
      %v2720 = vpop.f32.mrb[0].mxu0
      %v2721 = vadd.f32 0.0, %v2720
      %v2722 = vpop.f32.mrb[0].mxu0
      %v2723 = vadd.f32 0.0, %v2722
      %2724 = vmatprep.mubr.bf16.mxu0 0
      %2725 = vmatmul.mubr.bf16.gmra.mrb[0].mxu0 %v1065
      %v2726 = vpop.f32.mrb[0].mxu0
      %v2727 = vadd.f32 0.0, %v2726
      %v2728 = vpop.f32.mrb[0].mxu0
      %v2729 = vadd.f32 0.0, %v2728
      %v2730 = vpop.f32.mrb[0].mxu0
      %v2731 = vadd.f32 0.0, %v2730
      %v2732 = vpop.f32.mrb[0].mxu0
      %v2733 = vadd.f32 0.0, %v2732
      %2734 = vmatprep.mubr.bf16.mxu0 0
      %2735 = vmatmul.mubr.bf16.gmra.mrb[0].mxu0 %v1067
      %v2736 = vpop.f32.mrb[0].mxu0
      %v2737 = vadd.f32 0.0, %v2736
      %v2738 = vpop.f32.mrb[0].mxu0
      %v2739 = vadd.f32 0.0, %v2738
      %v2740 = vpop.f32.mrb[0].mxu0
      %v2741 = vadd.f32 0.0, %v2740
      %v2742 = vpop.f32.mrb[0].mxu0
      %v2743 = vadd.f32 0.0, %v2742
      %2744 = vmatprep.mubr.bf16.mxu0 0
      %2745 = vmatmul.mubr.bf16.gmra.mrb[0].mxu0 %v1069
      %v2746 = vpop.f32.mrb[0].mxu0
      %v2747 = vadd.f32 0.0, %v2746
      %v2748 = vpop.f32.mrb[0].mxu0
      %v2749 = vadd.f32 0.0, %v2748
      %v2750 = vpop.f32.mrb[0].mxu0
      %v2751 = vadd.f32 0.0, %v2750
      %v2752 = vpop.f32.mrb[0].mxu0
      %v2753 = vadd.f32 0.0, %v2752
      %2754 = vmatprep.mubr.bf16.mxu0 0
      %2755 = vmatmul.mubr.bf16.gmra.mrb[0].mxu0 %v1071
      %v2756 = vpop.f32.mrb[0].mxu0
      %v2757 = vadd.f32 0.0, %v2756
      %v2758 = vpop.f32.mrb[0].mxu0
      %v2759 = vadd.f32 0.0, %v2758
      %v2760 = vpop.f32.mrb[0].mxu0
      %v2761 = vadd.f32 0.0, %v2760
      %v2762 = vpop.f32.mrb[0].mxu0
      %v2763 = vadd.f32 0.0, %v2762
      %2764 = vmatprep.mubr.bf16.mxu0 0
      %2765 = vmatmul.mubr.bf16.gmra.mrb[0].mxu0 %v1073
      %v2766 = vpop.f32.mrb[0].mxu0
      %v2767 = vadd.f32 0.0, %v2766
      %v2768 = vpop.f32.mrb[0].mxu0
      %v2769 = vadd.f32 0.0, %v2768
      %v2770 = vpop.f32.mrb[0].mxu0
      %v2771 = vadd.f32 0.0, %v2770
      %v2772 = vpop.f32.mrb[0].mxu0
      %v2773 = vadd.f32 0.0, %v2772
      %2774 = vmatprep.mubr.bf16.mxu0 0
      %2775 = vmatmul.mubr.bf16.gmra.mrb[0].mxu0 %v1075
      %v2776 = vpop.f32.mrb[0].mxu0
      %v2777 = vadd.f32 0.0, %v2776
      %v2778 = vpop.f32.mrb[0].mxu0
      %v2779 = vadd.f32 0.0, %v2778
      %v2780 = vpop.f32.mrb[0].mxu0
      %v2781 = vadd.f32 0.0, %v2780
      %v2782 = vpop.f32.mrb[0].mxu0
      %v2783 = vadd.f32 0.0, %v2782
      %2784 = vmatprep.mubr.bf16.mxu0 0
      %2785 = vmatmul.mubr.bf16.gmra.mrb[0].mxu0 %v1077
      %v2786 = vpop.f32.mrb[0].mxu0
      %v2787 = vadd.f32 0.0, %v2786
      %v2788 = vpop.f32.mrb[0].mxu0
      %v2789 = vadd.f32 0.0, %v2788
      %v2790 = vpop.f32.mrb[0].mxu0
      %v2791 = vadd.f32 0.0, %v2790
      %v2792 = vpop.f32.mrb[0].mxu0
      %v2793 = vadd.f32 0.0, %v2792
      %2794 = vmatprep.mubr.bf16.mxu0 0
      %2795 = vmatmul.mubr.bf16.gmra.mrb[0].mxu0 %v1079
      %v2796 = vpop.f32.mrb[0].mxu0
      %v2797 = vadd.f32 0.0, %v2796
      %v2798 = vpop.f32.mrb[0].mxu0
      %v2799 = vadd.f32 0.0, %v2798
      %v2800 = vpop.f32.mrb[0].mxu0
      %v2801 = vadd.f32 0.0, %v2800
      %v2802 = vpop.f32.mrb[0].mxu0
      %v2803 = vadd.f32 0.0, %v2802
      %2804 = vmatprep.mubr.bf16.mxu0 0
      %2805 = vmatmul.mubr.bf16.gmra.mrb[0].mxu0 %v1081
      %v2806 = vpop.f32.mrb[0].mxu0
      %v2807 = vadd.f32 0.0, %v2806
      %v2808 = vpop.f32.mrb[0].mxu0
      %v2809 = vadd.f32 0.0, %v2808
      %v2810 = vpop.f32.mrb[0].mxu0
      %v2811 = vadd.f32 0.0, %v2810
      %v2812 = vpop.f32.mrb[0].mxu0
      %v2813 = vadd.f32 0.0, %v2812
      %2814 = vmatprep.mubr.bf16.mxu0 0
      %2815 = vmatmul.mubr.bf16.gmra.mrb[0].mxu0 %v1083
      %v2816 = vpop.f32.mrb[0].mxu0
      %v2817 = vadd.f32 0.0, %v2816
      %v2818 = vpop.f32.mrb[0].mxu0
      %v2819 = vadd.f32 0.0, %v2818
      %v2820 = vpop.f32.mrb[0].mxu0
      %v2821 = vadd.f32 0.0, %v2820
      %v2822 = vpop.f32.mrb[0].mxu0
      %v2823 = vadd.f32 0.0, %v2822
      %2824 = vmatprep.mubr.bf16.mxu0 0
      %2825 = vmatmul.mubr.bf16.gmra.mrb[0].mxu0 %v1737
      %v2826 = vpop.f32.mrb[0].mxu0
      %v2827 = vadd.f32 0.0, %v2826
      %v2828 = vpop.f32.mrb[0].mxu0
      %v2829 = vadd.f32 0.0, %v2828
      %v2830 = vpop.f32.mrb[0].mxu0
      %v2831 = vadd.f32 0.0, %v2830
      %v2832 = vpop.f32.mrb[0].mxu0
      %v2833 = vadd.f32 0.0, %v2832
      %2834 = vmatprep.mubr.bf16.mxu0 0
      %2835 = vmatmul.mubr.bf16.gmra.mrb[0].mxu0 %v1083
      %v2836 = vpop.f32.mrb[0].mxu0
      %v2837 = vadd.f32 0.0, %v2836
      %v2838 = vpop.f32.mrb[0].mxu0
      %v2839 = vadd.f32 0.0, %v2838
      %v2840 = vpop.f32.mrb[0].mxu0
      %v2841 = vadd.f32 0.0, %v2840
      %v2842 = vpop.f32.mrb[0].mxu0
      %v2843 = vadd.f32 0.0, %v2842
      %2844 = vdwg.mxu0
      %v2845 = vadd.f32 %v2548, %v2687
      %v2846 = vadd.f32 %v2549, %v2689
      %v2847 = vadd.f32 %v2550, %v2691
      %v2848 = vadd.f32 %v2551, %v2693
      %v2849 = vadd.f32 %v2552, %v2697
      %v2850 = vadd.f32 %v2553, %v2699
      %v2851 = vadd.f32 %v2554, %v2701
      %v2852 = vadd.f32 %v2555, %v2703
      %v2853 = vadd.f32 %v2556, %v2707
      %v2854 = vadd.f32 %v2557, %v2709
      %v2855 = vadd.f32 %v2558, %v2711
      %v2856 = vadd.f32 %v2559, %v2713
      %v2857 = vadd.f32 %v2560, %v2717
      %v2858 = vadd.f32 %v2561, %v2719
      %v2859 = vadd.f32 %v2562, %v2721
      %v2860 = vadd.f32 %v2563, %v2723
      %v2861 = vadd.f32 %v2564, %v2727
      %v2862 = vadd.f32 %v2565, %v2729
      %v2863 = vadd.f32 %v2566, %v2731
      %v2864 = vadd.f32 %v2567, %v2733
      %v2865 = vadd.f32 %v2568, %v2737
      %v2866 = vadd.f32 %v2569, %v2739
      %v2867 = vadd.f32 %v2570, %v2741
      %v2868 = vadd.f32 %v2571, %v2743
      %v2869 = vadd.f32 %v2572, %v2747
      %v2870 = vadd.f32 %v2573, %v2749
      %v2871 = vadd.f32 %v2574, %v2751
      %v2872 = vadd.f32 %v2575, %v2753
      %v2873 = vadd.f32 %v2576, %v2757
      %v2874 = vadd.f32 %v2577, %v2759
      %v2875 = vadd.f32 %v2578, %v2761
      %v2876 = vadd.f32 %v2579, %v2763
      %v2877 = vadd.f32 %v2580, %v2767
      %v2878 = vadd.f32 %v2581, %v2769
      %v2879 = vadd.f32 %v2582, %v2771
      %v2880 = vadd.f32 %v2583, %v2773
      %v2881 = vadd.f32 %v2584, %v2777
      %v2882 = vadd.f32 %v2585, %v2779
      %v2883 = vadd.f32 %v2586, %v2781
      %v2884 = vadd.f32 %v2587, %v2783
      %v2885 = vadd.f32 %v2588, %v2787
      %v2886 = vadd.f32 %v2589, %v2789
      %v2887 = vadd.f32 %v2590, %v2791
      %v2888 = vadd.f32 %v2591, %v2793
      %v2889 = vadd.f32 %v2592, %v2797
      %v2890 = vadd.f32 %v2593, %v2799
      %v2891 = vadd.f32 %v2594, %v2801
      %v2892 = vadd.f32 %v2595, %v2803
      %v2893 = vadd.f32 %v2596, %v2807
      %v2894 = vadd.f32 %v2597, %v2809
      %v2895 = vadd.f32 %v2598, %v2811
      %v2896 = vadd.f32 %v2599, %v2813
      %v2897 = vadd.f32 %v2600, %v2817
      %v2898 = vadd.f32 %v2601, %v2819
      %v2899 = vadd.f32 %v2602, %v2821
      %v2900 = vadd.f32 %v2603, %v2823
      %v2901 = vadd.f32 %v2604, %v2827
      %v2902 = vadd.f32 %v2605, %v2829
      %v2903 = vadd.f32 %v2606, %v2831
      %v2904 = vadd.f32 %v2607, %v2833
      %v2905 = vadd.f32 %v2608, %v2837
      %v2906 = vadd.f32 %v2609, %v2839
      %v2907 = vadd.f32 %v2610, %v2841
      %v2908 = vadd.f32 %v2611, %v2843
      %v2917 = vunpack.c.l.b16 %v312
      %v2918 = vunpack.c.h.b16 %v312
      %v2919 = vunpack.c.l.b16 %v313
      %v2920 = vunpack.c.h.b16 %v313
      %v2921 = vunpack.c.l.b16 %v314
      %v2922 = vunpack.c.h.b16 %v314
      %v2923 = vunpack.c.l.b16 %v315
      %v2924 = vunpack.c.h.b16 %v315
      %v2925 = vunpack.c.l.b16 %v316
      %v2926 = vunpack.c.h.b16 %v316
      %v2927 = vunpack.c.l.b16 %v317
      %v2928 = vunpack.c.h.b16 %v317
      %v2929 = vunpack.c.l.b16 %v318
      %v2930 = vunpack.c.h.b16 %v318
      %v2931 = vunpack.c.l.b16 %v319
      %v2932 = vunpack.c.h.b16 %v319
      %v2933 = vpack.c.b16 %v2919, %v2917
      %v2934 = vpack.c.b16 %v2920, %v2918
      %v2935 = vpack.c.b16 %v2923, %v2921
      %v2936 = vpack.c.b16 %v2924, %v2922
      %v2937 = vpack.c.b16 %v2927, %v2925
      %v2938 = vpack.c.b16 %v2928, %v2926
      %v2939 = vpack.c.b16 %v2931, %v2929
      %v2940 = vpack.c.b16 %v2932, %v2930
      %2949 = vmatprep.subr.bf16.mxu0 %v2934
      %2950 = vmatpush1.bf16.msra.mxu0 %v2933
      %2951 = vmatprep.subr.bf16.mxu0 %v2936
      %2952 = vmatpush1.bf16.msra.mxu0 %v2935
      %2953 = vmatprep.subr.bf16.mxu0 %v2938
      %2954 = vmatpush1.bf16.msra.mxu0 %v2937
      %2955 = vmatprep.subr.bf16.mxu0 %v2940
      %2956 = vmatpush1.bf16.msra.mxu0 %v2939
      %2957 = vmatprep.subr.bf16.mxu0 0
      %2958 = vmatpush1.bf16.msra.mxu0 0
      %2959 = vmatprep.subr.bf16.mxu0 0
      %2960 = vmatpush1.bf16.msra.mxu0 0
      %2961 = vmatprep.subr.bf16.mxu0 0
      %2962 = vmatpush1.bf16.msra.mxu0 0
      %2963 = vmatprep.subr.bf16.mxu0 0
      %2964 = vmatpush1.bf16.msra.mxu0 0
      %2965 = vmatprep.subr.bf16.mxu0 0
      %2966 = vmatpush1.bf16.msra.mxu0 0
      %2967 = vmatprep.subr.bf16.mxu0 0
      %2968 = vmatpush1.bf16.msra.mxu0 0
      %2969 = vmatprep.subr.bf16.mxu0 0
      %2970 = vmatpush1.bf16.msra.mxu0 0
      %2971 = vmatprep.subr.bf16.mxu0 0
      %2972 = vmatpush1.bf16.msra.mxu0 0
      %2973 = vmatprep.subr.bf16.mxu0 0
      %2974 = vmatpush1.bf16.msra.mxu0 0
      %2975 = vmatprep.subr.bf16.mxu0 0
      %2976 = vmatpush1.bf16.msra.mxu0 0
      %2977 = vmatprep.subr.bf16.mxu0 0
      %2978 = vmatpush1.bf16.msra.mxu0 0
      %2979 = vmatprep.subr.bf16.mxu0 0
      %2980 = vmatpush1.bf16.msra.mxu0 0
      %2981 = vmatprep.mubr.bf16.mxu0 0
      %2982 = vmatmul.mubr.bf16.gmra.mrb[0].mxu0 %v778
      %v2983 = vpop.f32.mrb[0].mxu0
      %v2984 = vadd.f32 0.0, %v2983
      %v2985 = vpop.f32.mrb[0].mxu0
      %v2986 = vadd.f32 0.0, %v2985
      %v2987 = vpop.f32.mrb[0].mxu0
      %v2988 = vadd.f32 0.0, %v2987
      %v2989 = vpop.f32.mrb[0].mxu0
      %v2990 = vadd.f32 0.0, %v2989
      %2991 = vmatprep.mubr.bf16.mxu0 0
      %2992 = vmatmul.mubr.bf16.gmra.mrb[0].mxu0 %v784
      %v2993 = vpop.f32.mrb[0].mxu0
      %v2994 = vadd.f32 0.0, %v2993
      %v2995 = vpop.f32.mrb[0].mxu0
      %v2996 = vadd.f32 0.0, %v2995
      %v2997 = vpop.f32.mrb[0].mxu0
      %v2998 = vadd.f32 0.0, %v2997
      %v2999 = vpop.f32.mrb[0].mxu0
      %v3000 = vadd.f32 0.0, %v2999
      %3001 = vmatprep.mubr.bf16.mxu0 0
      %3002 = vmatmul.mubr.bf16.gmra.mrb[0].mxu0 %v787
      %v3003 = vpop.f32.mrb[0].mxu0
      %v3004 = vadd.f32 0.0, %v3003
      %v3005 = vpop.f32.mrb[0].mxu0
      %v3006 = vadd.f32 0.0, %v3005
      %v3007 = vpop.f32.mrb[0].mxu0
      %v3008 = vadd.f32 0.0, %v3007
      %v3009 = vpop.f32.mrb[0].mxu0
      %v3010 = vadd.f32 0.0, %v3009
      %3011 = vmatprep.mubr.bf16.mxu0 0
      %3012 = vmatmul.mubr.bf16.gmra.mrb[0].mxu0 %v790
      %v3013 = vpop.f32.mrb[0].mxu0
      %v3014 = vadd.f32 0.0, %v3013
      %v3015 = vpop.f32.mrb[0].mxu0
      %v3016 = vadd.f32 0.0, %v3015
      %v3017 = vpop.f32.mrb[0].mxu0
      %v3018 = vadd.f32 0.0, %v3017
      %v3019 = vpop.f32.mrb[0].mxu0
      %v3020 = vadd.f32 0.0, %v3019
      %3021 = vmatprep.mubr.bf16.mxu0 0
      %3022 = vmatmul.mubr.bf16.gmra.mrb[0].mxu0 %v793
      %v3023 = vpop.f32.mrb[0].mxu0
      %v3024 = vadd.f32 0.0, %v3023
      %v3025 = vpop.f32.mrb[0].mxu0
      %v3026 = vadd.f32 0.0, %v3025
      %v3027 = vpop.f32.mrb[0].mxu0
      %v3028 = vadd.f32 0.0, %v3027
      %v3029 = vpop.f32.mrb[0].mxu0
      %v3030 = vadd.f32 0.0, %v3029
      %3031 = vmatprep.mubr.bf16.mxu0 0
      %3032 = vmatmul.mubr.bf16.gmra.mrb[0].mxu0 %v796
      %v3033 = vpop.f32.mrb[0].mxu0
      %v3034 = vadd.f32 0.0, %v3033
      %v3035 = vpop.f32.mrb[0].mxu0
      %v3036 = vadd.f32 0.0, %v3035
      %v3037 = vpop.f32.mrb[0].mxu0
      %v3038 = vadd.f32 0.0, %v3037
      %v3039 = vpop.f32.mrb[0].mxu0
      %v3040 = vadd.f32 0.0, %v3039
      %3041 = vmatprep.mubr.bf16.mxu0 0
      %3042 = vmatmul.mubr.bf16.gmra.mrb[0].mxu0 %v799
      %v3043 = vpop.f32.mrb[0].mxu0
      %v3044 = vadd.f32 0.0, %v3043
      %v3045 = vpop.f32.mrb[0].mxu0
      %v3046 = vadd.f32 0.0, %v3045
      %v3047 = vpop.f32.mrb[0].mxu0
      %v3048 = vadd.f32 0.0, %v3047
      %v3049 = vpop.f32.mrb[0].mxu0
      %v3050 = vadd.f32 0.0, %v3049
      %3051 = vmatprep.mubr.bf16.mxu0 0
      %3052 = vmatmul.mubr.bf16.gmra.mrb[0].mxu0 %v802
      %v3053 = vpop.f32.mrb[0].mxu0
      %v3054 = vadd.f32 0.0, %v3053
      %v3055 = vpop.f32.mrb[0].mxu0
      %v3056 = vadd.f32 0.0, %v3055
      %v3057 = vpop.f32.mrb[0].mxu0
      %v3058 = vadd.f32 0.0, %v3057
      %v3059 = vpop.f32.mrb[0].mxu0
      %v3060 = vadd.f32 0.0, %v3059
      %3061 = vmatprep.mubr.bf16.mxu0 0
      %3062 = vmatmul.mubr.bf16.gmra.mrb[0].mxu0 %v805
      %v3063 = vpop.f32.mrb[0].mxu0
      %v3064 = vadd.f32 0.0, %v3063
      %v3065 = vpop.f32.mrb[0].mxu0
      %v3066 = vadd.f32 0.0, %v3065
      %v3067 = vpop.f32.mrb[0].mxu0
      %v3068 = vadd.f32 0.0, %v3067
      %v3069 = vpop.f32.mrb[0].mxu0
      %v3070 = vadd.f32 0.0, %v3069
      %3071 = vmatprep.mubr.bf16.mxu0 0
      %3072 = vmatmul.mubr.bf16.gmra.mrb[0].mxu0 %v808
      %v3073 = vpop.f32.mrb[0].mxu0
      %v3074 = vadd.f32 0.0, %v3073
      %v3075 = vpop.f32.mrb[0].mxu0
      %v3076 = vadd.f32 0.0, %v3075
      %v3077 = vpop.f32.mrb[0].mxu0
      %v3078 = vadd.f32 0.0, %v3077
      %v3079 = vpop.f32.mrb[0].mxu0
      %v3080 = vadd.f32 0.0, %v3079
      %3081 = vmatprep.mubr.bf16.mxu0 0
      %3082 = vmatmul.mubr.bf16.gmra.mrb[0].mxu0 %v811
      %v3083 = vpop.f32.mrb[0].mxu0
      %v3084 = vadd.f32 0.0, %v3083
      %v3085 = vpop.f32.mrb[0].mxu0
      %v3086 = vadd.f32 0.0, %v3085
      %v3087 = vpop.f32.mrb[0].mxu0
      %v3088 = vadd.f32 0.0, %v3087
      %v3089 = vpop.f32.mrb[0].mxu0
      %v3090 = vadd.f32 0.0, %v3089
      %3091 = vmatprep.mubr.bf16.mxu0 0
      %3092 = vmatmul.mubr.bf16.gmra.mrb[0].mxu0 %v814
      %v3093 = vpop.f32.mrb[0].mxu0
      %v3094 = vadd.f32 0.0, %v3093
      %v3095 = vpop.f32.mrb[0].mxu0
      %v3096 = vadd.f32 0.0, %v3095
      %v3097 = vpop.f32.mrb[0].mxu0
      %v3098 = vadd.f32 0.0, %v3097
      %v3099 = vpop.f32.mrb[0].mxu0
      %v3100 = vadd.f32 0.0, %v3099
      %3101 = vmatprep.mubr.bf16.mxu0 0
      %3102 = vmatmul.mubr.bf16.gmra.mrb[0].mxu0 %v817
      %v3103 = vpop.f32.mrb[0].mxu0
      %v3104 = vadd.f32 0.0, %v3103
      %v3105 = vpop.f32.mrb[0].mxu0
      %v3106 = vadd.f32 0.0, %v3105
      %v3107 = vpop.f32.mrb[0].mxu0
      %v3108 = vadd.f32 0.0, %v3107
      %v3109 = vpop.f32.mrb[0].mxu0
      %v3110 = vadd.f32 0.0, %v3109
      %3111 = vmatprep.mubr.bf16.mxu0 0
      %3112 = vmatmul.mubr.bf16.gmra.mrb[0].mxu0 %v820
      %v3113 = vpop.f32.mrb[0].mxu0
      %v3114 = vadd.f32 0.0, %v3113
      %v3115 = vpop.f32.mrb[0].mxu0
      %v3116 = vadd.f32 0.0, %v3115
      %v3117 = vpop.f32.mrb[0].mxu0
      %v3118 = vadd.f32 0.0, %v3117
      %v3119 = vpop.f32.mrb[0].mxu0
      %v3120 = vadd.f32 0.0, %v3119
      %3121 = vmatprep.mubr.bf16.mxu0 0
      %3122 = vmatmul.mubr.bf16.gmra.mrb[0].mxu0 %v2048
      %v3123 = vpop.f32.mrb[0].mxu0
      %v3124 = vadd.f32 0.0, %v3123
      %v3125 = vpop.f32.mrb[0].mxu0
      %v3126 = vadd.f32 0.0, %v3125
      %v3127 = vpop.f32.mrb[0].mxu0
      %v3128 = vadd.f32 0.0, %v3127
      %v3129 = vpop.f32.mrb[0].mxu0
      %v3130 = vadd.f32 0.0, %v3129
      %3131 = vmatprep.mubr.bf16.mxu0 0
      %3132 = vmatmul.mubr.bf16.gmra.mrb[0].mxu0 %v820
      %v3133 = vpop.f32.mrb[0].mxu0
      %v3134 = vadd.f32 0.0, %v3133
      %v3135 = vpop.f32.mrb[0].mxu0
      %v3136 = vadd.f32 0.0, %v3135
      %v3137 = vpop.f32.mrb[0].mxu0
      %v3138 = vadd.f32 0.0, %v3137
      %v3139 = vpop.f32.mrb[0].mxu0
      %v3140 = vadd.f32 0.0, %v3139
      %3141 = vdwg.mxu0
      %v3142 = vadd.f32 %v2845, %v2984
      %v3143 = vadd.f32 %v2846, %v2986
      %v3144 = vadd.f32 %v2847, %v2988
      %v3145 = vadd.f32 %v2848, %v2990
      %v3146 = vadd.f32 %v2849, %v2994
      %v3147 = vadd.f32 %v2850, %v2996
      %v3148 = vadd.f32 %v2851, %v2998
      %v3149 = vadd.f32 %v2852, %v3000
      %v3150 = vadd.f32 %v2853, %v3004
      %v3151 = vadd.f32 %v2854, %v3006
      %v3152 = vadd.f32 %v2855, %v3008
      %v3153 = vadd.f32 %v2856, %v3010
      %v3154 = vadd.f32 %v2857, %v3014
      %v3155 = vadd.f32 %v2858, %v3016
      %v3156 = vadd.f32 %v2859, %v3018
      %v3157 = vadd.f32 %v2860, %v3020
      %v3158 = vadd.f32 %v2861, %v3024
      %v3159 = vadd.f32 %v2862, %v3026
      %v3160 = vadd.f32 %v2863, %v3028
      %v3161 = vadd.f32 %v2864, %v3030
      %v3162 = vadd.f32 %v2865, %v3034
      %v3163 = vadd.f32 %v2866, %v3036
      %v3164 = vadd.f32 %v2867, %v3038
      %v3165 = vadd.f32 %v2868, %v3040
      %v3166 = vadd.f32 %v2869, %v3044
      %v3167 = vadd.f32 %v2870, %v3046
      %v3168 = vadd.f32 %v2871, %v3048
      %v3169 = vadd.f32 %v2872, %v3050
      %v3170 = vadd.f32 %v2873, %v3054
      %v3171 = vadd.f32 %v2874, %v3056
      %v3172 = vadd.f32 %v2875, %v3058
      %v3173 = vadd.f32 %v2876, %v3060
      %v3174 = vadd.f32 %v2877, %v3064
      %v3175 = vadd.f32 %v2878, %v3066
      %v3176 = vadd.f32 %v2879, %v3068
      %v3177 = vadd.f32 %v2880, %v3070
      %v3178 = vadd.f32 %v2881, %v3074
      %v3179 = vadd.f32 %v2882, %v3076
      %v3180 = vadd.f32 %v2883, %v3078
      %v3181 = vadd.f32 %v2884, %v3080
      %v3182 = vadd.f32 %v2885, %v3084
      %v3183 = vadd.f32 %v2886, %v3086
      %v3184 = vadd.f32 %v2887, %v3088
      %v3185 = vadd.f32 %v2888, %v3090
      %v3186 = vadd.f32 %v2889, %v3094
      %v3187 = vadd.f32 %v2890, %v3096
      %v3188 = vadd.f32 %v2891, %v3098
      %v3189 = vadd.f32 %v2892, %v3100
      %v3190 = vadd.f32 %v2893, %v3104
      %v3191 = vadd.f32 %v2894, %v3106
      %v3192 = vadd.f32 %v2895, %v3108
      %v3193 = vadd.f32 %v2896, %v3110
      %v3194 = vadd.f32 %v2897, %v3114
      %v3195 = vadd.f32 %v2898, %v3116
      %v3196 = vadd.f32 %v2899, %v3118
      %v3197 = vadd.f32 %v2900, %v3120
      %v3198 = vadd.f32 %v2901, %v3124
      %v3199 = vadd.f32 %v2902, %v3126
      %v3200 = vadd.f32 %v2903, %v3128
      %v3201 = vadd.f32 %v2904, %v3130
      %v3202 = vadd.f32 %v2905, %v3134
      %v3203 = vadd.f32 %v2906, %v3136
      %v3204 = vadd.f32 %v2907, %v3138
      %v3205 = vadd.f32 %v2908, %v3140
      %v3214 = vunpack.c.l.b16 %v320
      %v3215 = vunpack.c.h.b16 %v320
      %v3216 = vunpack.c.l.b16 %v321
      %v3217 = vunpack.c.h.b16 %v321
      %v3218 = vunpack.c.l.b16 %v322
      %v3219 = vunpack.c.h.b16 %v322
      %v3220 = vunpack.c.l.b16 %v323
      %v3221 = vunpack.c.h.b16 %v323
      %v3222 = vunpack.c.l.b16 %v324
      %v3223 = vunpack.c.h.b16 %v324
      %v3224 = vunpack.c.l.b16 %v325
      %v3225 = vunpack.c.h.b16 %v325
      %v3226 = vunpack.c.l.b16 %v326
      %v3227 = vunpack.c.h.b16 %v326
      %v3228 = vunpack.c.l.b16 %v327
      %v3229 = vunpack.c.h.b16 %v327
      %v3230 = vpack.c.b16 %v3216, %v3214
      %v3231 = vpack.c.b16 %v3217, %v3215
      %v3232 = vpack.c.b16 %v3220, %v3218
      %v3233 = vpack.c.b16 %v3221, %v3219
      %v3234 = vpack.c.b16 %v3224, %v3222
      %v3235 = vpack.c.b16 %v3225, %v3223
      %v3236 = vpack.c.b16 %v3228, %v3226
      %v3237 = vpack.c.b16 %v3229, %v3227
      %3246 = vmatprep.subr.bf16.mxu0 %v3231
      %3247 = vmatpush1.bf16.msra.mxu0 %v3230
      %3248 = vmatprep.subr.bf16.mxu0 %v3233
      %3249 = vmatpush1.bf16.msra.mxu0 %v3232
      %3250 = vmatprep.subr.bf16.mxu0 %v3235
      %3251 = vmatpush1.bf16.msra.mxu0 %v3234
      %3252 = vmatprep.subr.bf16.mxu0 %v3237
      %3253 = vmatpush1.bf16.msra.mxu0 %v3236
      %3254 = vmatprep.subr.bf16.mxu0 0
      %3255 = vmatpush1.bf16.msra.mxu0 0
      %3256 = vmatprep.subr.bf16.mxu0 0
      %3257 = vmatpush1.bf16.msra.mxu0 0
      %3258 = vmatprep.subr.bf16.mxu0 0
      %3259 = vmatpush1.bf16.msra.mxu0 0
      %3260 = vmatprep.subr.bf16.mxu0 0
      %3261 = vmatpush1.bf16.msra.mxu0 0
      %3262 = vmatprep.subr.bf16.mxu0 0
      %3263 = vmatpush1.bf16.msra.mxu0 0
      %3264 = vmatprep.subr.bf16.mxu0 0
      %3265 = vmatpush1.bf16.msra.mxu0 0
      %3266 = vmatprep.subr.bf16.mxu0 0
      %3267 = vmatpush1.bf16.msra.mxu0 0
      %3268 = vmatprep.subr.bf16.mxu0 0
      %3269 = vmatpush1.bf16.msra.mxu0 0
      %3270 = vmatprep.subr.bf16.mxu0 0
      %3271 = vmatpush1.bf16.msra.mxu0 0
      %3272 = vmatprep.subr.bf16.mxu0 0
      %3273 = vmatpush1.bf16.msra.mxu0 0
      %3274 = vmatprep.subr.bf16.mxu0 0
      %3275 = vmatpush1.bf16.msra.mxu0 0
      %3276 = vmatprep.subr.bf16.mxu0 0
      %3277 = vmatpush1.bf16.msra.mxu0 0
      %3278 = vmatprep.mubr.bf16.mxu0 0
      %3279 = vmatmul.mubr.bf16.gmra.mrb[0].mxu0 %v1395
      %v3280 = vpop.f32.mrb[0].mxu0
      %v3281 = vadd.f32 0.0, %v3280
      %v3282 = vpop.f32.mrb[0].mxu0
      %v3283 = vadd.f32 0.0, %v3282
      %v3284 = vpop.f32.mrb[0].mxu0
      %v3285 = vadd.f32 0.0, %v3284
      %v3286 = vpop.f32.mrb[0].mxu0
      %v3287 = vadd.f32 0.0, %v3286
      %3288 = vmatprep.mubr.bf16.mxu0 0
      %3289 = vmatmul.mubr.bf16.gmra.mrb[0].mxu0 %v1401
      %v3290 = vpop.f32.mrb[0].mxu0
      %v3291 = vadd.f32 0.0, %v3290
      %v3292 = vpop.f32.mrb[0].mxu0
      %v3293 = vadd.f32 0.0, %v3292
      %v3294 = vpop.f32.mrb[0].mxu0
      %v3295 = vadd.f32 0.0, %v3294
      %v3296 = vpop.f32.mrb[0].mxu0
      %v3297 = vadd.f32 0.0, %v3296
      %3298 = vmatprep.mubr.bf16.mxu0 0
      %3299 = vmatmul.mubr.bf16.gmra.mrb[0].mxu0 %v1404
      %v3300 = vpop.f32.mrb[0].mxu0
      %v3301 = vadd.f32 0.0, %v3300
      %v3302 = vpop.f32.mrb[0].mxu0
      %v3303 = vadd.f32 0.0, %v3302
      %v3304 = vpop.f32.mrb[0].mxu0
      %v3305 = vadd.f32 0.0, %v3304
      %v3306 = vpop.f32.mrb[0].mxu0
      %v3307 = vadd.f32 0.0, %v3306
      %3308 = vmatprep.mubr.bf16.mxu0 0
      %3309 = vmatmul.mubr.bf16.gmra.mrb[0].mxu0 %v1407
      %v3310 = vpop.f32.mrb[0].mxu0
      %v3311 = vadd.f32 0.0, %v3310
      %v3312 = vpop.f32.mrb[0].mxu0
      %v3313 = vadd.f32 0.0, %v3312
      %v3314 = vpop.f32.mrb[0].mxu0
      %v3315 = vadd.f32 0.0, %v3314
      %v3316 = vpop.f32.mrb[0].mxu0
      %v3317 = vadd.f32 0.0, %v3316
      %3318 = vmatprep.mubr.bf16.mxu0 0
      %3319 = vmatmul.mubr.bf16.gmra.mrb[0].mxu0 %v1410
      %v3320 = vpop.f32.mrb[0].mxu0
      %v3321 = vadd.f32 0.0, %v3320
      %v3322 = vpop.f32.mrb[0].mxu0
      %v3323 = vadd.f32 0.0, %v3322
      %v3324 = vpop.f32.mrb[0].mxu0
      %v3325 = vadd.f32 0.0, %v3324
      %v3326 = vpop.f32.mrb[0].mxu0
      %v3327 = vadd.f32 0.0, %v3326
      %3328 = vmatprep.mubr.bf16.mxu0 0
      %3329 = vmatmul.mubr.bf16.gmra.mrb[0].mxu0 %v1413
      %v3330 = vpop.f32.mrb[0].mxu0
      %v3331 = vadd.f32 0.0, %v3330
      %v3332 = vpop.f32.mrb[0].mxu0
      %v3333 = vadd.f32 0.0, %v3332
      %v3334 = vpop.f32.mrb[0].mxu0
      %v3335 = vadd.f32 0.0, %v3334
      %v3336 = vpop.f32.mrb[0].mxu0
      %v3337 = vadd.f32 0.0, %v3336
      %3338 = vmatprep.mubr.bf16.mxu0 0
      %3339 = vmatmul.mubr.bf16.gmra.mrb[0].mxu0 %v1416
      %v3340 = vpop.f32.mrb[0].mxu0
      %v3341 = vadd.f32 0.0, %v3340
      %v3342 = vpop.f32.mrb[0].mxu0
      %v3343 = vadd.f32 0.0, %v3342
      %v3344 = vpop.f32.mrb[0].mxu0
      %v3345 = vadd.f32 0.0, %v3344
      %v3346 = vpop.f32.mrb[0].mxu0
      %v3347 = vadd.f32 0.0, %v3346
      %3348 = vmatprep.mubr.bf16.mxu0 0
      %3349 = vmatmul.mubr.bf16.gmra.mrb[0].mxu0 %v1419
      %v3350 = vpop.f32.mrb[0].mxu0
      %v3351 = vadd.f32 0.0, %v3350
      %v3352 = vpop.f32.mrb[0].mxu0
      %v3353 = vadd.f32 0.0, %v3352
      %v3354 = vpop.f32.mrb[0].mxu0
      %v3355 = vadd.f32 0.0, %v3354
      %v3356 = vpop.f32.mrb[0].mxu0
      %v3357 = vadd.f32 0.0, %v3356
      %3358 = vmatprep.mubr.bf16.mxu0 0
      %3359 = vmatmul.mubr.bf16.gmra.mrb[0].mxu0 %v1422
      %v3360 = vpop.f32.mrb[0].mxu0
      %v3361 = vadd.f32 0.0, %v3360
      %v3362 = vpop.f32.mrb[0].mxu0
      %v3363 = vadd.f32 0.0, %v3362
      %v3364 = vpop.f32.mrb[0].mxu0
      %v3365 = vadd.f32 0.0, %v3364
      %v3366 = vpop.f32.mrb[0].mxu0
      %v3367 = vadd.f32 0.0, %v3366
      %3368 = vmatprep.mubr.bf16.mxu0 0
      %3369 = vmatmul.mubr.bf16.gmra.mrb[0].mxu0 %v1425
      %v3370 = vpop.f32.mrb[0].mxu0
      %v3371 = vadd.f32 0.0, %v3370
      %v3372 = vpop.f32.mrb[0].mxu0
      %v3373 = vadd.f32 0.0, %v3372
      %v3374 = vpop.f32.mrb[0].mxu0
      %v3375 = vadd.f32 0.0, %v3374
      %v3376 = vpop.f32.mrb[0].mxu0
      %v3377 = vadd.f32 0.0, %v3376
      %3378 = vmatprep.mubr.bf16.mxu0 0
      %3379 = vmatmul.mubr.bf16.gmra.mrb[0].mxu0 %v1428
      %v3380 = vpop.f32.mrb[0].mxu0
      %v3381 = vadd.f32 0.0, %v3380
      %v3382 = vpop.f32.mrb[0].mxu0
      %v3383 = vadd.f32 0.0, %v3382
      %v3384 = vpop.f32.mrb[0].mxu0
      %v3385 = vadd.f32 0.0, %v3384
      %v3386 = vpop.f32.mrb[0].mxu0
      %v3387 = vadd.f32 0.0, %v3386
      %3388 = vmatprep.mubr.bf16.mxu0 0
      %3389 = vmatmul.mubr.bf16.gmra.mrb[0].mxu0 %v1431
      %v3390 = vpop.f32.mrb[0].mxu0
      %v3391 = vadd.f32 0.0, %v3390
      %v3392 = vpop.f32.mrb[0].mxu0
      %v3393 = vadd.f32 0.0, %v3392
      %v3394 = vpop.f32.mrb[0].mxu0
      %v3395 = vadd.f32 0.0, %v3394
      %v3396 = vpop.f32.mrb[0].mxu0
      %v3397 = vadd.f32 0.0, %v3396
      %3398 = vmatprep.mubr.bf16.mxu0 0
      %3399 = vmatmul.mubr.bf16.gmra.mrb[0].mxu0 %v1434
      %v3400 = vpop.f32.mrb[0].mxu0
      %v3401 = vadd.f32 0.0, %v3400
      %v3402 = vpop.f32.mrb[0].mxu0
      %v3403 = vadd.f32 0.0, %v3402
      %v3404 = vpop.f32.mrb[0].mxu0
      %v3405 = vadd.f32 0.0, %v3404
      %v3406 = vpop.f32.mrb[0].mxu0
      %v3407 = vadd.f32 0.0, %v3406
      %3408 = vmatprep.mubr.bf16.mxu0 0
      %3409 = vmatmul.mubr.bf16.gmra.mrb[0].mxu0 %v1437
      %v3410 = vpop.f32.mrb[0].mxu0
      %v3411 = vadd.f32 0.0, %v3410
      %v3412 = vpop.f32.mrb[0].mxu0
      %v3413 = vadd.f32 0.0, %v3412
      %v3414 = vpop.f32.mrb[0].mxu0
      %v3415 = vadd.f32 0.0, %v3414
      %v3416 = vpop.f32.mrb[0].mxu0
      %v3417 = vadd.f32 0.0, %v3416
      %3418 = vmatprep.mubr.bf16.mxu0 0
      %3419 = vmatmul.mubr.bf16.gmra.mrb[0].mxu0 %v2353
      %v3420 = vpop.f32.mrb[0].mxu0
      %v3421 = vadd.f32 0.0, %v3420
      %v3422 = vpop.f32.mrb[0].mxu0
      %v3423 = vadd.f32 0.0, %v3422
      %v3424 = vpop.f32.mrb[0].mxu0
      %v3425 = vadd.f32 0.0, %v3424
      %v3426 = vpop.f32.mrb[0].mxu0
      %v3427 = vadd.f32 0.0, %v3426
      %3428 = vmatprep.mubr.bf16.mxu0 0
      %3429 = vmatmul.mubr.bf16.gmra.mrb[0].mxu0 %v1437
      %v3430 = vpop.f32.mrb[0].mxu0
      %v3431 = vadd.f32 0.0, %v3430
      %v3432 = vpop.f32.mrb[0].mxu0
      %v3433 = vadd.f32 0.0, %v3432
      %v3434 = vpop.f32.mrb[0].mxu0
      %v3435 = vadd.f32 0.0, %v3434
      %v3436 = vpop.f32.mrb[0].mxu0
      %v3437 = vadd.f32 0.0, %v3436
      %3438 = vdwg.mxu0
      %v3439 = vadd.f32 %v3142, %v3281
      %v3440 = vadd.f32 %v3143, %v3283
      %v3441 = vadd.f32 %v3144, %v3285
      %v3442 = vadd.f32 %v3145, %v3287
      %v3443 = vadd.f32 %v3146, %v3291
      %v3444 = vadd.f32 %v3147, %v3293
      %v3445 = vadd.f32 %v3148, %v3295
      %v3446 = vadd.f32 %v3149, %v3297
      %v3447 = vadd.f32 %v3150, %v3301
      %v3448 = vadd.f32 %v3151, %v3303
      %v3449 = vadd.f32 %v3152, %v3305
      %v3450 = vadd.f32 %v3153, %v3307
      %v3451 = vadd.f32 %v3154, %v3311
      %v3452 = vadd.f32 %v3155, %v3313
      %v3453 = vadd.f32 %v3156, %v3315
      %v3454 = vadd.f32 %v3157, %v3317
      %v3455 = vadd.f32 %v3158, %v3321
      %v3456 = vadd.f32 %v3159, %v3323
      %v3457 = vadd.f32 %v3160, %v3325
      %v3458 = vadd.f32 %v3161, %v3327
      %v3459 = vadd.f32 %v3162, %v3331
      %v3460 = vadd.f32 %v3163, %v3333
      %v3461 = vadd.f32 %v3164, %v3335
      %v3462 = vadd.f32 %v3165, %v3337
      %v3463 = vadd.f32 %v3166, %v3341
      %v3464 = vadd.f32 %v3167, %v3343
      %v3465 = vadd.f32 %v3168, %v3345
      %v3466 = vadd.f32 %v3169, %v3347
      %v3467 = vadd.f32 %v3170, %v3351
      %v3468 = vadd.f32 %v3171, %v3353
      %v3469 = vadd.f32 %v3172, %v3355
      %v3470 = vadd.f32 %v3173, %v3357
      %v3471 = vadd.f32 %v3174, %v3361
      %v3472 = vadd.f32 %v3175, %v3363
      %v3473 = vadd.f32 %v3176, %v3365
      %v3474 = vadd.f32 %v3177, %v3367
      %v3475 = vadd.f32 %v3178, %v3371
      %v3476 = vadd.f32 %v3179, %v3373
      %v3477 = vadd.f32 %v3180, %v3375
      %v3478 = vadd.f32 %v3181, %v3377
      %v3479 = vadd.f32 %v3182, %v3381
      %v3480 = vadd.f32 %v3183, %v3383
      %v3481 = vadd.f32 %v3184, %v3385
      %v3482 = vadd.f32 %v3185, %v3387
      %v3483 = vadd.f32 %v3186, %v3391
      %v3484 = vadd.f32 %v3187, %v3393
      %v3485 = vadd.f32 %v3188, %v3395
      %v3486 = vadd.f32 %v3189, %v3397
      %v3487 = vadd.f32 %v3190, %v3401
      %v3488 = vadd.f32 %v3191, %v3403
      %v3489 = vadd.f32 %v3192, %v3405
      %v3490 = vadd.f32 %v3193, %v3407
      %v3491 = vadd.f32 %v3194, %v3411
      %v3492 = vadd.f32 %v3195, %v3413
      %v3493 = vadd.f32 %v3196, %v3415
      %v3494 = vadd.f32 %v3197, %v3417
      %v3495 = vadd.f32 %v3198, %v3421
      %v3496 = vadd.f32 %v3199, %v3423
      %v3497 = vadd.f32 %v3200, %v3425
      %v3498 = vadd.f32 %v3201, %v3427
      %v3499 = vadd.f32 %v3202, %v3431
      %v3500 = vadd.f32 %v3203, %v3433
      %v3501 = vadd.f32 %v3204, %v3435
      %v3502 = vadd.f32 %v3205, %v3437
      %v3503 = vld [vmem:[%s2] sm:$0x3]
      %v3505 = vlaneseq
      %v3506 = vshrl.u32 %v3505, 7
      %v3507 = vsub.s32 0, %v3506
      %v3508 = vrot.slane %v3503, %v3507
      %v3509 = vlaneseq
      %v3510 = vshrl.u32 %v3509, 7
      %v3511 = vsub.s32 1, %v3510
      %v3512 = vrot.slane %v3503, %v3511
      %v3515 = vadd.f32 %v3439, %v3508
      %v3516 = vadd.f32 %v3440, %v3512
      %v3517 = vadd.f32 %v3441, %v3508
      %v3518 = vadd.f32 %v3442, %v3512
      %v3519 = vadd.f32 %v3443, %v3508
      %v3520 = vadd.f32 %v3444, %v3512
      %v3521 = vadd.f32 %v3445, %v3508
      %v3522 = vadd.f32 %v3446, %v3512
      %v3523 = vadd.f32 %v3447, %v3508
      %v3524 = vadd.f32 %v3448, %v3512
      %v3525 = vadd.f32 %v3449, %v3508
      %v3526 = vadd.f32 %v3450, %v3512
      %v3527 = vadd.f32 %v3451, %v3508
      %v3528 = vadd.f32 %v3452, %v3512
      %v3529 = vadd.f32 %v3453, %v3508
      %v3530 = vadd.f32 %v3454, %v3512
      %v3531 = vadd.f32 %v3455, %v3508
      %v3532 = vadd.f32 %v3456, %v3512
      %v3533 = vadd.f32 %v3457, %v3508
      %v3534 = vadd.f32 %v3458, %v3512
      %v3535 = vadd.f32 %v3459, %v3508
      %v3536 = vadd.f32 %v3460, %v3512
      %v3537 = vadd.f32 %v3461, %v3508
      %v3538 = vadd.f32 %v3462, %v3512
      %v3539 = vadd.f32 %v3463, %v3508
      %v3540 = vadd.f32 %v3464, %v3512
      %v3541 = vadd.f32 %v3465, %v3508
      %v3542 = vadd.f32 %v3466, %v3512
      %v3543 = vadd.f32 %v3467, %v3508
      %v3544 = vadd.f32 %v3468, %v3512
      %v3545 = vadd.f32 %v3469, %v3508
      %v3546 = vadd.f32 %v3470, %v3512
      %v3547 = vadd.f32 %v3471, %v3508
      %v3548 = vadd.f32 %v3472, %v3512
      %v3549 = vadd.f32 %v3473, %v3508
      %v3550 = vadd.f32 %v3474, %v3512
      %v3551 = vadd.f32 %v3475, %v3508
      %v3552 = vadd.f32 %v3476, %v3512
      %v3553 = vadd.f32 %v3477, %v3508
      %v3554 = vadd.f32 %v3478, %v3512
      %v3555 = vadd.f32 %v3479, %v3508
      %v3556 = vadd.f32 %v3480, %v3512
      %v3557 = vadd.f32 %v3481, %v3508
      %v3558 = vadd.f32 %v3482, %v3512
      %v3559 = vadd.f32 %v3483, %v3508
      %v3560 = vadd.f32 %v3484, %v3512
      %v3561 = vadd.f32 %v3485, %v3508
      %v3562 = vadd.f32 %v3486, %v3512
      %v3563 = vadd.f32 %v3487, %v3508
      %v3564 = vadd.f32 %v3488, %v3512
      %v3565 = vadd.f32 %v3489, %v3508
      %v3566 = vadd.f32 %v3490, %v3512
      %v3567 = vadd.f32 %v3491, %v3508
      %v3568 = vadd.f32 %v3492, %v3512
      %v3569 = vadd.f32 %v3493, %v3508
      %v3570 = vadd.f32 %v3494, %v3512
      %v3571 = vadd.f32 %v3495, %v3508
      %v3572 = vadd.f32 %v3496, %v3512
      %v3573 = vadd.f32 %v3497, %v3508
      %v3574 = vadd.f32 %v3498, %v3512
      %v3575 = vadd.f32 %v3499, %v3508
      %v3576 = vadd.f32 %v3500, %v3512
      %v3577 = vadd.f32 %v3501, %v3508
      %v3578 = vadd.f32 %v3502, %v3512
      %3579 = vst [vmem:[%s206] sm:$0xff] %v3515
      %3580 = vst.msk [vmem:[%s206 + $0x8] sm:$0xff] %vm776, %v3516
      %3581 = vst [vmem:[%s206 + $0x10] sm:$0xff] %v3517
      %3582 = vst.msk [vmem:[%s206 + $0x18] sm:$0xff] %vm776, %v3518
      %3583 = vst [vmem:[%s206 + $0x20] sm:$0xff] %v3519
      %3584 = vst.msk [vmem:[%s206 + $0x28] sm:$0xff] %vm776, %v3520
      %3585 = vst [vmem:[%s206 + $0x30] sm:$0xff] %v3521
      %3586 = vst.msk [vmem:[%s206 + $0x38] sm:$0xff] %vm776, %v3522
      %3587 = vst [vmem:[%s206 + $0x40] sm:$0xff] %v3523
      %3588 = vst.msk [vmem:[%s206 + $0x48] sm:$0xff] %vm776, %v3524
      %3589 = vst [vmem:[%s206 + $0x50] sm:$0xff] %v3525
      %3590 = vst.msk [vmem:[%s206 + $0x58] sm:$0xff] %vm776, %v3526
      %3591 = vst [vmem:[%s206 + $0x60] sm:$0xff] %v3527
      %3592 = vst.msk [vmem:[%s206 + $0x68] sm:$0xff] %vm776, %v3528
      %3593 = vst [vmem:[%s206 + $0x70] sm:$0xff] %v3529
      %3594 = vst.msk [vmem:[%s206 + $0x78] sm:$0xff] %vm776, %v3530
      %3595 = vst [vmem:[%s206 + $0x80] sm:$0xff] %v3531
      %3596 = vst.msk [vmem:[%s206 + $0x88] sm:$0xff] %vm776, %v3532
      %3597 = vst [vmem:[%s206 + $0x90] sm:$0xff] %v3533
      %3598 = vst.msk [vmem:[%s206 + $0x98] sm:$0xff] %vm776, %v3534
      %3599 = vst [vmem:[%s206 + $0xa0] sm:$0xff] %v3535
      %3600 = vst.msk [vmem:[%s206 + $0xa8] sm:$0xff] %vm776, %v3536
      %3601 = vst [vmem:[%s206 + $0xb0] sm:$0xff] %v3537
      %3602 = vst.msk [vmem:[%s206 + $0xb8] sm:$0xff] %vm776, %v3538
      %3603 = vst [vmem:[%s206 + $0xc0] sm:$0xff] %v3539
      %3604 = vst.msk [vmem:[%s206 + $0xc8] sm:$0xff] %vm776, %v3540
      %3605 = vst [vmem:[%s206 + $0xd0] sm:$0xff] %v3541
      %3606 = vst.msk [vmem:[%s206 + $0xd8] sm:$0xff] %vm776, %v3542
      %3607 = vst [vmem:[%s206 + $0xe0] sm:$0xff] %v3543
      %3608 = vst.msk [vmem:[%s206 + $0xe8] sm:$0xff] %vm776, %v3544
      %3609 = vst [vmem:[%s206 + $0xf0] sm:$0xff] %v3545
      %3610 = vst.msk [vmem:[%s206 + $0xf8] sm:$0xff] %vm776, %v3546
      %3611 = vst [vmem:[%s206 + $0x100] sm:$0xff] %v3547
      %3612 = vst.msk [vmem:[%s206 + $0x108] sm:$0xff] %vm776, %v3548
      %3613 = vst [vmem:[%s206 + $0x110] sm:$0xff] %v3549
      %3614 = vst.msk [vmem:[%s206 + $0x118] sm:$0xff] %vm776, %v3550
      %3615 = vst [vmem:[%s206 + $0x120] sm:$0xff] %v3551
      %3616 = vst.msk [vmem:[%s206 + $0x128] sm:$0xff] %vm776, %v3552
      %3617 = vst [vmem:[%s206 + $0x130] sm:$0xff] %v3553
      %3618 = vst.msk [vmem:[%s206 + $0x138] sm:$0xff] %vm776, %v3554
      %3619 = vst [vmem:[%s206 + $0x140] sm:$0xff] %v3555
      %3620 = vst.msk [vmem:[%s206 + $0x148] sm:$0xff] %vm776, %v3556
      %3621 = vst [vmem:[%s206 + $0x150] sm:$0xff] %v3557
      %3622 = vst.msk [vmem:[%s206 + $0x158] sm:$0xff] %vm776, %v3558
      %3623 = vst [vmem:[%s206 + $0x160] sm:$0xff] %v3559
      %3624 = vst.msk [vmem:[%s206 + $0x168] sm:$0xff] %vm776, %v3560
      %3625 = vst [vmem:[%s206 + $0x170] sm:$0xff] %v3561
      %3626 = vst.msk [vmem:[%s206 + $0x178] sm:$0xff] %vm776, %v3562
      %3627 = vst [vmem:[%s206 + $0x180] sm:$0xff] %v3563
      %3628 = vst.msk [vmem:[%s206 + $0x188] sm:$0xff] %vm776, %v3564
      %3629 = vst [vmem:[%s206 + $0x190] sm:$0xff] %v3565
      %3630 = vst.msk [vmem:[%s206 + $0x198] sm:$0xff] %vm776, %v3566
      %3631 = vst [vmem:[%s206 + $0x1a0] sm:$0xff] %v3567
      %3632 = vst.msk [vmem:[%s206 + $0x1a8] sm:$0xff] %vm776, %v3568
      %3633 = vst [vmem:[%s206 + $0x1b0] sm:$0xff] %v3569
      %3634 = vst.msk [vmem:[%s206 + $0x1b8] sm:$0xff] %vm776, %v3570
      %3635 = vst [vmem:[%s206 + $0x1c0] sm:$0xff] %v3571
      %3636 = vst.msk [vmem:[%s206 + $0x1c8] sm:$0xff] %vm776, %v3572
      %3637 = vst [vmem:[%s206 + $0x1d0] sm:$0xff] %v3573
      %3638 = vst.msk [vmem:[%s206 + $0x1d8] sm:$0xff] %vm776, %v3574
      %3639 = vst [vmem:[%s206 + $0x1e0] sm:$0xff] %v3575
      %3640 = vst.msk [vmem:[%s206 + $0x1e8] sm:$0xff] %vm776, %v3576
      %3641 = vst [vmem:[%s206 + $0x1f0] sm:$0xff] %v3577
      %3642 = vst.msk [vmem:[%s206 + $0x1f8] sm:$0xff] %vm776, %v3578
      %p3643 = scmp.lt.s32.totalorder %s18, 1
      %s3644 = scalar_select %p3643, %s18, 1
      %p3645 = scmp.lt.s32.totalorder %s19, 2
      %s3646 = scalar_select %p3645, %s19, 2
      %s3647 = smul.addr %s3646, 64
      %s3648 = smul.addr %s3644, 192
      %s3649 = sadd.s32 %s3647, %s3648
      %s3650 = smul.addr %s3649, 8
      %s3651 = scalar_lea.vmem %s3, %s3650
      // Predicated region
      $region33: #{gen_gate_gru.2} parent=31 // pred_check
        %p3652 = pneg %p116
      $region34: #{gen_gate_gru.2} parent=31 // pred_check_branch
        %3654 = sbr.rel (%p3652) target = $region36
      $region35: #{gen_gate_gru.2} parent=31 // pred_region
        _
      $region36: #{gen_gate_gru.2} parent=31 // pred_fallthru
        _
    $region32: #{gen_gate_gru.2} parent=5 // pred_fallthru
      _
    %p3655 = scmp.le.s32.totalorder 2, %s9
    // Predicated region
    $region37: #{gen_gate_gru.2} parent=5 // pred_check
      %p3656 = pneg %p3655
    $region38: #{gen_gate_gru.2} parent=5 // pred_check_branch
      %3658 = sbr.rel (%p3656) target = $region40
    $region39: #{gen_gate_gru.2} parent=5 // pred_region
      %s3659 = ssub.s32 %s9, 2
      // Predicated region
      $region41: #{gen_gate_gru.2} parent=39 // pred_check
        %p3660 = pneg %p122
      $region42: #{gen_gate_gru.2} parent=39 // pred_check_branch
        %3662 = sbr.rel (%p3660) target = $region44
      $region43: #{gen_gate_gru.2} parent=39 // pred_region
        %p3663 = scmp.lt.s32.totalorder %s20, 1
        %s3664 = scalar_select %p3663, %s20, 1
        %p3665 = scmp.lt.s32.totalorder %s21, 2
        %s3666 = scalar_select %p3665, %s21, 2
        %s3667 = smul.addr %s3666, 64
        %s3668 = smul.addr %s3664, 192
        %s3669 = sadd.s32 %s3667, %s3668
        %s3670 = smul.addr %s3669, 8
        %s3671 = scalar_lea.vmem %s3, %s3670
      $region44: #{gen_gate_gru.2} parent=39 // pred_fallthru
        _
    $region40: #{gen_gate_gru.2} parent=5 // pred_fallthru
      _
  $region6: #{gen_gate_gru.2} parent=0 // loop_footer
    %s13 = sadd.s32 1, %s9
  $region7: #{gen_gate_gru.2} parent=0 // loop_footer_branch
    %8 = sbr.rel target = $region3
  $region8: #{gen_gate_gru.2} parent=0 // loop_exit
    _

// kernel: gen_gate_gru.3
$region0: #{gen_gate_gru.3}
  #allocation0 [shape = 'u32[]', space=smem, size = 0x4, offset = 0x4, fixed_abs, tag = 'smem constant byte address 0x4 - core index']
  #allocation1 [shape = 'u32[144,128]{1,0:T(1,128)}', space=vmem, size = 0x12000, scoped, tag = 'internal scratch']
  #allocation2 [shape = 'f32[16,16,64]{2,1,0:T(8,128)}', space=vmem, size = 0x20000, scoped, tag = 'scratch operand']
  %s0 = inlined_call_operand.vmem [shape: f32[2,3,256,192], index: 0, kind: input, shape index: {}]
  %s1 = inlined_call_operand.vmem [shape: f32[2,16,16,64], index: 1, kind: input, shape index: {}]
  %s2 = inlined_call_operand.vmem [shape: bf16[3,3,64,128], index: 2, kind: input, shape index: {}]
  %s3 = inlined_call_operand.vmem [shape: bf16[3,3,64,64], index: 3, kind: input, shape index: {}]
  %s4 = inlined_call_operand.hbm [shape: f32[2,3,256,64], index: 4, kind: output, shape index: {}]
  %s5 = sld [smem:[#allocation0]]
  $region53: #{gen_gate_gru.3} parent=0
    _
  %s7 = ssub.s32 1, %s5
  %s8 = scalar_select 0, %s7, %s5
  $region1: #{gen_gate_gru.3} parent=0
    #allocation3 [shape = 'u8[262144]{0}', space=vmem, size = 0x40000, scoped, tag = 'output window, operand 0']
    #allocation4 [shape = 's32[2]{0}', space=sflag, size = 0x8, scoped, tag = 'scoped memory for gen_gate_gru.3']
    %9 = vsyncpa [#allocation4], 0
    %s10 = scalar_lea.sflag [#allocation4], 1
    %11 = vsyncpa %s10, 0
    loop: start=0, step=1, limit=8
    $region2: #{gen_gate_gru.3} parent=1 // loop_pre_header
      _
    $region3: #{gen_gate_gru.3} parent=1 // loop_header
      %s13 = sphi 0, %s17
      %p14 = scmp.ge.s32.totalorder %s13, 8
      %s20 = sphi 0, %s32
      %s21 = sphi 0, %s28
      %s22 = sphi 0, %s20
      %s23 = sphi 0, %s21
      %s24 = sphi 0, %s22
      %s25 = sphi 0, %s23
      %s37 = sphi 0, %s39
      %s40 = sphi 0, %s37
      %s41 = sphi 0, %s40
      %s57 = sphi 0, %s41
      %s63 = sphi 0, %s65
      %s66 = sphi 0, %s63
      %s67 = sphi 0, %s66
      %s83 = sphi 0, %s67
      %s87 = sphi 0, %s87
      %s89 = sphi 0, %s87
      %s90 = sphi 0, %s89
      %s104 = sphi 0, %s90
      %s108 = sphi 0, %s108
      %s110 = sphi 0, %s108
      %s111 = sphi 0, %s110
      %s125 = sphi 0, %s111
      %s133 = sphi 0, %s135
      %s136 = sphi 0, %s133
      %s137 = sphi 0, %s136
      %s153 = sphi 0, %s137
    $region4: #{gen_gate_gru.3} parent=1 // loop_header_branch
      %16 = sbr.rel (%p14) target = $region8
    $region5: #{gen_gate_gru.3} parent=1 // loop_body
      %s18 = ssub.s32 %s13, 1
      %s19 = ssub.s32 %s13, 2
      %s26 = sadd.s32 1, %s21
      %p27 = scmp.ge.s32.totalorder %s26, 3
      %s28 = scalar_select %p27, 0, %s26
      %s29 = sadd.s32 1, %s20
      %s30 = scalar_select %p27, %s29, %s20
      %p31 = scmp.ge.s32.totalorder %s30, 2
      %s32 = scalar_select %p31, 0, %s30
      %s33 = ssub.s32 %s20, %s32
      %s34 = ssub.s32 %s21, %s28
      %s35 = sor.u32 %s33, %s34
      %p36 = scmp.eq.s32.totalorder %s35, 0
      %s38 = sadd.s32 %s37, 1
      %s39 = scalar_select %p36, %s37, %s38
      %p42 = pneg %p36
      %p43 = scmp.eq.s32.totalorder %s13, 5
      %p44 = por %p42, %p43
      %p45 = scmp.ne.s32.totalorder %s37, %s40
      %p46 = scmp.eq.s32.totalorder %s13, 0
      %p47 = por %p45, %p46
      %p48 = scmp.ne.s32.totalorder %s37, %s40
      %p49 = scmp.eq.s32.totalorder %s18, 5
      %p50 = por %p48, %p49
      %p51 = scmp.ne.s32.totalorder %s40, %s41
      %p52 = scmp.eq.s32.totalorder %s18, 0
      %p53 = por %p51, %p52
      %p54 = scmp.ne.s32.totalorder %s40, %s41
      %p55 = scmp.eq.s32.totalorder %s19, 5
      %p56 = por %p54, %p55
      %p58 = scmp.ne.s32.totalorder %s41, %s57
      %p59 = scmp.eq.s32.totalorder %s19, 0
      %p60 = por %p58, %p59
      %s61 = ssub.s32 %s20, %s32
      %p62 = scmp.eq.s32.totalorder %s61, 0
      %s64 = sadd.s32 %s63, 1
      %s65 = scalar_select %p62, %s63, %s64
      %p68 = pneg %p62
      %p69 = scmp.eq.s32.totalorder %s13, 5
      %p70 = por %p68, %p69
      %p71 = scmp.ne.s32.totalorder %s63, %s66
      %p72 = scmp.eq.s32.totalorder %s13, 0
      %p73 = por %p71, %p72
      %p74 = scmp.ne.s32.totalorder %s63, %s66
      %p75 = scmp.eq.s32.totalorder %s18, 5
      %p76 = por %p74, %p75
      %p77 = scmp.ne.s32.totalorder %s66, %s67
      %p78 = scmp.eq.s32.totalorder %s18, 0
      %p79 = por %p77, %p78
      %p80 = scmp.ne.s32.totalorder %s66, %s67
      %p81 = scmp.eq.s32.totalorder %s19, 5
      %p82 = por %p80, %p81
      %p84 = scmp.ne.s32.totalorder %s67, %s83
      %p85 = scmp.eq.s32.totalorder %s19, 0
      %p86 = por %p84, %p85
      %s88 = sadd.s32 %s87, 1
      %p91 = scmp.eq.s32.totalorder %s13, 5
      %p92 = scmp.ne.s32.totalorder %s87, %s89
      %p93 = scmp.eq.s32.totalorder %s13, 0
      %p94 = por %p92, %p93
      %p95 = scmp.ne.s32.totalorder %s87, %s89
      %p96 = scmp.eq.s32.totalorder %s18, 5
      %p97 = por %p95, %p96
      %p98 = scmp.ne.s32.totalorder %s89, %s90
      %p99 = scmp.eq.s32.totalorder %s18, 0
      %p100 = por %p98, %p99
      %p101 = scmp.ne.s32.totalorder %s89, %s90
      %p102 = scmp.eq.s32.totalorder %s19, 5
      %p103 = por %p101, %p102
      %p105 = scmp.ne.s32.totalorder %s90, %s104
      %p106 = scmp.eq.s32.totalorder %s19, 0
      %p107 = por %p105, %p106
      %s109 = sadd.s32 %s108, 1
      %p112 = scmp.eq.s32.totalorder %s13, 5
      %p113 = scmp.ne.s32.totalorder %s108, %s110
      %p114 = scmp.eq.s32.totalorder %s13, 0
      %p115 = por %p113, %p114
      %p116 = scmp.ne.s32.totalorder %s108, %s110
      %p117 = scmp.eq.s32.totalorder %s18, 5
      %p118 = por %p116, %p117
      %p119 = scmp.ne.s32.totalorder %s110, %s111
      %p120 = scmp.eq.s32.totalorder %s18, 0
      %p121 = por %p119, %p120
      %p122 = scmp.ne.s32.totalorder %s110, %s111
      %p123 = scmp.eq.s32.totalorder %s19, 5
      %p124 = por %p122, %p123
      %p126 = scmp.ne.s32.totalorder %s111, %s125
      %p127 = scmp.eq.s32.totalorder %s19, 0
      %p128 = por %p126, %p127
      %s129 = ssub.s32 %s20, %s32
      %s130 = ssub.s32 %s21, %s28
      %s131 = sor.u32 %s129, %s130
      %p132 = scmp.eq.s32.totalorder %s131, 0
      %s134 = sadd.s32 %s133, 1
      %s135 = scalar_select %p132, %s133, %s134
      %p138 = pneg %p132
      %p139 = scmp.eq.s32.totalorder %s13, 5
      %p140 = por %p138, %p139
      %p141 = scmp.ne.s32.totalorder %s133, %s136
      %p142 = scmp.eq.s32.totalorder %s13, 0
      %p143 = por %p141, %p142
      %p144 = scmp.ne.s32.totalorder %s133, %s136
      %p145 = scmp.eq.s32.totalorder %s18, 5
      %p146 = por %p144, %p145
      %p147 = scmp.ne.s32.totalorder %s136, %s137
      %p148 = scmp.eq.s32.totalorder %s18, 0
      %p149 = por %p147, %p148
      %p150 = scmp.ne.s32.totalorder %s136, %s137
      %p151 = scmp.eq.s32.totalorder %s19, 5
      %p152 = por %p150, %p151
      %p154 = scmp.ne.s32.totalorder %s137, %s153
      %p155 = scmp.eq.s32.totalorder %s19, 0
      %p156 = por %p154, %p155
      %p157 = scmp.le.s32.totalorder 1, %s13
      %p158 = scmp.lt.s32.totalorder %s13, 7
      %p159 = pnand %p157, %p158
      %p160 = pneg %p159
      // Predicated region
      $region9: #{gen_gate_gru.3} parent=5 // pred_check
        _
      $region10: #{gen_gate_gru.3} parent=5 // pred_check_branch
        %162 = sbr.rel (%p159) target = $region12
      $region11: #{gen_gate_gru.3} parent=5 // pred_region
        %s163 = ssub.s32 %s13, 1
        // Predicated region
        $region13: #{gen_gate_gru.3} parent=11 // pred_check
          %p164 = pneg %p100
        $region14: #{gen_gate_gru.3} parent=11 // pred_check_branch
          %166 = sbr.rel (%p164) target = $region16
        $region15: #{gen_gate_gru.3} parent=11 // pred_region
          _
        $region16: #{gen_gate_gru.3} parent=11 // pred_fallthru
          _
        // Predicated region
        $region17: #{gen_gate_gru.3} parent=11 // pred_check
          %p167 = pneg %p121
        $region18: #{gen_gate_gru.3} parent=11 // pred_check_branch
          %169 = sbr.rel (%p167) target = $region20
        $region19: #{gen_gate_gru.3} parent=11 // pred_region
          _
        $region20: #{gen_gate_gru.3} parent=11 // pred_fallthru
          _
      $region12: #{gen_gate_gru.3} parent=5 // pred_fallthru
        _
      %p170 = scmp.lt.s32.totalorder %s13, 6
      // Predicated region
      $region21: #{gen_gate_gru.3} parent=5 // pred_check
        %p171 = pneg %p170
      $region22: #{gen_gate_gru.3} parent=5 // pred_check_branch
        %173 = sbr.rel (%p171) target = $region24
      $region23: #{gen_gate_gru.3} parent=5 // pred_region
        // Predicated region
        $region25: #{gen_gate_gru.3} parent=23 // pred_check
          %p174 = pneg %p47
        $region26: #{gen_gate_gru.3} parent=23 // pred_check_branch
          %176 = sbr.rel (%p174) target = $region28
        $region27: #{gen_gate_gru.3} parent=23 // pred_region
          %p177 = scmp.lt.s32.totalorder %s20, 1
          %s178 = scalar_select %p177, %s20, 1
          %p179 = scmp.lt.s32.totalorder %s21, 2
          %s180 = scalar_select %p179, %s21, 2
          %s181 = smul.addr %s180, 64
          %s182 = smul.addr %s178, 192
          %s183 = sadd.s32 %s181, %s182
          %s184 = smul.addr %s183, 8
          %s185 = scalar_lea.vmem %s0, %s184
        $region28: #{gen_gate_gru.3} parent=23 // pred_fallthru
          _
        // Predicated region
        $region29: #{gen_gate_gru.3} parent=23 // pred_check
          %p186 = pneg %p73
        $region30: #{gen_gate_gru.3} parent=23 // pred_check_branch
          %188 = sbr.rel (%p186) target = $region32
        $region31: #{gen_gate_gru.3} parent=23 // pred_region
          %p189 = scmp.lt.s32.totalorder %s20, 1
          %s190 = scalar_select %p189, %s20, 1
          %s191 = smul.addr %s190, 32
          %s192 = smul.addr %s191, 8
          %s193 = scalar_lea.vmem %s1, %s192
        $region32: #{gen_gate_gru.3} parent=23 // pred_fallthru
          _
      $region24: #{gen_gate_gru.3} parent=5 // pred_fallthru
        _
      %p194 = scmp.le.s32.totalorder 1, %s13
      %p195 = scmp.lt.s32.totalorder %s13, 7
      %p196 = pnand %p194, %p195
      %p197 = pneg %p196
      // Predicated region
      $region33: #{gen_gate_gru.3} parent=5 // pred_check
        _
      $region34: #{gen_gate_gru.3} parent=5 // pred_check_branch
        %199 = sbr.rel (%p196) target = $region36
      $region35: #{gen_gate_gru.3} parent=5 // pred_region
        %s200 = ssub.s32 %s13, 1
        %p201 = scmp.lt.s32.totalorder %s22, 1
        %s202 = scalar_select %p201, %s22, 1
        %p203 = scmp.lt.s32.totalorder %s23, 2
        %s204 = scalar_select %p203, %s23, 2
        %s205 = smul.addr %s204, 64
        %s206 = smul.addr %s202, 192
        %s207 = sadd.s32 %s205, %s206
        %s208 = smul.addr %s207, 8
        %s209 = scalar_lea.vmem %s0, %s208
        %p210 = pneg %p53
        %p211 = pneg %p50
        %p212 = scmp.lt.s32.totalorder %s22, 1
        %s213 = scalar_select %p212, %s22, 1
        %s214 = smul.addr %s213, 32
        %s215 = smul.addr %s214, 8
        %s216 = scalar_lea.vmem %s1, %s215
        %p217 = pneg %p79
        %p218 = pneg %p76
        %p219 = pneg %p100
        %p220 = pneg %p97
        %p221 = pneg %p121
        %p222 = pneg %p118
        %p223 = pneg %p149
        %p224 = pneg %p146
        %s225 = sand.u32 %s136, 1
        %s226 = scalar_lea.sflag [#allocation4], %s225
        %s227 = sand.u32 %s136, 1
        %s228 = smul.addr %s227, 256
        %s229 = scalar_lea.vmem [#allocation3], %s228
        %p230 = scmp.lt.s32.totalorder %s22, 1
        %s231 = scalar_select %p230, %s22, 1
        %p232 = scmp.lt.s32.totalorder %s23, 2
        %s233 = scalar_select %p232, %s23, 2
        %s234 = smul.addr %s233, 64
        %s235 = smul.addr %s231, 192
        %s236 = sadd.s32 %s234, %s235
        %s237 = smul.addr %s236, 8
        %s238 = scalar_lea.vmem %s0, %s237
        %p239 = scmp.lt.s32.totalorder %s22, 1
        %s240 = scalar_select %p239, %s22, 1
        %s241 = smul.addr %s240, 32
        %s242 = smul.addr %s241, 8
        %s243 = scalar_lea.vmem %s1, %s242
        %p245 = scmp.eq.s32.totalorder %s23, 0
        // Predicated region
        $region37: #{gen_gate_gru.3} parent=35 // pred_check
          %p246 = pneg %p245
        $region38: #{gen_gate_gru.3} parent=35 // pred_check_branch
          %248 = sbr.rel (%p246) target = $region40
        $region39: #{gen_gate_gru.3} parent=35 // pred_region
          %v249 = vld [vmem:[%s243] sm:$0xff]
          %v250 = vld [vmem:[%s243 + $0x8] sm:$0xff]
          %v251 = vld [vmem:[%s243 + $0x10] sm:$0xff]
          %v252 = vld [vmem:[%s243 + $0x18] sm:$0xff]
          %v253 = vld [vmem:[%s243 + $0x20] sm:$0xff]
          %v254 = vld [vmem:[%s243 + $0x28] sm:$0xff]
          %v255 = vld [vmem:[%s243 + $0x30] sm:$0xff]
          %v256 = vld [vmem:[%s243 + $0x38] sm:$0xff]
          %v257 = vld [vmem:[%s243 + $0x40] sm:$0xff]
          %v258 = vld [vmem:[%s243 + $0x48] sm:$0xff]
          %v259 = vld [vmem:[%s243 + $0x50] sm:$0xff]
          %v260 = vld [vmem:[%s243 + $0x58] sm:$0xff]
          %v261 = vld [vmem:[%s243 + $0x60] sm:$0xff]
          %v262 = vld [vmem:[%s243 + $0x68] sm:$0xff]
          %v263 = vld [vmem:[%s243 + $0x70] sm:$0xff]
          %v264 = vld [vmem:[%s243 + $0x78] sm:$0xff]
          %v265 = vld [vmem:[%s243 + $0x80] sm:$0xff]
          %v266 = vld [vmem:[%s243 + $0x88] sm:$0xff]
          %v267 = vld [vmem:[%s243 + $0x90] sm:$0xff]
          %v268 = vld [vmem:[%s243 + $0x98] sm:$0xff]
          %v269 = vld [vmem:[%s243 + $0xa0] sm:$0xff]
          %v270 = vld [vmem:[%s243 + $0xa8] sm:$0xff]
          %v271 = vld [vmem:[%s243 + $0xb0] sm:$0xff]
          %v272 = vld [vmem:[%s243 + $0xb8] sm:$0xff]
          %v273 = vld [vmem:[%s243 + $0xc0] sm:$0xff]
          %v274 = vld [vmem:[%s243 + $0xc8] sm:$0xff]
          %v275 = vld [vmem:[%s243 + $0xd0] sm:$0xff]
          %v276 = vld [vmem:[%s243 + $0xd8] sm:$0xff]
          %v277 = vld [vmem:[%s243 + $0xe0] sm:$0xff]
          %v278 = vld [vmem:[%s243 + $0xe8] sm:$0xff]
          %v279 = vld [vmem:[%s243 + $0xf0] sm:$0xff]
          %v280 = vld [vmem:[%s243 + $0xf8] sm:$0xff]
          %vm281 = vcmask 523264
          %282 = vst.msk [vmem:[#allocation2] sm:$0xff] %vm281, %v249
          %283 = vst.msk [vmem:[#allocation2 + $0x8] sm:$0xff] %vm281, %v250
          %284 = vst.msk [vmem:[#allocation2 + $0x10] sm:$0xff] %vm281, %v251
          %285 = vst.msk [vmem:[#allocation2 + $0x18] sm:$0xff] %vm281, %v252
          %286 = vst.msk [vmem:[#allocation2 + $0x20] sm:$0xff] %vm281, %v253
          %287 = vst.msk [vmem:[#allocation2 + $0x28] sm:$0xff] %vm281, %v254
          %288 = vst.msk [vmem:[#allocation2 + $0x30] sm:$0xff] %vm281, %v255
          %289 = vst.msk [vmem:[#allocation2 + $0x38] sm:$0xff] %vm281, %v256
          %290 = vst.msk [vmem:[#allocation2 + $0x40] sm:$0xff] %vm281, %v257
          %291 = vst.msk [vmem:[#allocation2 + $0x48] sm:$0xff] %vm281, %v258
          %292 = vst.msk [vmem:[#allocation2 + $0x50] sm:$0xff] %vm281, %v259
          %293 = vst.msk [vmem:[#allocation2 + $0x58] sm:$0xff] %vm281, %v260
          %294 = vst.msk [vmem:[#allocation2 + $0x60] sm:$0xff] %vm281, %v261
          %295 = vst.msk [vmem:[#allocation2 + $0x68] sm:$0xff] %vm281, %v262
          %296 = vst.msk [vmem:[#allocation2 + $0x70] sm:$0xff] %vm281, %v263
          %297 = vst.msk [vmem:[#allocation2 + $0x78] sm:$0xff] %vm281, %v264
          %298 = vst.msk [vmem:[#allocation2 + $0x80] sm:$0xff] %vm281, %v265
          %299 = vst.msk [vmem:[#allocation2 + $0x88] sm:$0xff] %vm281, %v266
          %300 = vst.msk [vmem:[#allocation2 + $0x90] sm:$0xff] %vm281, %v267
          %301 = vst.msk [vmem:[#allocation2 + $0x98] sm:$0xff] %vm281, %v268
          %302 = vst.msk [vmem:[#allocation2 + $0xa0] sm:$0xff] %vm281, %v269
          %303 = vst.msk [vmem:[#allocation2 + $0xa8] sm:$0xff] %vm281, %v270
          %304 = vst.msk [vmem:[#allocation2 + $0xb0] sm:$0xff] %vm281, %v271
          %305 = vst.msk [vmem:[#allocation2 + $0xb8] sm:$0xff] %vm281, %v272
          %306 = vst.msk [vmem:[#allocation2 + $0xc0] sm:$0xff] %vm281, %v273
          %307 = vst.msk [vmem:[#allocation2 + $0xc8] sm:$0xff] %vm281, %v274
          %308 = vst.msk [vmem:[#allocation2 + $0xd0] sm:$0xff] %vm281, %v275
          %309 = vst.msk [vmem:[#allocation2 + $0xd8] sm:$0xff] %vm281, %v276
          %310 = vst.msk [vmem:[#allocation2 + $0xe0] sm:$0xff] %vm281, %v277
          %311 = vst.msk [vmem:[#allocation2 + $0xe8] sm:$0xff] %vm281, %v278
          %312 = vst.msk [vmem:[#allocation2 + $0xf0] sm:$0xff] %vm281, %v279
          %313 = vst.msk [vmem:[#allocation2 + $0xf8] sm:$0xff] %vm281, %v280
        $region40: #{gen_gate_gru.3} parent=35 // pred_fallthru
          _
        %v314 = vld [vmem:[#allocation2] sm:$0xff]
        %v315 = vld [vmem:[#allocation2 + $0x8] sm:$0xff]
        %v316 = vld [vmem:[#allocation2 + $0x10] sm:$0xff]
        %v317 = vld [vmem:[#allocation2 + $0x18] sm:$0xff]
        %v318 = vld [vmem:[#allocation2 + $0x20] sm:$0xff]
        %v319 = vld [vmem:[#allocation2 + $0x28] sm:$0xff]
        %v320 = vld [vmem:[#allocation2 + $0x30] sm:$0xff]
        %v321 = vld [vmem:[#allocation2 + $0x38] sm:$0xff]
        %v322 = vld [vmem:[#allocation2 + $0x40] sm:$0xff]
        %v323 = vld [vmem:[#allocation2 + $0x48] sm:$0xff]
        %v324 = vld [vmem:[#allocation2 + $0x50] sm:$0xff]
        %v325 = vld [vmem:[#allocation2 + $0x58] sm:$0xff]
        %v326 = vld [vmem:[#allocation2 + $0x60] sm:$0xff]
        %v327 = vld [vmem:[#allocation2 + $0x68] sm:$0xff]
        %v328 = vld [vmem:[#allocation2 + $0x70] sm:$0xff]
        %v329 = vld [vmem:[#allocation2 + $0x78] sm:$0xff]
        %v330 = vld [vmem:[#allocation2 + $0x80] sm:$0xff]
        %v331 = vld [vmem:[#allocation2 + $0x88] sm:$0xff]
        %v332 = vld [vmem:[#allocation2 + $0x90] sm:$0xff]
        %v333 = vld [vmem:[#allocation2 + $0x98] sm:$0xff]
        %v334 = vld [vmem:[#allocation2 + $0xa0] sm:$0xff]
        %v335 = vld [vmem:[#allocation2 + $0xa8] sm:$0xff]
        %v336 = vld [vmem:[#allocation2 + $0xb0] sm:$0xff]
        %v337 = vld [vmem:[#allocation2 + $0xb8] sm:$0xff]
        %v338 = vld [vmem:[#allocation2 + $0xc0] sm:$0xff]
        %v339 = vld [vmem:[#allocation2 + $0xc8] sm:$0xff]
        %v340 = vld [vmem:[#allocation2 + $0xd0] sm:$0xff]
        %v341 = vld [vmem:[#allocation2 + $0xd8] sm:$0xff]
        %v342 = vld [vmem:[#allocation2 + $0xe0] sm:$0xff]
        %v343 = vld [vmem:[#allocation2 + $0xe8] sm:$0xff]
        %v344 = vld [vmem:[#allocation2 + $0xf0] sm:$0xff]
        %v345 = vld [vmem:[#allocation2 + $0xf8] sm:$0xff]
        %v346 = vld [vmem:[%s238] sm:$0xff]
        %v347 = vld [vmem:[%s238 + $0x8] sm:$0xff]
        %v348 = vld [vmem:[%s238 + $0x10] sm:$0xff]
        %v349 = vld [vmem:[%s238 + $0x18] sm:$0xff]
        %v350 = vld [vmem:[%s238 + $0x20] sm:$0xff]
        %v351 = vld [vmem:[%s238 + $0x28] sm:$0xff]
        %v352 = vld [vmem:[%s238 + $0x30] sm:$0xff]
        %v353 = vld [vmem:[%s238 + $0x38] sm:$0xff]
        %v354 = vld [vmem:[%s238 + $0x40] sm:$0xff]
        %v355 = vld [vmem:[%s238 + $0x48] sm:$0xff]
        %v356 = vld [vmem:[%s238 + $0x50] sm:$0xff]
        %v357 = vld [vmem:[%s238 + $0x58] sm:$0xff]
        %v358 = vld [vmem:[%s238 + $0x60] sm:$0xff]
        %v359 = vld [vmem:[%s238 + $0x68] sm:$0xff]
        %v360 = vld [vmem:[%s238 + $0x70] sm:$0xff]
        %v361 = vld [vmem:[%s238 + $0x78] sm:$0xff]
        %v362 = vld [vmem:[%s238 + $0x80] sm:$0xff]
        %v363 = vld [vmem:[%s238 + $0x88] sm:$0xff]
        %v364 = vld [vmem:[%s238 + $0x90] sm:$0xff]
        %v365 = vld [vmem:[%s238 + $0x98] sm:$0xff]
        %v366 = vld [vmem:[%s238 + $0xa0] sm:$0xff]
        %v367 = vld [vmem:[%s238 + $0xa8] sm:$0xff]
        %v368 = vld [vmem:[%s238 + $0xb0] sm:$0xff]
        %v369 = vld [vmem:[%s238 + $0xb8] sm:$0xff]
        %v370 = vld [vmem:[%s238 + $0xc0] sm:$0xff]
        %v371 = vld [vmem:[%s238 + $0xc8] sm:$0xff]
        %v372 = vld [vmem:[%s238 + $0xd0] sm:$0xff]
        %v373 = vld [vmem:[%s238 + $0xd8] sm:$0xff]
        %v374 = vld [vmem:[%s238 + $0xe0] sm:$0xff]
        %v375 = vld [vmem:[%s238 + $0xe8] sm:$0xff]
        %v376 = vld [vmem:[%s238 + $0xf0] sm:$0xff]
        %v377 = vld [vmem:[%s238 + $0xf8] sm:$0xff]
        %v378 = vld [vmem:[%s238 + $0x100] sm:$0xff]
        %v379 = vld [vmem:[%s238 + $0x108] sm:$0xff]
        %v380 = vld [vmem:[%s238 + $0x110] sm:$0xff]
        %v381 = vld [vmem:[%s238 + $0x118] sm:$0xff]
        %v382 = vld [vmem:[%s238 + $0x120] sm:$0xff]
        %v383 = vld [vmem:[%s238 + $0x128] sm:$0xff]
        %v384 = vld [vmem:[%s238 + $0x130] sm:$0xff]
        %v385 = vld [vmem:[%s238 + $0x138] sm:$0xff]
        %v386 = vld [vmem:[%s238 + $0x140] sm:$0xff]
        %v387 = vld [vmem:[%s238 + $0x148] sm:$0xff]
        %v388 = vld [vmem:[%s238 + $0x150] sm:$0xff]
        %v389 = vld [vmem:[%s238 + $0x158] sm:$0xff]
        %v390 = vld [vmem:[%s238 + $0x160] sm:$0xff]
        %v391 = vld [vmem:[%s238 + $0x168] sm:$0xff]
        %v392 = vld [vmem:[%s238 + $0x170] sm:$0xff]
        %v393 = vld [vmem:[%s238 + $0x178] sm:$0xff]
        %v394 = vld [vmem:[%s238 + $0x180] sm:$0xff]
        %v395 = vld [vmem:[%s238 + $0x188] sm:$0xff]
        %v396 = vld [vmem:[%s238 + $0x190] sm:$0xff]
        %v397 = vld [vmem:[%s238 + $0x198] sm:$0xff]
        %v398 = vld [vmem:[%s238 + $0x1a0] sm:$0xff]
        %v399 = vld [vmem:[%s238 + $0x1a8] sm:$0xff]
        %v400 = vld [vmem:[%s238 + $0x1b0] sm:$0xff]
        %v401 = vld [vmem:[%s238 + $0x1b8] sm:$0xff]
        %v402 = vld [vmem:[%s238 + $0x1c0] sm:$0xff]
        %v403 = vld [vmem:[%s238 + $0x1c8] sm:$0xff]
        %v404 = vld [vmem:[%s238 + $0x1d0] sm:$0xff]
        %v405 = vld [vmem:[%s238 + $0x1d8] sm:$0xff]
        %v406 = vld [vmem:[%s238 + $0x1e0] sm:$0xff]
        %v407 = vld [vmem:[%s238 + $0x1e8] sm:$0xff]
        %v408 = vld [vmem:[%s238 + $0x1f0] sm:$0xff]
        %v409 = vld [vmem:[%s238 + $0x1f8] sm:$0xff]
        %v410 = vpack.c.bf16 %v315, %v314
        %v411 = vpack.c.bf16 %v317, %v316
        %v412 = vpack.c.bf16 %v319, %v318
        %v413 = vpack.c.bf16 %v321, %v320
        %v414 = vpack.c.bf16 %v323, %v322
        %v415 = vpack.c.bf16 %v325, %v324
        %v416 = vpack.c.bf16 %v327, %v326
        %v417 = vpack.c.bf16 %v329, %v328
        %v418 = vpack.c.bf16 %v331, %v330
        %v419 = vpack.c.bf16 %v333, %v332
        %v420 = vpack.c.bf16 %v335, %v334
        %v421 = vpack.c.bf16 %v337, %v336
        %v422 = vpack.c.bf16 %v339, %v338
        %v423 = vpack.c.bf16 %v341, %v340
        %v424 = vpack.c.bf16 %v343, %v342
        %v425 = vpack.c.bf16 %v345, %v344
        %v426 = vld [vmem:[%s2] sm:$0xf]
        %v427 = vld [vmem:[%s2 + $0x4] sm:$0xf]
        %v428 = vld [vmem:[%s2 + $0x8] sm:$0xf]
        %v429 = vld [vmem:[%s2 + $0xc] sm:$0xf]
        %v430 = vld [vmem:[%s2 + $0x10] sm:$0xf]
        %v431 = vld [vmem:[%s2 + $0x14] sm:$0xf]
        %v432 = vld [vmem:[%s2 + $0x18] sm:$0xf]
        %v433 = vld [vmem:[%s2 + $0x1c] sm:$0xf]
        %v434 = vld [vmem:[%s2 + $0x20] sm:$0xf]
        %v435 = vld [vmem:[%s2 + $0x24] sm:$0xf]
        %v436 = vld [vmem:[%s2 + $0x28] sm:$0xf]
        %v437 = vld [vmem:[%s2 + $0x2c] sm:$0xf]
        %v438 = vld [vmem:[%s2 + $0x30] sm:$0xf]
        %v439 = vld [vmem:[%s2 + $0x34] sm:$0xf]
        %v440 = vld [vmem:[%s2 + $0x38] sm:$0xf]
        %v441 = vld [vmem:[%s2 + $0x3c] sm:$0xf]
        %v442 = vld [vmem:[%s2 + $0x40] sm:$0xf]
        %v443 = vld [vmem:[%s2 + $0x44] sm:$0xf]
        %v444 = vld [vmem:[%s2 + $0x48] sm:$0xf]
        %v445 = vld [vmem:[%s2 + $0x4c] sm:$0xf]
        %v446 = vld [vmem:[%s2 + $0x50] sm:$0xf]
        %v447 = vld [vmem:[%s2 + $0x54] sm:$0xf]
        %v448 = vld [vmem:[%s2 + $0x58] sm:$0xf]
        %v449 = vld [vmem:[%s2 + $0x5c] sm:$0xf]
        %v450 = vld [vmem:[%s2 + $0x60] sm:$0xf]
        %v451 = vld [vmem:[%s2 + $0x64] sm:$0xf]
        %v452 = vld [vmem:[%s2 + $0x68] sm:$0xf]
        %v453 = vld [vmem:[%s2 + $0x6c] sm:$0xf]
        %v454 = vld [vmem:[%s2 + $0x70] sm:$0xf]
        %v455 = vld [vmem:[%s2 + $0x74] sm:$0xf]
        %v456 = vld [vmem:[%s2 + $0x78] sm:$0xf]
        %v457 = vld [vmem:[%s2 + $0x7c] sm:$0xf]
        %v458 = vld [vmem:[%s2 + $0x80] sm:$0xf]
        %v459 = vld [vmem:[%s2 + $0x84] sm:$0xf]
        %v460 = vld [vmem:[%s2 + $0x88] sm:$0xf]
        %v461 = vld [vmem:[%s2 + $0x8c] sm:$0xf]
        %v462 = vld [vmem:[%s2 + $0x90] sm:$0xf]
        %v463 = vld [vmem:[%s2 + $0x94] sm:$0xf]
        %v464 = vld [vmem:[%s2 + $0x98] sm:$0xf]
        %v465 = vld [vmem:[%s2 + $0x9c] sm:$0xf]
        %v466 = vld [vmem:[%s2 + $0xa0] sm:$0xf]
        %v467 = vld [vmem:[%s2 + $0xa4] sm:$0xf]
        %v468 = vld [vmem:[%s2 + $0xa8] sm:$0xf]
        %v469 = vld [vmem:[%s2 + $0xac] sm:$0xf]
        %v470 = vld [vmem:[%s2 + $0xb0] sm:$0xf]
        %v471 = vld [vmem:[%s2 + $0xb4] sm:$0xf]
        %v472 = vld [vmem:[%s2 + $0xb8] sm:$0xf]
        %v473 = vld [vmem:[%s2 + $0xbc] sm:$0xf]
        %v474 = vld [vmem:[%s2 + $0xc0] sm:$0xf]
        %v475 = vld [vmem:[%s2 + $0xc4] sm:$0xf]
        %v476 = vld [vmem:[%s2 + $0xc8] sm:$0xf]
        %v477 = vld [vmem:[%s2 + $0xcc] sm:$0xf]
        %v478 = vld [vmem:[%s2 + $0xd0] sm:$0xf]
        %v479 = vld [vmem:[%s2 + $0xd4] sm:$0xf]
        %v480 = vld [vmem:[%s2 + $0xd8] sm:$0xf]
        %v481 = vld [vmem:[%s2 + $0xdc] sm:$0xf]
        %v482 = vld [vmem:[%s2 + $0xe0] sm:$0xf]
        %v483 = vld [vmem:[%s2 + $0xe4] sm:$0xf]
        %v484 = vld [vmem:[%s2 + $0xe8] sm:$0xf]
        %v485 = vld [vmem:[%s2 + $0xec] sm:$0xf]
        %v486 = vld [vmem:[%s2 + $0xf0] sm:$0xf]
        %v487 = vld [vmem:[%s2 + $0xf4] sm:$0xf]
        %v488 = vld [vmem:[%s2 + $0xf8] sm:$0xf]
        %v489 = vld [vmem:[%s2 + $0xfc] sm:$0xf]
        %v490 = vld [vmem:[%s2 + $0x100] sm:$0xf]
        %v491 = vld [vmem:[%s2 + $0x104] sm:$0xf]
        %v492 = vld [vmem:[%s2 + $0x108] sm:$0xf]
        %v493 = vld [vmem:[%s2 + $0x10c] sm:$0xf]
        %v494 = vld [vmem:[%s2 + $0x110] sm:$0xf]
        %v495 = vld [vmem:[%s2 + $0x114] sm:$0xf]
        %v496 = vld [vmem:[%s2 + $0x118] sm:$0xf]
        %v497 = vld [vmem:[%s2 + $0x11c] sm:$0xf]
        %v499 = vshrl.u32 %v411, 16
        %v502 = vshrl.u32 %v410, 16
        %v505 = vshrl.u32 %v412, 16
        %v508 = vshrl.u32 %v413, 16
        %v511 = vshrl.u32 %v414, 16
        %v514 = vshrl.u32 %v415, 16
        %v517 = vshrl.u32 %v416, 16
        %v520 = vshrl.u32 %v417, 16
        %v523 = vshrl.u32 %v418, 16
        %v526 = vshrl.u32 %v419, 16
        %v529 = vshrl.u32 %v420, 16
        %v532 = vshrl.u32 %v421, 16
        %v535 = vshrl.u32 %v422, 16
        %v538 = vshrl.u32 %v423, 16
        %v541 = vshrl.u32 %v424, 16
        %v544 = vshrl.u32 %v425, 16
        %v562 = vrot.slane %v499, 7
        %v563 = vshll.u32 %v411, 16
        %v565 = vor.u32 %v562, %v563
        %v566 = vrot.slane %v502, 7
        %v567 = vshll.u32 %v410, 16
        %v569 = vor.u32 %v566, %v567
        %v570 = vrot.slane %v505, 7
        %v571 = vshll.u32 %v412, 16
        %v573 = vor.u32 %v570, %v571
        %v574 = vrot.slane %v508, 7
        %v575 = vshll.u32 %v413, 16
        %v577 = vor.u32 %v574, %v575
        %v578 = vrot.slane %v511, 7
        %v579 = vshll.u32 %v414, 16
        %v581 = vor.u32 %v578, %v579
        %v582 = vrot.slane %v514, 7
        %v583 = vshll.u32 %v415, 16
        %v585 = vor.u32 %v582, %v583
        %v586 = vrot.slane %v517, 7
        %v587 = vshll.u32 %v416, 16
        %v589 = vor.u32 %v586, %v587
        %v590 = vrot.slane %v520, 7
        %v591 = vshll.u32 %v417, 16
        %v593 = vor.u32 %v590, %v591
        %v594 = vrot.slane %v523, 7
        %v595 = vshll.u32 %v418, 16
        %v597 = vor.u32 %v594, %v595
        %v598 = vrot.slane %v526, 7
        %v599 = vshll.u32 %v419, 16
        %v601 = vor.u32 %v598, %v599
        %v602 = vrot.slane %v529, 7
        %v603 = vshll.u32 %v420, 16
        %v605 = vor.u32 %v602, %v603
        %v606 = vrot.slane %v532, 7
        %v607 = vshll.u32 %v421, 16
        %v609 = vor.u32 %v606, %v607
        %v610 = vrot.slane %v535, 7
        %v611 = vshll.u32 %v422, 16
        %v613 = vor.u32 %v610, %v611
        %v614 = vrot.slane %v538, 7
        %v615 = vshll.u32 %v423, 16
        %v617 = vor.u32 %v614, %v615
        %v618 = vrot.slane %v541, 7
        %v619 = vshll.u32 %v424, 16
        %v621 = vor.u32 %v618, %v619
        %v622 = vrot.slane %v544, 7
        %v623 = vshll.u32 %v425, 16
        %v625 = vor.u32 %v622, %v623
        %v658 = vrot.slane %v563, 7
        %v659 = vrot.slane %v567, 7
        %v660 = vrot.slane %v571, 7
        %v661 = vrot.slane %v575, 7
        %v662 = vrot.slane %v579, 7
        %v663 = vrot.slane %v583, 7
        %v664 = vrot.slane %v587, 7
        %v665 = vrot.slane %v591, 7
        %v666 = vrot.slane %v595, 7
        %v667 = vrot.slane %v599, 7
        %v668 = vrot.slane %v603, 7
        %v669 = vrot.slane %v607, 7
        %v670 = vrot.slane %v611, 7
        %v671 = vrot.slane %v615, 7
        %v672 = vrot.slane %v619, 7
        %v673 = vrot.slane %v623, 7
        %vm690 = vcmask 1040384
        %vm691 = vsmask.f32 256
        %vm692 = vmand %vm690, %vm691
        %v693 = vsel %vm692, %v499, %v565
        %v694 = vsel %vm692, %v502, %v569
        %v695 = vsel %vm692, %v505, %v573
        %v696 = vsel %vm692, %v508, %v577
        %v697 = vsel %vm692, %v511, %v581
        %v698 = vsel %vm692, %v514, %v585
        %v699 = vsel %vm692, %v517, %v589
        %v700 = vsel %vm692, %v520, %v593
        %v701 = vsel %vm692, %v523, %v597
        %v702 = vsel %vm692, %v526, %v601
        %v703 = vsel %vm692, %v529, %v605
        %v704 = vsel %vm692, %v532, %v609
        %v705 = vsel %vm692, %v535, %v613
        %v706 = vsel %vm692, %v538, %v617
        %v707 = vsel %vm692, %v541, %v621
        %v708 = vsel %vm692, %v544, %v625
        %v709 = vsel %vm692, %v562, %v658
        %v710 = vsel %vm692, %v566, %v659
        %v711 = vsel %vm692, %v570, %v660
        %v712 = vsel %vm692, %v574, %v661
        %v713 = vsel %vm692, %v578, %v662
        %v714 = vsel %vm692, %v582, %v663
        %v715 = vsel %vm692, %v586, %v664
        %v716 = vsel %vm692, %v590, %v665
        %v717 = vsel %vm692, %v594, %v666
        %v718 = vsel %vm692, %v598, %v667
        %v719 = vsel %vm692, %v602, %v668
        %v720 = vsel %vm692, %v606, %v669
        %v721 = vsel %vm692, %v610, %v670
        %v722 = vsel %vm692, %v614, %v671
        %v723 = vsel %vm692, %v618, %v672
        %v724 = vsel %vm692, %v622, %v673
        %vm725 = vsmask.f32 7424
        %v727 = vshrl.u32 %v693, 16
        %v729 = vshll.u32 %v693, 16
        %v731 = vrot.slane %v729, 1
        %v732 = vor.u32 %v727, %v731
        %v734 = vshll.u32 %v709, 16
        %v736 = vrot.slane %v734, 1
        %v737 = vsel %vm725, %v732, %v736
        %v739 = vshrl.u32 %v694, 16
        %v741 = vshll.u32 %v694, 16
        %v743 = vrot.slane %v741, 1
        %v744 = vor.u32 %v739, %v743
        %v746 = vshll.u32 %v710, 16
        %v748 = vrot.slane %v746, 1
        %v749 = vsel %vm725, %v744, %v748
        %v751 = vshrl.u32 %v695, 16
        %v753 = vshll.u32 %v695, 16
        %v755 = vrot.slane %v753, 1
        %v756 = vor.u32 %v751, %v755
        %v758 = vshll.u32 %v711, 16
        %v760 = vrot.slane %v758, 1
        %v761 = vsel %vm725, %v756, %v760
        %v763 = vshrl.u32 %v696, 16
        %v765 = vshll.u32 %v696, 16
        %v767 = vrot.slane %v765, 1
        %v768 = vor.u32 %v763, %v767
        %v770 = vshll.u32 %v712, 16
        %v772 = vrot.slane %v770, 1
        %v773 = vsel %vm725, %v768, %v772
        %v775 = vshrl.u32 %v697, 16
        %v777 = vshll.u32 %v697, 16
        %v779 = vrot.slane %v777, 1
        %v780 = vor.u32 %v775, %v779
        %v782 = vshll.u32 %v713, 16
        %v784 = vrot.slane %v782, 1
        %v785 = vsel %vm725, %v780, %v784
        %v787 = vshrl.u32 %v698, 16
        %v789 = vshll.u32 %v698, 16
        %v791 = vrot.slane %v789, 1
        %v792 = vor.u32 %v787, %v791
        %v794 = vshll.u32 %v714, 16
        %v796 = vrot.slane %v794, 1
        %v797 = vsel %vm725, %v792, %v796
        %v799 = vshrl.u32 %v699, 16
        %v801 = vshll.u32 %v699, 16
        %v803 = vrot.slane %v801, 1
        %v804 = vor.u32 %v799, %v803
        %v806 = vshll.u32 %v715, 16
        %v808 = vrot.slane %v806, 1
        %v809 = vsel %vm725, %v804, %v808
        %v811 = vshrl.u32 %v700, 16
        %v813 = vshll.u32 %v700, 16
        %v815 = vrot.slane %v813, 1
        %v816 = vor.u32 %v811, %v815
        %v818 = vshll.u32 %v716, 16
        %v820 = vrot.slane %v818, 1
        %v821 = vsel %vm725, %v816, %v820
        %v823 = vshrl.u32 %v701, 16
        %v825 = vshll.u32 %v701, 16
        %v827 = vrot.slane %v825, 1
        %v828 = vor.u32 %v823, %v827
        %v830 = vshll.u32 %v717, 16
        %v832 = vrot.slane %v830, 1
        %v833 = vsel %vm725, %v828, %v832
        %v835 = vshrl.u32 %v702, 16
        %v837 = vshll.u32 %v702, 16
        %v839 = vrot.slane %v837, 1
        %v840 = vor.u32 %v835, %v839
        %v842 = vshll.u32 %v718, 16
        %v844 = vrot.slane %v842, 1
        %v845 = vsel %vm725, %v840, %v844
        %v847 = vshrl.u32 %v703, 16
        %v849 = vshll.u32 %v703, 16
        %v851 = vrot.slane %v849, 1
        %v852 = vor.u32 %v847, %v851
        %v854 = vshll.u32 %v719, 16
        %v856 = vrot.slane %v854, 1
        %v857 = vsel %vm725, %v852, %v856
        %v859 = vshrl.u32 %v704, 16
        %v861 = vshll.u32 %v704, 16
        %v863 = vrot.slane %v861, 1
        %v864 = vor.u32 %v859, %v863
        %v866 = vshll.u32 %v720, 16
        %v868 = vrot.slane %v866, 1
        %v869 = vsel %vm725, %v864, %v868
        %v871 = vshrl.u32 %v705, 16
        %v873 = vshll.u32 %v705, 16
        %v875 = vrot.slane %v873, 1
        %v876 = vor.u32 %v871, %v875
        %v878 = vshll.u32 %v721, 16
        %v880 = vrot.slane %v878, 1
        %v881 = vsel %vm725, %v876, %v880
        %v883 = vshrl.u32 %v706, 16
        %v885 = vshll.u32 %v706, 16
        %v887 = vrot.slane %v885, 1
        %v888 = vor.u32 %v883, %v887
        %v890 = vshll.u32 %v722, 16
        %v892 = vrot.slane %v890, 1
        %v893 = vsel %vm725, %v888, %v892
        %v895 = vshrl.u32 %v707, 16
        %v897 = vshll.u32 %v707, 16
        %v899 = vrot.slane %v897, 1
        %v900 = vor.u32 %v895, %v899
        %v902 = vshll.u32 %v723, 16
        %v904 = vrot.slane %v902, 1
        %v905 = vsel %vm725, %v900, %v904
        %v914 = vunpack.c.l.b16 %v434
        %v915 = vunpack.c.l.b16 %v435
        %v916 = vunpack.c.l.b16 %v436
        %v917 = vunpack.c.l.b16 %v437
        %v918 = vunpack.c.l.b16 %v438
        %v919 = vunpack.c.l.b16 %v439
        %v920 = vunpack.c.l.b16 %v440
        %v921 = vunpack.c.l.b16 %v441
        %v922 = vpack.c.b16 %v915, %v914
        %v923 = vpack.c.b16 %v917, %v916
        %v924 = vpack.c.b16 %v919, %v918
        %v925 = vpack.c.b16 %v921, %v920
        %vm930 = vcmask 523264
        %v932 = vsel %vm930, %v737, 0
        %v935 = vsel %vm930, %v749, 0
        %v938 = vsel %vm930, %v761, 0
        %v941 = vsel %vm930, %v773, 0
        %v944 = vsel %vm930, %v785, 0
        %v947 = vsel %vm930, %v797, 0
        %v950 = vsel %vm930, %v809, 0
        %v953 = vsel %vm930, %v821, 0
        %v956 = vsel %vm930, %v833, 0
        %v959 = vsel %vm930, %v845, 0
        %v962 = vsel %vm930, %v857, 0
        %v965 = vsel %vm930, %v869, 0
        %v968 = vsel %vm930, %v881, 0
        %v971 = vsel %vm930, %v893, 0
        %v974 = vsel %vm930, %v905, 0
        %976 = vmatprep.subr.bf16.mxu0 0
        %977 = vmatpush1.bf16.msra.mxu0 %v922
        %978 = vmatprep.subr.bf16.mxu0 0
        %979 = vmatpush1.bf16.msra.mxu0 %v923
        %980 = vmatprep.subr.bf16.mxu0 0
        %981 = vmatpush1.bf16.msra.mxu0 %v924
        %982 = vmatprep.subr.bf16.mxu0 0
        %983 = vmatpush1.bf16.msra.mxu0 %v925
        %984 = vmatprep.subr.bf16.mxu0 0
        %985 = vmatpush1.bf16.msra.mxu0 0
        %986 = vmatprep.subr.bf16.mxu0 0
        %987 = vmatpush1.bf16.msra.mxu0 0
        %988 = vmatprep.subr.bf16.mxu0 0
        %989 = vmatpush1.bf16.msra.mxu0 0
        %990 = vmatprep.subr.bf16.mxu0 0
        %991 = vmatpush1.bf16.msra.mxu0 0
        %992 = vmatprep.subr.bf16.mxu0 0
        %993 = vmatpush1.bf16.msra.mxu0 0
        %994 = vmatprep.subr.bf16.mxu0 0
        %995 = vmatpush1.bf16.msra.mxu0 0
        %996 = vmatprep.subr.bf16.mxu0 0
        %997 = vmatpush1.bf16.msra.mxu0 0
        %998 = vmatprep.subr.bf16.mxu0 0
        %999 = vmatpush1.bf16.msra.mxu0 0
        %1000 = vmatprep.subr.bf16.mxu0 0
        %1001 = vmatpush1.bf16.msra.mxu0 0
        %1002 = vmatprep.subr.bf16.mxu0 0
        %1003 = vmatpush1.bf16.msra.mxu0 0
        %1004 = vmatprep.subr.bf16.mxu0 0
        %1005 = vmatpush1.bf16.msra.mxu0 0
        %1006 = vmatprep.subr.bf16.mxu0 0
        %1007 = vmatpush1.bf16.msra.mxu0 0
        %1008 = vmatprep.mubr.bf16.mxu0 0
        %1009 = vmatmul.mubr.bf16.gmra.mrb[0].mxu0 %v932
        %v1010 = vpop.f32.mrb[0].mxu0
        %v1011 = vadd.f32 0.0, %v1010
        %v1012 = vpop.f32.mrb[0].mxu0
        %v1013 = vpop.f32.mrb[0].mxu0
        %v1014 = vadd.f32 0.0, %v1013
        %v1015 = vpop.f32.mrb[0].mxu0
        %1016 = vmatprep.mubr.bf16.mxu0 0
        %1017 = vmatmul.mubr.bf16.gmra.mrb[0].mxu0 %v935
        %v1018 = vpop.f32.mrb[0].mxu0
        %v1019 = vadd.f32 0.0, %v1018
        %v1020 = vpop.f32.mrb[0].mxu0
        %v1021 = vpop.f32.mrb[0].mxu0
        %v1022 = vadd.f32 0.0, %v1021
        %v1023 = vpop.f32.mrb[0].mxu0
        %1024 = vmatprep.mubr.bf16.mxu0 0
        %1025 = vmatmul.mubr.bf16.gmra.mrb[0].mxu0 %v932
        %v1026 = vpop.f32.mrb[0].mxu0
        %v1027 = vadd.f32 0.0, %v1026
        %v1028 = vpop.f32.mrb[0].mxu0
        %v1029 = vpop.f32.mrb[0].mxu0
        %v1030 = vadd.f32 0.0, %v1029
        %v1031 = vpop.f32.mrb[0].mxu0
        %1032 = vmatprep.mubr.bf16.mxu0 0
        %1033 = vmatmul.mubr.bf16.gmra.mrb[0].mxu0 %v938
        %v1034 = vpop.f32.mrb[0].mxu0
        %v1035 = vadd.f32 0.0, %v1034
        %v1036 = vpop.f32.mrb[0].mxu0
        %v1037 = vpop.f32.mrb[0].mxu0
        %v1038 = vadd.f32 0.0, %v1037
        %v1039 = vpop.f32.mrb[0].mxu0
        %1040 = vmatprep.mubr.bf16.mxu0 0
        %1041 = vmatmul.mubr.bf16.gmra.mrb[0].mxu0 %v941
        %v1042 = vpop.f32.mrb[0].mxu0
        %v1043 = vadd.f32 0.0, %v1042
        %v1044 = vpop.f32.mrb[0].mxu0
        %v1045 = vpop.f32.mrb[0].mxu0
        %v1046 = vadd.f32 0.0, %v1045
        %v1047 = vpop.f32.mrb[0].mxu0
        %1048 = vmatprep.mubr.bf16.mxu0 0
        %1049 = vmatmul.mubr.bf16.gmra.mrb[0].mxu0 %v944
        %v1050 = vpop.f32.mrb[0].mxu0
        %v1051 = vadd.f32 0.0, %v1050
        %v1052 = vpop.f32.mrb[0].mxu0
        %v1053 = vpop.f32.mrb[0].mxu0
        %v1054 = vadd.f32 0.0, %v1053
        %v1055 = vpop.f32.mrb[0].mxu0
        %1056 = vmatprep.mubr.bf16.mxu0 0
        %1057 = vmatmul.mubr.bf16.gmra.mrb[0].mxu0 %v947
        %v1058 = vpop.f32.mrb[0].mxu0
        %v1059 = vadd.f32 0.0, %v1058
        %v1060 = vpop.f32.mrb[0].mxu0
        %v1061 = vpop.f32.mrb[0].mxu0
        %v1062 = vadd.f32 0.0, %v1061
        %v1063 = vpop.f32.mrb[0].mxu0
        %1064 = vmatprep.mubr.bf16.mxu0 0
        %1065 = vmatmul.mubr.bf16.gmra.mrb[0].mxu0 %v950
        %v1066 = vpop.f32.mrb[0].mxu0
        %v1067 = vadd.f32 0.0, %v1066
        %v1068 = vpop.f32.mrb[0].mxu0
        %v1069 = vpop.f32.mrb[0].mxu0
        %v1070 = vadd.f32 0.0, %v1069
        %v1071 = vpop.f32.mrb[0].mxu0
        %1072 = vmatprep.mubr.bf16.mxu0 0
        %1073 = vmatmul.mubr.bf16.gmra.mrb[0].mxu0 %v953
        %v1074 = vpop.f32.mrb[0].mxu0
        %v1075 = vadd.f32 0.0, %v1074
        %v1076 = vpop.f32.mrb[0].mxu0
        %v1077 = vpop.f32.mrb[0].mxu0
        %v1078 = vadd.f32 0.0, %v1077
        %v1079 = vpop.f32.mrb[0].mxu0
        %1080 = vmatprep.mubr.bf16.mxu0 0
        %1081 = vmatmul.mubr.bf16.gmra.mrb[0].mxu0 %v956
        %v1082 = vpop.f32.mrb[0].mxu0
        %v1083 = vadd.f32 0.0, %v1082
        %v1084 = vpop.f32.mrb[0].mxu0
        %v1085 = vpop.f32.mrb[0].mxu0
        %v1086 = vadd.f32 0.0, %v1085
        %v1087 = vpop.f32.mrb[0].mxu0
        %1088 = vmatprep.mubr.bf16.mxu0 0
        %1089 = vmatmul.mubr.bf16.gmra.mrb[0].mxu0 %v959
        %v1090 = vpop.f32.mrb[0].mxu0
        %v1091 = vadd.f32 0.0, %v1090
        %v1092 = vpop.f32.mrb[0].mxu0
        %v1093 = vpop.f32.mrb[0].mxu0
        %v1094 = vadd.f32 0.0, %v1093
        %v1095 = vpop.f32.mrb[0].mxu0
        %1096 = vmatprep.mubr.bf16.mxu0 0
        %1097 = vmatmul.mubr.bf16.gmra.mrb[0].mxu0 %v962
        %v1098 = vpop.f32.mrb[0].mxu0
        %v1099 = vadd.f32 0.0, %v1098
        %v1100 = vpop.f32.mrb[0].mxu0
        %v1101 = vpop.f32.mrb[0].mxu0
        %v1102 = vadd.f32 0.0, %v1101
        %v1103 = vpop.f32.mrb[0].mxu0
        %1104 = vmatprep.mubr.bf16.mxu0 0
        %1105 = vmatmul.mubr.bf16.gmra.mrb[0].mxu0 %v965
        %v1106 = vpop.f32.mrb[0].mxu0
        %v1107 = vadd.f32 0.0, %v1106
        %v1108 = vpop.f32.mrb[0].mxu0
        %v1109 = vpop.f32.mrb[0].mxu0
        %v1110 = vadd.f32 0.0, %v1109
        %v1111 = vpop.f32.mrb[0].mxu0
        %1112 = vmatprep.mubr.bf16.mxu0 0
        %1113 = vmatmul.mubr.bf16.gmra.mrb[0].mxu0 %v968
        %v1114 = vpop.f32.mrb[0].mxu0
        %v1115 = vadd.f32 0.0, %v1114
        %v1116 = vpop.f32.mrb[0].mxu0
        %v1117 = vpop.f32.mrb[0].mxu0
        %v1118 = vadd.f32 0.0, %v1117
        %v1119 = vpop.f32.mrb[0].mxu0
        %1120 = vmatprep.mubr.bf16.mxu0 0
        %1121 = vmatmul.mubr.bf16.gmra.mrb[0].mxu0 %v971
        %v1122 = vpop.f32.mrb[0].mxu0
        %v1123 = vadd.f32 0.0, %v1122
        %v1124 = vpop.f32.mrb[0].mxu0
        %v1125 = vpop.f32.mrb[0].mxu0
        %v1126 = vadd.f32 0.0, %v1125
        %v1127 = vpop.f32.mrb[0].mxu0
        %1128 = vmatprep.mubr.bf16.mxu0 0
        %1129 = vmatmul.mubr.bf16.gmra.mrb[0].mxu0 %v974
        %v1130 = vpop.f32.mrb[0].mxu0
        %v1131 = vadd.f32 0.0, %v1130
        %v1132 = vpop.f32.mrb[0].mxu0
        %v1133 = vpop.f32.mrb[0].mxu0
        %v1134 = vadd.f32 0.0, %v1133
        %v1135 = vpop.f32.mrb[0].mxu0
        %1136 = vdwg.mxu0
        %v1145 = vunpack.c.l.b16 %v426
        %v1146 = vunpack.c.l.b16 %v427
        %v1147 = vunpack.c.l.b16 %v428
        %v1148 = vunpack.c.l.b16 %v429
        %v1149 = vunpack.c.l.b16 %v430
        %v1150 = vunpack.c.l.b16 %v431
        %v1151 = vunpack.c.l.b16 %v432
        %v1152 = vunpack.c.l.b16 %v433
        %v1153 = vpack.c.b16 %v1146, %v1145
        %v1154 = vpack.c.b16 %v1148, %v1147
        %v1155 = vpack.c.b16 %v1150, %v1149
        %v1156 = vpack.c.b16 %v1152, %v1151
        %v1161 = vsel %vm930, %v693, 0
        %v1163 = vsel %vm930, %v694, 0
        %v1165 = vsel %vm930, %v695, 0
        %v1167 = vsel %vm930, %v696, 0
        %v1169 = vsel %vm930, %v697, 0
        %v1171 = vsel %vm930, %v698, 0
        %v1173 = vsel %vm930, %v699, 0
        %v1175 = vsel %vm930, %v700, 0
        %v1177 = vsel %vm930, %v701, 0
        %v1179 = vsel %vm930, %v702, 0
        %v1181 = vsel %vm930, %v703, 0
        %v1183 = vsel %vm930, %v704, 0
        %v1185 = vsel %vm930, %v705, 0
        %v1187 = vsel %vm930, %v706, 0
        %v1189 = vsel %vm930, %v707, 0
        %1191 = vmatprep.subr.bf16.mxu0 0
        %1192 = vmatpush1.bf16.msra.mxu0 %v1153
        %1193 = vmatprep.subr.bf16.mxu0 0
        %1194 = vmatpush1.bf16.msra.mxu0 %v1154
        %1195 = vmatprep.subr.bf16.mxu0 0
        %1196 = vmatpush1.bf16.msra.mxu0 %v1155
        %1197 = vmatprep.subr.bf16.mxu0 0
        %1198 = vmatpush1.bf16.msra.mxu0 %v1156
        %1199 = vmatprep.subr.bf16.mxu0 0
        %1200 = vmatpush1.bf16.msra.mxu0 0
        %1201 = vmatprep.subr.bf16.mxu0 0
        %1202 = vmatpush1.bf16.msra.mxu0 0
        %1203 = vmatprep.subr.bf16.mxu0 0
        %1204 = vmatpush1.bf16.msra.mxu0 0
        %1205 = vmatprep.subr.bf16.mxu0 0
        %1206 = vmatpush1.bf16.msra.mxu0 0
        %1207 = vmatprep.subr.bf16.mxu0 0
        %1208 = vmatpush1.bf16.msra.mxu0 0
        %1209 = vmatprep.subr.bf16.mxu0 0
        %1210 = vmatpush1.bf16.msra.mxu0 0
        %1211 = vmatprep.subr.bf16.mxu0 0
        %1212 = vmatpush1.bf16.msra.mxu0 0
        %1213 = vmatprep.subr.bf16.mxu0 0
        %1214 = vmatpush1.bf16.msra.mxu0 0
        %1215 = vmatprep.subr.bf16.mxu0 0
        %1216 = vmatpush1.bf16.msra.mxu0 0
        %1217 = vmatprep.subr.bf16.mxu0 0
        %1218 = vmatpush1.bf16.msra.mxu0 0
        %1219 = vmatprep.subr.bf16.mxu0 0
        %1220 = vmatpush1.bf16.msra.mxu0 0
        %1221 = vmatprep.subr.bf16.mxu0 0
        %1222 = vmatpush1.bf16.msra.mxu0 0
        %1223 = vmatprep.mubr.bf16.mxu0 0
        %1224 = vmatmul.mubr.bf16.gmra.mrb[0].mxu0 %v1161
        %v1225 = vpop.f32.mrb[0].mxu0
        %v1226 = vadd.f32 %v1011, %v1225
        %v1227 = vpop.f32.mrb[0].mxu0
        %v1228 = vpop.f32.mrb[0].mxu0
        %v1229 = vadd.f32 %v1014, %v1228
        %v1230 = vpop.f32.mrb[0].mxu0
        %1231 = vmatprep.mubr.bf16.mxu0 0
        %1232 = vmatmul.mubr.bf16.gmra.mrb[0].mxu0 %v1163
        %v1233 = vpop.f32.mrb[0].mxu0
        %v1234 = vadd.f32 %v1019, %v1233
        %v1235 = vpop.f32.mrb[0].mxu0
        %v1236 = vpop.f32.mrb[0].mxu0
        %v1237 = vadd.f32 %v1022, %v1236
        %v1238 = vpop.f32.mrb[0].mxu0
        %1239 = vmatprep.mubr.bf16.mxu0 0
        %1240 = vmatmul.mubr.bf16.gmra.mrb[0].mxu0 %v1161
        %v1241 = vpop.f32.mrb[0].mxu0
        %v1242 = vadd.f32 %v1027, %v1241
        %v1243 = vpop.f32.mrb[0].mxu0
        %v1244 = vpop.f32.mrb[0].mxu0
        %v1245 = vadd.f32 %v1030, %v1244
        %v1246 = vpop.f32.mrb[0].mxu0
        %1247 = vmatprep.mubr.bf16.mxu0 0
        %1248 = vmatmul.mubr.bf16.gmra.mrb[0].mxu0 %v1165
        %v1249 = vpop.f32.mrb[0].mxu0
        %v1250 = vadd.f32 %v1035, %v1249
        %v1251 = vpop.f32.mrb[0].mxu0
        %v1252 = vpop.f32.mrb[0].mxu0
        %v1253 = vadd.f32 %v1038, %v1252
        %v1254 = vpop.f32.mrb[0].mxu0
        %1255 = vmatprep.mubr.bf16.mxu0 0
        %1256 = vmatmul.mubr.bf16.gmra.mrb[0].mxu0 %v1167
        %v1257 = vpop.f32.mrb[0].mxu0
        %v1258 = vadd.f32 %v1043, %v1257
        %v1259 = vpop.f32.mrb[0].mxu0
        %v1260 = vpop.f32.mrb[0].mxu0
        %v1261 = vadd.f32 %v1046, %v1260
        %v1262 = vpop.f32.mrb[0].mxu0
        %1263 = vmatprep.mubr.bf16.mxu0 0
        %1264 = vmatmul.mubr.bf16.gmra.mrb[0].mxu0 %v1169
        %v1265 = vpop.f32.mrb[0].mxu0
        %v1266 = vadd.f32 %v1051, %v1265
        %v1267 = vpop.f32.mrb[0].mxu0
        %v1268 = vpop.f32.mrb[0].mxu0
        %v1269 = vadd.f32 %v1054, %v1268
        %v1270 = vpop.f32.mrb[0].mxu0
        %1271 = vmatprep.mubr.bf16.mxu0 0
        %1272 = vmatmul.mubr.bf16.gmra.mrb[0].mxu0 %v1171
        %v1273 = vpop.f32.mrb[0].mxu0
        %v1274 = vadd.f32 %v1059, %v1273
        %v1275 = vpop.f32.mrb[0].mxu0
        %v1276 = vpop.f32.mrb[0].mxu0
        %v1277 = vadd.f32 %v1062, %v1276
        %v1278 = vpop.f32.mrb[0].mxu0
        %1279 = vmatprep.mubr.bf16.mxu0 0
        %1280 = vmatmul.mubr.bf16.gmra.mrb[0].mxu0 %v1173
        %v1281 = vpop.f32.mrb[0].mxu0
        %v1282 = vadd.f32 %v1067, %v1281
        %v1283 = vpop.f32.mrb[0].mxu0
        %v1284 = vpop.f32.mrb[0].mxu0
        %v1285 = vadd.f32 %v1070, %v1284
        %v1286 = vpop.f32.mrb[0].mxu0
        %1287 = vmatprep.mubr.bf16.mxu0 0
        %1288 = vmatmul.mubr.bf16.gmra.mrb[0].mxu0 %v1175
        %v1289 = vpop.f32.mrb[0].mxu0
        %v1290 = vadd.f32 %v1075, %v1289
        %v1291 = vpop.f32.mrb[0].mxu0
        %v1292 = vpop.f32.mrb[0].mxu0
        %v1293 = vadd.f32 %v1078, %v1292
        %v1294 = vpop.f32.mrb[0].mxu0
        %1295 = vmatprep.mubr.bf16.mxu0 0
        %1296 = vmatmul.mubr.bf16.gmra.mrb[0].mxu0 %v1177
        %v1297 = vpop.f32.mrb[0].mxu0
        %v1298 = vadd.f32 %v1083, %v1297
        %v1299 = vpop.f32.mrb[0].mxu0
        %v1300 = vpop.f32.mrb[0].mxu0
        %v1301 = vadd.f32 %v1086, %v1300
        %v1302 = vpop.f32.mrb[0].mxu0
        %1303 = vmatprep.mubr.bf16.mxu0 0
        %1304 = vmatmul.mubr.bf16.gmra.mrb[0].mxu0 %v1179
        %v1305 = vpop.f32.mrb[0].mxu0
        %v1306 = vadd.f32 %v1091, %v1305
        %v1307 = vpop.f32.mrb[0].mxu0
        %v1308 = vpop.f32.mrb[0].mxu0
        %v1309 = vadd.f32 %v1094, %v1308
        %v1310 = vpop.f32.mrb[0].mxu0
        %1311 = vmatprep.mubr.bf16.mxu0 0
        %1312 = vmatmul.mubr.bf16.gmra.mrb[0].mxu0 %v1181
        %v1313 = vpop.f32.mrb[0].mxu0
        %v1314 = vadd.f32 %v1099, %v1313
        %v1315 = vpop.f32.mrb[0].mxu0
        %v1316 = vpop.f32.mrb[0].mxu0
        %v1317 = vadd.f32 %v1102, %v1316
        %v1318 = vpop.f32.mrb[0].mxu0
        %1319 = vmatprep.mubr.bf16.mxu0 0
        %1320 = vmatmul.mubr.bf16.gmra.mrb[0].mxu0 %v1183
        %v1321 = vpop.f32.mrb[0].mxu0
        %v1322 = vadd.f32 %v1107, %v1321
        %v1323 = vpop.f32.mrb[0].mxu0
        %v1324 = vpop.f32.mrb[0].mxu0
        %v1325 = vadd.f32 %v1110, %v1324
        %v1326 = vpop.f32.mrb[0].mxu0
        %1327 = vmatprep.mubr.bf16.mxu0 0
        %1328 = vmatmul.mubr.bf16.gmra.mrb[0].mxu0 %v1185
        %v1329 = vpop.f32.mrb[0].mxu0
        %v1330 = vadd.f32 %v1115, %v1329
        %v1331 = vpop.f32.mrb[0].mxu0
        %v1332 = vpop.f32.mrb[0].mxu0
        %v1333 = vadd.f32 %v1118, %v1332
        %v1334 = vpop.f32.mrb[0].mxu0
        %1335 = vmatprep.mubr.bf16.mxu0 0
        %1336 = vmatmul.mubr.bf16.gmra.mrb[0].mxu0 %v1187
        %v1337 = vpop.f32.mrb[0].mxu0
        %v1338 = vadd.f32 %v1123, %v1337
        %v1339 = vpop.f32.mrb[0].mxu0
        %v1340 = vpop.f32.mrb[0].mxu0
        %v1341 = vadd.f32 %v1126, %v1340
        %v1342 = vpop.f32.mrb[0].mxu0
        %1343 = vmatprep.mubr.bf16.mxu0 0
        %1344 = vmatmul.mubr.bf16.gmra.mrb[0].mxu0 %v1189
        %v1345 = vpop.f32.mrb[0].mxu0
        %v1346 = vadd.f32 %v1131, %v1345
        %v1347 = vpop.f32.mrb[0].mxu0
        %v1348 = vpop.f32.mrb[0].mxu0
        %v1349 = vadd.f32 %v1134, %v1348
        %v1350 = vpop.f32.mrb[0].mxu0
        %1351 = vdwg.mxu0
        %vm1382 = vcmask 1046528
        %v1383 = vrot.slane %v693, 1
        %v1384 = vrot.slane %v709, 1
        %v1385 = vsel %vm1382, %v1383, %v1384
        %v1386 = vrot.slane %v694, 1
        %v1387 = vrot.slane %v710, 1
        %v1388 = vsel %vm1382, %v1386, %v1387
        %v1389 = vrot.slane %v695, 1
        %v1390 = vrot.slane %v711, 1
        %v1391 = vsel %vm1382, %v1389, %v1390
        %v1392 = vrot.slane %v696, 1
        %v1393 = vrot.slane %v712, 1
        %v1394 = vsel %vm1382, %v1392, %v1393
        %v1395 = vrot.slane %v697, 1
        %v1396 = vrot.slane %v713, 1
        %v1397 = vsel %vm1382, %v1395, %v1396
        %v1398 = vrot.slane %v698, 1
        %v1399 = vrot.slane %v714, 1
        %v1400 = vsel %vm1382, %v1398, %v1399
        %v1401 = vrot.slane %v699, 1
        %v1402 = vrot.slane %v715, 1
        %v1403 = vsel %vm1382, %v1401, %v1402
        %v1404 = vrot.slane %v700, 1
        %v1405 = vrot.slane %v716, 1
        %v1406 = vsel %vm1382, %v1404, %v1405
        %v1407 = vrot.slane %v701, 1
        %v1408 = vrot.slane %v717, 1
        %v1409 = vsel %vm1382, %v1407, %v1408
        %v1410 = vrot.slane %v702, 1
        %v1411 = vrot.slane %v718, 1
        %v1412 = vsel %vm1382, %v1410, %v1411
        %v1413 = vrot.slane %v703, 1
        %v1414 = vrot.slane %v719, 1
        %v1415 = vsel %vm1382, %v1413, %v1414
        %v1416 = vrot.slane %v704, 1
        %v1417 = vrot.slane %v720, 1
        %v1418 = vsel %vm1382, %v1416, %v1417
        %v1419 = vrot.slane %v705, 1
        %v1420 = vrot.slane %v721, 1
        %v1421 = vsel %vm1382, %v1419, %v1420
        %v1422 = vrot.slane %v706, 1
        %v1423 = vrot.slane %v722, 1
        %v1424 = vsel %vm1382, %v1422, %v1423
        %v1425 = vrot.slane %v707, 1
        %v1426 = vrot.slane %v723, 1
        %v1427 = vsel %vm1382, %v1425, %v1426
        %v1436 = vunpack.c.l.b16 %v442
        %v1437 = vunpack.c.l.b16 %v443
        %v1438 = vunpack.c.l.b16 %v444
        %v1439 = vunpack.c.l.b16 %v445
        %v1440 = vunpack.c.l.b16 %v446
        %v1441 = vunpack.c.l.b16 %v447
        %v1442 = vunpack.c.l.b16 %v448
        %v1443 = vunpack.c.l.b16 %v449
        %v1444 = vpack.c.b16 %v1437, %v1436
        %v1445 = vpack.c.b16 %v1439, %v1438
        %v1446 = vpack.c.b16 %v1441, %v1440
        %v1447 = vpack.c.b16 %v1443, %v1442
        %v1453 = vsel %vm930, %v1385, 0
        %v1456 = vsel %vm930, %v1388, 0
        %v1459 = vsel %vm930, %v1391, 0
        %v1462 = vsel %vm930, %v1394, 0
        %v1465 = vsel %vm930, %v1397, 0
        %v1468 = vsel %vm930, %v1400, 0
        %v1471 = vsel %vm930, %v1403, 0
        %v1474 = vsel %vm930, %v1406, 0
        %v1477 = vsel %vm930, %v1409, 0
        %v1480 = vsel %vm930, %v1412, 0
        %v1483 = vsel %vm930, %v1415, 0
        %v1486 = vsel %vm930, %v1418, 0
        %v1489 = vsel %vm930, %v1421, 0
        %v1492 = vsel %vm930, %v1424, 0
        %v1495 = vsel %vm930, %v1427, 0
        %1497 = vmatprep.subr.bf16.mxu0 0
        %1498 = vmatpush1.bf16.msra.mxu0 %v1444
        %1499 = vmatprep.subr.bf16.mxu0 0
        %1500 = vmatpush1.bf16.msra.mxu0 %v1445
        %1501 = vmatprep.subr.bf16.mxu0 0
        %1502 = vmatpush1.bf16.msra.mxu0 %v1446
        %1503 = vmatprep.subr.bf16.mxu0 0
        %1504 = vmatpush1.bf16.msra.mxu0 %v1447
        %1505 = vmatprep.subr.bf16.mxu0 0
        %1506 = vmatpush1.bf16.msra.mxu0 0
        %1507 = vmatprep.subr.bf16.mxu0 0
        %1508 = vmatpush1.bf16.msra.mxu0 0
        %1509 = vmatprep.subr.bf16.mxu0 0
        %1510 = vmatpush1.bf16.msra.mxu0 0
        %1511 = vmatprep.subr.bf16.mxu0 0
        %1512 = vmatpush1.bf16.msra.mxu0 0
        %1513 = vmatprep.subr.bf16.mxu0 0
        %1514 = vmatpush1.bf16.msra.mxu0 0
        %1515 = vmatprep.subr.bf16.mxu0 0
        %1516 = vmatpush1.bf16.msra.mxu0 0
        %1517 = vmatprep.subr.bf16.mxu0 0
        %1518 = vmatpush1.bf16.msra.mxu0 0
        %1519 = vmatprep.subr.bf16.mxu0 0
        %1520 = vmatpush1.bf16.msra.mxu0 0
        %1521 = vmatprep.subr.bf16.mxu0 0
        %1522 = vmatpush1.bf16.msra.mxu0 0
        %1523 = vmatprep.subr.bf16.mxu0 0
        %1524 = vmatpush1.bf16.msra.mxu0 0
        %1525 = vmatprep.subr.bf16.mxu0 0
        %1526 = vmatpush1.bf16.msra.mxu0 0
        %1527 = vmatprep.subr.bf16.mxu0 0
        %1528 = vmatpush1.bf16.msra.mxu0 0
        %1529 = vmatprep.mubr.bf16.mxu0 0
        %1530 = vmatmul.mubr.bf16.gmra.mrb[0].mxu0 %v1453
        %v1531 = vpop.f32.mrb[0].mxu0
        %v1532 = vadd.f32 0.0, %v1531
        %v1533 = vpop.f32.mrb[0].mxu0
        %v1534 = vpop.f32.mrb[0].mxu0
        %v1535 = vadd.f32 0.0, %v1534
        %v1536 = vpop.f32.mrb[0].mxu0
        %1537 = vmatprep.mubr.bf16.mxu0 0
        %1538 = vmatmul.mubr.bf16.gmra.mrb[0].mxu0 %v1456
        %v1539 = vpop.f32.mrb[0].mxu0
        %v1540 = vadd.f32 0.0, %v1539
        %v1541 = vpop.f32.mrb[0].mxu0
        %v1542 = vpop.f32.mrb[0].mxu0
        %v1543 = vadd.f32 0.0, %v1542
        %v1544 = vpop.f32.mrb[0].mxu0
        %1545 = vmatprep.mubr.bf16.mxu0 0
        %1546 = vmatmul.mubr.bf16.gmra.mrb[0].mxu0 %v1453
        %v1547 = vpop.f32.mrb[0].mxu0
        %v1548 = vadd.f32 0.0, %v1547
        %v1549 = vpop.f32.mrb[0].mxu0
        %v1550 = vpop.f32.mrb[0].mxu0
        %v1551 = vadd.f32 0.0, %v1550
        %v1552 = vpop.f32.mrb[0].mxu0
        %1553 = vmatprep.mubr.bf16.mxu0 0
        %1554 = vmatmul.mubr.bf16.gmra.mrb[0].mxu0 %v1459
        %v1555 = vpop.f32.mrb[0].mxu0
        %v1556 = vadd.f32 0.0, %v1555
        %v1557 = vpop.f32.mrb[0].mxu0
        %v1558 = vpop.f32.mrb[0].mxu0
        %v1559 = vadd.f32 0.0, %v1558
        %v1560 = vpop.f32.mrb[0].mxu0
        %1561 = vmatprep.mubr.bf16.mxu0 0
        %1562 = vmatmul.mubr.bf16.gmra.mrb[0].mxu0 %v1462
        %v1563 = vpop.f32.mrb[0].mxu0
        %v1564 = vadd.f32 0.0, %v1563
        %v1565 = vpop.f32.mrb[0].mxu0
        %v1566 = vpop.f32.mrb[0].mxu0
        %v1567 = vadd.f32 0.0, %v1566
        %v1568 = vpop.f32.mrb[0].mxu0
        %1569 = vmatprep.mubr.bf16.mxu0 0
        %1570 = vmatmul.mubr.bf16.gmra.mrb[0].mxu0 %v1465
        %v1571 = vpop.f32.mrb[0].mxu0
        %v1572 = vadd.f32 0.0, %v1571
        %v1573 = vpop.f32.mrb[0].mxu0
        %v1574 = vpop.f32.mrb[0].mxu0
        %v1575 = vadd.f32 0.0, %v1574
        %v1576 = vpop.f32.mrb[0].mxu0
        %1577 = vmatprep.mubr.bf16.mxu0 0
        %1578 = vmatmul.mubr.bf16.gmra.mrb[0].mxu0 %v1468
        %v1579 = vpop.f32.mrb[0].mxu0
        %v1580 = vadd.f32 0.0, %v1579
        %v1581 = vpop.f32.mrb[0].mxu0
        %v1582 = vpop.f32.mrb[0].mxu0
        %v1583 = vadd.f32 0.0, %v1582
        %v1584 = vpop.f32.mrb[0].mxu0
        %1585 = vmatprep.mubr.bf16.mxu0 0
        %1586 = vmatmul.mubr.bf16.gmra.mrb[0].mxu0 %v1471
        %v1587 = vpop.f32.mrb[0].mxu0
        %v1588 = vadd.f32 0.0, %v1587
        %v1589 = vpop.f32.mrb[0].mxu0
        %v1590 = vpop.f32.mrb[0].mxu0
        %v1591 = vadd.f32 0.0, %v1590
        %v1592 = vpop.f32.mrb[0].mxu0
        %1593 = vmatprep.mubr.bf16.mxu0 0
        %1594 = vmatmul.mubr.bf16.gmra.mrb[0].mxu0 %v1474
        %v1595 = vpop.f32.mrb[0].mxu0
        %v1596 = vadd.f32 0.0, %v1595
        %v1597 = vpop.f32.mrb[0].mxu0
        %v1598 = vpop.f32.mrb[0].mxu0
        %v1599 = vadd.f32 0.0, %v1598
        %v1600 = vpop.f32.mrb[0].mxu0
        %1601 = vmatprep.mubr.bf16.mxu0 0
        %1602 = vmatmul.mubr.bf16.gmra.mrb[0].mxu0 %v1477
        %v1603 = vpop.f32.mrb[0].mxu0
        %v1604 = vadd.f32 0.0, %v1603
        %v1605 = vpop.f32.mrb[0].mxu0
        %v1606 = vpop.f32.mrb[0].mxu0
        %v1607 = vadd.f32 0.0, %v1606
        %v1608 = vpop.f32.mrb[0].mxu0
        %1609 = vmatprep.mubr.bf16.mxu0 0
        %1610 = vmatmul.mubr.bf16.gmra.mrb[0].mxu0 %v1480
        %v1611 = vpop.f32.mrb[0].mxu0
        %v1612 = vadd.f32 0.0, %v1611
        %v1613 = vpop.f32.mrb[0].mxu0
        %v1614 = vpop.f32.mrb[0].mxu0
        %v1615 = vadd.f32 0.0, %v1614
        %v1616 = vpop.f32.mrb[0].mxu0
        %1617 = vmatprep.mubr.bf16.mxu0 0
        %1618 = vmatmul.mubr.bf16.gmra.mrb[0].mxu0 %v1483
        %v1619 = vpop.f32.mrb[0].mxu0
        %v1620 = vadd.f32 0.0, %v1619
        %v1621 = vpop.f32.mrb[0].mxu0
        %v1622 = vpop.f32.mrb[0].mxu0
        %v1623 = vadd.f32 0.0, %v1622
        %v1624 = vpop.f32.mrb[0].mxu0
        %1625 = vmatprep.mubr.bf16.mxu0 0
        %1626 = vmatmul.mubr.bf16.gmra.mrb[0].mxu0 %v1486
        %v1627 = vpop.f32.mrb[0].mxu0
        %v1628 = vadd.f32 0.0, %v1627
        %v1629 = vpop.f32.mrb[0].mxu0
        %v1630 = vpop.f32.mrb[0].mxu0
        %v1631 = vadd.f32 0.0, %v1630
        %v1632 = vpop.f32.mrb[0].mxu0
        %1633 = vmatprep.mubr.bf16.mxu0 0
        %1634 = vmatmul.mubr.bf16.gmra.mrb[0].mxu0 %v1489
        %v1635 = vpop.f32.mrb[0].mxu0
        %v1636 = vadd.f32 0.0, %v1635
        %v1637 = vpop.f32.mrb[0].mxu0
        %v1638 = vpop.f32.mrb[0].mxu0
        %v1639 = vadd.f32 0.0, %v1638
        %v1640 = vpop.f32.mrb[0].mxu0
        %1641 = vmatprep.mubr.bf16.mxu0 0
        %1642 = vmatmul.mubr.bf16.gmra.mrb[0].mxu0 %v1492
        %v1643 = vpop.f32.mrb[0].mxu0
        %v1644 = vadd.f32 0.0, %v1643
        %v1645 = vpop.f32.mrb[0].mxu0
        %v1646 = vpop.f32.mrb[0].mxu0
        %v1647 = vadd.f32 0.0, %v1646
        %v1648 = vpop.f32.mrb[0].mxu0
        %1649 = vmatprep.mubr.bf16.mxu0 0
        %1650 = vmatmul.mubr.bf16.gmra.mrb[0].mxu0 %v1495
        %v1651 = vpop.f32.mrb[0].mxu0
        %v1652 = vadd.f32 0.0, %v1651
        %v1653 = vpop.f32.mrb[0].mxu0
        %v1654 = vpop.f32.mrb[0].mxu0
        %v1655 = vadd.f32 0.0, %v1654
        %v1656 = vpop.f32.mrb[0].mxu0
        %1657 = vdwg.mxu0
        %v1658 = vadd.f32 %v1226, %v1532
        %v1659 = vadd.f32 %v1229, %v1535
        %v1660 = vadd.f32 %v1234, %v1540
        %v1661 = vadd.f32 %v1237, %v1543
        %v1662 = vadd.f32 %v1242, %v1548
        %v1663 = vadd.f32 %v1245, %v1551
        %v1664 = vadd.f32 %v1250, %v1556
        %v1665 = vadd.f32 %v1253, %v1559
        %v1666 = vadd.f32 %v1258, %v1564
        %v1667 = vadd.f32 %v1261, %v1567
        %v1668 = vadd.f32 %v1266, %v1572
        %v1669 = vadd.f32 %v1269, %v1575
        %v1670 = vadd.f32 %v1274, %v1580
        %v1671 = vadd.f32 %v1277, %v1583
        %v1672 = vadd.f32 %v1282, %v1588
        %v1673 = vadd.f32 %v1285, %v1591
        %v1674 = vadd.f32 %v1290, %v1596
        %v1675 = vadd.f32 %v1293, %v1599
        %v1676 = vadd.f32 %v1298, %v1604
        %v1677 = vadd.f32 %v1301, %v1607
        %v1678 = vadd.f32 %v1306, %v1612
        %v1679 = vadd.f32 %v1309, %v1615
        %v1680 = vadd.f32 %v1314, %v1620
        %v1681 = vadd.f32 %v1317, %v1623
        %v1682 = vadd.f32 %v1322, %v1628
        %v1683 = vadd.f32 %v1325, %v1631
        %v1684 = vadd.f32 %v1330, %v1636
        %v1685 = vadd.f32 %v1333, %v1639
        %v1686 = vadd.f32 %v1338, %v1644
        %v1687 = vadd.f32 %v1341, %v1647
        %v1688 = vadd.f32 %v1346, %v1652
        %v1689 = vadd.f32 %v1349, %v1655
        %v1698 = vunpack.c.l.b16 %v450
        %v1699 = vunpack.c.l.b16 %v451
        %v1700 = vunpack.c.l.b16 %v452
        %v1701 = vunpack.c.l.b16 %v453
        %v1702 = vunpack.c.l.b16 %v454
        %v1703 = vunpack.c.l.b16 %v455
        %v1704 = vunpack.c.l.b16 %v456
        %v1705 = vunpack.c.l.b16 %v457
        %v1706 = vpack.c.b16 %v1699, %v1698
        %v1707 = vpack.c.b16 %v1701, %v1700
        %v1708 = vpack.c.b16 %v1703, %v1702
        %v1709 = vpack.c.b16 %v1705, %v1704
        %v1715 = vsel %vm930, %v708, 0
        %1717 = vmatprep.subr.bf16.mxu0 0
        %1718 = vmatpush1.bf16.msra.mxu0 %v1706
        %1719 = vmatprep.subr.bf16.mxu0 0
        %1720 = vmatpush1.bf16.msra.mxu0 %v1707
        %1721 = vmatprep.subr.bf16.mxu0 0
        %1722 = vmatpush1.bf16.msra.mxu0 %v1708
        %1723 = vmatprep.subr.bf16.mxu0 0
        %1724 = vmatpush1.bf16.msra.mxu0 %v1709
        %1725 = vmatprep.subr.bf16.mxu0 0
        %1726 = vmatpush1.bf16.msra.mxu0 0
        %1727 = vmatprep.subr.bf16.mxu0 0
        %1728 = vmatpush1.bf16.msra.mxu0 0
        %1729 = vmatprep.subr.bf16.mxu0 0
        %1730 = vmatpush1.bf16.msra.mxu0 0
        %1731 = vmatprep.subr.bf16.mxu0 0
        %1732 = vmatpush1.bf16.msra.mxu0 0
        %1733 = vmatprep.subr.bf16.mxu0 0
        %1734 = vmatpush1.bf16.msra.mxu0 0
        %1735 = vmatprep.subr.bf16.mxu0 0
        %1736 = vmatpush1.bf16.msra.mxu0 0
        %1737 = vmatprep.subr.bf16.mxu0 0
        %1738 = vmatpush1.bf16.msra.mxu0 0
        %1739 = vmatprep.subr.bf16.mxu0 0
        %1740 = vmatpush1.bf16.msra.mxu0 0
        %1741 = vmatprep.subr.bf16.mxu0 0
        %1742 = vmatpush1.bf16.msra.mxu0 0
        %1743 = vmatprep.subr.bf16.mxu0 0
        %1744 = vmatpush1.bf16.msra.mxu0 0
        %1745 = vmatprep.subr.bf16.mxu0 0
        %1746 = vmatpush1.bf16.msra.mxu0 0
        %1747 = vmatprep.subr.bf16.mxu0 0
        %1748 = vmatpush1.bf16.msra.mxu0 0
        %1749 = vmatprep.mubr.bf16.mxu0 0
        %1750 = vmatmul.mubr.bf16.gmra.mrb[0].mxu0 %v1163
        %v1751 = vpop.f32.mrb[0].mxu0
        %v1752 = vadd.f32 0.0, %v1751
        %v1753 = vpop.f32.mrb[0].mxu0
        %v1754 = vpop.f32.mrb[0].mxu0
        %v1755 = vadd.f32 0.0, %v1754
        %v1756 = vpop.f32.mrb[0].mxu0
        %1757 = vmatprep.mubr.bf16.mxu0 0
        %1758 = vmatmul.mubr.bf16.gmra.mrb[0].mxu0 %v1161
        %v1759 = vpop.f32.mrb[0].mxu0
        %v1760 = vadd.f32 0.0, %v1759
        %v1761 = vpop.f32.mrb[0].mxu0
        %v1762 = vpop.f32.mrb[0].mxu0
        %v1763 = vadd.f32 0.0, %v1762
        %v1764 = vpop.f32.mrb[0].mxu0
        %1765 = vmatprep.mubr.bf16.mxu0 0
        %1766 = vmatmul.mubr.bf16.gmra.mrb[0].mxu0 %v1165
        %v1767 = vpop.f32.mrb[0].mxu0
        %v1768 = vadd.f32 0.0, %v1767
        %v1769 = vpop.f32.mrb[0].mxu0
        %v1770 = vpop.f32.mrb[0].mxu0
        %v1771 = vadd.f32 0.0, %v1770
        %v1772 = vpop.f32.mrb[0].mxu0
        %1773 = vmatprep.mubr.bf16.mxu0 0
        %1774 = vmatmul.mubr.bf16.gmra.mrb[0].mxu0 %v1167
        %v1775 = vpop.f32.mrb[0].mxu0
        %v1776 = vadd.f32 0.0, %v1775
        %v1777 = vpop.f32.mrb[0].mxu0
        %v1778 = vpop.f32.mrb[0].mxu0
        %v1779 = vadd.f32 0.0, %v1778
        %v1780 = vpop.f32.mrb[0].mxu0
        %1781 = vmatprep.mubr.bf16.mxu0 0
        %1782 = vmatmul.mubr.bf16.gmra.mrb[0].mxu0 %v1169
        %v1783 = vpop.f32.mrb[0].mxu0
        %v1784 = vadd.f32 0.0, %v1783
        %v1785 = vpop.f32.mrb[0].mxu0
        %v1786 = vpop.f32.mrb[0].mxu0
        %v1787 = vadd.f32 0.0, %v1786
        %v1788 = vpop.f32.mrb[0].mxu0
        %1789 = vmatprep.mubr.bf16.mxu0 0
        %1790 = vmatmul.mubr.bf16.gmra.mrb[0].mxu0 %v1171
        %v1791 = vpop.f32.mrb[0].mxu0
        %v1792 = vadd.f32 0.0, %v1791
        %v1793 = vpop.f32.mrb[0].mxu0
        %v1794 = vpop.f32.mrb[0].mxu0
        %v1795 = vadd.f32 0.0, %v1794
        %v1796 = vpop.f32.mrb[0].mxu0
        %1797 = vmatprep.mubr.bf16.mxu0 0
        %1798 = vmatmul.mubr.bf16.gmra.mrb[0].mxu0 %v1173
        %v1799 = vpop.f32.mrb[0].mxu0
        %v1800 = vadd.f32 0.0, %v1799
        %v1801 = vpop.f32.mrb[0].mxu0
        %v1802 = vpop.f32.mrb[0].mxu0
        %v1803 = vadd.f32 0.0, %v1802
        %v1804 = vpop.f32.mrb[0].mxu0
        %1805 = vmatprep.mubr.bf16.mxu0 0
        %1806 = vmatmul.mubr.bf16.gmra.mrb[0].mxu0 %v1175
        %v1807 = vpop.f32.mrb[0].mxu0
        %v1808 = vadd.f32 0.0, %v1807
        %v1809 = vpop.f32.mrb[0].mxu0
        %v1810 = vpop.f32.mrb[0].mxu0
        %v1811 = vadd.f32 0.0, %v1810
        %v1812 = vpop.f32.mrb[0].mxu0
        %1813 = vmatprep.mubr.bf16.mxu0 0
        %1814 = vmatmul.mubr.bf16.gmra.mrb[0].mxu0 %v1177
        %v1815 = vpop.f32.mrb[0].mxu0
        %v1816 = vadd.f32 0.0, %v1815
        %v1817 = vpop.f32.mrb[0].mxu0
        %v1818 = vpop.f32.mrb[0].mxu0
        %v1819 = vadd.f32 0.0, %v1818
        %v1820 = vpop.f32.mrb[0].mxu0
        %1821 = vmatprep.mubr.bf16.mxu0 0
        %1822 = vmatmul.mubr.bf16.gmra.mrb[0].mxu0 %v1179
        %v1823 = vpop.f32.mrb[0].mxu0
        %v1824 = vadd.f32 0.0, %v1823
        %v1825 = vpop.f32.mrb[0].mxu0
        %v1826 = vpop.f32.mrb[0].mxu0
        %v1827 = vadd.f32 0.0, %v1826
        %v1828 = vpop.f32.mrb[0].mxu0
        %1829 = vmatprep.mubr.bf16.mxu0 0
        %1830 = vmatmul.mubr.bf16.gmra.mrb[0].mxu0 %v1181
        %v1831 = vpop.f32.mrb[0].mxu0
        %v1832 = vadd.f32 0.0, %v1831
        %v1833 = vpop.f32.mrb[0].mxu0
        %v1834 = vpop.f32.mrb[0].mxu0
        %v1835 = vadd.f32 0.0, %v1834
        %v1836 = vpop.f32.mrb[0].mxu0
        %1837 = vmatprep.mubr.bf16.mxu0 0
        %1838 = vmatmul.mubr.bf16.gmra.mrb[0].mxu0 %v1183
        %v1839 = vpop.f32.mrb[0].mxu0
        %v1840 = vadd.f32 0.0, %v1839
        %v1841 = vpop.f32.mrb[0].mxu0
        %v1842 = vpop.f32.mrb[0].mxu0
        %v1843 = vadd.f32 0.0, %v1842
        %v1844 = vpop.f32.mrb[0].mxu0
        %1845 = vmatprep.mubr.bf16.mxu0 0
        %1846 = vmatmul.mubr.bf16.gmra.mrb[0].mxu0 %v1185
        %v1847 = vpop.f32.mrb[0].mxu0
        %v1848 = vadd.f32 0.0, %v1847
        %v1849 = vpop.f32.mrb[0].mxu0
        %v1850 = vpop.f32.mrb[0].mxu0
        %v1851 = vadd.f32 0.0, %v1850
        %v1852 = vpop.f32.mrb[0].mxu0
        %1853 = vmatprep.mubr.bf16.mxu0 0
        %1854 = vmatmul.mubr.bf16.gmra.mrb[0].mxu0 %v1187
        %v1855 = vpop.f32.mrb[0].mxu0
        %v1856 = vadd.f32 0.0, %v1855
        %v1857 = vpop.f32.mrb[0].mxu0
        %v1858 = vpop.f32.mrb[0].mxu0
        %v1859 = vadd.f32 0.0, %v1858
        %v1860 = vpop.f32.mrb[0].mxu0
        %1861 = vmatprep.mubr.bf16.mxu0 0
        %1862 = vmatmul.mubr.bf16.gmra.mrb[0].mxu0 %v1189
        %v1863 = vpop.f32.mrb[0].mxu0
        %v1864 = vadd.f32 0.0, %v1863
        %v1865 = vpop.f32.mrb[0].mxu0
        %v1866 = vpop.f32.mrb[0].mxu0
        %v1867 = vadd.f32 0.0, %v1866
        %v1868 = vpop.f32.mrb[0].mxu0
        %1869 = vmatprep.mubr.bf16.mxu0 0
        %1870 = vmatmul.mubr.bf16.gmra.mrb[0].mxu0 %v1715
        %v1871 = vpop.f32.mrb[0].mxu0
        %v1872 = vadd.f32 0.0, %v1871
        %v1873 = vpop.f32.mrb[0].mxu0
        %v1874 = vpop.f32.mrb[0].mxu0
        %v1875 = vadd.f32 0.0, %v1874
        %v1876 = vpop.f32.mrb[0].mxu0
        %1877 = vdwg.mxu0
        %v1878 = vadd.f32 %v1658, %v1752
        %v1879 = vadd.f32 %v1659, %v1755
        %v1880 = vadd.f32 %v1660, %v1760
        %v1881 = vadd.f32 %v1661, %v1763
        %v1882 = vadd.f32 %v1662, %v1768
        %v1883 = vadd.f32 %v1663, %v1771
        %v1884 = vadd.f32 %v1664, %v1776
        %v1885 = vadd.f32 %v1665, %v1779
        %v1886 = vadd.f32 %v1666, %v1784
        %v1887 = vadd.f32 %v1667, %v1787
        %v1888 = vadd.f32 %v1668, %v1792
        %v1889 = vadd.f32 %v1669, %v1795
        %v1890 = vadd.f32 %v1670, %v1800
        %v1891 = vadd.f32 %v1671, %v1803
        %v1892 = vadd.f32 %v1672, %v1808
        %v1893 = vadd.f32 %v1673, %v1811
        %v1894 = vadd.f32 %v1674, %v1816
        %v1895 = vadd.f32 %v1675, %v1819
        %v1896 = vadd.f32 %v1676, %v1824
        %v1897 = vadd.f32 %v1677, %v1827
        %v1898 = vadd.f32 %v1678, %v1832
        %v1899 = vadd.f32 %v1679, %v1835
        %v1900 = vadd.f32 %v1680, %v1840
        %v1901 = vadd.f32 %v1681, %v1843
        %v1902 = vadd.f32 %v1682, %v1848
        %v1903 = vadd.f32 %v1683, %v1851
        %v1904 = vadd.f32 %v1684, %v1856
        %v1905 = vadd.f32 %v1685, %v1859
        %v1906 = vadd.f32 %v1686, %v1864
        %v1907 = vadd.f32 %v1687, %v1867
        %v1908 = vadd.f32 %v1688, %v1872
        %v1909 = vadd.f32 %v1689, %v1875
        %v1910 = vshrl.u32 %v708, 16
        %v1912 = vshll.u32 %v708, 16
        %v1914 = vrot.slane %v1912, 1
        %v1915 = vor.u32 %v1910, %v1914
        %v1917 = vshll.u32 %v724, 16
        %v1919 = vrot.slane %v1917, 1
        %v1920 = vsel %vm725, %v1915, %v1919
        %v1929 = vunpack.c.l.b16 %v458
        %v1930 = vunpack.c.l.b16 %v459
        %v1931 = vunpack.c.l.b16 %v460
        %v1932 = vunpack.c.l.b16 %v461
        %v1933 = vunpack.c.l.b16 %v462
        %v1934 = vunpack.c.l.b16 %v463
        %v1935 = vunpack.c.l.b16 %v464
        %v1936 = vunpack.c.l.b16 %v465
        %v1937 = vpack.c.b16 %v1930, %v1929
        %v1938 = vpack.c.b16 %v1932, %v1931
        %v1939 = vpack.c.b16 %v1934, %v1933
        %v1940 = vpack.c.b16 %v1936, %v1935
        %v1946 = vsel %vm930, %v1920, 0
        %1948 = vmatprep.subr.bf16.mxu0 0
        %1949 = vmatpush1.bf16.msra.mxu0 %v1937
        %1950 = vmatprep.subr.bf16.mxu0 0
        %1951 = vmatpush1.bf16.msra.mxu0 %v1938
        %1952 = vmatprep.subr.bf16.mxu0 0
        %1953 = vmatpush1.bf16.msra.mxu0 %v1939
        %1954 = vmatprep.subr.bf16.mxu0 0
        %1955 = vmatpush1.bf16.msra.mxu0 %v1940
        %1956 = vmatprep.subr.bf16.mxu0 0
        %1957 = vmatpush1.bf16.msra.mxu0 0
        %1958 = vmatprep.subr.bf16.mxu0 0
        %1959 = vmatpush1.bf16.msra.mxu0 0
        %1960 = vmatprep.subr.bf16.mxu0 0
        %1961 = vmatpush1.bf16.msra.mxu0 0
        %1962 = vmatprep.subr.bf16.mxu0 0
        %1963 = vmatpush1.bf16.msra.mxu0 0
        %1964 = vmatprep.subr.bf16.mxu0 0
        %1965 = vmatpush1.bf16.msra.mxu0 0
        %1966 = vmatprep.subr.bf16.mxu0 0
        %1967 = vmatpush1.bf16.msra.mxu0 0
        %1968 = vmatprep.subr.bf16.mxu0 0
        %1969 = vmatpush1.bf16.msra.mxu0 0
        %1970 = vmatprep.subr.bf16.mxu0 0
        %1971 = vmatpush1.bf16.msra.mxu0 0
        %1972 = vmatprep.subr.bf16.mxu0 0
        %1973 = vmatpush1.bf16.msra.mxu0 0
        %1974 = vmatprep.subr.bf16.mxu0 0
        %1975 = vmatpush1.bf16.msra.mxu0 0
        %1976 = vmatprep.subr.bf16.mxu0 0
        %1977 = vmatpush1.bf16.msra.mxu0 0
        %1978 = vmatprep.subr.bf16.mxu0 0
        %1979 = vmatpush1.bf16.msra.mxu0 0
        %1980 = vmatprep.mubr.bf16.mxu0 0
        %1981 = vmatmul.mubr.bf16.gmra.mrb[0].mxu0 %v935
        %v1982 = vpop.f32.mrb[0].mxu0
        %v1983 = vadd.f32 0.0, %v1982
        %v1984 = vpop.f32.mrb[0].mxu0
        %v1985 = vpop.f32.mrb[0].mxu0
        %v1986 = vadd.f32 0.0, %v1985
        %v1987 = vpop.f32.mrb[0].mxu0
        %1988 = vmatprep.mubr.bf16.mxu0 0
        %1989 = vmatmul.mubr.bf16.gmra.mrb[0].mxu0 %v932
        %v1990 = vpop.f32.mrb[0].mxu0
        %v1991 = vadd.f32 0.0, %v1990
        %v1992 = vpop.f32.mrb[0].mxu0
        %v1993 = vpop.f32.mrb[0].mxu0
        %v1994 = vadd.f32 0.0, %v1993
        %v1995 = vpop.f32.mrb[0].mxu0
        %1996 = vmatprep.mubr.bf16.mxu0 0
        %1997 = vmatmul.mubr.bf16.gmra.mrb[0].mxu0 %v938
        %v1998 = vpop.f32.mrb[0].mxu0
        %v1999 = vadd.f32 0.0, %v1998
        %v2000 = vpop.f32.mrb[0].mxu0
        %v2001 = vpop.f32.mrb[0].mxu0
        %v2002 = vadd.f32 0.0, %v2001
        %v2003 = vpop.f32.mrb[0].mxu0
        %2004 = vmatprep.mubr.bf16.mxu0 0
        %2005 = vmatmul.mubr.bf16.gmra.mrb[0].mxu0 %v941
        %v2006 = vpop.f32.mrb[0].mxu0
        %v2007 = vadd.f32 0.0, %v2006
        %v2008 = vpop.f32.mrb[0].mxu0
        %v2009 = vpop.f32.mrb[0].mxu0
        %v2010 = vadd.f32 0.0, %v2009
        %v2011 = vpop.f32.mrb[0].mxu0
        %2012 = vmatprep.mubr.bf16.mxu0 0
        %2013 = vmatmul.mubr.bf16.gmra.mrb[0].mxu0 %v944
        %v2014 = vpop.f32.mrb[0].mxu0
        %v2015 = vadd.f32 0.0, %v2014
        %v2016 = vpop.f32.mrb[0].mxu0
        %v2017 = vpop.f32.mrb[0].mxu0
        %v2018 = vadd.f32 0.0, %v2017
        %v2019 = vpop.f32.mrb[0].mxu0
        %2020 = vmatprep.mubr.bf16.mxu0 0
        %2021 = vmatmul.mubr.bf16.gmra.mrb[0].mxu0 %v947
        %v2022 = vpop.f32.mrb[0].mxu0
        %v2023 = vadd.f32 0.0, %v2022
        %v2024 = vpop.f32.mrb[0].mxu0
        %v2025 = vpop.f32.mrb[0].mxu0
        %v2026 = vadd.f32 0.0, %v2025
        %v2027 = vpop.f32.mrb[0].mxu0
        %2028 = vmatprep.mubr.bf16.mxu0 0
        %2029 = vmatmul.mubr.bf16.gmra.mrb[0].mxu0 %v950
        %v2030 = vpop.f32.mrb[0].mxu0
        %v2031 = vadd.f32 0.0, %v2030
        %v2032 = vpop.f32.mrb[0].mxu0
        %v2033 = vpop.f32.mrb[0].mxu0
        %v2034 = vadd.f32 0.0, %v2033
        %v2035 = vpop.f32.mrb[0].mxu0
        %2036 = vmatprep.mubr.bf16.mxu0 0
        %2037 = vmatmul.mubr.bf16.gmra.mrb[0].mxu0 %v953
        %v2038 = vpop.f32.mrb[0].mxu0
        %v2039 = vadd.f32 0.0, %v2038
        %v2040 = vpop.f32.mrb[0].mxu0
        %v2041 = vpop.f32.mrb[0].mxu0
        %v2042 = vadd.f32 0.0, %v2041
        %v2043 = vpop.f32.mrb[0].mxu0
        %2044 = vmatprep.mubr.bf16.mxu0 0
        %2045 = vmatmul.mubr.bf16.gmra.mrb[0].mxu0 %v956
        %v2046 = vpop.f32.mrb[0].mxu0
        %v2047 = vadd.f32 0.0, %v2046
        %v2048 = vpop.f32.mrb[0].mxu0
        %v2049 = vpop.f32.mrb[0].mxu0
        %v2050 = vadd.f32 0.0, %v2049
        %v2051 = vpop.f32.mrb[0].mxu0
        %2052 = vmatprep.mubr.bf16.mxu0 0
        %2053 = vmatmul.mubr.bf16.gmra.mrb[0].mxu0 %v959
        %v2054 = vpop.f32.mrb[0].mxu0
        %v2055 = vadd.f32 0.0, %v2054
        %v2056 = vpop.f32.mrb[0].mxu0
        %v2057 = vpop.f32.mrb[0].mxu0
        %v2058 = vadd.f32 0.0, %v2057
        %v2059 = vpop.f32.mrb[0].mxu0
        %2060 = vmatprep.mubr.bf16.mxu0 0
        %2061 = vmatmul.mubr.bf16.gmra.mrb[0].mxu0 %v962
        %v2062 = vpop.f32.mrb[0].mxu0
        %v2063 = vadd.f32 0.0, %v2062
        %v2064 = vpop.f32.mrb[0].mxu0
        %v2065 = vpop.f32.mrb[0].mxu0
        %v2066 = vadd.f32 0.0, %v2065
        %v2067 = vpop.f32.mrb[0].mxu0
        %2068 = vmatprep.mubr.bf16.mxu0 0
        %2069 = vmatmul.mubr.bf16.gmra.mrb[0].mxu0 %v965
        %v2070 = vpop.f32.mrb[0].mxu0
        %v2071 = vadd.f32 0.0, %v2070
        %v2072 = vpop.f32.mrb[0].mxu0
        %v2073 = vpop.f32.mrb[0].mxu0
        %v2074 = vadd.f32 0.0, %v2073
        %v2075 = vpop.f32.mrb[0].mxu0
        %2076 = vmatprep.mubr.bf16.mxu0 0
        %2077 = vmatmul.mubr.bf16.gmra.mrb[0].mxu0 %v968
        %v2078 = vpop.f32.mrb[0].mxu0
        %v2079 = vadd.f32 0.0, %v2078
        %v2080 = vpop.f32.mrb[0].mxu0
        %v2081 = vpop.f32.mrb[0].mxu0
        %v2082 = vadd.f32 0.0, %v2081
        %v2083 = vpop.f32.mrb[0].mxu0
        %2084 = vmatprep.mubr.bf16.mxu0 0
        %2085 = vmatmul.mubr.bf16.gmra.mrb[0].mxu0 %v971
        %v2086 = vpop.f32.mrb[0].mxu0
        %v2087 = vadd.f32 0.0, %v2086
        %v2088 = vpop.f32.mrb[0].mxu0
        %v2089 = vpop.f32.mrb[0].mxu0
        %v2090 = vadd.f32 0.0, %v2089
        %v2091 = vpop.f32.mrb[0].mxu0
        %2092 = vmatprep.mubr.bf16.mxu0 0
        %2093 = vmatmul.mubr.bf16.gmra.mrb[0].mxu0 %v974
        %v2094 = vpop.f32.mrb[0].mxu0
        %v2095 = vadd.f32 0.0, %v2094
        %v2096 = vpop.f32.mrb[0].mxu0
        %v2097 = vpop.f32.mrb[0].mxu0
        %v2098 = vadd.f32 0.0, %v2097
        %v2099 = vpop.f32.mrb[0].mxu0
        %2100 = vmatprep.mubr.bf16.mxu0 0
        %2101 = vmatmul.mubr.bf16.gmra.mrb[0].mxu0 %v1946
        %v2102 = vpop.f32.mrb[0].mxu0
        %v2103 = vadd.f32 0.0, %v2102
        %v2104 = vpop.f32.mrb[0].mxu0
        %v2105 = vpop.f32.mrb[0].mxu0
        %v2106 = vadd.f32 0.0, %v2105
        %v2107 = vpop.f32.mrb[0].mxu0
        %2108 = vdwg.mxu0
        %v2109 = vadd.f32 %v1878, %v1983
        %v2110 = vadd.f32 %v1879, %v1986
        %v2111 = vadd.f32 %v1880, %v1991
        %v2112 = vadd.f32 %v1881, %v1994
        %v2113 = vadd.f32 %v1882, %v1999
        %v2114 = vadd.f32 %v1883, %v2002
        %v2115 = vadd.f32 %v1884, %v2007
        %v2116 = vadd.f32 %v1885, %v2010
        %v2117 = vadd.f32 %v1886, %v2015
        %v2118 = vadd.f32 %v1887, %v2018
        %v2119 = vadd.f32 %v1888, %v2023
        %v2120 = vadd.f32 %v1889, %v2026
        %v2121 = vadd.f32 %v1890, %v2031
        %v2122 = vadd.f32 %v1891, %v2034
        %v2123 = vadd.f32 %v1892, %v2039
        %v2124 = vadd.f32 %v1893, %v2042
        %v2125 = vadd.f32 %v1894, %v2047
        %v2126 = vadd.f32 %v1895, %v2050
        %v2127 = vadd.f32 %v1896, %v2055
        %v2128 = vadd.f32 %v1897, %v2058
        %v2129 = vadd.f32 %v1898, %v2063
        %v2130 = vadd.f32 %v1899, %v2066
        %v2131 = vadd.f32 %v1900, %v2071
        %v2132 = vadd.f32 %v1901, %v2074
        %v2133 = vadd.f32 %v1902, %v2079
        %v2134 = vadd.f32 %v1903, %v2082
        %v2135 = vadd.f32 %v1904, %v2087
        %v2136 = vadd.f32 %v1905, %v2090
        %v2137 = vadd.f32 %v1906, %v2095
        %v2138 = vadd.f32 %v1907, %v2098
        %v2139 = vadd.f32 %v1908, %v2103
        %v2140 = vadd.f32 %v1909, %v2106
        %v2143 = vrot.slane %v708, 1
        %v2144 = vrot.slane %v724, 1
        %v2145 = vsel %vm1382, %v2143, %v2144
        %v2154 = vunpack.c.l.b16 %v466
        %v2155 = vunpack.c.l.b16 %v467
        %v2156 = vunpack.c.l.b16 %v468
        %v2157 = vunpack.c.l.b16 %v469
        %v2158 = vunpack.c.l.b16 %v470
        %v2159 = vunpack.c.l.b16 %v471
        %v2160 = vunpack.c.l.b16 %v472
        %v2161 = vunpack.c.l.b16 %v473
        %v2162 = vpack.c.b16 %v2155, %v2154
        %v2163 = vpack.c.b16 %v2157, %v2156
        %v2164 = vpack.c.b16 %v2159, %v2158
        %v2165 = vpack.c.b16 %v2161, %v2160
        %v2171 = vsel %vm930, %v2145, 0
        %2173 = vmatprep.subr.bf16.mxu0 0
        %2174 = vmatpush1.bf16.msra.mxu0 %v2162
        %2175 = vmatprep.subr.bf16.mxu0 0
        %2176 = vmatpush1.bf16.msra.mxu0 %v2163
        %2177 = vmatprep.subr.bf16.mxu0 0
        %2178 = vmatpush1.bf16.msra.mxu0 %v2164
        %2179 = vmatprep.subr.bf16.mxu0 0
        %2180 = vmatpush1.bf16.msra.mxu0 %v2165
        %2181 = vmatprep.subr.bf16.mxu0 0
        %2182 = vmatpush1.bf16.msra.mxu0 0
        %2183 = vmatprep.subr.bf16.mxu0 0
        %2184 = vmatpush1.bf16.msra.mxu0 0
        %2185 = vmatprep.subr.bf16.mxu0 0
        %2186 = vmatpush1.bf16.msra.mxu0 0
        %2187 = vmatprep.subr.bf16.mxu0 0
        %2188 = vmatpush1.bf16.msra.mxu0 0
        %2189 = vmatprep.subr.bf16.mxu0 0
        %2190 = vmatpush1.bf16.msra.mxu0 0
        %2191 = vmatprep.subr.bf16.mxu0 0
        %2192 = vmatpush1.bf16.msra.mxu0 0
        %2193 = vmatprep.subr.bf16.mxu0 0
        %2194 = vmatpush1.bf16.msra.mxu0 0
        %2195 = vmatprep.subr.bf16.mxu0 0
        %2196 = vmatpush1.bf16.msra.mxu0 0
        %2197 = vmatprep.subr.bf16.mxu0 0
        %2198 = vmatpush1.bf16.msra.mxu0 0
        %2199 = vmatprep.subr.bf16.mxu0 0
        %2200 = vmatpush1.bf16.msra.mxu0 0
        %2201 = vmatprep.subr.bf16.mxu0 0
        %2202 = vmatpush1.bf16.msra.mxu0 0
        %2203 = vmatprep.subr.bf16.mxu0 0
        %2204 = vmatpush1.bf16.msra.mxu0 0
        %2205 = vmatprep.mubr.bf16.mxu0 0
        %2206 = vmatmul.mubr.bf16.gmra.mrb[0].mxu0 %v1456
        %v2207 = vpop.f32.mrb[0].mxu0
        %v2208 = vadd.f32 0.0, %v2207
        %v2209 = vpop.f32.mrb[0].mxu0
        %v2210 = vpop.f32.mrb[0].mxu0
        %v2211 = vadd.f32 0.0, %v2210
        %v2212 = vpop.f32.mrb[0].mxu0
        %2213 = vmatprep.mubr.bf16.mxu0 0
        %2214 = vmatmul.mubr.bf16.gmra.mrb[0].mxu0 %v1453
        %v2215 = vpop.f32.mrb[0].mxu0
        %v2216 = vadd.f32 0.0, %v2215
        %v2217 = vpop.f32.mrb[0].mxu0
        %v2218 = vpop.f32.mrb[0].mxu0
        %v2219 = vadd.f32 0.0, %v2218
        %v2220 = vpop.f32.mrb[0].mxu0
        %2221 = vmatprep.mubr.bf16.mxu0 0
        %2222 = vmatmul.mubr.bf16.gmra.mrb[0].mxu0 %v1459
        %v2223 = vpop.f32.mrb[0].mxu0
        %v2224 = vadd.f32 0.0, %v2223
        %v2225 = vpop.f32.mrb[0].mxu0
        %v2226 = vpop.f32.mrb[0].mxu0
        %v2227 = vadd.f32 0.0, %v2226
        %v2228 = vpop.f32.mrb[0].mxu0
        %2229 = vmatprep.mubr.bf16.mxu0 0
        %2230 = vmatmul.mubr.bf16.gmra.mrb[0].mxu0 %v1462
        %v2231 = vpop.f32.mrb[0].mxu0
        %v2232 = vadd.f32 0.0, %v2231
        %v2233 = vpop.f32.mrb[0].mxu0
        %v2234 = vpop.f32.mrb[0].mxu0
        %v2235 = vadd.f32 0.0, %v2234
        %v2236 = vpop.f32.mrb[0].mxu0
        %2237 = vmatprep.mubr.bf16.mxu0 0
        %2238 = vmatmul.mubr.bf16.gmra.mrb[0].mxu0 %v1465
        %v2239 = vpop.f32.mrb[0].mxu0
        %v2240 = vadd.f32 0.0, %v2239
        %v2241 = vpop.f32.mrb[0].mxu0
        %v2242 = vpop.f32.mrb[0].mxu0
        %v2243 = vadd.f32 0.0, %v2242
        %v2244 = vpop.f32.mrb[0].mxu0
        %2245 = vmatprep.mubr.bf16.mxu0 0
        %2246 = vmatmul.mubr.bf16.gmra.mrb[0].mxu0 %v1468
        %v2247 = vpop.f32.mrb[0].mxu0
        %v2248 = vadd.f32 0.0, %v2247
        %v2249 = vpop.f32.mrb[0].mxu0
        %v2250 = vpop.f32.mrb[0].mxu0
        %v2251 = vadd.f32 0.0, %v2250
        %v2252 = vpop.f32.mrb[0].mxu0
        %2253 = vmatprep.mubr.bf16.mxu0 0
        %2254 = vmatmul.mubr.bf16.gmra.mrb[0].mxu0 %v1471
        %v2255 = vpop.f32.mrb[0].mxu0
        %v2256 = vadd.f32 0.0, %v2255
        %v2257 = vpop.f32.mrb[0].mxu0
        %v2258 = vpop.f32.mrb[0].mxu0
        %v2259 = vadd.f32 0.0, %v2258
        %v2260 = vpop.f32.mrb[0].mxu0
        %2261 = vmatprep.mubr.bf16.mxu0 0
        %2262 = vmatmul.mubr.bf16.gmra.mrb[0].mxu0 %v1474
        %v2263 = vpop.f32.mrb[0].mxu0
        %v2264 = vadd.f32 0.0, %v2263
        %v2265 = vpop.f32.mrb[0].mxu0
        %v2266 = vpop.f32.mrb[0].mxu0
        %v2267 = vadd.f32 0.0, %v2266
        %v2268 = vpop.f32.mrb[0].mxu0
        %2269 = vmatprep.mubr.bf16.mxu0 0
        %2270 = vmatmul.mubr.bf16.gmra.mrb[0].mxu0 %v1477
        %v2271 = vpop.f32.mrb[0].mxu0
        %v2272 = vadd.f32 0.0, %v2271
        %v2273 = vpop.f32.mrb[0].mxu0
        %v2274 = vpop.f32.mrb[0].mxu0
        %v2275 = vadd.f32 0.0, %v2274
        %v2276 = vpop.f32.mrb[0].mxu0
        %2277 = vmatprep.mubr.bf16.mxu0 0
        %2278 = vmatmul.mubr.bf16.gmra.mrb[0].mxu0 %v1480
        %v2279 = vpop.f32.mrb[0].mxu0
        %v2280 = vadd.f32 0.0, %v2279
        %v2281 = vpop.f32.mrb[0].mxu0
        %v2282 = vpop.f32.mrb[0].mxu0
        %v2283 = vadd.f32 0.0, %v2282
        %v2284 = vpop.f32.mrb[0].mxu0
        %2285 = vmatprep.mubr.bf16.mxu0 0
        %2286 = vmatmul.mubr.bf16.gmra.mrb[0].mxu0 %v1483
        %v2287 = vpop.f32.mrb[0].mxu0
        %v2288 = vadd.f32 0.0, %v2287
        %v2289 = vpop.f32.mrb[0].mxu0
        %v2290 = vpop.f32.mrb[0].mxu0
        %v2291 = vadd.f32 0.0, %v2290
        %v2292 = vpop.f32.mrb[0].mxu0
        %2293 = vmatprep.mubr.bf16.mxu0 0
        %2294 = vmatmul.mubr.bf16.gmra.mrb[0].mxu0 %v1486
        %v2295 = vpop.f32.mrb[0].mxu0
        %v2296 = vadd.f32 0.0, %v2295
        %v2297 = vpop.f32.mrb[0].mxu0
        %v2298 = vpop.f32.mrb[0].mxu0
        %v2299 = vadd.f32 0.0, %v2298
        %v2300 = vpop.f32.mrb[0].mxu0
        %2301 = vmatprep.mubr.bf16.mxu0 0
        %2302 = vmatmul.mubr.bf16.gmra.mrb[0].mxu0 %v1489
        %v2303 = vpop.f32.mrb[0].mxu0
        %v2304 = vadd.f32 0.0, %v2303
        %v2305 = vpop.f32.mrb[0].mxu0
        %v2306 = vpop.f32.mrb[0].mxu0
        %v2307 = vadd.f32 0.0, %v2306
        %v2308 = vpop.f32.mrb[0].mxu0
        %2309 = vmatprep.mubr.bf16.mxu0 0
        %2310 = vmatmul.mubr.bf16.gmra.mrb[0].mxu0 %v1492
        %v2311 = vpop.f32.mrb[0].mxu0
        %v2312 = vadd.f32 0.0, %v2311
        %v2313 = vpop.f32.mrb[0].mxu0
        %v2314 = vpop.f32.mrb[0].mxu0
        %v2315 = vadd.f32 0.0, %v2314
        %v2316 = vpop.f32.mrb[0].mxu0
        %2317 = vmatprep.mubr.bf16.mxu0 0
        %2318 = vmatmul.mubr.bf16.gmra.mrb[0].mxu0 %v1495
        %v2319 = vpop.f32.mrb[0].mxu0
        %v2320 = vadd.f32 0.0, %v2319
        %v2321 = vpop.f32.mrb[0].mxu0
        %v2322 = vpop.f32.mrb[0].mxu0
        %v2323 = vadd.f32 0.0, %v2322
        %v2324 = vpop.f32.mrb[0].mxu0
        %2325 = vmatprep.mubr.bf16.mxu0 0
        %2326 = vmatmul.mubr.bf16.gmra.mrb[0].mxu0 %v2171
        %v2327 = vpop.f32.mrb[0].mxu0
        %v2328 = vadd.f32 0.0, %v2327
        %v2329 = vpop.f32.mrb[0].mxu0
        %v2330 = vpop.f32.mrb[0].mxu0
        %v2331 = vadd.f32 0.0, %v2330
        %v2332 = vpop.f32.mrb[0].mxu0
        %2333 = vdwg.mxu0
        %v2334 = vadd.f32 %v2109, %v2208
        %v2335 = vadd.f32 %v2110, %v2211
        %v2336 = vadd.f32 %v2111, %v2216
        %v2337 = vadd.f32 %v2112, %v2219
        %v2338 = vadd.f32 %v2113, %v2224
        %v2339 = vadd.f32 %v2114, %v2227
        %v2340 = vadd.f32 %v2115, %v2232
        %v2341 = vadd.f32 %v2116, %v2235
        %v2342 = vadd.f32 %v2117, %v2240
        %v2343 = vadd.f32 %v2118, %v2243
        %v2344 = vadd.f32 %v2119, %v2248
        %v2345 = vadd.f32 %v2120, %v2251
        %v2346 = vadd.f32 %v2121, %v2256
        %v2347 = vadd.f32 %v2122, %v2259
        %v2348 = vadd.f32 %v2123, %v2264
        %v2349 = vadd.f32 %v2124, %v2267
        %v2350 = vadd.f32 %v2125, %v2272
        %v2351 = vadd.f32 %v2126, %v2275
        %v2352 = vadd.f32 %v2127, %v2280
        %v2353 = vadd.f32 %v2128, %v2283
        %v2354 = vadd.f32 %v2129, %v2288
        %v2355 = vadd.f32 %v2130, %v2291
        %v2356 = vadd.f32 %v2131, %v2296
        %v2357 = vadd.f32 %v2132, %v2299
        %v2358 = vadd.f32 %v2133, %v2304
        %v2359 = vadd.f32 %v2134, %v2307
        %v2360 = vadd.f32 %v2135, %v2312
        %v2361 = vadd.f32 %v2136, %v2315
        %v2362 = vadd.f32 %v2137, %v2320
        %v2363 = vadd.f32 %v2138, %v2323
        %v2364 = vadd.f32 %v2139, %v2328
        %v2365 = vadd.f32 %v2140, %v2331
        %v2374 = vunpack.c.l.b16 %v474
        %v2375 = vunpack.c.l.b16 %v475
        %v2376 = vunpack.c.l.b16 %v476
        %v2377 = vunpack.c.l.b16 %v477
        %v2378 = vunpack.c.l.b16 %v478
        %v2379 = vunpack.c.l.b16 %v479
        %v2380 = vunpack.c.l.b16 %v480
        %v2381 = vunpack.c.l.b16 %v481
        %v2382 = vpack.c.b16 %v2375, %v2374
        %v2383 = vpack.c.b16 %v2377, %v2376
        %v2384 = vpack.c.b16 %v2379, %v2378
        %v2385 = vpack.c.b16 %v2381, %v2380
        %2390 = vmatprep.subr.bf16.mxu0 0
        %2391 = vmatpush1.bf16.msra.mxu0 %v2382
        %2392 = vmatprep.subr.bf16.mxu0 0
        %2393 = vmatpush1.bf16.msra.mxu0 %v2383
        %2394 = vmatprep.subr.bf16.mxu0 0
        %2395 = vmatpush1.bf16.msra.mxu0 %v2384
        %2396 = vmatprep.subr.bf16.mxu0 0
        %2397 = vmatpush1.bf16.msra.mxu0 %v2385
        %2398 = vmatprep.subr.bf16.mxu0 0
        %2399 = vmatpush1.bf16.msra.mxu0 0
        %2400 = vmatprep.subr.bf16.mxu0 0
        %2401 = vmatpush1.bf16.msra.mxu0 0
        %2402 = vmatprep.subr.bf16.mxu0 0
        %2403 = vmatpush1.bf16.msra.mxu0 0
        %2404 = vmatprep.subr.bf16.mxu0 0
        %2405 = vmatpush1.bf16.msra.mxu0 0
        %2406 = vmatprep.subr.bf16.mxu0 0
        %2407 = vmatpush1.bf16.msra.mxu0 0
        %2408 = vmatprep.subr.bf16.mxu0 0
        %2409 = vmatpush1.bf16.msra.mxu0 0
        %2410 = vmatprep.subr.bf16.mxu0 0
        %2411 = vmatpush1.bf16.msra.mxu0 0
        %2412 = vmatprep.subr.bf16.mxu0 0
        %2413 = vmatpush1.bf16.msra.mxu0 0
        %2414 = vmatprep.subr.bf16.mxu0 0
        %2415 = vmatpush1.bf16.msra.mxu0 0
        %2416 = vmatprep.subr.bf16.mxu0 0
        %2417 = vmatpush1.bf16.msra.mxu0 0
        %2418 = vmatprep.subr.bf16.mxu0 0
        %2419 = vmatpush1.bf16.msra.mxu0 0
        %2420 = vmatprep.subr.bf16.mxu0 0
        %2421 = vmatpush1.bf16.msra.mxu0 0
        %2422 = vmatprep.mubr.bf16.mxu0 0
        %2423 = vmatmul.mubr.bf16.gmra.mrb[0].mxu0 %v1161
        %v2424 = vpop.f32.mrb[0].mxu0
        %v2425 = vadd.f32 0.0, %v2424
        %v2426 = vpop.f32.mrb[0].mxu0
        %v2427 = vpop.f32.mrb[0].mxu0
        %v2428 = vadd.f32 0.0, %v2427
        %v2429 = vpop.f32.mrb[0].mxu0
        %2430 = vmatprep.mubr.bf16.mxu0 0
        %2431 = vmatmul.mubr.bf16.gmra.mrb[0].mxu0 %v1165
        %v2432 = vpop.f32.mrb[0].mxu0
        %v2433 = vadd.f32 0.0, %v2432
        %v2434 = vpop.f32.mrb[0].mxu0
        %v2435 = vpop.f32.mrb[0].mxu0
        %v2436 = vadd.f32 0.0, %v2435
        %v2437 = vpop.f32.mrb[0].mxu0
        %2438 = vmatprep.mubr.bf16.mxu0 0
        %2439 = vmatmul.mubr.bf16.gmra.mrb[0].mxu0 %v1167
        %v2440 = vpop.f32.mrb[0].mxu0
        %v2441 = vadd.f32 0.0, %v2440
        %v2442 = vpop.f32.mrb[0].mxu0
        %v2443 = vpop.f32.mrb[0].mxu0
        %v2444 = vadd.f32 0.0, %v2443
        %v2445 = vpop.f32.mrb[0].mxu0
        %2446 = vmatprep.mubr.bf16.mxu0 0
        %2447 = vmatmul.mubr.bf16.gmra.mrb[0].mxu0 %v1169
        %v2448 = vpop.f32.mrb[0].mxu0
        %v2449 = vadd.f32 0.0, %v2448
        %v2450 = vpop.f32.mrb[0].mxu0
        %v2451 = vpop.f32.mrb[0].mxu0
        %v2452 = vadd.f32 0.0, %v2451
        %v2453 = vpop.f32.mrb[0].mxu0
        %2454 = vmatprep.mubr.bf16.mxu0 0
        %2455 = vmatmul.mubr.bf16.gmra.mrb[0].mxu0 %v1171
        %v2456 = vpop.f32.mrb[0].mxu0
        %v2457 = vadd.f32 0.0, %v2456
        %v2458 = vpop.f32.mrb[0].mxu0
        %v2459 = vpop.f32.mrb[0].mxu0
        %v2460 = vadd.f32 0.0, %v2459
        %v2461 = vpop.f32.mrb[0].mxu0
        %2462 = vmatprep.mubr.bf16.mxu0 0
        %2463 = vmatmul.mubr.bf16.gmra.mrb[0].mxu0 %v1173
        %v2464 = vpop.f32.mrb[0].mxu0
        %v2465 = vadd.f32 0.0, %v2464
        %v2466 = vpop.f32.mrb[0].mxu0
        %v2467 = vpop.f32.mrb[0].mxu0
        %v2468 = vadd.f32 0.0, %v2467
        %v2469 = vpop.f32.mrb[0].mxu0
        %2470 = vmatprep.mubr.bf16.mxu0 0
        %2471 = vmatmul.mubr.bf16.gmra.mrb[0].mxu0 %v1175
        %v2472 = vpop.f32.mrb[0].mxu0
        %v2473 = vadd.f32 0.0, %v2472
        %v2474 = vpop.f32.mrb[0].mxu0
        %v2475 = vpop.f32.mrb[0].mxu0
        %v2476 = vadd.f32 0.0, %v2475
        %v2477 = vpop.f32.mrb[0].mxu0
        %2478 = vmatprep.mubr.bf16.mxu0 0
        %2479 = vmatmul.mubr.bf16.gmra.mrb[0].mxu0 %v1177
        %v2480 = vpop.f32.mrb[0].mxu0
        %v2481 = vadd.f32 0.0, %v2480
        %v2482 = vpop.f32.mrb[0].mxu0
        %v2483 = vpop.f32.mrb[0].mxu0
        %v2484 = vadd.f32 0.0, %v2483
        %v2485 = vpop.f32.mrb[0].mxu0
        %2486 = vmatprep.mubr.bf16.mxu0 0
        %2487 = vmatmul.mubr.bf16.gmra.mrb[0].mxu0 %v1179
        %v2488 = vpop.f32.mrb[0].mxu0
        %v2489 = vadd.f32 0.0, %v2488
        %v2490 = vpop.f32.mrb[0].mxu0
        %v2491 = vpop.f32.mrb[0].mxu0
        %v2492 = vadd.f32 0.0, %v2491
        %v2493 = vpop.f32.mrb[0].mxu0
        %2494 = vmatprep.mubr.bf16.mxu0 0
        %2495 = vmatmul.mubr.bf16.gmra.mrb[0].mxu0 %v1181
        %v2496 = vpop.f32.mrb[0].mxu0
        %v2497 = vadd.f32 0.0, %v2496
        %v2498 = vpop.f32.mrb[0].mxu0
        %v2499 = vpop.f32.mrb[0].mxu0
        %v2500 = vadd.f32 0.0, %v2499
        %v2501 = vpop.f32.mrb[0].mxu0
        %2502 = vmatprep.mubr.bf16.mxu0 0
        %2503 = vmatmul.mubr.bf16.gmra.mrb[0].mxu0 %v1183
        %v2504 = vpop.f32.mrb[0].mxu0
        %v2505 = vadd.f32 0.0, %v2504
        %v2506 = vpop.f32.mrb[0].mxu0
        %v2507 = vpop.f32.mrb[0].mxu0
        %v2508 = vadd.f32 0.0, %v2507
        %v2509 = vpop.f32.mrb[0].mxu0
        %2510 = vmatprep.mubr.bf16.mxu0 0
        %2511 = vmatmul.mubr.bf16.gmra.mrb[0].mxu0 %v1185
        %v2512 = vpop.f32.mrb[0].mxu0
        %v2513 = vadd.f32 0.0, %v2512
        %v2514 = vpop.f32.mrb[0].mxu0
        %v2515 = vpop.f32.mrb[0].mxu0
        %v2516 = vadd.f32 0.0, %v2515
        %v2517 = vpop.f32.mrb[0].mxu0
        %2518 = vmatprep.mubr.bf16.mxu0 0
        %2519 = vmatmul.mubr.bf16.gmra.mrb[0].mxu0 %v1187
        %v2520 = vpop.f32.mrb[0].mxu0
        %v2521 = vadd.f32 0.0, %v2520
        %v2522 = vpop.f32.mrb[0].mxu0
        %v2523 = vpop.f32.mrb[0].mxu0
        %v2524 = vadd.f32 0.0, %v2523
        %v2525 = vpop.f32.mrb[0].mxu0
        %2526 = vmatprep.mubr.bf16.mxu0 0
        %2527 = vmatmul.mubr.bf16.gmra.mrb[0].mxu0 %v1189
        %v2528 = vpop.f32.mrb[0].mxu0
        %v2529 = vadd.f32 0.0, %v2528
        %v2530 = vpop.f32.mrb[0].mxu0
        %v2531 = vpop.f32.mrb[0].mxu0
        %v2532 = vadd.f32 0.0, %v2531
        %v2533 = vpop.f32.mrb[0].mxu0
        %2534 = vmatprep.mubr.bf16.mxu0 0
        %2535 = vmatmul.mubr.bf16.gmra.mrb[0].mxu0 %v1715
        %v2536 = vpop.f32.mrb[0].mxu0
        %v2537 = vadd.f32 0.0, %v2536
        %v2538 = vpop.f32.mrb[0].mxu0
        %v2539 = vpop.f32.mrb[0].mxu0
        %v2540 = vadd.f32 0.0, %v2539
        %v2541 = vpop.f32.mrb[0].mxu0
        %2542 = vmatprep.mubr.bf16.mxu0 0
        %2543 = vmatmul.mubr.bf16.gmra.mrb[0].mxu0 %v1189
        %v2544 = vpop.f32.mrb[0].mxu0
        %v2545 = vadd.f32 0.0, %v2544
        %v2546 = vpop.f32.mrb[0].mxu0
        %v2547 = vpop.f32.mrb[0].mxu0
        %v2548 = vadd.f32 0.0, %v2547
        %v2549 = vpop.f32.mrb[0].mxu0
        %2550 = vdwg.mxu0
        %v2551 = vadd.f32 %v2334, %v2425
        %v2552 = vadd.f32 %v2335, %v2428
        %v2553 = vadd.f32 %v2336, %v2433
        %v2554 = vadd.f32 %v2337, %v2436
        %v2555 = vadd.f32 %v2338, %v2441
        %v2556 = vadd.f32 %v2339, %v2444
        %v2557 = vadd.f32 %v2340, %v2449
        %v2558 = vadd.f32 %v2341, %v2452
        %v2559 = vadd.f32 %v2342, %v2457
        %v2560 = vadd.f32 %v2343, %v2460
        %v2561 = vadd.f32 %v2344, %v2465
        %v2562 = vadd.f32 %v2345, %v2468
        %v2563 = vadd.f32 %v2346, %v2473
        %v2564 = vadd.f32 %v2347, %v2476
        %v2565 = vadd.f32 %v2348, %v2481
        %v2566 = vadd.f32 %v2349, %v2484
        %v2567 = vadd.f32 %v2350, %v2489
        %v2568 = vadd.f32 %v2351, %v2492
        %v2569 = vadd.f32 %v2352, %v2497
        %v2570 = vadd.f32 %v2353, %v2500
        %v2571 = vadd.f32 %v2354, %v2505
        %v2572 = vadd.f32 %v2355, %v2508
        %v2573 = vadd.f32 %v2356, %v2513
        %v2574 = vadd.f32 %v2357, %v2516
        %v2575 = vadd.f32 %v2358, %v2521
        %v2576 = vadd.f32 %v2359, %v2524
        %v2577 = vadd.f32 %v2360, %v2529
        %v2578 = vadd.f32 %v2361, %v2532
        %v2579 = vadd.f32 %v2362, %v2537
        %v2580 = vadd.f32 %v2363, %v2540
        %v2581 = vadd.f32 %v2364, %v2545
        %v2582 = vadd.f32 %v2365, %v2548
        %v2591 = vunpack.c.l.b16 %v482
        %v2592 = vunpack.c.l.b16 %v483
        %v2593 = vunpack.c.l.b16 %v484
        %v2594 = vunpack.c.l.b16 %v485
        %v2595 = vunpack.c.l.b16 %v486
        %v2596 = vunpack.c.l.b16 %v487
        %v2597 = vunpack.c.l.b16 %v488
        %v2598 = vunpack.c.l.b16 %v489
        %v2599 = vpack.c.b16 %v2592, %v2591
        %v2600 = vpack.c.b16 %v2594, %v2593
        %v2601 = vpack.c.b16 %v2596, %v2595
        %v2602 = vpack.c.b16 %v2598, %v2597
        %2607 = vmatprep.subr.bf16.mxu0 0
        %2608 = vmatpush1.bf16.msra.mxu0 %v2599
        %2609 = vmatprep.subr.bf16.mxu0 0
        %2610 = vmatpush1.bf16.msra.mxu0 %v2600
        %2611 = vmatprep.subr.bf16.mxu0 0
        %2612 = vmatpush1.bf16.msra.mxu0 %v2601
        %2613 = vmatprep.subr.bf16.mxu0 0
        %2614 = vmatpush1.bf16.msra.mxu0 %v2602
        %2615 = vmatprep.subr.bf16.mxu0 0
        %2616 = vmatpush1.bf16.msra.mxu0 0
        %2617 = vmatprep.subr.bf16.mxu0 0
        %2618 = vmatpush1.bf16.msra.mxu0 0
        %2619 = vmatprep.subr.bf16.mxu0 0
        %2620 = vmatpush1.bf16.msra.mxu0 0
        %2621 = vmatprep.subr.bf16.mxu0 0
        %2622 = vmatpush1.bf16.msra.mxu0 0
        %2623 = vmatprep.subr.bf16.mxu0 0
        %2624 = vmatpush1.bf16.msra.mxu0 0
        %2625 = vmatprep.subr.bf16.mxu0 0
        %2626 = vmatpush1.bf16.msra.mxu0 0
        %2627 = vmatprep.subr.bf16.mxu0 0
        %2628 = vmatpush1.bf16.msra.mxu0 0
        %2629 = vmatprep.subr.bf16.mxu0 0
        %2630 = vmatpush1.bf16.msra.mxu0 0
        %2631 = vmatprep.subr.bf16.mxu0 0
        %2632 = vmatpush1.bf16.msra.mxu0 0
        %2633 = vmatprep.subr.bf16.mxu0 0
        %2634 = vmatpush1.bf16.msra.mxu0 0
        %2635 = vmatprep.subr.bf16.mxu0 0
        %2636 = vmatpush1.bf16.msra.mxu0 0
        %2637 = vmatprep.subr.bf16.mxu0 0
        %2638 = vmatpush1.bf16.msra.mxu0 0
        %2639 = vmatprep.mubr.bf16.mxu0 0
        %2640 = vmatmul.mubr.bf16.gmra.mrb[0].mxu0 %v932
        %v2641 = vpop.f32.mrb[0].mxu0
        %v2642 = vadd.f32 0.0, %v2641
        %v2643 = vpop.f32.mrb[0].mxu0
        %v2644 = vpop.f32.mrb[0].mxu0
        %v2645 = vadd.f32 0.0, %v2644
        %v2646 = vpop.f32.mrb[0].mxu0
        %2647 = vmatprep.mubr.bf16.mxu0 0
        %2648 = vmatmul.mubr.bf16.gmra.mrb[0].mxu0 %v938
        %v2649 = vpop.f32.mrb[0].mxu0
        %v2650 = vadd.f32 0.0, %v2649
        %v2651 = vpop.f32.mrb[0].mxu0
        %v2652 = vpop.f32.mrb[0].mxu0
        %v2653 = vadd.f32 0.0, %v2652
        %v2654 = vpop.f32.mrb[0].mxu0
        %2655 = vmatprep.mubr.bf16.mxu0 0
        %2656 = vmatmul.mubr.bf16.gmra.mrb[0].mxu0 %v941
        %v2657 = vpop.f32.mrb[0].mxu0
        %v2658 = vadd.f32 0.0, %v2657
        %v2659 = vpop.f32.mrb[0].mxu0
        %v2660 = vpop.f32.mrb[0].mxu0
        %v2661 = vadd.f32 0.0, %v2660
        %v2662 = vpop.f32.mrb[0].mxu0
        %2663 = vmatprep.mubr.bf16.mxu0 0
        %2664 = vmatmul.mubr.bf16.gmra.mrb[0].mxu0 %v944
        %v2665 = vpop.f32.mrb[0].mxu0
        %v2666 = vadd.f32 0.0, %v2665
        %v2667 = vpop.f32.mrb[0].mxu0
        %v2668 = vpop.f32.mrb[0].mxu0
        %v2669 = vadd.f32 0.0, %v2668
        %v2670 = vpop.f32.mrb[0].mxu0
        %2671 = vmatprep.mubr.bf16.mxu0 0
        %2672 = vmatmul.mubr.bf16.gmra.mrb[0].mxu0 %v947
        %v2673 = vpop.f32.mrb[0].mxu0
        %v2674 = vadd.f32 0.0, %v2673
        %v2675 = vpop.f32.mrb[0].mxu0
        %v2676 = vpop.f32.mrb[0].mxu0
        %v2677 = vadd.f32 0.0, %v2676
        %v2678 = vpop.f32.mrb[0].mxu0
        %2679 = vmatprep.mubr.bf16.mxu0 0
        %2680 = vmatmul.mubr.bf16.gmra.mrb[0].mxu0 %v950
        %v2681 = vpop.f32.mrb[0].mxu0
        %v2682 = vadd.f32 0.0, %v2681
        %v2683 = vpop.f32.mrb[0].mxu0
        %v2684 = vpop.f32.mrb[0].mxu0
        %v2685 = vadd.f32 0.0, %v2684
        %v2686 = vpop.f32.mrb[0].mxu0
        %2687 = vmatprep.mubr.bf16.mxu0 0
        %2688 = vmatmul.mubr.bf16.gmra.mrb[0].mxu0 %v953
        %v2689 = vpop.f32.mrb[0].mxu0
        %v2690 = vadd.f32 0.0, %v2689
        %v2691 = vpop.f32.mrb[0].mxu0
        %v2692 = vpop.f32.mrb[0].mxu0
        %v2693 = vadd.f32 0.0, %v2692
        %v2694 = vpop.f32.mrb[0].mxu0
        %2695 = vmatprep.mubr.bf16.mxu0 0
        %2696 = vmatmul.mubr.bf16.gmra.mrb[0].mxu0 %v956
        %v2697 = vpop.f32.mrb[0].mxu0
        %v2698 = vadd.f32 0.0, %v2697
        %v2699 = vpop.f32.mrb[0].mxu0
        %v2700 = vpop.f32.mrb[0].mxu0
        %v2701 = vadd.f32 0.0, %v2700
        %v2702 = vpop.f32.mrb[0].mxu0
        %2703 = vmatprep.mubr.bf16.mxu0 0
        %2704 = vmatmul.mubr.bf16.gmra.mrb[0].mxu0 %v959
        %v2705 = vpop.f32.mrb[0].mxu0
        %v2706 = vadd.f32 0.0, %v2705
        %v2707 = vpop.f32.mrb[0].mxu0
        %v2708 = vpop.f32.mrb[0].mxu0
        %v2709 = vadd.f32 0.0, %v2708
        %v2710 = vpop.f32.mrb[0].mxu0
        %2711 = vmatprep.mubr.bf16.mxu0 0
        %2712 = vmatmul.mubr.bf16.gmra.mrb[0].mxu0 %v962
        %v2713 = vpop.f32.mrb[0].mxu0
        %v2714 = vadd.f32 0.0, %v2713
        %v2715 = vpop.f32.mrb[0].mxu0
        %v2716 = vpop.f32.mrb[0].mxu0
        %v2717 = vadd.f32 0.0, %v2716
        %v2718 = vpop.f32.mrb[0].mxu0
        %2719 = vmatprep.mubr.bf16.mxu0 0
        %2720 = vmatmul.mubr.bf16.gmra.mrb[0].mxu0 %v965
        %v2721 = vpop.f32.mrb[0].mxu0
        %v2722 = vadd.f32 0.0, %v2721
        %v2723 = vpop.f32.mrb[0].mxu0
        %v2724 = vpop.f32.mrb[0].mxu0
        %v2725 = vadd.f32 0.0, %v2724
        %v2726 = vpop.f32.mrb[0].mxu0
        %2727 = vmatprep.mubr.bf16.mxu0 0
        %2728 = vmatmul.mubr.bf16.gmra.mrb[0].mxu0 %v968
        %v2729 = vpop.f32.mrb[0].mxu0
        %v2730 = vadd.f32 0.0, %v2729
        %v2731 = vpop.f32.mrb[0].mxu0
        %v2732 = vpop.f32.mrb[0].mxu0
        %v2733 = vadd.f32 0.0, %v2732
        %v2734 = vpop.f32.mrb[0].mxu0
        %2735 = vmatprep.mubr.bf16.mxu0 0
        %2736 = vmatmul.mubr.bf16.gmra.mrb[0].mxu0 %v971
        %v2737 = vpop.f32.mrb[0].mxu0
        %v2738 = vadd.f32 0.0, %v2737
        %v2739 = vpop.f32.mrb[0].mxu0
        %v2740 = vpop.f32.mrb[0].mxu0
        %v2741 = vadd.f32 0.0, %v2740
        %v2742 = vpop.f32.mrb[0].mxu0
        %2743 = vmatprep.mubr.bf16.mxu0 0
        %2744 = vmatmul.mubr.bf16.gmra.mrb[0].mxu0 %v974
        %v2745 = vpop.f32.mrb[0].mxu0
        %v2746 = vadd.f32 0.0, %v2745
        %v2747 = vpop.f32.mrb[0].mxu0
        %v2748 = vpop.f32.mrb[0].mxu0
        %v2749 = vadd.f32 0.0, %v2748
        %v2750 = vpop.f32.mrb[0].mxu0
        %2751 = vmatprep.mubr.bf16.mxu0 0
        %2752 = vmatmul.mubr.bf16.gmra.mrb[0].mxu0 %v1946
        %v2753 = vpop.f32.mrb[0].mxu0
        %v2754 = vadd.f32 0.0, %v2753
        %v2755 = vpop.f32.mrb[0].mxu0
        %v2756 = vpop.f32.mrb[0].mxu0
        %v2757 = vadd.f32 0.0, %v2756
        %v2758 = vpop.f32.mrb[0].mxu0
        %2759 = vmatprep.mubr.bf16.mxu0 0
        %2760 = vmatmul.mubr.bf16.gmra.mrb[0].mxu0 %v974
        %v2761 = vpop.f32.mrb[0].mxu0
        %v2762 = vadd.f32 0.0, %v2761
        %v2763 = vpop.f32.mrb[0].mxu0
        %v2764 = vpop.f32.mrb[0].mxu0
        %v2765 = vadd.f32 0.0, %v2764
        %v2766 = vpop.f32.mrb[0].mxu0
        %2767 = vdwg.mxu0
        %v2768 = vadd.f32 %v2551, %v2642
        %v2769 = vadd.f32 %v2552, %v2645
        %v2770 = vadd.f32 %v2553, %v2650
        %v2771 = vadd.f32 %v2554, %v2653
        %v2772 = vadd.f32 %v2555, %v2658
        %v2773 = vadd.f32 %v2556, %v2661
        %v2774 = vadd.f32 %v2557, %v2666
        %v2775 = vadd.f32 %v2558, %v2669
        %v2776 = vadd.f32 %v2559, %v2674
        %v2777 = vadd.f32 %v2560, %v2677
        %v2778 = vadd.f32 %v2561, %v2682
        %v2779 = vadd.f32 %v2562, %v2685
        %v2780 = vadd.f32 %v2563, %v2690
        %v2781 = vadd.f32 %v2564, %v2693
        %v2782 = vadd.f32 %v2565, %v2698
        %v2783 = vadd.f32 %v2566, %v2701
        %v2784 = vadd.f32 %v2567, %v2706
        %v2785 = vadd.f32 %v2568, %v2709
        %v2786 = vadd.f32 %v2569, %v2714
        %v2787 = vadd.f32 %v2570, %v2717
        %v2788 = vadd.f32 %v2571, %v2722
        %v2789 = vadd.f32 %v2572, %v2725
        %v2790 = vadd.f32 %v2573, %v2730
        %v2791 = vadd.f32 %v2574, %v2733
        %v2792 = vadd.f32 %v2575, %v2738
        %v2793 = vadd.f32 %v2576, %v2741
        %v2794 = vadd.f32 %v2577, %v2746
        %v2795 = vadd.f32 %v2578, %v2749
        %v2796 = vadd.f32 %v2579, %v2754
        %v2797 = vadd.f32 %v2580, %v2757
        %v2798 = vadd.f32 %v2581, %v2762
        %v2799 = vadd.f32 %v2582, %v2765
        %v2808 = vunpack.c.l.b16 %v490
        %v2809 = vunpack.c.l.b16 %v491
        %v2810 = vunpack.c.l.b16 %v492
        %v2811 = vunpack.c.l.b16 %v493
        %v2812 = vunpack.c.l.b16 %v494
        %v2813 = vunpack.c.l.b16 %v495
        %v2814 = vunpack.c.l.b16 %v496
        %v2815 = vunpack.c.l.b16 %v497
        %v2816 = vpack.c.b16 %v2809, %v2808
        %v2817 = vpack.c.b16 %v2811, %v2810
        %v2818 = vpack.c.b16 %v2813, %v2812
        %v2819 = vpack.c.b16 %v2815, %v2814
        %2824 = vmatprep.subr.bf16.mxu0 0
        %2825 = vmatpush1.bf16.msra.mxu0 %v2816
        %2826 = vmatprep.subr.bf16.mxu0 0
        %2827 = vmatpush1.bf16.msra.mxu0 %v2817
        %2828 = vmatprep.subr.bf16.mxu0 0
        %2829 = vmatpush1.bf16.msra.mxu0 %v2818
        %2830 = vmatprep.subr.bf16.mxu0 0
        %2831 = vmatpush1.bf16.msra.mxu0 %v2819
        %2832 = vmatprep.subr.bf16.mxu0 0
        %2833 = vmatpush1.bf16.msra.mxu0 0
        %2834 = vmatprep.subr.bf16.mxu0 0
        %2835 = vmatpush1.bf16.msra.mxu0 0
        %2836 = vmatprep.subr.bf16.mxu0 0
        %2837 = vmatpush1.bf16.msra.mxu0 0
        %2838 = vmatprep.subr.bf16.mxu0 0
        %2839 = vmatpush1.bf16.msra.mxu0 0
        %2840 = vmatprep.subr.bf16.mxu0 0
        %2841 = vmatpush1.bf16.msra.mxu0 0
        %2842 = vmatprep.subr.bf16.mxu0 0
        %2843 = vmatpush1.bf16.msra.mxu0 0
        %2844 = vmatprep.subr.bf16.mxu0 0
        %2845 = vmatpush1.bf16.msra.mxu0 0
        %2846 = vmatprep.subr.bf16.mxu0 0
        %2847 = vmatpush1.bf16.msra.mxu0 0
        %2848 = vmatprep.subr.bf16.mxu0 0
        %2849 = vmatpush1.bf16.msra.mxu0 0
        %2850 = vmatprep.subr.bf16.mxu0 0
        %2851 = vmatpush1.bf16.msra.mxu0 0
        %2852 = vmatprep.subr.bf16.mxu0 0
        %2853 = vmatpush1.bf16.msra.mxu0 0
        %2854 = vmatprep.subr.bf16.mxu0 0
        %2855 = vmatpush1.bf16.msra.mxu0 0
        %2856 = vmatprep.mubr.bf16.mxu0 0
        %2857 = vmatmul.mubr.bf16.gmra.mrb[0].mxu0 %v1453
        %v2858 = vpop.f32.mrb[0].mxu0
        %v2859 = vadd.f32 0.0, %v2858
        %v2860 = vpop.f32.mrb[0].mxu0
        %v2861 = vpop.f32.mrb[0].mxu0
        %v2862 = vadd.f32 0.0, %v2861
        %v2863 = vpop.f32.mrb[0].mxu0
        %2864 = vmatprep.mubr.bf16.mxu0 0
        %2865 = vmatmul.mubr.bf16.gmra.mrb[0].mxu0 %v1459
        %v2866 = vpop.f32.mrb[0].mxu0
        %v2867 = vadd.f32 0.0, %v2866
        %v2868 = vpop.f32.mrb[0].mxu0
        %v2869 = vpop.f32.mrb[0].mxu0
        %v2870 = vadd.f32 0.0, %v2869
        %v2871 = vpop.f32.mrb[0].mxu0
        %2872 = vmatprep.mubr.bf16.mxu0 0
        %2873 = vmatmul.mubr.bf16.gmra.mrb[0].mxu0 %v1462
        %v2874 = vpop.f32.mrb[0].mxu0
        %v2875 = vadd.f32 0.0, %v2874
        %v2876 = vpop.f32.mrb[0].mxu0
        %v2877 = vpop.f32.mrb[0].mxu0
        %v2878 = vadd.f32 0.0, %v2877
        %v2879 = vpop.f32.mrb[0].mxu0
        %2880 = vmatprep.mubr.bf16.mxu0 0
        %2881 = vmatmul.mubr.bf16.gmra.mrb[0].mxu0 %v1465
        %v2882 = vpop.f32.mrb[0].mxu0
        %v2883 = vadd.f32 0.0, %v2882
        %v2884 = vpop.f32.mrb[0].mxu0
        %v2885 = vpop.f32.mrb[0].mxu0
        %v2886 = vadd.f32 0.0, %v2885
        %v2887 = vpop.f32.mrb[0].mxu0
        %2888 = vmatprep.mubr.bf16.mxu0 0
        %2889 = vmatmul.mubr.bf16.gmra.mrb[0].mxu0 %v1468
        %v2890 = vpop.f32.mrb[0].mxu0
        %v2891 = vadd.f32 0.0, %v2890
        %v2892 = vpop.f32.mrb[0].mxu0
        %v2893 = vpop.f32.mrb[0].mxu0
        %v2894 = vadd.f32 0.0, %v2893
        %v2895 = vpop.f32.mrb[0].mxu0
        %2896 = vmatprep.mubr.bf16.mxu0 0
        %2897 = vmatmul.mubr.bf16.gmra.mrb[0].mxu0 %v1471
        %v2898 = vpop.f32.mrb[0].mxu0
        %v2899 = vadd.f32 0.0, %v2898
        %v2900 = vpop.f32.mrb[0].mxu0
        %v2901 = vpop.f32.mrb[0].mxu0
        %v2902 = vadd.f32 0.0, %v2901
        %v2903 = vpop.f32.mrb[0].mxu0
        %2904 = vmatprep.mubr.bf16.mxu0 0
        %2905 = vmatmul.mubr.bf16.gmra.mrb[0].mxu0 %v1474
        %v2906 = vpop.f32.mrb[0].mxu0
        %v2907 = vadd.f32 0.0, %v2906
        %v2908 = vpop.f32.mrb[0].mxu0
        %v2909 = vpop.f32.mrb[0].mxu0
        %v2910 = vadd.f32 0.0, %v2909
        %v2911 = vpop.f32.mrb[0].mxu0
        %2912 = vmatprep.mubr.bf16.mxu0 0
        %2913 = vmatmul.mubr.bf16.gmra.mrb[0].mxu0 %v1477
        %v2914 = vpop.f32.mrb[0].mxu0
        %v2915 = vadd.f32 0.0, %v2914
        %v2916 = vpop.f32.mrb[0].mxu0
        %v2917 = vpop.f32.mrb[0].mxu0
        %v2918 = vadd.f32 0.0, %v2917
        %v2919 = vpop.f32.mrb[0].mxu0
        %2920 = vmatprep.mubr.bf16.mxu0 0
        %2921 = vmatmul.mubr.bf16.gmra.mrb[0].mxu0 %v1480
        %v2922 = vpop.f32.mrb[0].mxu0
        %v2923 = vadd.f32 0.0, %v2922
        %v2924 = vpop.f32.mrb[0].mxu0
        %v2925 = vpop.f32.mrb[0].mxu0
        %v2926 = vadd.f32 0.0, %v2925
        %v2927 = vpop.f32.mrb[0].mxu0
        %2928 = vmatprep.mubr.bf16.mxu0 0
        %2929 = vmatmul.mubr.bf16.gmra.mrb[0].mxu0 %v1483
        %v2930 = vpop.f32.mrb[0].mxu0
        %v2931 = vadd.f32 0.0, %v2930
        %v2932 = vpop.f32.mrb[0].mxu0
        %v2933 = vpop.f32.mrb[0].mxu0
        %v2934 = vadd.f32 0.0, %v2933
        %v2935 = vpop.f32.mrb[0].mxu0
        %2936 = vmatprep.mubr.bf16.mxu0 0
        %2937 = vmatmul.mubr.bf16.gmra.mrb[0].mxu0 %v1486
        %v2938 = vpop.f32.mrb[0].mxu0
        %v2939 = vadd.f32 0.0, %v2938
        %v2940 = vpop.f32.mrb[0].mxu0
        %v2941 = vpop.f32.mrb[0].mxu0
        %v2942 = vadd.f32 0.0, %v2941
        %v2943 = vpop.f32.mrb[0].mxu0
        %2944 = vmatprep.mubr.bf16.mxu0 0
        %2945 = vmatmul.mubr.bf16.gmra.mrb[0].mxu0 %v1489
        %v2946 = vpop.f32.mrb[0].mxu0
        %v2947 = vadd.f32 0.0, %v2946
        %v2948 = vpop.f32.mrb[0].mxu0
        %v2949 = vpop.f32.mrb[0].mxu0
        %v2950 = vadd.f32 0.0, %v2949
        %v2951 = vpop.f32.mrb[0].mxu0
        %2952 = vmatprep.mubr.bf16.mxu0 0
        %2953 = vmatmul.mubr.bf16.gmra.mrb[0].mxu0 %v1492
        %v2954 = vpop.f32.mrb[0].mxu0
        %v2955 = vadd.f32 0.0, %v2954
        %v2956 = vpop.f32.mrb[0].mxu0
        %v2957 = vpop.f32.mrb[0].mxu0
        %v2958 = vadd.f32 0.0, %v2957
        %v2959 = vpop.f32.mrb[0].mxu0
        %2960 = vmatprep.mubr.bf16.mxu0 0
        %2961 = vmatmul.mubr.bf16.gmra.mrb[0].mxu0 %v1495
        %v2962 = vpop.f32.mrb[0].mxu0
        %v2963 = vadd.f32 0.0, %v2962
        %v2964 = vpop.f32.mrb[0].mxu0
        %v2965 = vpop.f32.mrb[0].mxu0
        %v2966 = vadd.f32 0.0, %v2965
        %v2967 = vpop.f32.mrb[0].mxu0
        %2968 = vmatprep.mubr.bf16.mxu0 0
        %2969 = vmatmul.mubr.bf16.gmra.mrb[0].mxu0 %v2171
        %v2970 = vpop.f32.mrb[0].mxu0
        %v2971 = vadd.f32 0.0, %v2970
        %v2972 = vpop.f32.mrb[0].mxu0
        %v2973 = vpop.f32.mrb[0].mxu0
        %v2974 = vadd.f32 0.0, %v2973
        %v2975 = vpop.f32.mrb[0].mxu0
        %2976 = vmatprep.mubr.bf16.mxu0 0
        %2977 = vmatmul.mubr.bf16.gmra.mrb[0].mxu0 %v1495
        %v2978 = vpop.f32.mrb[0].mxu0
        %v2979 = vadd.f32 0.0, %v2978
        %v2980 = vpop.f32.mrb[0].mxu0
        %v2981 = vpop.f32.mrb[0].mxu0
        %v2982 = vadd.f32 0.0, %v2981
        %v2983 = vpop.f32.mrb[0].mxu0
        %2984 = vdwg.mxu0
        %v2985 = vadd.f32 %v2768, %v2859
        %v2986 = vadd.f32 %v2769, %v2862
        %v2987 = vadd.f32 %v2770, %v2867
        %v2988 = vadd.f32 %v2771, %v2870
        %v2989 = vadd.f32 %v2772, %v2875
        %v2990 = vadd.f32 %v2773, %v2878
        %v2991 = vadd.f32 %v2774, %v2883
        %v2992 = vadd.f32 %v2775, %v2886
        %v2993 = vadd.f32 %v2776, %v2891
        %v2994 = vadd.f32 %v2777, %v2894
        %v2995 = vadd.f32 %v2778, %v2899
        %v2996 = vadd.f32 %v2779, %v2902
        %v2997 = vadd.f32 %v2780, %v2907
        %v2998 = vadd.f32 %v2781, %v2910
        %v2999 = vadd.f32 %v2782, %v2915
        %v3000 = vadd.f32 %v2783, %v2918
        %v3001 = vadd.f32 %v2784, %v2923
        %v3002 = vadd.f32 %v2785, %v2926
        %v3003 = vadd.f32 %v2786, %v2931
        %v3004 = vadd.f32 %v2787, %v2934
        %v3005 = vadd.f32 %v2788, %v2939
        %v3006 = vadd.f32 %v2789, %v2942
        %v3007 = vadd.f32 %v2790, %v2947
        %v3008 = vadd.f32 %v2791, %v2950
        %v3009 = vadd.f32 %v2792, %v2955
        %v3010 = vadd.f32 %v2793, %v2958
        %v3011 = vadd.f32 %v2794, %v2963
        %v3012 = vadd.f32 %v2795, %v2966
        %v3013 = vadd.f32 %v2796, %v2971
        %v3014 = vadd.f32 %v2797, %v2974
        %v3015 = vadd.f32 %v2798, %v2979
        %v3016 = vadd.f32 %v2799, %v2982
        %v3017 = vadd.f32 %v2985, %v346
        %v3018 = vadd.f32 %v2986, %v348
        %v3019 = vadd.f32 %v2987, %v350
        %v3020 = vadd.f32 %v2988, %v352
        %v3021 = vadd.f32 %v2989, %v354
        %v3022 = vadd.f32 %v2990, %v356
        %v3023 = vadd.f32 %v2991, %v358
        %v3024 = vadd.f32 %v2992, %v360
        %v3025 = vadd.f32 %v2993, %v362
        %v3026 = vadd.f32 %v2994, %v364
        %v3027 = vadd.f32 %v2995, %v366
        %v3028 = vadd.f32 %v2996, %v368
        %v3029 = vadd.f32 %v2997, %v370
        %v3030 = vadd.f32 %v2998, %v372
        %v3031 = vadd.f32 %v2999, %v374
        %v3032 = vadd.f32 %v3000, %v376
        %v3033 = vadd.f32 %v3001, %v378
        %v3034 = vadd.f32 %v3002, %v380
        %v3035 = vadd.f32 %v3003, %v382
        %v3036 = vadd.f32 %v3004, %v384
        %v3037 = vadd.f32 %v3005, %v386
        %v3038 = vadd.f32 %v3006, %v388
        %v3039 = vadd.f32 %v3007, %v390
        %v3040 = vadd.f32 %v3008, %v392
        %v3041 = vadd.f32 %v3009, %v394
        %v3042 = vadd.f32 %v3010, %v396
        %v3043 = vadd.f32 %v3011, %v398
        %v3044 = vadd.f32 %v3012, %v400
        %v3045 = vadd.f32 %v3013, %v402
        %v3046 = vadd.f32 %v3014, %v404
        %v3047 = vadd.f32 %v3015, %v406
        %v3048 = vadd.f32 %v3016, %v408
        %v3049 = vxor.u32 %v3017, 2147483648
        %v3050 = vxor.u32 %v3018, 2147483648
        %v3051 = vxor.u32 %v3019, 2147483648
        %v3052 = vxor.u32 %v3020, 2147483648
        %v3053 = vxor.u32 %v3021, 2147483648
        %v3054 = vxor.u32 %v3022, 2147483648
        %v3055 = vxor.u32 %v3023, 2147483648
        %v3056 = vxor.u32 %v3024, 2147483648
        %v3057 = vxor.u32 %v3025, 2147483648
        %v3058 = vxor.u32 %v3026, 2147483648
        %v3059 = vxor.u32 %v3027, 2147483648
        %v3060 = vxor.u32 %v3028, 2147483648
        %v3061 = vxor.u32 %v3029, 2147483648
        %v3062 = vxor.u32 %v3030, 2147483648
        %v3063 = vxor.u32 %v3031, 2147483648
        %v3064 = vxor.u32 %v3032, 2147483648
        %v3065 = vxor.u32 %v3033, 2147483648
        %v3066 = vxor.u32 %v3034, 2147483648
        %v3067 = vxor.u32 %v3035, 2147483648
        %v3068 = vxor.u32 %v3036, 2147483648
        %v3069 = vxor.u32 %v3037, 2147483648
        %v3070 = vxor.u32 %v3038, 2147483648
        %v3071 = vxor.u32 %v3039, 2147483648
        %v3072 = vxor.u32 %v3040, 2147483648
        %v3073 = vxor.u32 %v3041, 2147483648
        %v3074 = vxor.u32 %v3042, 2147483648
        %v3075 = vxor.u32 %v3043, 2147483648
        %v3076 = vxor.u32 %v3044, 2147483648
        %v3077 = vxor.u32 %v3045, 2147483648
        %v3078 = vxor.u32 %v3046, 2147483648
        %v3079 = vxor.u32 %v3047, 2147483648
        %v3080 = vxor.u32 %v3048, 2147483648
        %v3081 = vmul.f32 %v3049, 1.442695
        %v3082 = vpow.pop %v3081
        %v3083 = vmul.f32 %v3050, 1.442695
        %v3084 = vpow.pop %v3083
        %v3085 = vmul.f32 %v3051, 1.442695
        %v3086 = vpow.pop %v3085
        %v3087 = vmul.f32 %v3052, 1.442695
        %v3088 = vpow.pop %v3087
        %v3089 = vmul.f32 %v3053, 1.442695
        %v3090 = vpow.pop %v3089
        %v3091 = vmul.f32 %v3054, 1.442695
        %v3092 = vpow.pop %v3091
        %v3093 = vmul.f32 %v3055, 1.442695
        %v3094 = vpow.pop %v3093
        %v3095 = vmul.f32 %v3056, 1.442695
        %v3096 = vpow.pop %v3095
        %v3097 = vmul.f32 %v3057, 1.442695
        %v3098 = vpow.pop %v3097
        %v3099 = vmul.f32 %v3058, 1.442695
        %v3100 = vpow.pop %v3099
        %v3101 = vmul.f32 %v3059, 1.442695
        %v3102 = vpow.pop %v3101
        %v3103 = vmul.f32 %v3060, 1.442695
        %v3104 = vpow.pop %v3103
        %v3105 = vmul.f32 %v3061, 1.442695
        %v3106 = vpow.pop %v3105
        %v3107 = vmul.f32 %v3062, 1.442695
        %v3108 = vpow.pop %v3107
        %v3109 = vmul.f32 %v3063, 1.442695
        %v3110 = vpow.pop %v3109
        %v3111 = vmul.f32 %v3064, 1.442695
        %v3112 = vpow.pop %v3111
        %v3113 = vmul.f32 %v3065, 1.442695
        %v3114 = vpow.pop %v3113
        %v3115 = vmul.f32 %v3066, 1.442695
        %v3116 = vpow.pop %v3115
        %v3117 = vmul.f32 %v3067, 1.442695
        %v3118 = vpow.pop %v3117
        %v3119 = vmul.f32 %v3068, 1.442695
        %v3120 = vpow.pop %v3119
        %v3121 = vmul.f32 %v3069, 1.442695
        %v3122 = vpow.pop %v3121
        %v3123 = vmul.f32 %v3070, 1.442695
        %v3124 = vpow.pop %v3123
        %v3125 = vmul.f32 %v3071, 1.442695
        %v3126 = vpow.pop %v3125
        %v3127 = vmul.f32 %v3072, 1.442695
        %v3128 = vpow.pop %v3127
        %v3129 = vmul.f32 %v3073, 1.442695
        %v3130 = vpow.pop %v3129
        %v3131 = vmul.f32 %v3074, 1.442695
        %v3132 = vpow.pop %v3131
        %v3133 = vmul.f32 %v3075, 1.442695
        %v3134 = vpow.pop %v3133
        %v3135 = vmul.f32 %v3076, 1.442695
        %v3136 = vpow.pop %v3135
        %v3137 = vmul.f32 %v3077, 1.442695
        %v3138 = vpow.pop %v3137
        %v3139 = vmul.f32 %v3078, 1.442695
        %v3140 = vpow.pop %v3139
        %v3141 = vmul.f32 %v3079, 1.442695
        %v3142 = vpow.pop %v3141
        %v3143 = vmul.f32 %v3080, 1.442695
        %v3144 = vpow.pop %v3143
        %v3145 = vadd.f32 %v3082, 1.0
        %v3146 = vadd.f32 %v3084, 1.0
        %v3147 = vadd.f32 %v3086, 1.0
        %v3148 = vadd.f32 %v3088, 1.0
        %v3149 = vadd.f32 %v3090, 1.0
        %v3150 = vadd.f32 %v3092, 1.0
        %v3151 = vadd.f32 %v3094, 1.0
        %v3152 = vadd.f32 %v3096, 1.0
        %v3153 = vadd.f32 %v3098, 1.0
        %v3154 = vadd.f32 %v3100, 1.0
        %v3155 = vadd.f32 %v3102, 1.0
        %v3156 = vadd.f32 %v3104, 1.0
        %v3157 = vadd.f32 %v3106, 1.0
        %v3158 = vadd.f32 %v3108, 1.0
        %v3159 = vadd.f32 %v3110, 1.0
        %v3160 = vadd.f32 %v3112, 1.0
        %v3161 = vadd.f32 %v3114, 1.0
        %v3162 = vadd.f32 %v3116, 1.0
        %v3163 = vadd.f32 %v3118, 1.0
        %v3164 = vadd.f32 %v3120, 1.0
        %v3165 = vadd.f32 %v3122, 1.0
        %v3166 = vadd.f32 %v3124, 1.0
        %v3167 = vadd.f32 %v3126, 1.0
        %v3168 = vadd.f32 %v3128, 1.0
        %v3169 = vadd.f32 %v3130, 1.0
        %v3170 = vadd.f32 %v3132, 1.0
        %v3171 = vadd.f32 %v3134, 1.0
        %v3172 = vadd.f32 %v3136, 1.0
        %v3173 = vadd.f32 %v3138, 1.0
        %v3174 = vadd.f32 %v3140, 1.0
        %v3175 = vadd.f32 %v3142, 1.0
        %v3176 = vadd.f32 %v3144, 1.0
        %v3177 = vrcp.pop %v3145
        %v3178 = vmul.f32 1.0, %v3177
        %v3179 = vrcp.pop %v3146
        %v3180 = vmul.f32 1.0, %v3179
        %v3181 = vrcp.pop %v3147
        %v3182 = vmul.f32 1.0, %v3181
        %v3183 = vrcp.pop %v3148
        %v3184 = vmul.f32 1.0, %v3183
        %v3185 = vrcp.pop %v3149
        %v3186 = vmul.f32 1.0, %v3185
        %v3187 = vrcp.pop %v3150
        %v3188 = vmul.f32 1.0, %v3187
        %v3189 = vrcp.pop %v3151
        %v3190 = vmul.f32 1.0, %v3189
        %v3191 = vrcp.pop %v3152
        %v3192 = vmul.f32 1.0, %v3191
        %v3193 = vrcp.pop %v3153
        %v3194 = vmul.f32 1.0, %v3193
        %v3195 = vrcp.pop %v3154
        %v3196 = vmul.f32 1.0, %v3195
        %v3197 = vrcp.pop %v3155
        %v3198 = vmul.f32 1.0, %v3197
        %v3199 = vrcp.pop %v3156
        %v3200 = vmul.f32 1.0, %v3199
        %v3201 = vrcp.pop %v3157
        %v3202 = vmul.f32 1.0, %v3201
        %v3203 = vrcp.pop %v3158
        %v3204 = vmul.f32 1.0, %v3203
        %v3205 = vrcp.pop %v3159
        %v3206 = vmul.f32 1.0, %v3205
        %v3207 = vrcp.pop %v3160
        %v3208 = vmul.f32 1.0, %v3207
        %v3209 = vrcp.pop %v3161
        %v3210 = vmul.f32 1.0, %v3209
        %v3211 = vrcp.pop %v3162
        %v3212 = vmul.f32 1.0, %v3211
        %v3213 = vrcp.pop %v3163
        %v3214 = vmul.f32 1.0, %v3213
        %v3215 = vrcp.pop %v3164
        %v3216 = vmul.f32 1.0, %v3215
        %v3217 = vrcp.pop %v3165
        %v3218 = vmul.f32 1.0, %v3217
        %v3219 = vrcp.pop %v3166
        %v3220 = vmul.f32 1.0, %v3219
        %v3221 = vrcp.pop %v3167
        %v3222 = vmul.f32 1.0, %v3221
        %v3223 = vrcp.pop %v3168
        %v3224 = vmul.f32 1.0, %v3223
        %v3225 = vrcp.pop %v3169
        %v3226 = vmul.f32 1.0, %v3225
        %v3227 = vrcp.pop %v3170
        %v3228 = vmul.f32 1.0, %v3227
        %v3229 = vrcp.pop %v3171
        %v3230 = vmul.f32 1.0, %v3229
        %v3231 = vrcp.pop %v3172
        %v3232 = vmul.f32 1.0, %v3231
        %v3233 = vrcp.pop %v3173
        %v3234 = vmul.f32 1.0, %v3233
        %v3235 = vrcp.pop %v3174
        %v3236 = vmul.f32 1.0, %v3235
        %v3237 = vrcp.pop %v3175
        %v3238 = vmul.f32 1.0, %v3237
        %v3239 = vrcp.pop %v3176
        %v3240 = vmul.f32 1.0, %v3239
        %3273 = vrot.lane.b32.xlu0 %v314, 64
        %v3274 = vpop.permute.xlu0 %3273
        %3275 = vrot.lane.b32.xlu0 %v315, 64
        %v3276 = vpop.permute.xlu0 %3275
        %3277 = vrot.lane.b32.xlu0 %v316, 64
        %v3278 = vpop.permute.xlu0 %3277
        %3279 = vrot.lane.b32.xlu0 %v317, 64
        %v3280 = vpop.permute.xlu0 %3279
        %3281 = vrot.lane.b32.xlu0 %v318, 64
        %v3282 = vpop.permute.xlu0 %3281
        %3283 = vrot.lane.b32.xlu0 %v319, 64
        %v3284 = vpop.permute.xlu0 %3283
        %3285 = vrot.lane.b32.xlu0 %v320, 64
        %v3286 = vpop.permute.xlu0 %3285
        %3287 = vrot.lane.b32.xlu0 %v321, 64
        %v3288 = vpop.permute.xlu0 %3287
        %3289 = vrot.lane.b32.xlu0 %v322, 64
        %v3290 = vpop.permute.xlu0 %3289
        %3291 = vrot.lane.b32.xlu0 %v323, 64
        %v3292 = vpop.permute.xlu0 %3291
        %3293 = vrot.lane.b32.xlu0 %v324, 64
        %v3294 = vpop.permute.xlu0 %3293
        %3295 = vrot.lane.b32.xlu0 %v325, 64
        %v3296 = vpop.permute.xlu0 %3295
        %3297 = vrot.lane.b32.xlu0 %v326, 64
        %v3298 = vpop.permute.xlu0 %3297
        %3299 = vrot.lane.b32.xlu0 %v327, 64
        %v3300 = vpop.permute.xlu0 %3299
        %3301 = vrot.lane.b32.xlu0 %v328, 64
        %v3302 = vpop.permute.xlu0 %3301
        %3303 = vrot.lane.b32.xlu0 %v329, 64
        %v3304 = vpop.permute.xlu0 %3303
        %3305 = vrot.lane.b32.xlu0 %v330, 64
        %v3306 = vpop.permute.xlu0 %3305
        %3307 = vrot.lane.b32.xlu0 %v331, 64
        %v3308 = vpop.permute.xlu0 %3307
        %3309 = vrot.lane.b32.xlu0 %v332, 64
        %v3310 = vpop.permute.xlu0 %3309
        %3311 = vrot.lane.b32.xlu0 %v333, 64
        %v3312 = vpop.permute.xlu0 %3311
        %3313 = vrot.lane.b32.xlu0 %v334, 64
        %v3314 = vpop.permute.xlu0 %3313
        %3315 = vrot.lane.b32.xlu0 %v335, 64
        %v3316 = vpop.permute.xlu0 %3315
        %3317 = vrot.lane.b32.xlu0 %v336, 64
        %v3318 = vpop.permute.xlu0 %3317
        %3319 = vrot.lane.b32.xlu0 %v337, 64
        %v3320 = vpop.permute.xlu0 %3319
        %3321 = vrot.lane.b32.xlu0 %v338, 64
        %v3322 = vpop.permute.xlu0 %3321
        %3323 = vrot.lane.b32.xlu0 %v339, 64
        %v3324 = vpop.permute.xlu0 %3323
        %3325 = vrot.lane.b32.xlu0 %v340, 64
        %v3326 = vpop.permute.xlu0 %3325
        %3327 = vrot.lane.b32.xlu0 %v341, 64
        %v3328 = vpop.permute.xlu0 %3327
        %3329 = vrot.lane.b32.xlu0 %v342, 64
        %v3330 = vpop.permute.xlu0 %3329
        %3331 = vrot.lane.b32.xlu0 %v343, 64
        %v3332 = vpop.permute.xlu0 %3331
        %3333 = vrot.lane.b32.xlu0 %v344, 64
        %v3334 = vpop.permute.xlu0 %3333
        %3335 = vrot.lane.b32.xlu0 %v345, 64
        %v3336 = vpop.permute.xlu0 %3335
        %v3369 = vmul.f32 %v3178, %v3274
        %v3370 = vmul.f32 %v3180, %v3276
        %v3371 = vmul.f32 %v3182, %v3278
        %v3372 = vmul.f32 %v3184, %v3280
        %v3373 = vmul.f32 %v3186, %v3282
        %v3374 = vmul.f32 %v3188, %v3284
        %v3375 = vmul.f32 %v3190, %v3286
        %v3376 = vmul.f32 %v3192, %v3288
        %v3377 = vmul.f32 %v3194, %v3290
        %v3378 = vmul.f32 %v3196, %v3292
        %v3379 = vmul.f32 %v3198, %v3294
        %v3380 = vmul.f32 %v3200, %v3296
        %v3381 = vmul.f32 %v3202, %v3298
        %v3382 = vmul.f32 %v3204, %v3300
        %v3383 = vmul.f32 %v3206, %v3302
        %v3384 = vmul.f32 %v3208, %v3304
        %v3385 = vmul.f32 %v3210, %v3306
        %v3386 = vmul.f32 %v3212, %v3308
        %v3387 = vmul.f32 %v3214, %v3310
        %v3388 = vmul.f32 %v3216, %v3312
        %v3389 = vmul.f32 %v3218, %v3314
        %v3390 = vmul.f32 %v3220, %v3316
        %v3391 = vmul.f32 %v3222, %v3318
        %v3392 = vmul.f32 %v3224, %v3320
        %v3393 = vmul.f32 %v3226, %v3322
        %v3394 = vmul.f32 %v3228, %v3324
        %v3395 = vmul.f32 %v3230, %v3326
        %v3396 = vmul.f32 %v3232, %v3328
        %v3397 = vmul.f32 %v3234, %v3330
        %v3398 = vmul.f32 %v3236, %v3332
        %v3399 = vmul.f32 %v3238, %v3334
        %v3400 = vmul.f32 %v3240, %v3336
        %v3401 = vpack.c.bf16 %v3370, %v3369
        %v3402 = vpack.c.bf16 %v3372, %v3371
        %v3403 = vpack.c.bf16 %v3374, %v3373
        %v3404 = vpack.c.bf16 %v3376, %v3375
        %v3405 = vpack.c.bf16 %v3378, %v3377
        %v3406 = vpack.c.bf16 %v3380, %v3379
        %v3407 = vpack.c.bf16 %v3382, %v3381
        %v3408 = vpack.c.bf16 %v3384, %v3383
        %v3409 = vpack.c.bf16 %v3386, %v3385
        %v3410 = vpack.c.bf16 %v3388, %v3387
        %v3411 = vpack.c.bf16 %v3390, %v3389
        %v3412 = vpack.c.bf16 %v3392, %v3391
        %v3413 = vpack.c.bf16 %v3394, %v3393
        %v3414 = vpack.c.bf16 %v3396, %v3395
        %v3415 = vpack.c.bf16 %v3398, %v3397
        %v3416 = vpack.c.bf16 %v3400, %v3399
        %v3417 = vld [vmem:[%s3] sm:$0xf]
        %v3418 = vld [vmem:[%s3 + $0x4] sm:$0xf]
        %v3419 = vld [vmem:[%s3 + $0x8] sm:$0xf]
        %v3420 = vld [vmem:[%s3 + $0xc] sm:$0xf]
        %v3421 = vld [vmem:[%s3 + $0x10] sm:$0xf]
        %v3422 = vld [vmem:[%s3 + $0x14] sm:$0xf]
        %v3423 = vld [vmem:[%s3 + $0x18] sm:$0xf]
        %v3424 = vld [vmem:[%s3 + $0x1c] sm:$0xf]
        %v3425 = vld [vmem:[%s3 + $0x20] sm:$0xf]
        %v3426 = vld [vmem:[%s3 + $0x24] sm:$0xf]
        %v3427 = vld [vmem:[%s3 + $0x28] sm:$0xf]
        %v3428 = vld [vmem:[%s3 + $0x2c] sm:$0xf]
        %v3429 = vld [vmem:[%s3 + $0x30] sm:$0xf]
        %v3430 = vld [vmem:[%s3 + $0x34] sm:$0xf]
        %v3431 = vld [vmem:[%s3 + $0x38] sm:$0xf]
        %v3432 = vld [vmem:[%s3 + $0x3c] sm:$0xf]
        %v3433 = vld [vmem:[%s3 + $0x40] sm:$0xf]
        %v3434 = vld [vmem:[%s3 + $0x44] sm:$0xf]
        %v3435 = vld [vmem:[%s3 + $0x48] sm:$0xf]
        %v3436 = vld [vmem:[%s3 + $0x4c] sm:$0xf]
        %v3437 = vld [vmem:[%s3 + $0x50] sm:$0xf]
        %v3438 = vld [vmem:[%s3 + $0x54] sm:$0xf]
        %v3439 = vld [vmem:[%s3 + $0x58] sm:$0xf]
        %v3440 = vld [vmem:[%s3 + $0x5c] sm:$0xf]
        %v3441 = vld [vmem:[%s3 + $0x60] sm:$0xf]
        %v3442 = vld [vmem:[%s3 + $0x64] sm:$0xf]
        %v3443 = vld [vmem:[%s3 + $0x68] sm:$0xf]
        %v3444 = vld [vmem:[%s3 + $0x6c] sm:$0xf]
        %v3445 = vld [vmem:[%s3 + $0x70] sm:$0xf]
        %v3446 = vld [vmem:[%s3 + $0x74] sm:$0xf]
        %v3447 = vld [vmem:[%s3 + $0x78] sm:$0xf]
        %v3448 = vld [vmem:[%s3 + $0x7c] sm:$0xf]
        %v3449 = vld [vmem:[%s3 + $0x80] sm:$0xf]
        %v3450 = vld [vmem:[%s3 + $0x84] sm:$0xf]
        %v3451 = vld [vmem:[%s3 + $0x88] sm:$0xf]
        %v3452 = vld [vmem:[%s3 + $0x8c] sm:$0xf]
        %v3453 = vld [vmem:[%s3 + $0x90] sm:$0xf]
        %v3454 = vld [vmem:[%s3 + $0x94] sm:$0xf]
        %v3455 = vld [vmem:[%s3 + $0x98] sm:$0xf]
        %v3456 = vld [vmem:[%s3 + $0x9c] sm:$0xf]
        %v3457 = vld [vmem:[%s3 + $0xa0] sm:$0xf]
        %v3458 = vld [vmem:[%s3 + $0xa4] sm:$0xf]
        %v3459 = vld [vmem:[%s3 + $0xa8] sm:$0xf]
        %v3460 = vld [vmem:[%s3 + $0xac] sm:$0xf]
        %v3461 = vld [vmem:[%s3 + $0xb0] sm:$0xf]
        %v3462 = vld [vmem:[%s3 + $0xb4] sm:$0xf]
        %v3463 = vld [vmem:[%s3 + $0xb8] sm:$0xf]
        %v3464 = vld [vmem:[%s3 + $0xbc] sm:$0xf]
        %v3465 = vld [vmem:[%s3 + $0xc0] sm:$0xf]
        %v3466 = vld [vmem:[%s3 + $0xc4] sm:$0xf]
        %v3467 = vld [vmem:[%s3 + $0xc8] sm:$0xf]
        %v3468 = vld [vmem:[%s3 + $0xcc] sm:$0xf]
        %v3469 = vld [vmem:[%s3 + $0xd0] sm:$0xf]
        %v3470 = vld [vmem:[%s3 + $0xd4] sm:$0xf]
        %v3471 = vld [vmem:[%s3 + $0xd8] sm:$0xf]
        %v3472 = vld [vmem:[%s3 + $0xdc] sm:$0xf]
        %v3473 = vld [vmem:[%s3 + $0xe0] sm:$0xf]
        %v3474 = vld [vmem:[%s3 + $0xe4] sm:$0xf]
        %v3475 = vld [vmem:[%s3 + $0xe8] sm:$0xf]
        %v3476 = vld [vmem:[%s3 + $0xec] sm:$0xf]
        %v3477 = vld [vmem:[%s3 + $0xf0] sm:$0xf]
        %v3478 = vld [vmem:[%s3 + $0xf4] sm:$0xf]
        %v3479 = vld [vmem:[%s3 + $0xf8] sm:$0xf]
        %v3480 = vld [vmem:[%s3 + $0xfc] sm:$0xf]
        %v3481 = vld [vmem:[%s3 + $0x100] sm:$0xf]
        %v3482 = vld [vmem:[%s3 + $0x104] sm:$0xf]
        %v3483 = vld [vmem:[%s3 + $0x108] sm:$0xf]
        %v3484 = vld [vmem:[%s3 + $0x10c] sm:$0xf]
        %v3485 = vld [vmem:[%s3 + $0x110] sm:$0xf]
        %v3486 = vld [vmem:[%s3 + $0x114] sm:$0xf]
        %v3487 = vld [vmem:[%s3 + $0x118] sm:$0xf]
        %v3488 = vld [vmem:[%s3 + $0x11c] sm:$0xf]
        %v3490 = vshrl.u32 %v3402, 16
        %v3493 = vshrl.u32 %v3401, 16
        %v3496 = vshrl.u32 %v3403, 16
        %v3499 = vshrl.u32 %v3404, 16
        %v3502 = vshrl.u32 %v3405, 16
        %v3505 = vshrl.u32 %v3406, 16
        %v3508 = vshrl.u32 %v3407, 16
        %v3511 = vshrl.u32 %v3408, 16
        %v3514 = vshrl.u32 %v3409, 16
        %v3517 = vshrl.u32 %v3410, 16
        %v3520 = vshrl.u32 %v3411, 16
        %v3523 = vshrl.u32 %v3412, 16
        %v3526 = vshrl.u32 %v3413, 16
        %v3529 = vshrl.u32 %v3414, 16
        %v3532 = vshrl.u32 %v3415, 16
        %v3535 = vshrl.u32 %v3416, 16
        %v3553 = vrot.slane %v3490, 7
        %v3554 = vshll.u32 %v3402, 16
        %v3556 = vor.u32 %v3553, %v3554
        %v3557 = vrot.slane %v3493, 7
        %v3558 = vshll.u32 %v3401, 16
        %v3560 = vor.u32 %v3557, %v3558
        %v3561 = vrot.slane %v3496, 7
        %v3562 = vshll.u32 %v3403, 16
        %v3564 = vor.u32 %v3561, %v3562
        %v3565 = vrot.slane %v3499, 7
        %v3566 = vshll.u32 %v3404, 16
        %v3568 = vor.u32 %v3565, %v3566
        %v3569 = vrot.slane %v3502, 7
        %v3570 = vshll.u32 %v3405, 16
        %v3572 = vor.u32 %v3569, %v3570
        %v3573 = vrot.slane %v3505, 7
        %v3574 = vshll.u32 %v3406, 16
        %v3576 = vor.u32 %v3573, %v3574
        %v3577 = vrot.slane %v3508, 7
        %v3578 = vshll.u32 %v3407, 16
        %v3580 = vor.u32 %v3577, %v3578
        %v3581 = vrot.slane %v3511, 7
        %v3582 = vshll.u32 %v3408, 16
        %v3584 = vor.u32 %v3581, %v3582
        %v3585 = vrot.slane %v3514, 7
        %v3586 = vshll.u32 %v3409, 16
        %v3588 = vor.u32 %v3585, %v3586
        %v3589 = vrot.slane %v3517, 7
        %v3590 = vshll.u32 %v3410, 16
        %v3592 = vor.u32 %v3589, %v3590
        %v3593 = vrot.slane %v3520, 7
        %v3594 = vshll.u32 %v3411, 16
        %v3596 = vor.u32 %v3593, %v3594
        %v3597 = vrot.slane %v3523, 7
        %v3598 = vshll.u32 %v3412, 16
        %v3600 = vor.u32 %v3597, %v3598
        %v3601 = vrot.slane %v3526, 7
        %v3602 = vshll.u32 %v3413, 16
        %v3604 = vor.u32 %v3601, %v3602
        %v3605 = vrot.slane %v3529, 7
        %v3606 = vshll.u32 %v3414, 16
        %v3608 = vor.u32 %v3605, %v3606
        %v3609 = vrot.slane %v3532, 7
        %v3610 = vshll.u32 %v3415, 16
        %v3612 = vor.u32 %v3609, %v3610
        %v3613 = vrot.slane %v3535, 7
        %v3614 = vshll.u32 %v3416, 16
        %v3616 = vor.u32 %v3613, %v3614
        %v3649 = vrot.slane %v3554, 7
        %v3650 = vrot.slane %v3558, 7
        %v3651 = vrot.slane %v3562, 7
        %v3652 = vrot.slane %v3566, 7
        %v3653 = vrot.slane %v3570, 7
        %v3654 = vrot.slane %v3574, 7
        %v3655 = vrot.slane %v3578, 7
        %v3656 = vrot.slane %v3582, 7
        %v3657 = vrot.slane %v3586, 7
        %v3658 = vrot.slane %v3590, 7
        %v3659 = vrot.slane %v3594, 7
        %v3660 = vrot.slane %v3598, 7
        %v3661 = vrot.slane %v3602, 7
        %v3662 = vrot.slane %v3606, 7
        %v3663 = vrot.slane %v3610, 7
        %v3664 = vrot.slane %v3614, 7
        %v3681 = vsel %vm692, %v3490, %v3556
        %v3682 = vsel %vm692, %v3493, %v3560
        %v3683 = vsel %vm692, %v3496, %v3564
        %v3684 = vsel %vm692, %v3499, %v3568
        %v3685 = vsel %vm692, %v3502, %v3572
        %v3686 = vsel %vm692, %v3505, %v3576
        %v3687 = vsel %vm692, %v3508, %v3580
        %v3688 = vsel %vm692, %v3511, %v3584
        %v3689 = vsel %vm692, %v3514, %v3588
        %v3690 = vsel %vm692, %v3517, %v3592
        %v3691 = vsel %vm692, %v3520, %v3596
        %v3692 = vsel %vm692, %v3523, %v3600
        %v3693 = vsel %vm692, %v3526, %v3604
        %v3694 = vsel %vm692, %v3529, %v3608
        %v3695 = vsel %vm692, %v3532, %v3612
        %v3696 = vsel %vm692, %v3535, %v3616
        %v3697 = vsel %vm692, %v3553, %v3649
        %v3698 = vsel %vm692, %v3557, %v3650
        %v3699 = vsel %vm692, %v3561, %v3651
        %v3700 = vsel %vm692, %v3565, %v3652
        %v3701 = vsel %vm692, %v3569, %v3653
        %v3702 = vsel %vm692, %v3573, %v3654
        %v3703 = vsel %vm692, %v3577, %v3655
        %v3704 = vsel %vm692, %v3581, %v3656
        %v3705 = vsel %vm692, %v3585, %v3657
        %v3706 = vsel %vm692, %v3589, %v3658
        %v3707 = vsel %vm692, %v3593, %v3659
        %v3708 = vsel %vm692, %v3597, %v3660
        %v3709 = vsel %vm692, %v3601, %v3661
        %v3710 = vsel %vm692, %v3605, %v3662
        %v3711 = vsel %vm692, %v3609, %v3663
        %v3712 = vsel %vm692, %v3613, %v3664
        %v3714 = vshrl.u32 %v3681, 16
        %v3716 = vshll.u32 %v3681, 16
        %v3718 = vrot.slane %v3716, 1
        %v3719 = vor.u32 %v3714, %v3718
        %v3721 = vshll.u32 %v3697, 16
        %v3723 = vrot.slane %v3721, 1
        %v3724 = vsel %vm725, %v3719, %v3723
        %v3726 = vshrl.u32 %v3682, 16
        %v3728 = vshll.u32 %v3682, 16
        %v3730 = vrot.slane %v3728, 1
        %v3731 = vor.u32 %v3726, %v3730
        %v3733 = vshll.u32 %v3698, 16
        %v3735 = vrot.slane %v3733, 1
        %v3736 = vsel %vm725, %v3731, %v3735
        %v3738 = vshrl.u32 %v3683, 16
        %v3740 = vshll.u32 %v3683, 16
        %v3742 = vrot.slane %v3740, 1
        %v3743 = vor.u32 %v3738, %v3742
        %v3745 = vshll.u32 %v3699, 16
        %v3747 = vrot.slane %v3745, 1
        %v3748 = vsel %vm725, %v3743, %v3747
        %v3750 = vshrl.u32 %v3684, 16
        %v3752 = vshll.u32 %v3684, 16
        %v3754 = vrot.slane %v3752, 1
        %v3755 = vor.u32 %v3750, %v3754
        %v3757 = vshll.u32 %v3700, 16
        %v3759 = vrot.slane %v3757, 1
        %v3760 = vsel %vm725, %v3755, %v3759
        %v3762 = vshrl.u32 %v3685, 16
        %v3764 = vshll.u32 %v3685, 16
        %v3766 = vrot.slane %v3764, 1
        %v3767 = vor.u32 %v3762, %v3766
        %v3769 = vshll.u32 %v3701, 16
        %v3771 = vrot.slane %v3769, 1
        %v3772 = vsel %vm725, %v3767, %v3771
        %v3774 = vshrl.u32 %v3686, 16
        %v3776 = vshll.u32 %v3686, 16
        %v3778 = vrot.slane %v3776, 1
        %v3779 = vor.u32 %v3774, %v3778
        %v3781 = vshll.u32 %v3702, 16
        %v3783 = vrot.slane %v3781, 1
        %v3784 = vsel %vm725, %v3779, %v3783
        %v3786 = vshrl.u32 %v3687, 16
        %v3788 = vshll.u32 %v3687, 16
        %v3790 = vrot.slane %v3788, 1
        %v3791 = vor.u32 %v3786, %v3790
        %v3793 = vshll.u32 %v3703, 16
        %v3795 = vrot.slane %v3793, 1
        %v3796 = vsel %vm725, %v3791, %v3795
        %v3798 = vshrl.u32 %v3688, 16
        %v3800 = vshll.u32 %v3688, 16
        %v3802 = vrot.slane %v3800, 1
        %v3803 = vor.u32 %v3798, %v3802
        %v3805 = vshll.u32 %v3704, 16
        %v3807 = vrot.slane %v3805, 1
        %v3808 = vsel %vm725, %v3803, %v3807
        %v3810 = vshrl.u32 %v3689, 16
        %v3812 = vshll.u32 %v3689, 16
        %v3814 = vrot.slane %v3812, 1
        %v3815 = vor.u32 %v3810, %v3814
        %v3817 = vshll.u32 %v3705, 16
        %v3819 = vrot.slane %v3817, 1
        %v3820 = vsel %vm725, %v3815, %v3819
        %v3822 = vshrl.u32 %v3690, 16
        %v3824 = vshll.u32 %v3690, 16
        %v3826 = vrot.slane %v3824, 1
        %v3827 = vor.u32 %v3822, %v3826
        %v3829 = vshll.u32 %v3706, 16
        %v3831 = vrot.slane %v3829, 1
        %v3832 = vsel %vm725, %v3827, %v3831
        %v3834 = vshrl.u32 %v3691, 16
        %v3836 = vshll.u32 %v3691, 16
        %v3838 = vrot.slane %v3836, 1
        %v3839 = vor.u32 %v3834, %v3838
        %v3841 = vshll.u32 %v3707, 16
        %v3843 = vrot.slane %v3841, 1
        %v3844 = vsel %vm725, %v3839, %v3843
        %v3846 = vshrl.u32 %v3692, 16
        %v3848 = vshll.u32 %v3692, 16
        %v3850 = vrot.slane %v3848, 1
        %v3851 = vor.u32 %v3846, %v3850
        %v3853 = vshll.u32 %v3708, 16
        %v3855 = vrot.slane %v3853, 1
        %v3856 = vsel %vm725, %v3851, %v3855
        %v3858 = vshrl.u32 %v3693, 16
        %v3860 = vshll.u32 %v3693, 16
        %v3862 = vrot.slane %v3860, 1
        %v3863 = vor.u32 %v3858, %v3862
        %v3865 = vshll.u32 %v3709, 16
        %v3867 = vrot.slane %v3865, 1
        %v3868 = vsel %vm725, %v3863, %v3867
        %v3870 = vshrl.u32 %v3694, 16
        %v3872 = vshll.u32 %v3694, 16
        %v3874 = vrot.slane %v3872, 1
        %v3875 = vor.u32 %v3870, %v3874
        %v3877 = vshll.u32 %v3710, 16
        %v3879 = vrot.slane %v3877, 1
        %v3880 = vsel %vm725, %v3875, %v3879
        %v3882 = vshrl.u32 %v3695, 16
        %v3884 = vshll.u32 %v3695, 16
        %v3886 = vrot.slane %v3884, 1
        %v3887 = vor.u32 %v3882, %v3886
        %v3889 = vshll.u32 %v3711, 16
        %v3891 = vrot.slane %v3889, 1
        %v3892 = vsel %vm725, %v3887, %v3891
        %3893 = vrot.lane.b32.xlu0 %v3724, 64
        %v3894 = vpop.permute.xlu0 %3893
        %3895 = vrot.lane.b32.xlu0 %v3736, 64
        %v3896 = vpop.permute.xlu0 %3895
        %3897 = vrot.lane.b32.xlu0 %v3748, 64
        %v3898 = vpop.permute.xlu0 %3897
        %3899 = vrot.lane.b32.xlu0 %v3760, 64
        %v3900 = vpop.permute.xlu0 %3899
        %3901 = vrot.lane.b32.xlu0 %v3772, 64
        %v3902 = vpop.permute.xlu0 %3901
        %3903 = vrot.lane.b32.xlu0 %v3784, 64
        %v3904 = vpop.permute.xlu0 %3903
        %3905 = vrot.lane.b32.xlu0 %v3796, 64
        %v3906 = vpop.permute.xlu0 %3905
        %3907 = vrot.lane.b32.xlu0 %v3808, 64
        %v3908 = vpop.permute.xlu0 %3907
        %3909 = vrot.lane.b32.xlu0 %v3820, 64
        %v3910 = vpop.permute.xlu0 %3909
        %3911 = vrot.lane.b32.xlu0 %v3832, 64
        %v3912 = vpop.permute.xlu0 %3911
        %3913 = vrot.lane.b32.xlu0 %v3844, 64
        %v3914 = vpop.permute.xlu0 %3913
        %3915 = vrot.lane.b32.xlu0 %v3856, 64
        %v3916 = vpop.permute.xlu0 %3915
        %3917 = vrot.lane.b32.xlu0 %v3868, 64
        %v3918 = vpop.permute.xlu0 %3917
        %3919 = vrot.lane.b32.xlu0 %v3880, 64
        %v3920 = vpop.permute.xlu0 %3919
        %3921 = vrot.lane.b32.xlu0 %v3892, 64
        %v3922 = vpop.permute.xlu0 %3921
        %v3931 = vunpack.c.l.b16 %v3425
        %v3932 = vunpack.c.l.b16 %v3426
        %v3933 = vunpack.c.l.b16 %v3427
        %v3934 = vunpack.c.l.b16 %v3428
        %v3935 = vunpack.c.l.b16 %v3429
        %v3936 = vunpack.c.l.b16 %v3430
        %v3937 = vunpack.c.l.b16 %v3431
        %v3938 = vunpack.c.l.b16 %v3432
        %v3939 = vpack.c.b16 %v3932, %v3931
        %v3940 = vpack.c.b16 %v3934, %v3933
        %v3941 = vpack.c.b16 %v3936, %v3935
        %v3942 = vpack.c.b16 %v3938, %v3937
        %v3948 = vsel %vm930, %v3894, 0
        %v3951 = vsel %vm930, %v3896, 0
        %v3954 = vsel %vm930, %v3898, 0
        %v3957 = vsel %vm930, %v3900, 0
        %v3960 = vsel %vm930, %v3902, 0
        %v3963 = vsel %vm930, %v3904, 0
        %v3966 = vsel %vm930, %v3906, 0
        %v3969 = vsel %vm930, %v3908, 0
        %v3972 = vsel %vm930, %v3910, 0
        %v3975 = vsel %vm930, %v3912, 0
        %v3978 = vsel %vm930, %v3914, 0
        %v3981 = vsel %vm930, %v3916, 0
        %v3984 = vsel %vm930, %v3918, 0
        %v3987 = vsel %vm930, %v3920, 0
        %v3990 = vsel %vm930, %v3922, 0
        %3992 = vmatprep.subr.bf16.mxu0 0
        %3993 = vmatpush1.bf16.msra.mxu0 %v3939
        %3994 = vmatprep.subr.bf16.mxu0 0
        %3995 = vmatpush1.bf16.msra.mxu0 %v3940
        %3996 = vmatprep.subr.bf16.mxu0 0
        %3997 = vmatpush1.bf16.msra.mxu0 %v3941
        %3998 = vmatprep.subr.bf16.mxu0 0
        %3999 = vmatpush1.bf16.msra.mxu0 %v3942
        %4000 = vmatprep.subr.bf16.mxu0 0
        %4001 = vmatpush1.bf16.msra.mxu0 0
        %4002 = vmatprep.subr.bf16.mxu0 0
        %4003 = vmatpush1.bf16.msra.mxu0 0
        %4004 = vmatprep.subr.bf16.mxu0 0
        %4005 = vmatpush1.bf16.msra.mxu0 0
        %4006 = vmatprep.subr.bf16.mxu0 0
        %4007 = vmatpush1.bf16.msra.mxu0 0
        %4008 = vmatprep.subr.bf16.mxu0 0
        %4009 = vmatpush1.bf16.msra.mxu0 0
        %4010 = vmatprep.subr.bf16.mxu0 0
        %4011 = vmatpush1.bf16.msra.mxu0 0
        %4012 = vmatprep.subr.bf16.mxu0 0
        %4013 = vmatpush1.bf16.msra.mxu0 0
        %4014 = vmatprep.subr.bf16.mxu0 0
        %4015 = vmatpush1.bf16.msra.mxu0 0
        %4016 = vmatprep.subr.bf16.mxu0 0
        %4017 = vmatpush1.bf16.msra.mxu0 0
        %4018 = vmatprep.subr.bf16.mxu0 0
        %4019 = vmatpush1.bf16.msra.mxu0 0
        %4020 = vmatprep.subr.bf16.mxu0 0
        %4021 = vmatpush1.bf16.msra.mxu0 0
        %4022 = vmatprep.subr.bf16.mxu0 0
        %4023 = vmatpush1.bf16.msra.mxu0 0
        %4024 = vmatprep.mubr.bf16.mxu0 0
        %4025 = vmatmul.mubr.bf16.gmra.mrb[0].mxu0 %v3948
        %v4026 = vpop.f32.mrb[0].mxu0
        %v4027 = vadd.f32 0.0, %v4026
        %v4028 = vpop.f32.mrb[0].mxu0
        %v4029 = vpop.f32.mrb[0].mxu0
        %v4030 = vadd.f32 0.0, %v4029
        %v4031 = vpop.f32.mrb[0].mxu0
        %4032 = vmatprep.mubr.bf16.mxu0 0
        %4033 = vmatmul.mubr.bf16.gmra.mrb[0].mxu0 %v3951
        %v4034 = vpop.f32.mrb[0].mxu0
        %v4035 = vadd.f32 0.0, %v4034
        %v4036 = vpop.f32.mrb[0].mxu0
        %v4037 = vpop.f32.mrb[0].mxu0
        %v4038 = vadd.f32 0.0, %v4037
        %v4039 = vpop.f32.mrb[0].mxu0
        %4040 = vmatprep.mubr.bf16.mxu0 0
        %4041 = vmatmul.mubr.bf16.gmra.mrb[0].mxu0 %v3948
        %v4042 = vpop.f32.mrb[0].mxu0
        %v4043 = vadd.f32 0.0, %v4042
        %v4044 = vpop.f32.mrb[0].mxu0
        %v4045 = vpop.f32.mrb[0].mxu0
        %v4046 = vadd.f32 0.0, %v4045
        %v4047 = vpop.f32.mrb[0].mxu0
        %4048 = vmatprep.mubr.bf16.mxu0 0
        %4049 = vmatmul.mubr.bf16.gmra.mrb[0].mxu0 %v3954
        %v4050 = vpop.f32.mrb[0].mxu0
        %v4051 = vadd.f32 0.0, %v4050
        %v4052 = vpop.f32.mrb[0].mxu0
        %v4053 = vpop.f32.mrb[0].mxu0
        %v4054 = vadd.f32 0.0, %v4053
        %v4055 = vpop.f32.mrb[0].mxu0
        %4056 = vmatprep.mubr.bf16.mxu0 0
        %4057 = vmatmul.mubr.bf16.gmra.mrb[0].mxu0 %v3957
        %v4058 = vpop.f32.mrb[0].mxu0
        %v4059 = vadd.f32 0.0, %v4058
        %v4060 = vpop.f32.mrb[0].mxu0
        %v4061 = vpop.f32.mrb[0].mxu0
        %v4062 = vadd.f32 0.0, %v4061
        %v4063 = vpop.f32.mrb[0].mxu0
        %4064 = vmatprep.mubr.bf16.mxu0 0
        %4065 = vmatmul.mubr.bf16.gmra.mrb[0].mxu0 %v3960
        %v4066 = vpop.f32.mrb[0].mxu0
        %v4067 = vadd.f32 0.0, %v4066
        %v4068 = vpop.f32.mrb[0].mxu0
        %v4069 = vpop.f32.mrb[0].mxu0
        %v4070 = vadd.f32 0.0, %v4069
        %v4071 = vpop.f32.mrb[0].mxu0
        %4072 = vmatprep.mubr.bf16.mxu0 0
        %4073 = vmatmul.mubr.bf16.gmra.mrb[0].mxu0 %v3963
        %v4074 = vpop.f32.mrb[0].mxu0
        %v4075 = vadd.f32 0.0, %v4074
        %v4076 = vpop.f32.mrb[0].mxu0
        %v4077 = vpop.f32.mrb[0].mxu0
        %v4078 = vadd.f32 0.0, %v4077
        %v4079 = vpop.f32.mrb[0].mxu0
        %4080 = vmatprep.mubr.bf16.mxu0 0
        %4081 = vmatmul.mubr.bf16.gmra.mrb[0].mxu0 %v3966
        %v4082 = vpop.f32.mrb[0].mxu0
        %v4083 = vadd.f32 0.0, %v4082
        %v4084 = vpop.f32.mrb[0].mxu0
        %v4085 = vpop.f32.mrb[0].mxu0
        %v4086 = vadd.f32 0.0, %v4085
        %v4087 = vpop.f32.mrb[0].mxu0
        %4088 = vmatprep.mubr.bf16.mxu0 0
        %4089 = vmatmul.mubr.bf16.gmra.mrb[0].mxu0 %v3969
        %v4090 = vpop.f32.mrb[0].mxu0
        %v4091 = vadd.f32 0.0, %v4090
        %v4092 = vpop.f32.mrb[0].mxu0
        %v4093 = vpop.f32.mrb[0].mxu0
        %v4094 = vadd.f32 0.0, %v4093
        %v4095 = vpop.f32.mrb[0].mxu0
        %4096 = vmatprep.mubr.bf16.mxu0 0
        %4097 = vmatmul.mubr.bf16.gmra.mrb[0].mxu0 %v3972
        %v4098 = vpop.f32.mrb[0].mxu0
        %v4099 = vadd.f32 0.0, %v4098
        %v4100 = vpop.f32.mrb[0].mxu0
        %v4101 = vpop.f32.mrb[0].mxu0
        %v4102 = vadd.f32 0.0, %v4101
        %v4103 = vpop.f32.mrb[0].mxu0
        %4104 = vmatprep.mubr.bf16.mxu0 0
        %4105 = vmatmul.mubr.bf16.gmra.mrb[0].mxu0 %v3975
        %v4106 = vpop.f32.mrb[0].mxu0
        %v4107 = vadd.f32 0.0, %v4106
        %v4108 = vpop.f32.mrb[0].mxu0
        %v4109 = vpop.f32.mrb[0].mxu0
        %v4110 = vadd.f32 0.0, %v4109
        %v4111 = vpop.f32.mrb[0].mxu0
        %4112 = vmatprep.mubr.bf16.mxu0 0
        %4113 = vmatmul.mubr.bf16.gmra.mrb[0].mxu0 %v3978
        %v4114 = vpop.f32.mrb[0].mxu0
        %v4115 = vadd.f32 0.0, %v4114
        %v4116 = vpop.f32.mrb[0].mxu0
        %v4117 = vpop.f32.mrb[0].mxu0
        %v4118 = vadd.f32 0.0, %v4117
        %v4119 = vpop.f32.mrb[0].mxu0
        %4120 = vmatprep.mubr.bf16.mxu0 0
        %4121 = vmatmul.mubr.bf16.gmra.mrb[0].mxu0 %v3981
        %v4122 = vpop.f32.mrb[0].mxu0
        %v4123 = vadd.f32 0.0, %v4122
        %v4124 = vpop.f32.mrb[0].mxu0
        %v4125 = vpop.f32.mrb[0].mxu0
        %v4126 = vadd.f32 0.0, %v4125
        %v4127 = vpop.f32.mrb[0].mxu0
        %4128 = vmatprep.mubr.bf16.mxu0 0
        %4129 = vmatmul.mubr.bf16.gmra.mrb[0].mxu0 %v3984
        %v4130 = vpop.f32.mrb[0].mxu0
        %v4131 = vadd.f32 0.0, %v4130
        %v4132 = vpop.f32.mrb[0].mxu0
        %v4133 = vpop.f32.mrb[0].mxu0
        %v4134 = vadd.f32 0.0, %v4133
        %v4135 = vpop.f32.mrb[0].mxu0
        %4136 = vmatprep.mubr.bf16.mxu0 0
        %4137 = vmatmul.mubr.bf16.gmra.mrb[0].mxu0 %v3987
        %v4138 = vpop.f32.mrb[0].mxu0
        %v4139 = vadd.f32 0.0, %v4138
        %v4140 = vpop.f32.mrb[0].mxu0
        %v4141 = vpop.f32.mrb[0].mxu0
        %v4142 = vadd.f32 0.0, %v4141
        %v4143 = vpop.f32.mrb[0].mxu0
        %4144 = vmatprep.mubr.bf16.mxu0 0
        %4145 = vmatmul.mubr.bf16.gmra.mrb[0].mxu0 %v3990
        %v4146 = vpop.f32.mrb[0].mxu0
        %v4147 = vadd.f32 0.0, %v4146
        %v4148 = vpop.f32.mrb[0].mxu0
        %v4149 = vpop.f32.mrb[0].mxu0
        %v4150 = vadd.f32 0.0, %v4149
        %v4151 = vpop.f32.mrb[0].mxu0
        %4152 = vdwg.mxu0
        %4168 = vrot.lane.b32.xlu0 %v3681, 64
        %v4169 = vpop.permute.xlu0 %4168
        %4170 = vrot.lane.b32.xlu0 %v3682, 64
        %v4171 = vpop.permute.xlu0 %4170
        %4172 = vrot.lane.b32.xlu0 %v3683, 64
        %v4173 = vpop.permute.xlu0 %4172
        %4174 = vrot.lane.b32.xlu0 %v3684, 64
        %v4175 = vpop.permute.xlu0 %4174
        %4176 = vrot.lane.b32.xlu0 %v3685, 64
        %v4177 = vpop.permute.xlu0 %4176
        %4178 = vrot.lane.b32.xlu0 %v3686, 64
        %v4179 = vpop.permute.xlu0 %4178
        %4180 = vrot.lane.b32.xlu0 %v3687, 64
        %v4181 = vpop.permute.xlu0 %4180
        %4182 = vrot.lane.b32.xlu0 %v3688, 64
        %v4183 = vpop.permute.xlu0 %4182
        %4184 = vrot.lane.b32.xlu0 %v3689, 64
        %v4185 = vpop.permute.xlu0 %4184
        %4186 = vrot.lane.b32.xlu0 %v3690, 64
        %v4187 = vpop.permute.xlu0 %4186
        %4188 = vrot.lane.b32.xlu0 %v3691, 64
        %v4189 = vpop.permute.xlu0 %4188
        %4190 = vrot.lane.b32.xlu0 %v3692, 64
        %v4191 = vpop.permute.xlu0 %4190
        %4192 = vrot.lane.b32.xlu0 %v3693, 64
        %v4193 = vpop.permute.xlu0 %4192
        %4194 = vrot.lane.b32.xlu0 %v3694, 64
        %v4195 = vpop.permute.xlu0 %4194
        %4196 = vrot.lane.b32.xlu0 %v3695, 64
        %v4197 = vpop.permute.xlu0 %4196
        %v4206 = vunpack.c.l.b16 %v3417
        %v4207 = vunpack.c.l.b16 %v3418
        %v4208 = vunpack.c.l.b16 %v3419
        %v4209 = vunpack.c.l.b16 %v3420
        %v4210 = vunpack.c.l.b16 %v3421
        %v4211 = vunpack.c.l.b16 %v3422
        %v4212 = vunpack.c.l.b16 %v3423
        %v4213 = vunpack.c.l.b16 %v3424
        %v4214 = vpack.c.b16 %v4207, %v4206
        %v4215 = vpack.c.b16 %v4209, %v4208
        %v4216 = vpack.c.b16 %v4211, %v4210
        %v4217 = vpack.c.b16 %v4213, %v4212
        %v4223 = vsel %vm930, %v4169, 0
        %v4226 = vsel %vm930, %v4171, 0
        %v4229 = vsel %vm930, %v4173, 0
        %v4232 = vsel %vm930, %v4175, 0
        %v4235 = vsel %vm930, %v4177, 0
        %v4238 = vsel %vm930, %v4179, 0
        %v4241 = vsel %vm930, %v4181, 0
        %v4244 = vsel %vm930, %v4183, 0
        %v4247 = vsel %vm930, %v4185, 0
        %v4250 = vsel %vm930, %v4187, 0
        %v4253 = vsel %vm930, %v4189, 0
        %v4256 = vsel %vm930, %v4191, 0
        %v4259 = vsel %vm930, %v4193, 0
        %v4262 = vsel %vm930, %v4195, 0
        %v4265 = vsel %vm930, %v4197, 0
        %4267 = vmatprep.subr.bf16.mxu0 0
        %4268 = vmatpush1.bf16.msra.mxu0 %v4214
        %4269 = vmatprep.subr.bf16.mxu0 0
        %4270 = vmatpush1.bf16.msra.mxu0 %v4215
        %4271 = vmatprep.subr.bf16.mxu0 0
        %4272 = vmatpush1.bf16.msra.mxu0 %v4216
        %4273 = vmatprep.subr.bf16.mxu0 0
        %4274 = vmatpush1.bf16.msra.mxu0 %v4217
        %4275 = vmatprep.subr.bf16.mxu0 0
        %4276 = vmatpush1.bf16.msra.mxu0 0
        %4277 = vmatprep.subr.bf16.mxu0 0
        %4278 = vmatpush1.bf16.msra.mxu0 0
        %4279 = vmatprep.subr.bf16.mxu0 0
        %4280 = vmatpush1.bf16.msra.mxu0 0
        %4281 = vmatprep.subr.bf16.mxu0 0
        %4282 = vmatpush1.bf16.msra.mxu0 0
        %4283 = vmatprep.subr.bf16.mxu0 0
        %4284 = vmatpush1.bf16.msra.mxu0 0
        %4285 = vmatprep.subr.bf16.mxu0 0
        %4286 = vmatpush1.bf16.msra.mxu0 0
        %4287 = vmatprep.subr.bf16.mxu0 0
        %4288 = vmatpush1.bf16.msra.mxu0 0
        %4289 = vmatprep.subr.bf16.mxu0 0
        %4290 = vmatpush1.bf16.msra.mxu0 0
        %4291 = vmatprep.subr.bf16.mxu0 0
        %4292 = vmatpush1.bf16.msra.mxu0 0
        %4293 = vmatprep.subr.bf16.mxu0 0
        %4294 = vmatpush1.bf16.msra.mxu0 0
        %4295 = vmatprep.subr.bf16.mxu0 0
        %4296 = vmatpush1.bf16.msra.mxu0 0
        %4297 = vmatprep.subr.bf16.mxu0 0
        %4298 = vmatpush1.bf16.msra.mxu0 0
        %4299 = vmatprep.mubr.bf16.mxu0 0
        %4300 = vmatmul.mubr.bf16.gmra.mrb[0].mxu0 %v4223
        %v4301 = vpop.f32.mrb[0].mxu0
        %v4302 = vadd.f32 %v4027, %v4301
        %v4303 = vpop.f32.mrb[0].mxu0
        %v4304 = vpop.f32.mrb[0].mxu0
        %v4305 = vadd.f32 %v4030, %v4304
        %v4306 = vpop.f32.mrb[0].mxu0
        %4307 = vmatprep.mubr.bf16.mxu0 0
        %4308 = vmatmul.mubr.bf16.gmra.mrb[0].mxu0 %v4226
        %v4309 = vpop.f32.mrb[0].mxu0
        %v4310 = vadd.f32 %v4035, %v4309
        %v4311 = vpop.f32.mrb[0].mxu0
        %v4312 = vpop.f32.mrb[0].mxu0
        %v4313 = vadd.f32 %v4038, %v4312
        %v4314 = vpop.f32.mrb[0].mxu0
        %4315 = vmatprep.mubr.bf16.mxu0 0
        %4316 = vmatmul.mubr.bf16.gmra.mrb[0].mxu0 %v4223
        %v4317 = vpop.f32.mrb[0].mxu0
        %v4318 = vadd.f32 %v4043, %v4317
        %v4319 = vpop.f32.mrb[0].mxu0
        %v4320 = vpop.f32.mrb[0].mxu0
        %v4321 = vadd.f32 %v4046, %v4320
        %v4322 = vpop.f32.mrb[0].mxu0
        %4323 = vmatprep.mubr.bf16.mxu0 0
        %4324 = vmatmul.mubr.bf16.gmra.mrb[0].mxu0 %v4229
        %v4325 = vpop.f32.mrb[0].mxu0
        %v4326 = vadd.f32 %v4051, %v4325
        %v4327 = vpop.f32.mrb[0].mxu0
        %v4328 = vpop.f32.mrb[0].mxu0
        %v4329 = vadd.f32 %v4054, %v4328
        %v4330 = vpop.f32.mrb[0].mxu0
        %4331 = vmatprep.mubr.bf16.mxu0 0
        %4332 = vmatmul.mubr.bf16.gmra.mrb[0].mxu0 %v4232
        %v4333 = vpop.f32.mrb[0].mxu0
        %v4334 = vadd.f32 %v4059, %v4333
        %v4335 = vpop.f32.mrb[0].mxu0
        %v4336 = vpop.f32.mrb[0].mxu0
        %v4337 = vadd.f32 %v4062, %v4336
        %v4338 = vpop.f32.mrb[0].mxu0
        %4339 = vmatprep.mubr.bf16.mxu0 0
        %4340 = vmatmul.mubr.bf16.gmra.mrb[0].mxu0 %v4235
        %v4341 = vpop.f32.mrb[0].mxu0
        %v4342 = vadd.f32 %v4067, %v4341
        %v4343 = vpop.f32.mrb[0].mxu0
        %v4344 = vpop.f32.mrb[0].mxu0
        %v4345 = vadd.f32 %v4070, %v4344
        %v4346 = vpop.f32.mrb[0].mxu0
        %4347 = vmatprep.mubr.bf16.mxu0 0
        %4348 = vmatmul.mubr.bf16.gmra.mrb[0].mxu0 %v4238
        %v4349 = vpop.f32.mrb[0].mxu0
        %v4350 = vadd.f32 %v4075, %v4349
        %v4351 = vpop.f32.mrb[0].mxu0
        %v4352 = vpop.f32.mrb[0].mxu0
        %v4353 = vadd.f32 %v4078, %v4352
        %v4354 = vpop.f32.mrb[0].mxu0
        %4355 = vmatprep.mubr.bf16.mxu0 0
        %4356 = vmatmul.mubr.bf16.gmra.mrb[0].mxu0 %v4241
        %v4357 = vpop.f32.mrb[0].mxu0
        %v4358 = vadd.f32 %v4083, %v4357
        %v4359 = vpop.f32.mrb[0].mxu0
        %v4360 = vpop.f32.mrb[0].mxu0
        %v4361 = vadd.f32 %v4086, %v4360
        %v4362 = vpop.f32.mrb[0].mxu0
        %4363 = vmatprep.mubr.bf16.mxu0 0
        %4364 = vmatmul.mubr.bf16.gmra.mrb[0].mxu0 %v4244
        %v4365 = vpop.f32.mrb[0].mxu0
        %v4366 = vadd.f32 %v4091, %v4365
        %v4367 = vpop.f32.mrb[0].mxu0
        %v4368 = vpop.f32.mrb[0].mxu0
        %v4369 = vadd.f32 %v4094, %v4368
        %v4370 = vpop.f32.mrb[0].mxu0
        %4371 = vmatprep.mubr.bf16.mxu0 0
        %4372 = vmatmul.mubr.bf16.gmra.mrb[0].mxu0 %v4247
        %v4373 = vpop.f32.mrb[0].mxu0
        %v4374 = vadd.f32 %v4099, %v4373
        %v4375 = vpop.f32.mrb[0].mxu0
        %v4376 = vpop.f32.mrb[0].mxu0
        %v4377 = vadd.f32 %v4102, %v4376
        %v4378 = vpop.f32.mrb[0].mxu0
        %4379 = vmatprep.mubr.bf16.mxu0 0
        %4380 = vmatmul.mubr.bf16.gmra.mrb[0].mxu0 %v4250
        %v4381 = vpop.f32.mrb[0].mxu0
        %v4382 = vadd.f32 %v4107, %v4381
        %v4383 = vpop.f32.mrb[0].mxu0
        %v4384 = vpop.f32.mrb[0].mxu0
        %v4385 = vadd.f32 %v4110, %v4384
        %v4386 = vpop.f32.mrb[0].mxu0
        %4387 = vmatprep.mubr.bf16.mxu0 0
        %4388 = vmatmul.mubr.bf16.gmra.mrb[0].mxu0 %v4253
        %v4389 = vpop.f32.mrb[0].mxu0
        %v4390 = vadd.f32 %v4115, %v4389
        %v4391 = vpop.f32.mrb[0].mxu0
        %v4392 = vpop.f32.mrb[0].mxu0
        %v4393 = vadd.f32 %v4118, %v4392
        %v4394 = vpop.f32.mrb[0].mxu0
        %4395 = vmatprep.mubr.bf16.mxu0 0
        %4396 = vmatmul.mubr.bf16.gmra.mrb[0].mxu0 %v4256
        %v4397 = vpop.f32.mrb[0].mxu0
        %v4398 = vadd.f32 %v4123, %v4397
        %v4399 = vpop.f32.mrb[0].mxu0
        %v4400 = vpop.f32.mrb[0].mxu0
        %v4401 = vadd.f32 %v4126, %v4400
        %v4402 = vpop.f32.mrb[0].mxu0
        %4403 = vmatprep.mubr.bf16.mxu0 0
        %4404 = vmatmul.mubr.bf16.gmra.mrb[0].mxu0 %v4259
        %v4405 = vpop.f32.mrb[0].mxu0
        %v4406 = vadd.f32 %v4131, %v4405
        %v4407 = vpop.f32.mrb[0].mxu0
        %v4408 = vpop.f32.mrb[0].mxu0
        %v4409 = vadd.f32 %v4134, %v4408
        %v4410 = vpop.f32.mrb[0].mxu0
        %4411 = vmatprep.mubr.bf16.mxu0 0
        %4412 = vmatmul.mubr.bf16.gmra.mrb[0].mxu0 %v4262
        %v4413 = vpop.f32.mrb[0].mxu0
        %v4414 = vadd.f32 %v4139, %v4413
        %v4415 = vpop.f32.mrb[0].mxu0
        %v4416 = vpop.f32.mrb[0].mxu0
        %v4417 = vadd.f32 %v4142, %v4416
        %v4418 = vpop.f32.mrb[0].mxu0
        %4419 = vmatprep.mubr.bf16.mxu0 0
        %4420 = vmatmul.mubr.bf16.gmra.mrb[0].mxu0 %v4265
        %v4421 = vpop.f32.mrb[0].mxu0
        %v4422 = vadd.f32 %v4147, %v4421
        %v4423 = vpop.f32.mrb[0].mxu0
        %v4424 = vpop.f32.mrb[0].mxu0
        %v4425 = vadd.f32 %v4150, %v4424
        %v4426 = vpop.f32.mrb[0].mxu0
        %4427 = vdwg.mxu0
        %v4443 = vrot.slane %v3681, 1
        %v4444 = vrot.slane %v3697, 1
        %v4445 = vsel %vm1382, %v4443, %v4444
        %v4446 = vrot.slane %v3682, 1
        %v4447 = vrot.slane %v3698, 1
        %v4448 = vsel %vm1382, %v4446, %v4447
        %v4449 = vrot.slane %v3683, 1
        %v4450 = vrot.slane %v3699, 1
        %v4451 = vsel %vm1382, %v4449, %v4450
        %v4452 = vrot.slane %v3684, 1
        %v4453 = vrot.slane %v3700, 1
        %v4454 = vsel %vm1382, %v4452, %v4453
        %v4455 = vrot.slane %v3685, 1
        %v4456 = vrot.slane %v3701, 1
        %v4457 = vsel %vm1382, %v4455, %v4456
        %v4458 = vrot.slane %v3686, 1
        %v4459 = vrot.slane %v3702, 1
        %v4460 = vsel %vm1382, %v4458, %v4459
        %v4461 = vrot.slane %v3687, 1
        %v4462 = vrot.slane %v3703, 1
        %v4463 = vsel %vm1382, %v4461, %v4462
        %v4464 = vrot.slane %v3688, 1
        %v4465 = vrot.slane %v3704, 1
        %v4466 = vsel %vm1382, %v4464, %v4465
        %v4467 = vrot.slane %v3689, 1
        %v4468 = vrot.slane %v3705, 1
        %v4469 = vsel %vm1382, %v4467, %v4468
        %v4470 = vrot.slane %v3690, 1
        %v4471 = vrot.slane %v3706, 1
        %v4472 = vsel %vm1382, %v4470, %v4471
        %v4473 = vrot.slane %v3691, 1
        %v4474 = vrot.slane %v3707, 1
        %v4475 = vsel %vm1382, %v4473, %v4474
        %v4476 = vrot.slane %v3692, 1
        %v4477 = vrot.slane %v3708, 1
        %v4478 = vsel %vm1382, %v4476, %v4477
        %v4479 = vrot.slane %v3693, 1
        %v4480 = vrot.slane %v3709, 1
        %v4481 = vsel %vm1382, %v4479, %v4480
        %v4482 = vrot.slane %v3694, 1
        %v4483 = vrot.slane %v3710, 1
        %v4484 = vsel %vm1382, %v4482, %v4483
        %v4485 = vrot.slane %v3695, 1
        %v4486 = vrot.slane %v3711, 1
        %v4487 = vsel %vm1382, %v4485, %v4486
        %4488 = vrot.lane.b32.xlu0 %v4445, 64
        %v4489 = vpop.permute.xlu0 %4488
        %4490 = vrot.lane.b32.xlu0 %v4448, 64
        %v4491 = vpop.permute.xlu0 %4490
        %4492 = vrot.lane.b32.xlu0 %v4451, 64
        %v4493 = vpop.permute.xlu0 %4492
        %4494 = vrot.lane.b32.xlu0 %v4454, 64
        %v4495 = vpop.permute.xlu0 %4494
        %4496 = vrot.lane.b32.xlu0 %v4457, 64
        %v4497 = vpop.permute.xlu0 %4496
        %4498 = vrot.lane.b32.xlu0 %v4460, 64
        %v4499 = vpop.permute.xlu0 %4498
        %4500 = vrot.lane.b32.xlu0 %v4463, 64
        %v4501 = vpop.permute.xlu0 %4500
        %4502 = vrot.lane.b32.xlu0 %v4466, 64
        %v4503 = vpop.permute.xlu0 %4502
        %4504 = vrot.lane.b32.xlu0 %v4469, 64
        %v4505 = vpop.permute.xlu0 %4504
        %4506 = vrot.lane.b32.xlu0 %v4472, 64
        %v4507 = vpop.permute.xlu0 %4506
        %4508 = vrot.lane.b32.xlu0 %v4475, 64
        %v4509 = vpop.permute.xlu0 %4508
        %4510 = vrot.lane.b32.xlu0 %v4478, 64
        %v4511 = vpop.permute.xlu0 %4510
        %4512 = vrot.lane.b32.xlu0 %v4481, 64
        %v4513 = vpop.permute.xlu0 %4512
        %4514 = vrot.lane.b32.xlu0 %v4484, 64
        %v4515 = vpop.permute.xlu0 %4514
        %4516 = vrot.lane.b32.xlu0 %v4487, 64
        %v4517 = vpop.permute.xlu0 %4516
        %v4526 = vunpack.c.l.b16 %v3433
        %v4527 = vunpack.c.l.b16 %v3434
        %v4528 = vunpack.c.l.b16 %v3435
        %v4529 = vunpack.c.l.b16 %v3436
        %v4530 = vunpack.c.l.b16 %v3437
        %v4531 = vunpack.c.l.b16 %v3438
        %v4532 = vunpack.c.l.b16 %v3439
        %v4533 = vunpack.c.l.b16 %v3440
        %v4534 = vpack.c.b16 %v4527, %v4526
        %v4535 = vpack.c.b16 %v4529, %v4528
        %v4536 = vpack.c.b16 %v4531, %v4530
        %v4537 = vpack.c.b16 %v4533, %v4532
        %v4543 = vsel %vm930, %v4489, 0
        %v4546 = vsel %vm930, %v4491, 0
        %v4549 = vsel %vm930, %v4493, 0
        %v4552 = vsel %vm930, %v4495, 0
        %v4555 = vsel %vm930, %v4497, 0
        %v4558 = vsel %vm930, %v4499, 0
        %v4561 = vsel %vm930, %v4501, 0
        %v4564 = vsel %vm930, %v4503, 0
        %v4567 = vsel %vm930, %v4505, 0
        %v4570 = vsel %vm930, %v4507, 0
        %v4573 = vsel %vm930, %v4509, 0
        %v4576 = vsel %vm930, %v4511, 0
        %v4579 = vsel %vm930, %v4513, 0
        %v4582 = vsel %vm930, %v4515, 0
        %v4585 = vsel %vm930, %v4517, 0
        %4587 = vmatprep.subr.bf16.mxu0 0
        %4588 = vmatpush1.bf16.msra.mxu0 %v4534
        %4589 = vmatprep.subr.bf16.mxu0 0
        %4590 = vmatpush1.bf16.msra.mxu0 %v4535
        %4591 = vmatprep.subr.bf16.mxu0 0
        %4592 = vmatpush1.bf16.msra.mxu0 %v4536
        %4593 = vmatprep.subr.bf16.mxu0 0
        %4594 = vmatpush1.bf16.msra.mxu0 %v4537
        %4595 = vmatprep.subr.bf16.mxu0 0
        %4596 = vmatpush1.bf16.msra.mxu0 0
        %4597 = vmatprep.subr.bf16.mxu0 0
        %4598 = vmatpush1.bf16.msra.mxu0 0
        %4599 = vmatprep.subr.bf16.mxu0 0
        %4600 = vmatpush1.bf16.msra.mxu0 0
        %4601 = vmatprep.subr.bf16.mxu0 0
        %4602 = vmatpush1.bf16.msra.mxu0 0
        %4603 = vmatprep.subr.bf16.mxu0 0
        %4604 = vmatpush1.bf16.msra.mxu0 0
        %4605 = vmatprep.subr.bf16.mxu0 0
        %4606 = vmatpush1.bf16.msra.mxu0 0
        %4607 = vmatprep.subr.bf16.mxu0 0
        %4608 = vmatpush1.bf16.msra.mxu0 0
        %4609 = vmatprep.subr.bf16.mxu0 0
        %4610 = vmatpush1.bf16.msra.mxu0 0
        %4611 = vmatprep.subr.bf16.mxu0 0
        %4612 = vmatpush1.bf16.msra.mxu0 0
        %4613 = vmatprep.subr.bf16.mxu0 0
        %4614 = vmatpush1.bf16.msra.mxu0 0
        %4615 = vmatprep.subr.bf16.mxu0 0
        %4616 = vmatpush1.bf16.msra.mxu0 0
        %4617 = vmatprep.subr.bf16.mxu0 0
        %4618 = vmatpush1.bf16.msra.mxu0 0
        %4619 = vmatprep.mubr.bf16.mxu0 0
        %4620 = vmatmul.mubr.bf16.gmra.mrb[0].mxu0 %v4543
        %v4621 = vpop.f32.mrb[0].mxu0
        %v4622 = vadd.f32 0.0, %v4621
        %v4623 = vpop.f32.mrb[0].mxu0
        %v4624 = vpop.f32.mrb[0].mxu0
        %v4625 = vadd.f32 0.0, %v4624
        %v4626 = vpop.f32.mrb[0].mxu0
        %4627 = vmatprep.mubr.bf16.mxu0 0
        %4628 = vmatmul.mubr.bf16.gmra.mrb[0].mxu0 %v4546
        %v4629 = vpop.f32.mrb[0].mxu0
        %v4630 = vadd.f32 0.0, %v4629
        %v4631 = vpop.f32.mrb[0].mxu0
        %v4632 = vpop.f32.mrb[0].mxu0
        %v4633 = vadd.f32 0.0, %v4632
        %v4634 = vpop.f32.mrb[0].mxu0
        %4635 = vmatprep.mubr.bf16.mxu0 0
        %4636 = vmatmul.mubr.bf16.gmra.mrb[0].mxu0 %v4543
        %v4637 = vpop.f32.mrb[0].mxu0
        %v4638 = vadd.f32 0.0, %v4637
        %v4639 = vpop.f32.mrb[0].mxu0
        %v4640 = vpop.f32.mrb[0].mxu0
        %v4641 = vadd.f32 0.0, %v4640
        %v4642 = vpop.f32.mrb[0].mxu0
        %4643 = vmatprep.mubr.bf16.mxu0 0
        %4644 = vmatmul.mubr.bf16.gmra.mrb[0].mxu0 %v4549
        %v4645 = vpop.f32.mrb[0].mxu0
        %v4646 = vadd.f32 0.0, %v4645
        %v4647 = vpop.f32.mrb[0].mxu0
        %v4648 = vpop.f32.mrb[0].mxu0
        %v4649 = vadd.f32 0.0, %v4648
        %v4650 = vpop.f32.mrb[0].mxu0
        %4651 = vmatprep.mubr.bf16.mxu0 0
        %4652 = vmatmul.mubr.bf16.gmra.mrb[0].mxu0 %v4552
        %v4653 = vpop.f32.mrb[0].mxu0
        %v4654 = vadd.f32 0.0, %v4653
        %v4655 = vpop.f32.mrb[0].mxu0
        %v4656 = vpop.f32.mrb[0].mxu0
        %v4657 = vadd.f32 0.0, %v4656
        %v4658 = vpop.f32.mrb[0].mxu0
        %4659 = vmatprep.mubr.bf16.mxu0 0
        %4660 = vmatmul.mubr.bf16.gmra.mrb[0].mxu0 %v4555
        %v4661 = vpop.f32.mrb[0].mxu0
        %v4662 = vadd.f32 0.0, %v4661
        %v4663 = vpop.f32.mrb[0].mxu0
        %v4664 = vpop.f32.mrb[0].mxu0
        %v4665 = vadd.f32 0.0, %v4664
        %v4666 = vpop.f32.mrb[0].mxu0
        %4667 = vmatprep.mubr.bf16.mxu0 0
        %4668 = vmatmul.mubr.bf16.gmra.mrb[0].mxu0 %v4558
        %v4669 = vpop.f32.mrb[0].mxu0
        %v4670 = vadd.f32 0.0, %v4669
        %v4671 = vpop.f32.mrb[0].mxu0
        %v4672 = vpop.f32.mrb[0].mxu0
        %v4673 = vadd.f32 0.0, %v4672
        %v4674 = vpop.f32.mrb[0].mxu0
        %4675 = vmatprep.mubr.bf16.mxu0 0
        %4676 = vmatmul.mubr.bf16.gmra.mrb[0].mxu0 %v4561
        %v4677 = vpop.f32.mrb[0].mxu0
        %v4678 = vadd.f32 0.0, %v4677
        %v4679 = vpop.f32.mrb[0].mxu0
        %v4680 = vpop.f32.mrb[0].mxu0
        %v4681 = vadd.f32 0.0, %v4680
        %v4682 = vpop.f32.mrb[0].mxu0
        %4683 = vmatprep.mubr.bf16.mxu0 0
        %4684 = vmatmul.mubr.bf16.gmra.mrb[0].mxu0 %v4564
        %v4685 = vpop.f32.mrb[0].mxu0
        %v4686 = vadd.f32 0.0, %v4685
        %v4687 = vpop.f32.mrb[0].mxu0
        %v4688 = vpop.f32.mrb[0].mxu0
        %v4689 = vadd.f32 0.0, %v4688
        %v4690 = vpop.f32.mrb[0].mxu0
        %4691 = vmatprep.mubr.bf16.mxu0 0
        %4692 = vmatmul.mubr.bf16.gmra.mrb[0].mxu0 %v4567
        %v4693 = vpop.f32.mrb[0].mxu0
        %v4694 = vadd.f32 0.0, %v4693
        %v4695 = vpop.f32.mrb[0].mxu0
        %v4696 = vpop.f32.mrb[0].mxu0
        %v4697 = vadd.f32 0.0, %v4696
        %v4698 = vpop.f32.mrb[0].mxu0
        %4699 = vmatprep.mubr.bf16.mxu0 0
        %4700 = vmatmul.mubr.bf16.gmra.mrb[0].mxu0 %v4570
        %v4701 = vpop.f32.mrb[0].mxu0
        %v4702 = vadd.f32 0.0, %v4701
        %v4703 = vpop.f32.mrb[0].mxu0
        %v4704 = vpop.f32.mrb[0].mxu0
        %v4705 = vadd.f32 0.0, %v4704
        %v4706 = vpop.f32.mrb[0].mxu0
        %4707 = vmatprep.mubr.bf16.mxu0 0
        %4708 = vmatmul.mubr.bf16.gmra.mrb[0].mxu0 %v4573
        %v4709 = vpop.f32.mrb[0].mxu0
        %v4710 = vadd.f32 0.0, %v4709
        %v4711 = vpop.f32.mrb[0].mxu0
        %v4712 = vpop.f32.mrb[0].mxu0
        %v4713 = vadd.f32 0.0, %v4712
        %v4714 = vpop.f32.mrb[0].mxu0
        %4715 = vmatprep.mubr.bf16.mxu0 0
        %4716 = vmatmul.mubr.bf16.gmra.mrb[0].mxu0 %v4576
        %v4717 = vpop.f32.mrb[0].mxu0
        %v4718 = vadd.f32 0.0, %v4717
        %v4719 = vpop.f32.mrb[0].mxu0
        %v4720 = vpop.f32.mrb[0].mxu0
        %v4721 = vadd.f32 0.0, %v4720
        %v4722 = vpop.f32.mrb[0].mxu0
        %4723 = vmatprep.mubr.bf16.mxu0 0
        %4724 = vmatmul.mubr.bf16.gmra.mrb[0].mxu0 %v4579
        %v4725 = vpop.f32.mrb[0].mxu0
        %v4726 = vadd.f32 0.0, %v4725
        %v4727 = vpop.f32.mrb[0].mxu0
        %v4728 = vpop.f32.mrb[0].mxu0
        %v4729 = vadd.f32 0.0, %v4728
        %v4730 = vpop.f32.mrb[0].mxu0
        %4731 = vmatprep.mubr.bf16.mxu0 0
        %4732 = vmatmul.mubr.bf16.gmra.mrb[0].mxu0 %v4582
        %v4733 = vpop.f32.mrb[0].mxu0
        %v4734 = vadd.f32 0.0, %v4733
        %v4735 = vpop.f32.mrb[0].mxu0
        %v4736 = vpop.f32.mrb[0].mxu0
        %v4737 = vadd.f32 0.0, %v4736
        %v4738 = vpop.f32.mrb[0].mxu0
        %4739 = vmatprep.mubr.bf16.mxu0 0
        %4740 = vmatmul.mubr.bf16.gmra.mrb[0].mxu0 %v4585
        %v4741 = vpop.f32.mrb[0].mxu0
        %v4742 = vadd.f32 0.0, %v4741
        %v4743 = vpop.f32.mrb[0].mxu0
        %v4744 = vpop.f32.mrb[0].mxu0
        %v4745 = vadd.f32 0.0, %v4744
        %v4746 = vpop.f32.mrb[0].mxu0
        %4747 = vdwg.mxu0
        %v4748 = vadd.f32 %v4302, %v4622
        %v4749 = vadd.f32 %v4305, %v4625
        %v4750 = vadd.f32 %v4310, %v4630
        %v4751 = vadd.f32 %v4313, %v4633
        %v4752 = vadd.f32 %v4318, %v4638
        %v4753 = vadd.f32 %v4321, %v4641
        %v4754 = vadd.f32 %v4326, %v4646
        %v4755 = vadd.f32 %v4329, %v4649
        %v4756 = vadd.f32 %v4334, %v4654
        %v4757 = vadd.f32 %v4337, %v4657
        %v4758 = vadd.f32 %v4342, %v4662
        %v4759 = vadd.f32 %v4345, %v4665
        %v4760 = vadd.f32 %v4350, %v4670
        %v4761 = vadd.f32 %v4353, %v4673
        %v4762 = vadd.f32 %v4358, %v4678
        %v4763 = vadd.f32 %v4361, %v4681
        %v4764 = vadd.f32 %v4366, %v4686
        %v4765 = vadd.f32 %v4369, %v4689
        %v4766 = vadd.f32 %v4374, %v4694
        %v4767 = vadd.f32 %v4377, %v4697
        %v4768 = vadd.f32 %v4382, %v4702
        %v4769 = vadd.f32 %v4385, %v4705
        %v4770 = vadd.f32 %v4390, %v4710
        %v4771 = vadd.f32 %v4393, %v4713
        %v4772 = vadd.f32 %v4398, %v4718
        %v4773 = vadd.f32 %v4401, %v4721
        %v4774 = vadd.f32 %v4406, %v4726
        %v4775 = vadd.f32 %v4409, %v4729
        %v4776 = vadd.f32 %v4414, %v4734
        %v4777 = vadd.f32 %v4417, %v4737
        %v4778 = vadd.f32 %v4422, %v4742
        %v4779 = vadd.f32 %v4425, %v4745
        %4781 = vrot.lane.b32.xlu0 %v3696, 64
        %v4782 = vpop.permute.xlu0 %4781
        %v4791 = vunpack.c.l.b16 %v3441
        %v4792 = vunpack.c.l.b16 %v3442
        %v4793 = vunpack.c.l.b16 %v3443
        %v4794 = vunpack.c.l.b16 %v3444
        %v4795 = vunpack.c.l.b16 %v3445
        %v4796 = vunpack.c.l.b16 %v3446
        %v4797 = vunpack.c.l.b16 %v3447
        %v4798 = vunpack.c.l.b16 %v3448
        %v4799 = vpack.c.b16 %v4792, %v4791
        %v4800 = vpack.c.b16 %v4794, %v4793
        %v4801 = vpack.c.b16 %v4796, %v4795
        %v4802 = vpack.c.b16 %v4798, %v4797
        %v4808 = vsel %vm930, %v4782, 0
        %4810 = vmatprep.subr.bf16.mxu0 0
        %4811 = vmatpush1.bf16.msra.mxu0 %v4799
        %4812 = vmatprep.subr.bf16.mxu0 0
        %4813 = vmatpush1.bf16.msra.mxu0 %v4800
        %4814 = vmatprep.subr.bf16.mxu0 0
        %4815 = vmatpush1.bf16.msra.mxu0 %v4801
        %4816 = vmatprep.subr.bf16.mxu0 0
        %4817 = vmatpush1.bf16.msra.mxu0 %v4802
        %4818 = vmatprep.subr.bf16.mxu0 0
        %4819 = vmatpush1.bf16.msra.mxu0 0
        %4820 = vmatprep.subr.bf16.mxu0 0
        %4821 = vmatpush1.bf16.msra.mxu0 0
        %4822 = vmatprep.subr.bf16.mxu0 0
        %4823 = vmatpush1.bf16.msra.mxu0 0
        %4824 = vmatprep.subr.bf16.mxu0 0
        %4825 = vmatpush1.bf16.msra.mxu0 0
        %4826 = vmatprep.subr.bf16.mxu0 0
        %4827 = vmatpush1.bf16.msra.mxu0 0
        %4828 = vmatprep.subr.bf16.mxu0 0
        %4829 = vmatpush1.bf16.msra.mxu0 0
        %4830 = vmatprep.subr.bf16.mxu0 0
        %4831 = vmatpush1.bf16.msra.mxu0 0
        %4832 = vmatprep.subr.bf16.mxu0 0
        %4833 = vmatpush1.bf16.msra.mxu0 0
        %4834 = vmatprep.subr.bf16.mxu0 0
        %4835 = vmatpush1.bf16.msra.mxu0 0
        %4836 = vmatprep.subr.bf16.mxu0 0
        %4837 = vmatpush1.bf16.msra.mxu0 0
        %4838 = vmatprep.subr.bf16.mxu0 0
        %4839 = vmatpush1.bf16.msra.mxu0 0
        %4840 = vmatprep.subr.bf16.mxu0 0
        %4841 = vmatpush1.bf16.msra.mxu0 0
        %4842 = vmatprep.mubr.bf16.mxu0 0
        %4843 = vmatmul.mubr.bf16.gmra.mrb[0].mxu0 %v4226
        %v4844 = vpop.f32.mrb[0].mxu0
        %v4845 = vadd.f32 0.0, %v4844
        %v4846 = vpop.f32.mrb[0].mxu0
        %v4847 = vpop.f32.mrb[0].mxu0
        %v4848 = vadd.f32 0.0, %v4847
        %v4849 = vpop.f32.mrb[0].mxu0
        %4850 = vmatprep.mubr.bf16.mxu0 0
        %4851 = vmatmul.mubr.bf16.gmra.mrb[0].mxu0 %v4223
        %v4852 = vpop.f32.mrb[0].mxu0
        %v4853 = vadd.f32 0.0, %v4852
        %v4854 = vpop.f32.mrb[0].mxu0
        %v4855 = vpop.f32.mrb[0].mxu0
        %v4856 = vadd.f32 0.0, %v4855
        %v4857 = vpop.f32.mrb[0].mxu0
        %4858 = vmatprep.mubr.bf16.mxu0 0
        %4859 = vmatmul.mubr.bf16.gmra.mrb[0].mxu0 %v4229
        %v4860 = vpop.f32.mrb[0].mxu0
        %v4861 = vadd.f32 0.0, %v4860
        %v4862 = vpop.f32.mrb[0].mxu0
        %v4863 = vpop.f32.mrb[0].mxu0
        %v4864 = vadd.f32 0.0, %v4863
        %v4865 = vpop.f32.mrb[0].mxu0
        %4866 = vmatprep.mubr.bf16.mxu0 0
        %4867 = vmatmul.mubr.bf16.gmra.mrb[0].mxu0 %v4232
        %v4868 = vpop.f32.mrb[0].mxu0
        %v4869 = vadd.f32 0.0, %v4868
        %v4870 = vpop.f32.mrb[0].mxu0
        %v4871 = vpop.f32.mrb[0].mxu0
        %v4872 = vadd.f32 0.0, %v4871
        %v4873 = vpop.f32.mrb[0].mxu0
        %4874 = vmatprep.mubr.bf16.mxu0 0
        %4875 = vmatmul.mubr.bf16.gmra.mrb[0].mxu0 %v4235
        %v4876 = vpop.f32.mrb[0].mxu0
        %v4877 = vadd.f32 0.0, %v4876
        %v4878 = vpop.f32.mrb[0].mxu0
        %v4879 = vpop.f32.mrb[0].mxu0
        %v4880 = vadd.f32 0.0, %v4879
        %v4881 = vpop.f32.mrb[0].mxu0
        %4882 = vmatprep.mubr.bf16.mxu0 0
        %4883 = vmatmul.mubr.bf16.gmra.mrb[0].mxu0 %v4238
        %v4884 = vpop.f32.mrb[0].mxu0
        %v4885 = vadd.f32 0.0, %v4884
        %v4886 = vpop.f32.mrb[0].mxu0
        %v4887 = vpop.f32.mrb[0].mxu0
        %v4888 = vadd.f32 0.0, %v4887
        %v4889 = vpop.f32.mrb[0].mxu0
        %4890 = vmatprep.mubr.bf16.mxu0 0
        %4891 = vmatmul.mubr.bf16.gmra.mrb[0].mxu0 %v4241
        %v4892 = vpop.f32.mrb[0].mxu0
        %v4893 = vadd.f32 0.0, %v4892
        %v4894 = vpop.f32.mrb[0].mxu0
        %v4895 = vpop.f32.mrb[0].mxu0
        %v4896 = vadd.f32 0.0, %v4895
        %v4897 = vpop.f32.mrb[0].mxu0
        %4898 = vmatprep.mubr.bf16.mxu0 0
        %4899 = vmatmul.mubr.bf16.gmra.mrb[0].mxu0 %v4244
        %v4900 = vpop.f32.mrb[0].mxu0
        %v4901 = vadd.f32 0.0, %v4900
        %v4902 = vpop.f32.mrb[0].mxu0
        %v4903 = vpop.f32.mrb[0].mxu0
        %v4904 = vadd.f32 0.0, %v4903
        %v4905 = vpop.f32.mrb[0].mxu0
        %4906 = vmatprep.mubr.bf16.mxu0 0
        %4907 = vmatmul.mubr.bf16.gmra.mrb[0].mxu0 %v4247
        %v4908 = vpop.f32.mrb[0].mxu0
        %v4909 = vadd.f32 0.0, %v4908
        %v4910 = vpop.f32.mrb[0].mxu0
        %v4911 = vpop.f32.mrb[0].mxu0
        %v4912 = vadd.f32 0.0, %v4911
        %v4913 = vpop.f32.mrb[0].mxu0
        %4914 = vmatprep.mubr.bf16.mxu0 0
        %4915 = vmatmul.mubr.bf16.gmra.mrb[0].mxu0 %v4250
        %v4916 = vpop.f32.mrb[0].mxu0
        %v4917 = vadd.f32 0.0, %v4916
        %v4918 = vpop.f32.mrb[0].mxu0
        %v4919 = vpop.f32.mrb[0].mxu0
        %v4920 = vadd.f32 0.0, %v4919
        %v4921 = vpop.f32.mrb[0].mxu0
        %4922 = vmatprep.mubr.bf16.mxu0 0
        %4923 = vmatmul.mubr.bf16.gmra.mrb[0].mxu0 %v4253
        %v4924 = vpop.f32.mrb[0].mxu0
        %v4925 = vadd.f32 0.0, %v4924
        %v4926 = vpop.f32.mrb[0].mxu0
        %v4927 = vpop.f32.mrb[0].mxu0
        %v4928 = vadd.f32 0.0, %v4927
        %v4929 = vpop.f32.mrb[0].mxu0
        %4930 = vmatprep.mubr.bf16.mxu0 0
        %4931 = vmatmul.mubr.bf16.gmra.mrb[0].mxu0 %v4256
        %v4932 = vpop.f32.mrb[0].mxu0
        %v4933 = vadd.f32 0.0, %v4932
        %v4934 = vpop.f32.mrb[0].mxu0
        %v4935 = vpop.f32.mrb[0].mxu0
        %v4936 = vadd.f32 0.0, %v4935
        %v4937 = vpop.f32.mrb[0].mxu0
        %4938 = vmatprep.mubr.bf16.mxu0 0
        %4939 = vmatmul.mubr.bf16.gmra.mrb[0].mxu0 %v4259
        %v4940 = vpop.f32.mrb[0].mxu0
        %v4941 = vadd.f32 0.0, %v4940
        %v4942 = vpop.f32.mrb[0].mxu0
        %v4943 = vpop.f32.mrb[0].mxu0
        %v4944 = vadd.f32 0.0, %v4943
        %v4945 = vpop.f32.mrb[0].mxu0
        %4946 = vmatprep.mubr.bf16.mxu0 0
        %4947 = vmatmul.mubr.bf16.gmra.mrb[0].mxu0 %v4262
        %v4948 = vpop.f32.mrb[0].mxu0
        %v4949 = vadd.f32 0.0, %v4948
        %v4950 = vpop.f32.mrb[0].mxu0
        %v4951 = vpop.f32.mrb[0].mxu0
        %v4952 = vadd.f32 0.0, %v4951
        %v4953 = vpop.f32.mrb[0].mxu0
        %4954 = vmatprep.mubr.bf16.mxu0 0
        %4955 = vmatmul.mubr.bf16.gmra.mrb[0].mxu0 %v4265
        %v4956 = vpop.f32.mrb[0].mxu0
        %v4957 = vadd.f32 0.0, %v4956
        %v4958 = vpop.f32.mrb[0].mxu0
        %v4959 = vpop.f32.mrb[0].mxu0
        %v4960 = vadd.f32 0.0, %v4959
        %v4961 = vpop.f32.mrb[0].mxu0
        %4962 = vmatprep.mubr.bf16.mxu0 0
        %4963 = vmatmul.mubr.bf16.gmra.mrb[0].mxu0 %v4808
        %v4964 = vpop.f32.mrb[0].mxu0
        %v4965 = vadd.f32 0.0, %v4964
        %v4966 = vpop.f32.mrb[0].mxu0
        %v4967 = vpop.f32.mrb[0].mxu0
        %v4968 = vadd.f32 0.0, %v4967
        %v4969 = vpop.f32.mrb[0].mxu0
        %4970 = vdwg.mxu0
        %v4971 = vadd.f32 %v4748, %v4845
        %v4972 = vadd.f32 %v4749, %v4848
        %v4973 = vadd.f32 %v4750, %v4853
        %v4974 = vadd.f32 %v4751, %v4856
        %v4975 = vadd.f32 %v4752, %v4861
        %v4976 = vadd.f32 %v4753, %v4864
        %v4977 = vadd.f32 %v4754, %v4869
        %v4978 = vadd.f32 %v4755, %v4872
        %v4979 = vadd.f32 %v4756, %v4877
        %v4980 = vadd.f32 %v4757, %v4880
        %v4981 = vadd.f32 %v4758, %v4885
        %v4982 = vadd.f32 %v4759, %v4888
        %v4983 = vadd.f32 %v4760, %v4893
        %v4984 = vadd.f32 %v4761, %v4896
        %v4985 = vadd.f32 %v4762, %v4901
        %v4986 = vadd.f32 %v4763, %v4904
        %v4987 = vadd.f32 %v4764, %v4909
        %v4988 = vadd.f32 %v4765, %v4912
        %v4989 = vadd.f32 %v4766, %v4917
        %v4990 = vadd.f32 %v4767, %v4920
        %v4991 = vadd.f32 %v4768, %v4925
        %v4992 = vadd.f32 %v4769, %v4928
        %v4993 = vadd.f32 %v4770, %v4933
        %v4994 = vadd.f32 %v4771, %v4936
        %v4995 = vadd.f32 %v4772, %v4941
        %v4996 = vadd.f32 %v4773, %v4944
        %v4997 = vadd.f32 %v4774, %v4949
        %v4998 = vadd.f32 %v4775, %v4952
        %v4999 = vadd.f32 %v4776, %v4957
        %v5000 = vadd.f32 %v4777, %v4960
        %v5001 = vadd.f32 %v4778, %v4965
        %v5002 = vadd.f32 %v4779, %v4968
        %v5004 = vshrl.u32 %v3696, 16
        %v5006 = vshll.u32 %v3696, 16
        %v5008 = vrot.slane %v5006, 1
        %v5009 = vor.u32 %v5004, %v5008
        %v5011 = vshll.u32 %v3712, 16
        %v5013 = vrot.slane %v5011, 1
        %v5014 = vsel %vm725, %v5009, %v5013
        %5015 = vrot.lane.b32.xlu0 %v5014, 64
        %v5016 = vpop.permute.xlu0 %5015
        %v5025 = vunpack.c.l.b16 %v3449
        %v5026 = vunpack.c.l.b16 %v3450
        %v5027 = vunpack.c.l.b16 %v3451
        %v5028 = vunpack.c.l.b16 %v3452
        %v5029 = vunpack.c.l.b16 %v3453
        %v5030 = vunpack.c.l.b16 %v3454
        %v5031 = vunpack.c.l.b16 %v3455
        %v5032 = vunpack.c.l.b16 %v3456
        %v5033 = vpack.c.b16 %v5026, %v5025
        %v5034 = vpack.c.b16 %v5028, %v5027
        %v5035 = vpack.c.b16 %v5030, %v5029
        %v5036 = vpack.c.b16 %v5032, %v5031
        %v5042 = vsel %vm930, %v5016, 0
        %5044 = vmatprep.subr.bf16.mxu0 0
        %5045 = vmatpush1.bf16.msra.mxu0 %v5033
        %5046 = vmatprep.subr.bf16.mxu0 0
        %5047 = vmatpush1.bf16.msra.mxu0 %v5034
        %5048 = vmatprep.subr.bf16.mxu0 0
        %5049 = vmatpush1.bf16.msra.mxu0 %v5035
        %5050 = vmatprep.subr.bf16.mxu0 0
        %5051 = vmatpush1.bf16.msra.mxu0 %v5036
        %5052 = vmatprep.subr.bf16.mxu0 0
        %5053 = vmatpush1.bf16.msra.mxu0 0
        %5054 = vmatprep.subr.bf16.mxu0 0
        %5055 = vmatpush1.bf16.msra.mxu0 0
        %5056 = vmatprep.subr.bf16.mxu0 0
        %5057 = vmatpush1.bf16.msra.mxu0 0
        %5058 = vmatprep.subr.bf16.mxu0 0
        %5059 = vmatpush1.bf16.msra.mxu0 0
        %5060 = vmatprep.subr.bf16.mxu0 0
        %5061 = vmatpush1.bf16.msra.mxu0 0
        %5062 = vmatprep.subr.bf16.mxu0 0
        %5063 = vmatpush1.bf16.msra.mxu0 0
        %5064 = vmatprep.subr.bf16.mxu0 0
        %5065 = vmatpush1.bf16.msra.mxu0 0
        %5066 = vmatprep.subr.bf16.mxu0 0
        %5067 = vmatpush1.bf16.msra.mxu0 0
        %5068 = vmatprep.subr.bf16.mxu0 0
        %5069 = vmatpush1.bf16.msra.mxu0 0
        %5070 = vmatprep.subr.bf16.mxu0 0
        %5071 = vmatpush1.bf16.msra.mxu0 0
        %5072 = vmatprep.subr.bf16.mxu0 0
        %5073 = vmatpush1.bf16.msra.mxu0 0
        %5074 = vmatprep.subr.bf16.mxu0 0
        %5075 = vmatpush1.bf16.msra.mxu0 0
        %5076 = vmatprep.mubr.bf16.mxu0 0
        %5077 = vmatmul.mubr.bf16.gmra.mrb[0].mxu0 %v3951
        %v5078 = vpop.f32.mrb[0].mxu0
        %v5079 = vadd.f32 0.0, %v5078
        %v5080 = vpop.f32.mrb[0].mxu0
        %v5081 = vpop.f32.mrb[0].mxu0
        %v5082 = vadd.f32 0.0, %v5081
        %v5083 = vpop.f32.mrb[0].mxu0
        %5084 = vmatprep.mubr.bf16.mxu0 0
        %5085 = vmatmul.mubr.bf16.gmra.mrb[0].mxu0 %v3948
        %v5086 = vpop.f32.mrb[0].mxu0
        %v5087 = vadd.f32 0.0, %v5086
        %v5088 = vpop.f32.mrb[0].mxu0
        %v5089 = vpop.f32.mrb[0].mxu0
        %v5090 = vadd.f32 0.0, %v5089
        %v5091 = vpop.f32.mrb[0].mxu0
        %5092 = vmatprep.mubr.bf16.mxu0 0
        %5093 = vmatmul.mubr.bf16.gmra.mrb[0].mxu0 %v3954
        %v5094 = vpop.f32.mrb[0].mxu0
        %v5095 = vadd.f32 0.0, %v5094
        %v5096 = vpop.f32.mrb[0].mxu0
        %v5097 = vpop.f32.mrb[0].mxu0
        %v5098 = vadd.f32 0.0, %v5097
        %v5099 = vpop.f32.mrb[0].mxu0
        %5100 = vmatprep.mubr.bf16.mxu0 0
        %5101 = vmatmul.mubr.bf16.gmra.mrb[0].mxu0 %v3957
        %v5102 = vpop.f32.mrb[0].mxu0
        %v5103 = vadd.f32 0.0, %v5102
        %v5104 = vpop.f32.mrb[0].mxu0
        %v5105 = vpop.f32.mrb[0].mxu0
        %v5106 = vadd.f32 0.0, %v5105
        %v5107 = vpop.f32.mrb[0].mxu0
        %5108 = vmatprep.mubr.bf16.mxu0 0
        %5109 = vmatmul.mubr.bf16.gmra.mrb[0].mxu0 %v3960
        %v5110 = vpop.f32.mrb[0].mxu0
        %v5111 = vadd.f32 0.0, %v5110
        %v5112 = vpop.f32.mrb[0].mxu0
        %v5113 = vpop.f32.mrb[0].mxu0
        %v5114 = vadd.f32 0.0, %v5113
        %v5115 = vpop.f32.mrb[0].mxu0
        %5116 = vmatprep.mubr.bf16.mxu0 0
        %5117 = vmatmul.mubr.bf16.gmra.mrb[0].mxu0 %v3963
        %v5118 = vpop.f32.mrb[0].mxu0
        %v5119 = vadd.f32 0.0, %v5118
        %v5120 = vpop.f32.mrb[0].mxu0
        %v5121 = vpop.f32.mrb[0].mxu0
        %v5122 = vadd.f32 0.0, %v5121
        %v5123 = vpop.f32.mrb[0].mxu0
        %5124 = vmatprep.mubr.bf16.mxu0 0
        %5125 = vmatmul.mubr.bf16.gmra.mrb[0].mxu0 %v3966
        %v5126 = vpop.f32.mrb[0].mxu0
        %v5127 = vadd.f32 0.0, %v5126
        %v5128 = vpop.f32.mrb[0].mxu0
        %v5129 = vpop.f32.mrb[0].mxu0
        %v5130 = vadd.f32 0.0, %v5129
        %v5131 = vpop.f32.mrb[0].mxu0
        %5132 = vmatprep.mubr.bf16.mxu0 0
        %5133 = vmatmul.mubr.bf16.gmra.mrb[0].mxu0 %v3969
        %v5134 = vpop.f32.mrb[0].mxu0
        %v5135 = vadd.f32 0.0, %v5134
        %v5136 = vpop.f32.mrb[0].mxu0
        %v5137 = vpop.f32.mrb[0].mxu0
        %v5138 = vadd.f32 0.0, %v5137
        %v5139 = vpop.f32.mrb[0].mxu0
        %5140 = vmatprep.mubr.bf16.mxu0 0
        %5141 = vmatmul.mubr.bf16.gmra.mrb[0].mxu0 %v3972
        %v5142 = vpop.f32.mrb[0].mxu0
        %v5143 = vadd.f32 0.0, %v5142
        %v5144 = vpop.f32.mrb[0].mxu0
        %v5145 = vpop.f32.mrb[0].mxu0
        %v5146 = vadd.f32 0.0, %v5145
        %v5147 = vpop.f32.mrb[0].mxu0
        %5148 = vmatprep.mubr.bf16.mxu0 0
        %5149 = vmatmul.mubr.bf16.gmra.mrb[0].mxu0 %v3975
        %v5150 = vpop.f32.mrb[0].mxu0
        %v5151 = vadd.f32 0.0, %v5150
        %v5152 = vpop.f32.mrb[0].mxu0
        %v5153 = vpop.f32.mrb[0].mxu0
        %v5154 = vadd.f32 0.0, %v5153
        %v5155 = vpop.f32.mrb[0].mxu0
        %5156 = vmatprep.mubr.bf16.mxu0 0
        %5157 = vmatmul.mubr.bf16.gmra.mrb[0].mxu0 %v3978
        %v5158 = vpop.f32.mrb[0].mxu0
        %v5159 = vadd.f32 0.0, %v5158
        %v5160 = vpop.f32.mrb[0].mxu0
        %v5161 = vpop.f32.mrb[0].mxu0
        %v5162 = vadd.f32 0.0, %v5161
        %v5163 = vpop.f32.mrb[0].mxu0
        %5164 = vmatprep.mubr.bf16.mxu0 0
        %5165 = vmatmul.mubr.bf16.gmra.mrb[0].mxu0 %v3981
        %v5166 = vpop.f32.mrb[0].mxu0
        %v5167 = vadd.f32 0.0, %v5166
        %v5168 = vpop.f32.mrb[0].mxu0
        %v5169 = vpop.f32.mrb[0].mxu0
        %v5170 = vadd.f32 0.0, %v5169
        %v5171 = vpop.f32.mrb[0].mxu0
        %5172 = vmatprep.mubr.bf16.mxu0 0
        %5173 = vmatmul.mubr.bf16.gmra.mrb[0].mxu0 %v3984
        %v5174 = vpop.f32.mrb[0].mxu0
        %v5175 = vadd.f32 0.0, %v5174
        %v5176 = vpop.f32.mrb[0].mxu0
        %v5177 = vpop.f32.mrb[0].mxu0
        %v5178 = vadd.f32 0.0, %v5177
        %v5179 = vpop.f32.mrb[0].mxu0
        %5180 = vmatprep.mubr.bf16.mxu0 0
        %5181 = vmatmul.mubr.bf16.gmra.mrb[0].mxu0 %v3987
        %v5182 = vpop.f32.mrb[0].mxu0
        %v5183 = vadd.f32 0.0, %v5182
        %v5184 = vpop.f32.mrb[0].mxu0
        %v5185 = vpop.f32.mrb[0].mxu0
        %v5186 = vadd.f32 0.0, %v5185
        %v5187 = vpop.f32.mrb[0].mxu0
        %5188 = vmatprep.mubr.bf16.mxu0 0
        %5189 = vmatmul.mubr.bf16.gmra.mrb[0].mxu0 %v3990
        %v5190 = vpop.f32.mrb[0].mxu0
        %v5191 = vadd.f32 0.0, %v5190
        %v5192 = vpop.f32.mrb[0].mxu0
        %v5193 = vpop.f32.mrb[0].mxu0
        %v5194 = vadd.f32 0.0, %v5193
        %v5195 = vpop.f32.mrb[0].mxu0
        %5196 = vmatprep.mubr.bf16.mxu0 0
        %5197 = vmatmul.mubr.bf16.gmra.mrb[0].mxu0 %v5042
        %v5198 = vpop.f32.mrb[0].mxu0
        %v5199 = vadd.f32 0.0, %v5198
        %v5200 = vpop.f32.mrb[0].mxu0
        %v5201 = vpop.f32.mrb[0].mxu0
        %v5202 = vadd.f32 0.0, %v5201
        %v5203 = vpop.f32.mrb[0].mxu0
        %5204 = vdwg.mxu0
        %v5205 = vadd.f32 %v4971, %v5079
        %v5206 = vadd.f32 %v4972, %v5082
        %v5207 = vadd.f32 %v4973, %v5087
        %v5208 = vadd.f32 %v4974, %v5090
        %v5209 = vadd.f32 %v4975, %v5095
        %v5210 = vadd.f32 %v4976, %v5098
        %v5211 = vadd.f32 %v4977, %v5103
        %v5212 = vadd.f32 %v4978, %v5106
        %v5213 = vadd.f32 %v4979, %v5111
        %v5214 = vadd.f32 %v4980, %v5114
        %v5215 = vadd.f32 %v4981, %v5119
        %v5216 = vadd.f32 %v4982, %v5122
        %v5217 = vadd.f32 %v4983, %v5127
        %v5218 = vadd.f32 %v4984, %v5130
        %v5219 = vadd.f32 %v4985, %v5135
        %v5220 = vadd.f32 %v4986, %v5138
        %v5221 = vadd.f32 %v4987, %v5143
        %v5222 = vadd.f32 %v4988, %v5146
        %v5223 = vadd.f32 %v4989, %v5151
        %v5224 = vadd.f32 %v4990, %v5154
        %v5225 = vadd.f32 %v4991, %v5159
        %v5226 = vadd.f32 %v4992, %v5162
        %v5227 = vadd.f32 %v4993, %v5167
        %v5228 = vadd.f32 %v4994, %v5170
        %v5229 = vadd.f32 %v4995, %v5175
        %v5230 = vadd.f32 %v4996, %v5178
        %v5231 = vadd.f32 %v4997, %v5183
        %v5232 = vadd.f32 %v4998, %v5186
        %v5233 = vadd.f32 %v4999, %v5191
        %v5234 = vadd.f32 %v5000, %v5194
        %v5235 = vadd.f32 %v5001, %v5199
        %v5236 = vadd.f32 %v5002, %v5202
        %v5238 = vrot.slane %v3696, 1
        %v5239 = vrot.slane %v3712, 1
        %v5240 = vsel %vm1382, %v5238, %v5239
        %5241 = vrot.lane.b32.xlu0 %v5240, 64
        %v5242 = vpop.permute.xlu0 %5241
        %v5251 = vunpack.c.l.b16 %v3457
        %v5252 = vunpack.c.l.b16 %v3458
        %v5253 = vunpack.c.l.b16 %v3459
        %v5254 = vunpack.c.l.b16 %v3460
        %v5255 = vunpack.c.l.b16 %v3461
        %v5256 = vunpack.c.l.b16 %v3462
        %v5257 = vunpack.c.l.b16 %v3463
        %v5258 = vunpack.c.l.b16 %v3464
        %v5259 = vpack.c.b16 %v5252, %v5251
        %v5260 = vpack.c.b16 %v5254, %v5253
        %v5261 = vpack.c.b16 %v5256, %v5255
        %v5262 = vpack.c.b16 %v5258, %v5257
        %v5268 = vsel %vm930, %v5242, 0
        %5270 = vmatprep.subr.bf16.mxu0 0
        %5271 = vmatpush1.bf16.msra.mxu0 %v5259
        %5272 = vmatprep.subr.bf16.mxu0 0
        %5273 = vmatpush1.bf16.msra.mxu0 %v5260
        %5274 = vmatprep.subr.bf16.mxu0 0
        %5275 = vmatpush1.bf16.msra.mxu0 %v5261
        %5276 = vmatprep.subr.bf16.mxu0 0
        %5277 = vmatpush1.bf16.msra.mxu0 %v5262
        %5278 = vmatprep.subr.bf16.mxu0 0
        %5279 = vmatpush1.bf16.msra.mxu0 0
        %5280 = vmatprep.subr.bf16.mxu0 0
        %5281 = vmatpush1.bf16.msra.mxu0 0
        %5282 = vmatprep.subr.bf16.mxu0 0
        %5283 = vmatpush1.bf16.msra.mxu0 0
        %5284 = vmatprep.subr.bf16.mxu0 0
        %5285 = vmatpush1.bf16.msra.mxu0 0
        %5286 = vmatprep.subr.bf16.mxu0 0
        %5287 = vmatpush1.bf16.msra.mxu0 0
        %5288 = vmatprep.subr.bf16.mxu0 0
        %5289 = vmatpush1.bf16.msra.mxu0 0
        %5290 = vmatprep.subr.bf16.mxu0 0
        %5291 = vmatpush1.bf16.msra.mxu0 0
        %5292 = vmatprep.subr.bf16.mxu0 0
        %5293 = vmatpush1.bf16.msra.mxu0 0
        %5294 = vmatprep.subr.bf16.mxu0 0
        %5295 = vmatpush1.bf16.msra.mxu0 0
        %5296 = vmatprep.subr.bf16.mxu0 0
        %5297 = vmatpush1.bf16.msra.mxu0 0
        %5298 = vmatprep.subr.bf16.mxu0 0
        %5299 = vmatpush1.bf16.msra.mxu0 0
        %5300 = vmatprep.subr.bf16.mxu0 0
        %5301 = vmatpush1.bf16.msra.mxu0 0
        %5302 = vmatprep.mubr.bf16.mxu0 0
        %5303 = vmatmul.mubr.bf16.gmra.mrb[0].mxu0 %v4546
        %v5304 = vpop.f32.mrb[0].mxu0
        %v5305 = vadd.f32 0.0, %v5304
        %v5306 = vpop.f32.mrb[0].mxu0
        %v5307 = vpop.f32.mrb[0].mxu0
        %v5308 = vadd.f32 0.0, %v5307
        %v5309 = vpop.f32.mrb[0].mxu0
        %5310 = vmatprep.mubr.bf16.mxu0 0
        %5311 = vmatmul.mubr.bf16.gmra.mrb[0].mxu0 %v4543
        %v5312 = vpop.f32.mrb[0].mxu0
        %v5313 = vadd.f32 0.0, %v5312
        %v5314 = vpop.f32.mrb[0].mxu0
        %v5315 = vpop.f32.mrb[0].mxu0
        %v5316 = vadd.f32 0.0, %v5315
        %v5317 = vpop.f32.mrb[0].mxu0
        %5318 = vmatprep.mubr.bf16.mxu0 0
        %5319 = vmatmul.mubr.bf16.gmra.mrb[0].mxu0 %v4549
        %v5320 = vpop.f32.mrb[0].mxu0
        %v5321 = vadd.f32 0.0, %v5320
        %v5322 = vpop.f32.mrb[0].mxu0
        %v5323 = vpop.f32.mrb[0].mxu0
        %v5324 = vadd.f32 0.0, %v5323
        %v5325 = vpop.f32.mrb[0].mxu0
        %5326 = vmatprep.mubr.bf16.mxu0 0
        %5327 = vmatmul.mubr.bf16.gmra.mrb[0].mxu0 %v4552
        %v5328 = vpop.f32.mrb[0].mxu0
        %v5329 = vadd.f32 0.0, %v5328
        %v5330 = vpop.f32.mrb[0].mxu0
        %v5331 = vpop.f32.mrb[0].mxu0
        %v5332 = vadd.f32 0.0, %v5331
        %v5333 = vpop.f32.mrb[0].mxu0
        %5334 = vmatprep.mubr.bf16.mxu0 0
        %5335 = vmatmul.mubr.bf16.gmra.mrb[0].mxu0 %v4555
        %v5336 = vpop.f32.mrb[0].mxu0
        %v5337 = vadd.f32 0.0, %v5336
        %v5338 = vpop.f32.mrb[0].mxu0
        %v5339 = vpop.f32.mrb[0].mxu0
        %v5340 = vadd.f32 0.0, %v5339
        %v5341 = vpop.f32.mrb[0].mxu0
        %5342 = vmatprep.mubr.bf16.mxu0 0
        %5343 = vmatmul.mubr.bf16.gmra.mrb[0].mxu0 %v4558
        %v5344 = vpop.f32.mrb[0].mxu0
        %v5345 = vadd.f32 0.0, %v5344
        %v5346 = vpop.f32.mrb[0].mxu0
        %v5347 = vpop.f32.mrb[0].mxu0
        %v5348 = vadd.f32 0.0, %v5347
        %v5349 = vpop.f32.mrb[0].mxu0
        %5350 = vmatprep.mubr.bf16.mxu0 0
        %5351 = vmatmul.mubr.bf16.gmra.mrb[0].mxu0 %v4561
        %v5352 = vpop.f32.mrb[0].mxu0
        %v5353 = vadd.f32 0.0, %v5352
        %v5354 = vpop.f32.mrb[0].mxu0
        %v5355 = vpop.f32.mrb[0].mxu0
        %v5356 = vadd.f32 0.0, %v5355
        %v5357 = vpop.f32.mrb[0].mxu0
        %5358 = vmatprep.mubr.bf16.mxu0 0
        %5359 = vmatmul.mubr.bf16.gmra.mrb[0].mxu0 %v4564
        %v5360 = vpop.f32.mrb[0].mxu0
        %v5361 = vadd.f32 0.0, %v5360
        %v5362 = vpop.f32.mrb[0].mxu0
        %v5363 = vpop.f32.mrb[0].mxu0
        %v5364 = vadd.f32 0.0, %v5363
        %v5365 = vpop.f32.mrb[0].mxu0
        %5366 = vmatprep.mubr.bf16.mxu0 0
        %5367 = vmatmul.mubr.bf16.gmra.mrb[0].mxu0 %v4567
        %v5368 = vpop.f32.mrb[0].mxu0
        %v5369 = vadd.f32 0.0, %v5368
        %v5370 = vpop.f32.mrb[0].mxu0
        %v5371 = vpop.f32.mrb[0].mxu0
        %v5372 = vadd.f32 0.0, %v5371
        %v5373 = vpop.f32.mrb[0].mxu0
        %5374 = vmatprep.mubr.bf16.mxu0 0
        %5375 = vmatmul.mubr.bf16.gmra.mrb[0].mxu0 %v4570
        %v5376 = vpop.f32.mrb[0].mxu0
        %v5377 = vadd.f32 0.0, %v5376
        %v5378 = vpop.f32.mrb[0].mxu0
        %v5379 = vpop.f32.mrb[0].mxu0
        %v5380 = vadd.f32 0.0, %v5379
        %v5381 = vpop.f32.mrb[0].mxu0
        %5382 = vmatprep.mubr.bf16.mxu0 0
        %5383 = vmatmul.mubr.bf16.gmra.mrb[0].mxu0 %v4573
        %v5384 = vpop.f32.mrb[0].mxu0
        %v5385 = vadd.f32 0.0, %v5384
        %v5386 = vpop.f32.mrb[0].mxu0
        %v5387 = vpop.f32.mrb[0].mxu0
        %v5388 = vadd.f32 0.0, %v5387
        %v5389 = vpop.f32.mrb[0].mxu0
        %5390 = vmatprep.mubr.bf16.mxu0 0
        %5391 = vmatmul.mubr.bf16.gmra.mrb[0].mxu0 %v4576
        %v5392 = vpop.f32.mrb[0].mxu0
        %v5393 = vadd.f32 0.0, %v5392
        %v5394 = vpop.f32.mrb[0].mxu0
        %v5395 = vpop.f32.mrb[0].mxu0
        %v5396 = vadd.f32 0.0, %v5395
        %v5397 = vpop.f32.mrb[0].mxu0
        %5398 = vmatprep.mubr.bf16.mxu0 0
        %5399 = vmatmul.mubr.bf16.gmra.mrb[0].mxu0 %v4579
        %v5400 = vpop.f32.mrb[0].mxu0
        %v5401 = vadd.f32 0.0, %v5400
        %v5402 = vpop.f32.mrb[0].mxu0
        %v5403 = vpop.f32.mrb[0].mxu0
        %v5404 = vadd.f32 0.0, %v5403
        %v5405 = vpop.f32.mrb[0].mxu0
        %5406 = vmatprep.mubr.bf16.mxu0 0
        %5407 = vmatmul.mubr.bf16.gmra.mrb[0].mxu0 %v4582
        %v5408 = vpop.f32.mrb[0].mxu0
        %v5409 = vadd.f32 0.0, %v5408
        %v5410 = vpop.f32.mrb[0].mxu0
        %v5411 = vpop.f32.mrb[0].mxu0
        %v5412 = vadd.f32 0.0, %v5411
        %v5413 = vpop.f32.mrb[0].mxu0
        %5414 = vmatprep.mubr.bf16.mxu0 0
        %5415 = vmatmul.mubr.bf16.gmra.mrb[0].mxu0 %v4585
        %v5416 = vpop.f32.mrb[0].mxu0
        %v5417 = vadd.f32 0.0, %v5416
        %v5418 = vpop.f32.mrb[0].mxu0
        %v5419 = vpop.f32.mrb[0].mxu0
        %v5420 = vadd.f32 0.0, %v5419
        %v5421 = vpop.f32.mrb[0].mxu0
        %5422 = vmatprep.mubr.bf16.mxu0 0
        %5423 = vmatmul.mubr.bf16.gmra.mrb[0].mxu0 %v5268
        %v5424 = vpop.f32.mrb[0].mxu0
        %v5425 = vadd.f32 0.0, %v5424
        %v5426 = vpop.f32.mrb[0].mxu0
        %v5427 = vpop.f32.mrb[0].mxu0
        %v5428 = vadd.f32 0.0, %v5427
        %v5429 = vpop.f32.mrb[0].mxu0
        %5430 = vdwg.mxu0
        %v5431 = vadd.f32 %v5205, %v5305
        %v5432 = vadd.f32 %v5206, %v5308
        %v5433 = vadd.f32 %v5207, %v5313
        %v5434 = vadd.f32 %v5208, %v5316
        %v5435 = vadd.f32 %v5209, %v5321
        %v5436 = vadd.f32 %v5210, %v5324
        %v5437 = vadd.f32 %v5211, %v5329
        %v5438 = vadd.f32 %v5212, %v5332
        %v5439 = vadd.f32 %v5213, %v5337
        %v5440 = vadd.f32 %v5214, %v5340
        %v5441 = vadd.f32 %v5215, %v5345
        %v5442 = vadd.f32 %v5216, %v5348
        %v5443 = vadd.f32 %v5217, %v5353
        %v5444 = vadd.f32 %v5218, %v5356
        %v5445 = vadd.f32 %v5219, %v5361
        %v5446 = vadd.f32 %v5220, %v5364
        %v5447 = vadd.f32 %v5221, %v5369
        %v5448 = vadd.f32 %v5222, %v5372
        %v5449 = vadd.f32 %v5223, %v5377
        %v5450 = vadd.f32 %v5224, %v5380
        %v5451 = vadd.f32 %v5225, %v5385
        %v5452 = vadd.f32 %v5226, %v5388
        %v5453 = vadd.f32 %v5227, %v5393
        %v5454 = vadd.f32 %v5228, %v5396
        %v5455 = vadd.f32 %v5229, %v5401
        %v5456 = vadd.f32 %v5230, %v5404
        %v5457 = vadd.f32 %v5231, %v5409
        %v5458 = vadd.f32 %v5232, %v5412
        %v5459 = vadd.f32 %v5233, %v5417
        %v5460 = vadd.f32 %v5234, %v5420
        %v5461 = vadd.f32 %v5235, %v5425
        %v5462 = vadd.f32 %v5236, %v5428
        %v5471 = vunpack.c.l.b16 %v3465
        %v5472 = vunpack.c.l.b16 %v3466
        %v5473 = vunpack.c.l.b16 %v3467
        %v5474 = vunpack.c.l.b16 %v3468
        %v5475 = vunpack.c.l.b16 %v3469
        %v5476 = vunpack.c.l.b16 %v3470
        %v5477 = vunpack.c.l.b16 %v3471
        %v5478 = vunpack.c.l.b16 %v3472
        %v5479 = vpack.c.b16 %v5472, %v5471
        %v5480 = vpack.c.b16 %v5474, %v5473
        %v5481 = vpack.c.b16 %v5476, %v5475
        %v5482 = vpack.c.b16 %v5478, %v5477
        %5487 = vmatprep.subr.bf16.mxu0 0
        %5488 = vmatpush1.bf16.msra.mxu0 %v5479
        %5489 = vmatprep.subr.bf16.mxu0 0
        %5490 = vmatpush1.bf16.msra.mxu0 %v5480
        %5491 = vmatprep.subr.bf16.mxu0 0
        %5492 = vmatpush1.bf16.msra.mxu0 %v5481
        %5493 = vmatprep.subr.bf16.mxu0 0
        %5494 = vmatpush1.bf16.msra.mxu0 %v5482
        %5495 = vmatprep.subr.bf16.mxu0 0
        %5496 = vmatpush1.bf16.msra.mxu0 0
        %5497 = vmatprep.subr.bf16.mxu0 0
        %5498 = vmatpush1.bf16.msra.mxu0 0
        %5499 = vmatprep.subr.bf16.mxu0 0
        %5500 = vmatpush1.bf16.msra.mxu0 0
        %5501 = vmatprep.subr.bf16.mxu0 0
        %5502 = vmatpush1.bf16.msra.mxu0 0
        %5503 = vmatprep.subr.bf16.mxu0 0
        %5504 = vmatpush1.bf16.msra.mxu0 0
        %5505 = vmatprep.subr.bf16.mxu0 0
        %5506 = vmatpush1.bf16.msra.mxu0 0
        %5507 = vmatprep.subr.bf16.mxu0 0
        %5508 = vmatpush1.bf16.msra.mxu0 0
        %5509 = vmatprep.subr.bf16.mxu0 0
        %5510 = vmatpush1.bf16.msra.mxu0 0
        %5511 = vmatprep.subr.bf16.mxu0 0
        %5512 = vmatpush1.bf16.msra.mxu0 0
        %5513 = vmatprep.subr.bf16.mxu0 0
        %5514 = vmatpush1.bf16.msra.mxu0 0
        %5515 = vmatprep.subr.bf16.mxu0 0
        %5516 = vmatpush1.bf16.msra.mxu0 0
        %5517 = vmatprep.subr.bf16.mxu0 0
        %5518 = vmatpush1.bf16.msra.mxu0 0
        %5519 = vmatprep.mubr.bf16.mxu0 0
        %5520 = vmatmul.mubr.bf16.gmra.mrb[0].mxu0 %v4223
        %v5521 = vpop.f32.mrb[0].mxu0
        %v5522 = vadd.f32 0.0, %v5521
        %v5523 = vpop.f32.mrb[0].mxu0
        %v5524 = vpop.f32.mrb[0].mxu0
        %v5525 = vadd.f32 0.0, %v5524
        %v5526 = vpop.f32.mrb[0].mxu0
        %5527 = vmatprep.mubr.bf16.mxu0 0
        %5528 = vmatmul.mubr.bf16.gmra.mrb[0].mxu0 %v4229
        %v5529 = vpop.f32.mrb[0].mxu0
        %v5530 = vadd.f32 0.0, %v5529
        %v5531 = vpop.f32.mrb[0].mxu0
        %v5532 = vpop.f32.mrb[0].mxu0
        %v5533 = vadd.f32 0.0, %v5532
        %v5534 = vpop.f32.mrb[0].mxu0
        %5535 = vmatprep.mubr.bf16.mxu0 0
        %5536 = vmatmul.mubr.bf16.gmra.mrb[0].mxu0 %v4232
        %v5537 = vpop.f32.mrb[0].mxu0
        %v5538 = vadd.f32 0.0, %v5537
        %v5539 = vpop.f32.mrb[0].mxu0
        %v5540 = vpop.f32.mrb[0].mxu0
        %v5541 = vadd.f32 0.0, %v5540
        %v5542 = vpop.f32.mrb[0].mxu0
        %5543 = vmatprep.mubr.bf16.mxu0 0
        %5544 = vmatmul.mubr.bf16.gmra.mrb[0].mxu0 %v4235
        %v5545 = vpop.f32.mrb[0].mxu0
        %v5546 = vadd.f32 0.0, %v5545
        %v5547 = vpop.f32.mrb[0].mxu0
        %v5548 = vpop.f32.mrb[0].mxu0
        %v5549 = vadd.f32 0.0, %v5548
        %v5550 = vpop.f32.mrb[0].mxu0
        %5551 = vmatprep.mubr.bf16.mxu0 0
        %5552 = vmatmul.mubr.bf16.gmra.mrb[0].mxu0 %v4238
        %v5553 = vpop.f32.mrb[0].mxu0
        %v5554 = vadd.f32 0.0, %v5553
        %v5555 = vpop.f32.mrb[0].mxu0
        %v5556 = vpop.f32.mrb[0].mxu0
        %v5557 = vadd.f32 0.0, %v5556
        %v5558 = vpop.f32.mrb[0].mxu0
        %5559 = vmatprep.mubr.bf16.mxu0 0
        %5560 = vmatmul.mubr.bf16.gmra.mrb[0].mxu0 %v4241
        %v5561 = vpop.f32.mrb[0].mxu0
        %v5562 = vadd.f32 0.0, %v5561
        %v5563 = vpop.f32.mrb[0].mxu0
        %v5564 = vpop.f32.mrb[0].mxu0
        %v5565 = vadd.f32 0.0, %v5564
        %v5566 = vpop.f32.mrb[0].mxu0
        %5567 = vmatprep.mubr.bf16.mxu0 0
        %5568 = vmatmul.mubr.bf16.gmra.mrb[0].mxu0 %v4244
        %v5569 = vpop.f32.mrb[0].mxu0
        %v5570 = vadd.f32 0.0, %v5569
        %v5571 = vpop.f32.mrb[0].mxu0
        %v5572 = vpop.f32.mrb[0].mxu0
        %v5573 = vadd.f32 0.0, %v5572
        %v5574 = vpop.f32.mrb[0].mxu0
        %5575 = vmatprep.mubr.bf16.mxu0 0
        %5576 = vmatmul.mubr.bf16.gmra.mrb[0].mxu0 %v4247
        %v5577 = vpop.f32.mrb[0].mxu0
        %v5578 = vadd.f32 0.0, %v5577
        %v5579 = vpop.f32.mrb[0].mxu0
        %v5580 = vpop.f32.mrb[0].mxu0
        %v5581 = vadd.f32 0.0, %v5580
        %v5582 = vpop.f32.mrb[0].mxu0
        %5583 = vmatprep.mubr.bf16.mxu0 0
        %5584 = vmatmul.mubr.bf16.gmra.mrb[0].mxu0 %v4250
        %v5585 = vpop.f32.mrb[0].mxu0
        %v5586 = vadd.f32 0.0, %v5585
        %v5587 = vpop.f32.mrb[0].mxu0
        %v5588 = vpop.f32.mrb[0].mxu0
        %v5589 = vadd.f32 0.0, %v5588
        %v5590 = vpop.f32.mrb[0].mxu0
        %5591 = vmatprep.mubr.bf16.mxu0 0
        %5592 = vmatmul.mubr.bf16.gmra.mrb[0].mxu0 %v4253
        %v5593 = vpop.f32.mrb[0].mxu0
        %v5594 = vadd.f32 0.0, %v5593
        %v5595 = vpop.f32.mrb[0].mxu0
        %v5596 = vpop.f32.mrb[0].mxu0
        %v5597 = vadd.f32 0.0, %v5596
        %v5598 = vpop.f32.mrb[0].mxu0
        %5599 = vmatprep.mubr.bf16.mxu0 0
        %5600 = vmatmul.mubr.bf16.gmra.mrb[0].mxu0 %v4256
        %v5601 = vpop.f32.mrb[0].mxu0
        %v5602 = vadd.f32 0.0, %v5601
        %v5603 = vpop.f32.mrb[0].mxu0
        %v5604 = vpop.f32.mrb[0].mxu0
        %v5605 = vadd.f32 0.0, %v5604
        %v5606 = vpop.f32.mrb[0].mxu0
        %5607 = vmatprep.mubr.bf16.mxu0 0
        %5608 = vmatmul.mubr.bf16.gmra.mrb[0].mxu0 %v4259
        %v5609 = vpop.f32.mrb[0].mxu0
        %v5610 = vadd.f32 0.0, %v5609
        %v5611 = vpop.f32.mrb[0].mxu0
        %v5612 = vpop.f32.mrb[0].mxu0
        %v5613 = vadd.f32 0.0, %v5612
        %v5614 = vpop.f32.mrb[0].mxu0
        %5615 = vmatprep.mubr.bf16.mxu0 0
        %5616 = vmatmul.mubr.bf16.gmra.mrb[0].mxu0 %v4262
        %v5617 = vpop.f32.mrb[0].mxu0
        %v5618 = vadd.f32 0.0, %v5617
        %v5619 = vpop.f32.mrb[0].mxu0
        %v5620 = vpop.f32.mrb[0].mxu0
        %v5621 = vadd.f32 0.0, %v5620
        %v5622 = vpop.f32.mrb[0].mxu0
        %5623 = vmatprep.mubr.bf16.mxu0 0
        %5624 = vmatmul.mubr.bf16.gmra.mrb[0].mxu0 %v4265
        %v5625 = vpop.f32.mrb[0].mxu0
        %v5626 = vadd.f32 0.0, %v5625
        %v5627 = vpop.f32.mrb[0].mxu0
        %v5628 = vpop.f32.mrb[0].mxu0
        %v5629 = vadd.f32 0.0, %v5628
        %v5630 = vpop.f32.mrb[0].mxu0
        %5631 = vmatprep.mubr.bf16.mxu0 0
        %5632 = vmatmul.mubr.bf16.gmra.mrb[0].mxu0 %v4808
        %v5633 = vpop.f32.mrb[0].mxu0
        %v5634 = vadd.f32 0.0, %v5633
        %v5635 = vpop.f32.mrb[0].mxu0
        %v5636 = vpop.f32.mrb[0].mxu0
        %v5637 = vadd.f32 0.0, %v5636
        %v5638 = vpop.f32.mrb[0].mxu0
        %5639 = vmatprep.mubr.bf16.mxu0 0
        %5640 = vmatmul.mubr.bf16.gmra.mrb[0].mxu0 %v4265
        %v5641 = vpop.f32.mrb[0].mxu0
        %v5642 = vadd.f32 0.0, %v5641
        %v5643 = vpop.f32.mrb[0].mxu0
        %v5644 = vpop.f32.mrb[0].mxu0
        %v5645 = vadd.f32 0.0, %v5644
        %v5646 = vpop.f32.mrb[0].mxu0
        %5647 = vdwg.mxu0
        %v5648 = vadd.f32 %v5431, %v5522
        %v5649 = vadd.f32 %v5432, %v5525
        %v5650 = vadd.f32 %v5433, %v5530
        %v5651 = vadd.f32 %v5434, %v5533
        %v5652 = vadd.f32 %v5435, %v5538
        %v5653 = vadd.f32 %v5436, %v5541
        %v5654 = vadd.f32 %v5437, %v5546
        %v5655 = vadd.f32 %v5438, %v5549
        %v5656 = vadd.f32 %v5439, %v5554
        %v5657 = vadd.f32 %v5440, %v5557
        %v5658 = vadd.f32 %v5441, %v5562
        %v5659 = vadd.f32 %v5442, %v5565
        %v5660 = vadd.f32 %v5443, %v5570
        %v5661 = vadd.f32 %v5444, %v5573
        %v5662 = vadd.f32 %v5445, %v5578
        %v5663 = vadd.f32 %v5446, %v5581
        %v5664 = vadd.f32 %v5447, %v5586
        %v5665 = vadd.f32 %v5448, %v5589
        %v5666 = vadd.f32 %v5449, %v5594
        %v5667 = vadd.f32 %v5450, %v5597
        %v5668 = vadd.f32 %v5451, %v5602
        %v5669 = vadd.f32 %v5452, %v5605
        %v5670 = vadd.f32 %v5453, %v5610
        %v5671 = vadd.f32 %v5454, %v5613
        %v5672 = vadd.f32 %v5455, %v5618
        %v5673 = vadd.f32 %v5456, %v5621
        %v5674 = vadd.f32 %v5457, %v5626
        %v5675 = vadd.f32 %v5458, %v5629
        %v5676 = vadd.f32 %v5459, %v5634
        %v5677 = vadd.f32 %v5460, %v5637
        %v5678 = vadd.f32 %v5461, %v5642
        %v5679 = vadd.f32 %v5462, %v5645
        %v5688 = vunpack.c.l.b16 %v3473
        %v5689 = vunpack.c.l.b16 %v3474
        %v5690 = vunpack.c.l.b16 %v3475
        %v5691 = vunpack.c.l.b16 %v3476
        %v5692 = vunpack.c.l.b16 %v3477
        %v5693 = vunpack.c.l.b16 %v3478
        %v5694 = vunpack.c.l.b16 %v3479
        %v5695 = vunpack.c.l.b16 %v3480
        %v5696 = vpack.c.b16 %v5689, %v5688
        %v5697 = vpack.c.b16 %v5691, %v5690
        %v5698 = vpack.c.b16 %v5693, %v5692
        %v5699 = vpack.c.b16 %v5695, %v5694
        %5704 = vmatprep.subr.bf16.mxu0 0
        %5705 = vmatpush1.bf16.msra.mxu0 %v5696
        %5706 = vmatprep.subr.bf16.mxu0 0
        %5707 = vmatpush1.bf16.msra.mxu0 %v5697
        %5708 = vmatprep.subr.bf16.mxu0 0
        %5709 = vmatpush1.bf16.msra.mxu0 %v5698
        %5710 = vmatprep.subr.bf16.mxu0 0
        %5711 = vmatpush1.bf16.msra.mxu0 %v5699
        %5712 = vmatprep.subr.bf16.mxu0 0
        %5713 = vmatpush1.bf16.msra.mxu0 0
        %5714 = vmatprep.subr.bf16.mxu0 0
        %5715 = vmatpush1.bf16.msra.mxu0 0
        %5716 = vmatprep.subr.bf16.mxu0 0
        %5717 = vmatpush1.bf16.msra.mxu0 0
        %5718 = vmatprep.subr.bf16.mxu0 0
        %5719 = vmatpush1.bf16.msra.mxu0 0
        %5720 = vmatprep.subr.bf16.mxu0 0
        %5721 = vmatpush1.bf16.msra.mxu0 0
        %5722 = vmatprep.subr.bf16.mxu0 0
        %5723 = vmatpush1.bf16.msra.mxu0 0
        %5724 = vmatprep.subr.bf16.mxu0 0
        %5725 = vmatpush1.bf16.msra.mxu0 0
        %5726 = vmatprep.subr.bf16.mxu0 0
        %5727 = vmatpush1.bf16.msra.mxu0 0
        %5728 = vmatprep.subr.bf16.mxu0 0
        %5729 = vmatpush1.bf16.msra.mxu0 0
        %5730 = vmatprep.subr.bf16.mxu0 0
        %5731 = vmatpush1.bf16.msra.mxu0 0
        %5732 = vmatprep.subr.bf16.mxu0 0
        %5733 = vmatpush1.bf16.msra.mxu0 0
        %5734 = vmatprep.subr.bf16.mxu0 0
        %5735 = vmatpush1.bf16.msra.mxu0 0
        %5736 = vmatprep.mubr.bf16.mxu0 0
        %5737 = vmatmul.mubr.bf16.gmra.mrb[0].mxu0 %v3948
        %v5738 = vpop.f32.mrb[0].mxu0
        %v5739 = vadd.f32 0.0, %v5738
        %v5740 = vpop.f32.mrb[0].mxu0
        %v5741 = vpop.f32.mrb[0].mxu0
        %v5742 = vadd.f32 0.0, %v5741
        %v5743 = vpop.f32.mrb[0].mxu0
        %5744 = vmatprep.mubr.bf16.mxu0 0
        %5745 = vmatmul.mubr.bf16.gmra.mrb[0].mxu0 %v3954
        %v5746 = vpop.f32.mrb[0].mxu0
        %v5747 = vadd.f32 0.0, %v5746
        %v5748 = vpop.f32.mrb[0].mxu0
        %v5749 = vpop.f32.mrb[0].mxu0
        %v5750 = vadd.f32 0.0, %v5749
        %v5751 = vpop.f32.mrb[0].mxu0
        %5752 = vmatprep.mubr.bf16.mxu0 0
        %5753 = vmatmul.mubr.bf16.gmra.mrb[0].mxu0 %v3957
        %v5754 = vpop.f32.mrb[0].mxu0
        %v5755 = vadd.f32 0.0, %v5754
        %v5756 = vpop.f32.mrb[0].mxu0
        %v5757 = vpop.f32.mrb[0].mxu0
        %v5758 = vadd.f32 0.0, %v5757
        %v5759 = vpop.f32.mrb[0].mxu0
        %5760 = vmatprep.mubr.bf16.mxu0 0
        %5761 = vmatmul.mubr.bf16.gmra.mrb[0].mxu0 %v3960
        %v5762 = vpop.f32.mrb[0].mxu0
        %v5763 = vadd.f32 0.0, %v5762
        %v5764 = vpop.f32.mrb[0].mxu0
        %v5765 = vpop.f32.mrb[0].mxu0
        %v5766 = vadd.f32 0.0, %v5765
        %v5767 = vpop.f32.mrb[0].mxu0
        %5768 = vmatprep.mubr.bf16.mxu0 0
        %5769 = vmatmul.mubr.bf16.gmra.mrb[0].mxu0 %v3963
        %v5770 = vpop.f32.mrb[0].mxu0
        %v5771 = vadd.f32 0.0, %v5770
        %v5772 = vpop.f32.mrb[0].mxu0
        %v5773 = vpop.f32.mrb[0].mxu0
        %v5774 = vadd.f32 0.0, %v5773
        %v5775 = vpop.f32.mrb[0].mxu0
        %5776 = vmatprep.mubr.bf16.mxu0 0
        %5777 = vmatmul.mubr.bf16.gmra.mrb[0].mxu0 %v3966
        %v5778 = vpop.f32.mrb[0].mxu0
        %v5779 = vadd.f32 0.0, %v5778
        %v5780 = vpop.f32.mrb[0].mxu0
        %v5781 = vpop.f32.mrb[0].mxu0
        %v5782 = vadd.f32 0.0, %v5781
        %v5783 = vpop.f32.mrb[0].mxu0
        %5784 = vmatprep.mubr.bf16.mxu0 0
        %5785 = vmatmul.mubr.bf16.gmra.mrb[0].mxu0 %v3969
        %v5786 = vpop.f32.mrb[0].mxu0
        %v5787 = vadd.f32 0.0, %v5786
        %v5788 = vpop.f32.mrb[0].mxu0
        %v5789 = vpop.f32.mrb[0].mxu0
        %v5790 = vadd.f32 0.0, %v5789
        %v5791 = vpop.f32.mrb[0].mxu0
        %5792 = vmatprep.mubr.bf16.mxu0 0
        %5793 = vmatmul.mubr.bf16.gmra.mrb[0].mxu0 %v3972
        %v5794 = vpop.f32.mrb[0].mxu0
        %v5795 = vadd.f32 0.0, %v5794
        %v5796 = vpop.f32.mrb[0].mxu0
        %v5797 = vpop.f32.mrb[0].mxu0
        %v5798 = vadd.f32 0.0, %v5797
        %v5799 = vpop.f32.mrb[0].mxu0
        %5800 = vmatprep.mubr.bf16.mxu0 0
        %5801 = vmatmul.mubr.bf16.gmra.mrb[0].mxu0 %v3975
        %v5802 = vpop.f32.mrb[0].mxu0
        %v5803 = vadd.f32 0.0, %v5802
        %v5804 = vpop.f32.mrb[0].mxu0
        %v5805 = vpop.f32.mrb[0].mxu0
        %v5806 = vadd.f32 0.0, %v5805
        %v5807 = vpop.f32.mrb[0].mxu0
        %5808 = vmatprep.mubr.bf16.mxu0 0
        %5809 = vmatmul.mubr.bf16.gmra.mrb[0].mxu0 %v3978
        %v5810 = vpop.f32.mrb[0].mxu0
        %v5811 = vadd.f32 0.0, %v5810
        %v5812 = vpop.f32.mrb[0].mxu0
        %v5813 = vpop.f32.mrb[0].mxu0
        %v5814 = vadd.f32 0.0, %v5813
        %v5815 = vpop.f32.mrb[0].mxu0
        %5816 = vmatprep.mubr.bf16.mxu0 0
        %5817 = vmatmul.mubr.bf16.gmra.mrb[0].mxu0 %v3981
        %v5818 = vpop.f32.mrb[0].mxu0
        %v5819 = vadd.f32 0.0, %v5818
        %v5820 = vpop.f32.mrb[0].mxu0
        %v5821 = vpop.f32.mrb[0].mxu0
        %v5822 = vadd.f32 0.0, %v5821
        %v5823 = vpop.f32.mrb[0].mxu0
        %5824 = vmatprep.mubr.bf16.mxu0 0
        %5825 = vmatmul.mubr.bf16.gmra.mrb[0].mxu0 %v3984
        %v5826 = vpop.f32.mrb[0].mxu0
        %v5827 = vadd.f32 0.0, %v5826
        %v5828 = vpop.f32.mrb[0].mxu0
        %v5829 = vpop.f32.mrb[0].mxu0
        %v5830 = vadd.f32 0.0, %v5829
        %v5831 = vpop.f32.mrb[0].mxu0
        %5832 = vmatprep.mubr.bf16.mxu0 0
        %5833 = vmatmul.mubr.bf16.gmra.mrb[0].mxu0 %v3987
        %v5834 = vpop.f32.mrb[0].mxu0
        %v5835 = vadd.f32 0.0, %v5834
        %v5836 = vpop.f32.mrb[0].mxu0
        %v5837 = vpop.f32.mrb[0].mxu0
        %v5838 = vadd.f32 0.0, %v5837
        %v5839 = vpop.f32.mrb[0].mxu0
        %5840 = vmatprep.mubr.bf16.mxu0 0
        %5841 = vmatmul.mubr.bf16.gmra.mrb[0].mxu0 %v3990
        %v5842 = vpop.f32.mrb[0].mxu0
        %v5843 = vadd.f32 0.0, %v5842
        %v5844 = vpop.f32.mrb[0].mxu0
        %v5845 = vpop.f32.mrb[0].mxu0
        %v5846 = vadd.f32 0.0, %v5845
        %v5847 = vpop.f32.mrb[0].mxu0
        %5848 = vmatprep.mubr.bf16.mxu0 0
        %5849 = vmatmul.mubr.bf16.gmra.mrb[0].mxu0 %v5042
        %v5850 = vpop.f32.mrb[0].mxu0
        %v5851 = vadd.f32 0.0, %v5850
        %v5852 = vpop.f32.mrb[0].mxu0
        %v5853 = vpop.f32.mrb[0].mxu0
        %v5854 = vadd.f32 0.0, %v5853
        %v5855 = vpop.f32.mrb[0].mxu0
        %5856 = vmatprep.mubr.bf16.mxu0 0
        %5857 = vmatmul.mubr.bf16.gmra.mrb[0].mxu0 %v3990
        %v5858 = vpop.f32.mrb[0].mxu0
        %v5859 = vadd.f32 0.0, %v5858
        %v5860 = vpop.f32.mrb[0].mxu0
        %v5861 = vpop.f32.mrb[0].mxu0
        %v5862 = vadd.f32 0.0, %v5861
        %v5863 = vpop.f32.mrb[0].mxu0
        %5864 = vdwg.mxu0
        %v5865 = vadd.f32 %v5648, %v5739
        %v5866 = vadd.f32 %v5649, %v5742
        %v5867 = vadd.f32 %v5650, %v5747
        %v5868 = vadd.f32 %v5651, %v5750
        %v5869 = vadd.f32 %v5652, %v5755
        %v5870 = vadd.f32 %v5653, %v5758
        %v5871 = vadd.f32 %v5654, %v5763
        %v5872 = vadd.f32 %v5655, %v5766
        %v5873 = vadd.f32 %v5656, %v5771
        %v5874 = vadd.f32 %v5657, %v5774
        %v5875 = vadd.f32 %v5658, %v5779
        %v5876 = vadd.f32 %v5659, %v5782
        %v5877 = vadd.f32 %v5660, %v5787
        %v5878 = vadd.f32 %v5661, %v5790
        %v5879 = vadd.f32 %v5662, %v5795
        %v5880 = vadd.f32 %v5663, %v5798
        %v5881 = vadd.f32 %v5664, %v5803
        %v5882 = vadd.f32 %v5665, %v5806
        %v5883 = vadd.f32 %v5666, %v5811
        %v5884 = vadd.f32 %v5667, %v5814
        %v5885 = vadd.f32 %v5668, %v5819
        %v5886 = vadd.f32 %v5669, %v5822
        %v5887 = vadd.f32 %v5670, %v5827
        %v5888 = vadd.f32 %v5671, %v5830
        %v5889 = vadd.f32 %v5672, %v5835
        %v5890 = vadd.f32 %v5673, %v5838
        %v5891 = vadd.f32 %v5674, %v5843
        %v5892 = vadd.f32 %v5675, %v5846
        %v5893 = vadd.f32 %v5676, %v5851
        %v5894 = vadd.f32 %v5677, %v5854
        %v5895 = vadd.f32 %v5678, %v5859
        %v5896 = vadd.f32 %v5679, %v5862
        %v5905 = vunpack.c.l.b16 %v3481
        %v5906 = vunpack.c.l.b16 %v3482
        %v5907 = vunpack.c.l.b16 %v3483
        %v5908 = vunpack.c.l.b16 %v3484
        %v5909 = vunpack.c.l.b16 %v3485
        %v5910 = vunpack.c.l.b16 %v3486
        %v5911 = vunpack.c.l.b16 %v3487
        %v5912 = vunpack.c.l.b16 %v3488
        %v5913 = vpack.c.b16 %v5906, %v5905
        %v5914 = vpack.c.b16 %v5908, %v5907
        %v5915 = vpack.c.b16 %v5910, %v5909
        %v5916 = vpack.c.b16 %v5912, %v5911
        %5921 = vmatprep.subr.bf16.mxu0 0
        %5922 = vmatpush1.bf16.msra.mxu0 %v5913
        %5923 = vmatprep.subr.bf16.mxu0 0
        %5924 = vmatpush1.bf16.msra.mxu0 %v5914
        %5925 = vmatprep.subr.bf16.mxu0 0
        %5926 = vmatpush1.bf16.msra.mxu0 %v5915
        %5927 = vmatprep.subr.bf16.mxu0 0
        %5928 = vmatpush1.bf16.msra.mxu0 %v5916
        %5929 = vmatprep.subr.bf16.mxu0 0
        %5930 = vmatpush1.bf16.msra.mxu0 0
        %5931 = vmatprep.subr.bf16.mxu0 0
        %5932 = vmatpush1.bf16.msra.mxu0 0
        %5933 = vmatprep.subr.bf16.mxu0 0
        %5934 = vmatpush1.bf16.msra.mxu0 0
        %5935 = vmatprep.subr.bf16.mxu0 0
        %5936 = vmatpush1.bf16.msra.mxu0 0
        %5937 = vmatprep.subr.bf16.mxu0 0
        %5938 = vmatpush1.bf16.msra.mxu0 0
        %5939 = vmatprep.subr.bf16.mxu0 0
        %5940 = vmatpush1.bf16.msra.mxu0 0
        %5941 = vmatprep.subr.bf16.mxu0 0
        %5942 = vmatpush1.bf16.msra.mxu0 0
        %5943 = vmatprep.subr.bf16.mxu0 0
        %5944 = vmatpush1.bf16.msra.mxu0 0
        %5945 = vmatprep.subr.bf16.mxu0 0
        %5946 = vmatpush1.bf16.msra.mxu0 0
        %5947 = vmatprep.subr.bf16.mxu0 0
        %5948 = vmatpush1.bf16.msra.mxu0 0
        %5949 = vmatprep.subr.bf16.mxu0 0
        %5950 = vmatpush1.bf16.msra.mxu0 0
        %5951 = vmatprep.subr.bf16.mxu0 0
        %5952 = vmatpush1.bf16.msra.mxu0 0
        %5953 = vmatprep.mubr.bf16.mxu0 0
        %5954 = vmatmul.mubr.bf16.gmra.mrb[0].mxu0 %v4543
        %v5955 = vpop.f32.mrb[0].mxu0
        %v5956 = vadd.f32 0.0, %v5955
        %v5957 = vpop.f32.mrb[0].mxu0
        %v5958 = vpop.f32.mrb[0].mxu0
        %v5959 = vadd.f32 0.0, %v5958
        %v5960 = vpop.f32.mrb[0].mxu0
        %5961 = vmatprep.mubr.bf16.mxu0 0
        %5962 = vmatmul.mubr.bf16.gmra.mrb[0].mxu0 %v4549
        %v5963 = vpop.f32.mrb[0].mxu0
        %v5964 = vadd.f32 0.0, %v5963
        %v5965 = vpop.f32.mrb[0].mxu0
        %v5966 = vpop.f32.mrb[0].mxu0
        %v5967 = vadd.f32 0.0, %v5966
        %v5968 = vpop.f32.mrb[0].mxu0
        %5969 = vmatprep.mubr.bf16.mxu0 0
        %5970 = vmatmul.mubr.bf16.gmra.mrb[0].mxu0 %v4552
        %v5971 = vpop.f32.mrb[0].mxu0
        %v5972 = vadd.f32 0.0, %v5971
        %v5973 = vpop.f32.mrb[0].mxu0
        %v5974 = vpop.f32.mrb[0].mxu0
        %v5975 = vadd.f32 0.0, %v5974
        %v5976 = vpop.f32.mrb[0].mxu0
        %5977 = vmatprep.mubr.bf16.mxu0 0
        %5978 = vmatmul.mubr.bf16.gmra.mrb[0].mxu0 %v4555
        %v5979 = vpop.f32.mrb[0].mxu0
        %v5980 = vadd.f32 0.0, %v5979
        %v5981 = vpop.f32.mrb[0].mxu0
        %v5982 = vpop.f32.mrb[0].mxu0
        %v5983 = vadd.f32 0.0, %v5982
        %v5984 = vpop.f32.mrb[0].mxu0
        %5985 = vmatprep.mubr.bf16.mxu0 0
        %5986 = vmatmul.mubr.bf16.gmra.mrb[0].mxu0 %v4558
        %v5987 = vpop.f32.mrb[0].mxu0
        %v5988 = vadd.f32 0.0, %v5987
        %v5989 = vpop.f32.mrb[0].mxu0
        %v5990 = vpop.f32.mrb[0].mxu0
        %v5991 = vadd.f32 0.0, %v5990
        %v5992 = vpop.f32.mrb[0].mxu0
        %5993 = vmatprep.mubr.bf16.mxu0 0
        %5994 = vmatmul.mubr.bf16.gmra.mrb[0].mxu0 %v4561
        %v5995 = vpop.f32.mrb[0].mxu0
        %v5996 = vadd.f32 0.0, %v5995
        %v5997 = vpop.f32.mrb[0].mxu0
        %v5998 = vpop.f32.mrb[0].mxu0
        %v5999 = vadd.f32 0.0, %v5998
        %v6000 = vpop.f32.mrb[0].mxu0
        %6001 = vmatprep.mubr.bf16.mxu0 0
        %6002 = vmatmul.mubr.bf16.gmra.mrb[0].mxu0 %v4564
        %v6003 = vpop.f32.mrb[0].mxu0
        %v6004 = vadd.f32 0.0, %v6003
        %v6005 = vpop.f32.mrb[0].mxu0
        %v6006 = vpop.f32.mrb[0].mxu0
        %v6007 = vadd.f32 0.0, %v6006
        %v6008 = vpop.f32.mrb[0].mxu0
        %6009 = vmatprep.mubr.bf16.mxu0 0
        %6010 = vmatmul.mubr.bf16.gmra.mrb[0].mxu0 %v4567
        %v6011 = vpop.f32.mrb[0].mxu0
        %v6012 = vadd.f32 0.0, %v6011
        %v6013 = vpop.f32.mrb[0].mxu0
        %v6014 = vpop.f32.mrb[0].mxu0
        %v6015 = vadd.f32 0.0, %v6014
        %v6016 = vpop.f32.mrb[0].mxu0
        %6017 = vmatprep.mubr.bf16.mxu0 0
        %6018 = vmatmul.mubr.bf16.gmra.mrb[0].mxu0 %v4570
        %v6019 = vpop.f32.mrb[0].mxu0
        %v6020 = vadd.f32 0.0, %v6019
        %v6021 = vpop.f32.mrb[0].mxu0
        %v6022 = vpop.f32.mrb[0].mxu0
        %v6023 = vadd.f32 0.0, %v6022
        %v6024 = vpop.f32.mrb[0].mxu0
        %6025 = vmatprep.mubr.bf16.mxu0 0
        %6026 = vmatmul.mubr.bf16.gmra.mrb[0].mxu0 %v4573
        %v6027 = vpop.f32.mrb[0].mxu0
        %v6028 = vadd.f32 0.0, %v6027
        %v6029 = vpop.f32.mrb[0].mxu0
        %v6030 = vpop.f32.mrb[0].mxu0
        %v6031 = vadd.f32 0.0, %v6030
        %v6032 = vpop.f32.mrb[0].mxu0
        %6033 = vmatprep.mubr.bf16.mxu0 0
        %6034 = vmatmul.mubr.bf16.gmra.mrb[0].mxu0 %v4576
        %v6035 = vpop.f32.mrb[0].mxu0
        %v6036 = vadd.f32 0.0, %v6035
        %v6037 = vpop.f32.mrb[0].mxu0
        %v6038 = vpop.f32.mrb[0].mxu0
        %v6039 = vadd.f32 0.0, %v6038
        %v6040 = vpop.f32.mrb[0].mxu0
        %6041 = vmatprep.mubr.bf16.mxu0 0
        %6042 = vmatmul.mubr.bf16.gmra.mrb[0].mxu0 %v4579
        %v6043 = vpop.f32.mrb[0].mxu0
        %v6044 = vadd.f32 0.0, %v6043
        %v6045 = vpop.f32.mrb[0].mxu0
        %v6046 = vpop.f32.mrb[0].mxu0
        %v6047 = vadd.f32 0.0, %v6046
        %v6048 = vpop.f32.mrb[0].mxu0
        %6049 = vmatprep.mubr.bf16.mxu0 0
        %6050 = vmatmul.mubr.bf16.gmra.mrb[0].mxu0 %v4582
        %v6051 = vpop.f32.mrb[0].mxu0
        %v6052 = vadd.f32 0.0, %v6051
        %v6053 = vpop.f32.mrb[0].mxu0
        %v6054 = vpop.f32.mrb[0].mxu0
        %v6055 = vadd.f32 0.0, %v6054
        %v6056 = vpop.f32.mrb[0].mxu0
        %6057 = vmatprep.mubr.bf16.mxu0 0
        %6058 = vmatmul.mubr.bf16.gmra.mrb[0].mxu0 %v4585
        %v6059 = vpop.f32.mrb[0].mxu0
        %v6060 = vadd.f32 0.0, %v6059
        %v6061 = vpop.f32.mrb[0].mxu0
        %v6062 = vpop.f32.mrb[0].mxu0
        %v6063 = vadd.f32 0.0, %v6062
        %v6064 = vpop.f32.mrb[0].mxu0
        %6065 = vmatprep.mubr.bf16.mxu0 0
        %6066 = vmatmul.mubr.bf16.gmra.mrb[0].mxu0 %v5268
        %v6067 = vpop.f32.mrb[0].mxu0
        %v6068 = vadd.f32 0.0, %v6067
        %v6069 = vpop.f32.mrb[0].mxu0
        %v6070 = vpop.f32.mrb[0].mxu0
        %v6071 = vadd.f32 0.0, %v6070
        %v6072 = vpop.f32.mrb[0].mxu0
        %6073 = vmatprep.mubr.bf16.mxu0 0
        %6074 = vmatmul.mubr.bf16.gmra.mrb[0].mxu0 %v4585
        %v6075 = vpop.f32.mrb[0].mxu0
        %v6076 = vadd.f32 0.0, %v6075
        %v6077 = vpop.f32.mrb[0].mxu0
        %v6078 = vpop.f32.mrb[0].mxu0
        %v6079 = vadd.f32 0.0, %v6078
        %v6080 = vpop.f32.mrb[0].mxu0
        %6081 = vdwg.mxu0
        %v6082 = vadd.f32 %v5865, %v5956
        %v6083 = vadd.f32 %v5866, %v5959
        %v6084 = vadd.f32 %v5867, %v5964
        %v6085 = vadd.f32 %v5868, %v5967
        %v6086 = vadd.f32 %v5869, %v5972
        %v6087 = vadd.f32 %v5870, %v5975
        %v6088 = vadd.f32 %v5871, %v5980
        %v6089 = vadd.f32 %v5872, %v5983
        %v6090 = vadd.f32 %v5873, %v5988
        %v6091 = vadd.f32 %v5874, %v5991
        %v6092 = vadd.f32 %v5875, %v5996
        %v6093 = vadd.f32 %v5876, %v5999
        %v6094 = vadd.f32 %v5877, %v6004
        %v6095 = vadd.f32 %v5878, %v6007
        %v6096 = vadd.f32 %v5879, %v6012
        %v6097 = vadd.f32 %v5880, %v6015
        %v6098 = vadd.f32 %v5881, %v6020
        %v6099 = vadd.f32 %v5882, %v6023
        %v6100 = vadd.f32 %v5883, %v6028
        %v6101 = vadd.f32 %v5884, %v6031
        %v6102 = vadd.f32 %v5885, %v6036
        %v6103 = vadd.f32 %v5886, %v6039
        %v6104 = vadd.f32 %v5887, %v6044
        %v6105 = vadd.f32 %v5888, %v6047
        %v6106 = vadd.f32 %v5889, %v6052
        %v6107 = vadd.f32 %v5890, %v6055
        %v6108 = vadd.f32 %v5891, %v6060
        %v6109 = vadd.f32 %v5892, %v6063
        %v6110 = vadd.f32 %v5893, %v6068
        %v6111 = vadd.f32 %v5894, %v6071
        %v6112 = vadd.f32 %v5895, %v6076
        %v6113 = vadd.f32 %v5896, %v6079
        %v6114 = vadd.f32 %v6082, %v347
        %v6115 = vadd.f32 %v6083, %v349
        %v6116 = vadd.f32 %v6084, %v351
        %v6117 = vadd.f32 %v6085, %v353
        %v6118 = vadd.f32 %v6086, %v355
        %v6119 = vadd.f32 %v6087, %v357
        %v6120 = vadd.f32 %v6088, %v359
        %v6121 = vadd.f32 %v6089, %v361
        %v6122 = vadd.f32 %v6090, %v363
        %v6123 = vadd.f32 %v6091, %v365
        %v6124 = vadd.f32 %v6092, %v367
        %v6125 = vadd.f32 %v6093, %v369
        %v6126 = vadd.f32 %v6094, %v371
        %v6127 = vadd.f32 %v6095, %v373
        %v6128 = vadd.f32 %v6096, %v375
        %v6129 = vadd.f32 %v6097, %v377
        %v6130 = vadd.f32 %v6098, %v379
        %v6131 = vadd.f32 %v6099, %v381
        %v6132 = vadd.f32 %v6100, %v383
        %v6133 = vadd.f32 %v6101, %v385
        %v6134 = vadd.f32 %v6102, %v387
        %v6135 = vadd.f32 %v6103, %v389
        %v6136 = vadd.f32 %v6104, %v391
        %v6137 = vadd.f32 %v6105, %v393
        %v6138 = vadd.f32 %v6106, %v395
        %v6139 = vadd.f32 %v6107, %v397
        %v6140 = vadd.f32 %v6108, %v399
        %v6141 = vadd.f32 %v6109, %v401
        %v6142 = vadd.f32 %v6110, %v403
        %v6143 = vadd.f32 %v6111, %v405
        %v6144 = vadd.f32 %v6112, %v407
        %v6145 = vadd.f32 %v6113, %v409
        %v6146 = vmul.f32 %v3178, %v314
        %v6147 = vmul.f32 %v3180, %v315
        %v6148 = vmul.f32 %v3182, %v316
        %v6149 = vmul.f32 %v3184, %v317
        %v6150 = vmul.f32 %v3186, %v318
        %v6151 = vmul.f32 %v3188, %v319
        %v6152 = vmul.f32 %v3190, %v320
        %v6153 = vmul.f32 %v3192, %v321
        %v6154 = vmul.f32 %v3194, %v322
        %v6155 = vmul.f32 %v3196, %v323
        %v6156 = vmul.f32 %v3198, %v324
        %v6157 = vmul.f32 %v3200, %v325
        %v6158 = vmul.f32 %v3202, %v326
        %v6159 = vmul.f32 %v3204, %v327
        %v6160 = vmul.f32 %v3206, %v328
        %v6161 = vmul.f32 %v3208, %v329
        %v6162 = vmul.f32 %v3210, %v330
        %v6163 = vmul.f32 %v3212, %v331
        %v6164 = vmul.f32 %v3214, %v332
        %v6165 = vmul.f32 %v3216, %v333
        %v6166 = vmul.f32 %v3218, %v334
        %v6167 = vmul.f32 %v3220, %v335
        %v6168 = vmul.f32 %v3222, %v336
        %v6169 = vmul.f32 %v3224, %v337
        %v6170 = vmul.f32 %v3226, %v338
        %v6171 = vmul.f32 %v3228, %v339
        %v6172 = vmul.f32 %v3230, %v340
        %v6173 = vmul.f32 %v3232, %v341
        %v6174 = vmul.f32 %v3234, %v342
        %v6175 = vmul.f32 %v3236, %v343
        %v6176 = vmul.f32 %v3238, %v344
        %v6177 = vmul.f32 %v3240, %v345
        %v6178 = vsub.f32 1.0, %v3178
        %v6179 = vsub.f32 1.0, %v3180
        %v6180 = vsub.f32 1.0, %v3182
        %v6181 = vsub.f32 1.0, %v3184
        %v6182 = vsub.f32 1.0, %v3186
        %v6183 = vsub.f32 1.0, %v3188
        %v6184 = vsub.f32 1.0, %v3190
        %v6185 = vsub.f32 1.0, %v3192
        %v6186 = vsub.f32 1.0, %v3194
        %v6187 = vsub.f32 1.0, %v3196
        %v6188 = vsub.f32 1.0, %v3198
        %v6189 = vsub.f32 1.0, %v3200
        %v6190 = vsub.f32 1.0, %v3202
        %v6191 = vsub.f32 1.0, %v3204
        %v6192 = vsub.f32 1.0, %v3206
        %v6193 = vsub.f32 1.0, %v3208
        %v6194 = vsub.f32 1.0, %v3210
        %v6195 = vsub.f32 1.0, %v3212
        %v6196 = vsub.f32 1.0, %v3214
        %v6197 = vsub.f32 1.0, %v3216
        %v6198 = vsub.f32 1.0, %v3218
        %v6199 = vsub.f32 1.0, %v3220
        %v6200 = vsub.f32 1.0, %v3222
        %v6201 = vsub.f32 1.0, %v3224
        %v6202 = vsub.f32 1.0, %v3226
        %v6203 = vsub.f32 1.0, %v3228
        %v6204 = vsub.f32 1.0, %v3230
        %v6205 = vsub.f32 1.0, %v3232
        %v6206 = vsub.f32 1.0, %v3234
        %v6207 = vsub.f32 1.0, %v3236
        %v6208 = vsub.f32 1.0, %v3238
        %v6209 = vsub.f32 1.0, %v3240
        %v6210 = vtanh.pop %v6114
        %v6211 = vtanh.pop %v6115
        %v6212 = vtanh.pop %v6116
        %v6213 = vtanh.pop %v6117
        %v6214 = vtanh.pop %v6118
        %v6215 = vtanh.pop %v6119
        %v6216 = vtanh.pop %v6120
        %v6217 = vtanh.pop %v6121
        %v6218 = vtanh.pop %v6122
        %v6219 = vtanh.pop %v6123
        %v6220 = vtanh.pop %v6124
        %v6221 = vtanh.pop %v6125
        %v6222 = vtanh.pop %v6126
        %v6223 = vtanh.pop %v6127
        %v6224 = vtanh.pop %v6128
        %v6225 = vtanh.pop %v6129
        %v6226 = vtanh.pop %v6130
        %v6227 = vtanh.pop %v6131
        %v6228 = vtanh.pop %v6132
        %v6229 = vtanh.pop %v6133
        %v6230 = vtanh.pop %v6134
        %v6231 = vtanh.pop %v6135
        %v6232 = vtanh.pop %v6136
        %v6233 = vtanh.pop %v6137
        %v6234 = vtanh.pop %v6138
        %v6235 = vtanh.pop %v6139
        %v6236 = vtanh.pop %v6140
        %v6237 = vtanh.pop %v6141
        %v6238 = vtanh.pop %v6142
        %v6239 = vtanh.pop %v6143
        %v6240 = vtanh.pop %v6144
        %v6241 = vtanh.pop %v6145
        %v6242 = vmul.f32 %v6178, %v6210
        %v6243 = vmul.f32 %v6179, %v6211
        %v6244 = vmul.f32 %v6180, %v6212
        %v6245 = vmul.f32 %v6181, %v6213
        %v6246 = vmul.f32 %v6182, %v6214
        %v6247 = vmul.f32 %v6183, %v6215
        %v6248 = vmul.f32 %v6184, %v6216
        %v6249 = vmul.f32 %v6185, %v6217
        %v6250 = vmul.f32 %v6186, %v6218
        %v6251 = vmul.f32 %v6187, %v6219
        %v6252 = vmul.f32 %v6188, %v6220
        %v6253 = vmul.f32 %v6189, %v6221
        %v6254 = vmul.f32 %v6190, %v6222
        %v6255 = vmul.f32 %v6191, %v6223
        %v6256 = vmul.f32 %v6192, %v6224
        %v6257 = vmul.f32 %v6193, %v6225
        %v6258 = vmul.f32 %v6194, %v6226
        %v6259 = vmul.f32 %v6195, %v6227
        %v6260 = vmul.f32 %v6196, %v6228
        %v6261 = vmul.f32 %v6197, %v6229
        %v6262 = vmul.f32 %v6198, %v6230
        %v6263 = vmul.f32 %v6199, %v6231
        %v6264 = vmul.f32 %v6200, %v6232
        %v6265 = vmul.f32 %v6201, %v6233
        %v6266 = vmul.f32 %v6202, %v6234
        %v6267 = vmul.f32 %v6203, %v6235
        %v6268 = vmul.f32 %v6204, %v6236
        %v6269 = vmul.f32 %v6205, %v6237
        %v6270 = vmul.f32 %v6206, %v6238
        %v6271 = vmul.f32 %v6207, %v6239
        %v6272 = vmul.f32 %v6208, %v6240
        %v6273 = vmul.f32 %v6209, %v6241
        %v6274 = vadd.f32 %v6146, %v6242
        %v6275 = vadd.f32 %v6147, %v6243
        %v6276 = vadd.f32 %v6148, %v6244
        %v6277 = vadd.f32 %v6149, %v6245
        %v6278 = vadd.f32 %v6150, %v6246
        %v6279 = vadd.f32 %v6151, %v6247
        %v6280 = vadd.f32 %v6152, %v6248
        %v6281 = vadd.f32 %v6153, %v6249
        %v6282 = vadd.f32 %v6154, %v6250
        %v6283 = vadd.f32 %v6155, %v6251
        %v6284 = vadd.f32 %v6156, %v6252
        %v6285 = vadd.f32 %v6157, %v6253
        %v6286 = vadd.f32 %v6158, %v6254
        %v6287 = vadd.f32 %v6159, %v6255
        %v6288 = vadd.f32 %v6160, %v6256
        %v6289 = vadd.f32 %v6161, %v6257
        %v6290 = vadd.f32 %v6162, %v6258
        %v6291 = vadd.f32 %v6163, %v6259
        %v6292 = vadd.f32 %v6164, %v6260
        %v6293 = vadd.f32 %v6165, %v6261
        %v6294 = vadd.f32 %v6166, %v6262
        %v6295 = vadd.f32 %v6167, %v6263
        %v6296 = vadd.f32 %v6168, %v6264
        %v6297 = vadd.f32 %v6169, %v6265
        %v6298 = vadd.f32 %v6170, %v6266
        %v6299 = vadd.f32 %v6171, %v6267
        %v6300 = vadd.f32 %v6172, %v6268
        %v6301 = vadd.f32 %v6173, %v6269
        %v6302 = vadd.f32 %v6174, %v6270
        %v6303 = vadd.f32 %v6175, %v6271
        %v6304 = vadd.f32 %v6176, %v6272
        %v6305 = vadd.f32 %v6177, %v6273
        %6306 = vst.msk [vmem:[#allocation2] sm:$0xff] %vm930, %v6274
        %6307 = vst.msk [vmem:[#allocation2 + $0x8] sm:$0xff] %vm930, %v6275
        %6308 = vst.msk [vmem:[#allocation2 + $0x10] sm:$0xff] %vm930, %v6276
        %6309 = vst.msk [vmem:[#allocation2 + $0x18] sm:$0xff] %vm930, %v6277
        %6310 = vst.msk [vmem:[#allocation2 + $0x20] sm:$0xff] %vm930, %v6278
        %6311 = vst.msk [vmem:[#allocation2 + $0x28] sm:$0xff] %vm930, %v6279
        %6312 = vst.msk [vmem:[#allocation2 + $0x30] sm:$0xff] %vm930, %v6280
        %6313 = vst.msk [vmem:[#allocation2 + $0x38] sm:$0xff] %vm930, %v6281
        %6314 = vst.msk [vmem:[#allocation2 + $0x40] sm:$0xff] %vm930, %v6282
        %6315 = vst.msk [vmem:[#allocation2 + $0x48] sm:$0xff] %vm930, %v6283
        %6316 = vst.msk [vmem:[#allocation2 + $0x50] sm:$0xff] %vm930, %v6284
        %6317 = vst.msk [vmem:[#allocation2 + $0x58] sm:$0xff] %vm930, %v6285
        %6318 = vst.msk [vmem:[#allocation2 + $0x60] sm:$0xff] %vm930, %v6286
        %6319 = vst.msk [vmem:[#allocation2 + $0x68] sm:$0xff] %vm930, %v6287
        %6320 = vst.msk [vmem:[#allocation2 + $0x70] sm:$0xff] %vm930, %v6288
        %6321 = vst.msk [vmem:[#allocation2 + $0x78] sm:$0xff] %vm930, %v6289
        %6322 = vst.msk [vmem:[#allocation2 + $0x80] sm:$0xff] %vm930, %v6290
        %6323 = vst.msk [vmem:[#allocation2 + $0x88] sm:$0xff] %vm930, %v6291
        %6324 = vst.msk [vmem:[#allocation2 + $0x90] sm:$0xff] %vm930, %v6292
        %6325 = vst.msk [vmem:[#allocation2 + $0x98] sm:$0xff] %vm930, %v6293
        %6326 = vst.msk [vmem:[#allocation2 + $0xa0] sm:$0xff] %vm930, %v6294
        %6327 = vst.msk [vmem:[#allocation2 + $0xa8] sm:$0xff] %vm930, %v6295
        %6328 = vst.msk [vmem:[#allocation2 + $0xb0] sm:$0xff] %vm930, %v6296
        %6329 = vst.msk [vmem:[#allocation2 + $0xb8] sm:$0xff] %vm930, %v6297
        %6330 = vst.msk [vmem:[#allocation2 + $0xc0] sm:$0xff] %vm930, %v6298
        %6331 = vst.msk [vmem:[#allocation2 + $0xc8] sm:$0xff] %vm930, %v6299
        %6332 = vst.msk [vmem:[#allocation2 + $0xd0] sm:$0xff] %vm930, %v6300
        %6333 = vst.msk [vmem:[#allocation2 + $0xd8] sm:$0xff] %vm930, %v6301
        %6334 = vst.msk [vmem:[#allocation2 + $0xe0] sm:$0xff] %vm930, %v6302
        %6335 = vst.msk [vmem:[#allocation2 + $0xe8] sm:$0xff] %vm930, %v6303
        %6336 = vst.msk [vmem:[#allocation2 + $0xf0] sm:$0xff] %vm930, %v6304
        %6337 = vst.msk [vmem:[#allocation2 + $0xf8] sm:$0xff] %vm930, %v6305
        %6338 = vst.msk [vmem:[%s229] sm:$0xff] %vm930, %v6274
        %6339 = vst.msk [vmem:[%s229 + $0x8] sm:$0xff] %vm930, %v6275
        %6340 = vst.msk [vmem:[%s229 + $0x10] sm:$0xff] %vm930, %v6276
        %6341 = vst.msk [vmem:[%s229 + $0x18] sm:$0xff] %vm930, %v6277
        %6342 = vst.msk [vmem:[%s229 + $0x20] sm:$0xff] %vm930, %v6278
        %6343 = vst.msk [vmem:[%s229 + $0x28] sm:$0xff] %vm930, %v6279
        %6344 = vst.msk [vmem:[%s229 + $0x30] sm:$0xff] %vm930, %v6280
        %6345 = vst.msk [vmem:[%s229 + $0x38] sm:$0xff] %vm930, %v6281
        %6346 = vst.msk [vmem:[%s229 + $0x40] sm:$0xff] %vm930, %v6282
        %6347 = vst.msk [vmem:[%s229 + $0x48] sm:$0xff] %vm930, %v6283
        %6348 = vst.msk [vmem:[%s229 + $0x50] sm:$0xff] %vm930, %v6284
        %6349 = vst.msk [vmem:[%s229 + $0x58] sm:$0xff] %vm930, %v6285
        %6350 = vst.msk [vmem:[%s229 + $0x60] sm:$0xff] %vm930, %v6286
        %6351 = vst.msk [vmem:[%s229 + $0x68] sm:$0xff] %vm930, %v6287
        %6352 = vst.msk [vmem:[%s229 + $0x70] sm:$0xff] %vm930, %v6288
        %6353 = vst.msk [vmem:[%s229 + $0x78] sm:$0xff] %vm930, %v6289
        %6354 = vst.msk [vmem:[%s229 + $0x80] sm:$0xff] %vm930, %v6290
        %6355 = vst.msk [vmem:[%s229 + $0x88] sm:$0xff] %vm930, %v6291
        %6356 = vst.msk [vmem:[%s229 + $0x90] sm:$0xff] %vm930, %v6292
        %6357 = vst.msk [vmem:[%s229 + $0x98] sm:$0xff] %vm930, %v6293
        %6358 = vst.msk [vmem:[%s229 + $0xa0] sm:$0xff] %vm930, %v6294
        %6359 = vst.msk [vmem:[%s229 + $0xa8] sm:$0xff] %vm930, %v6295
        %6360 = vst.msk [vmem:[%s229 + $0xb0] sm:$0xff] %vm930, %v6296
        %6361 = vst.msk [vmem:[%s229 + $0xb8] sm:$0xff] %vm930, %v6297
        %6362 = vst.msk [vmem:[%s229 + $0xc0] sm:$0xff] %vm930, %v6298
        %6363 = vst.msk [vmem:[%s229 + $0xc8] sm:$0xff] %vm930, %v6299
        %6364 = vst.msk [vmem:[%s229 + $0xd0] sm:$0xff] %vm930, %v6300
        %6365 = vst.msk [vmem:[%s229 + $0xd8] sm:$0xff] %vm930, %v6301
        %6366 = vst.msk [vmem:[%s229 + $0xe0] sm:$0xff] %vm930, %v6302
        %6367 = vst.msk [vmem:[%s229 + $0xe8] sm:$0xff] %vm930, %v6303
        %6368 = vst.msk [vmem:[%s229 + $0xf0] sm:$0xff] %vm930, %v6304
        %6369 = vst.msk [vmem:[%s229 + $0xf8] sm:$0xff] %vm930, %v6305
        %s6370 = sand.u32 %s136, 1
        %s6371 = scalar_lea.sflag [#allocation4], %s6370
        %s6372 = sand.u32 %s136, 1
        %s6373 = smul.addr %s6372, 256
        %s6374 = scalar_lea.vmem [#allocation3], %s6373
        // Predicated region
        $region41: #{gen_gate_gru.3} parent=35 // pred_check
          %p6375 = pneg %p146
        $region42: #{gen_gate_gru.3} parent=35 // pred_check_branch
          %6377 = sbr.rel (%p6375) target = $region44
        $region43: #{gen_gate_gru.3} parent=35 // pred_region
          %s6379 = ssub.s32 4096, 4096
          %6380 = vsyncadd %s6371, %s6379
          %s6381 = smul.addr %s23, 32
          %s6382 = smul.addr %s22, 96
          %s6383 = sadd.s32 %s6381, %s6382
          %s6384 = smul.addr %s6383, 128
          %s6385 = scalar_lea.hbm %s4, %s6384
          %s6386 = sshll.u32 %s6374, 4
          %s6387 = int_to_ptr.vmem [resolvable:$true] %s6386
          %6392 = dma.vmem_to_hbm [thread:$0]  %s6387, 4096, %s6385, %s6371, 128, 128, 8
        $region44: #{gen_gate_gru.3} parent=35 // pred_fallthru
          _
      $region36: #{gen_gate_gru.3} parent=5 // pred_fallthru
        _
      %p6393 = scmp.le.s32.totalorder 2, %s13
      // Predicated region
      $region45: #{gen_gate_gru.3} parent=5 // pred_check
        %p6394 = pneg %p6393
      $region46: #{gen_gate_gru.3} parent=5 // pred_check_branch
        %6396 = sbr.rel (%p6394) target = $region48
      $region47: #{gen_gate_gru.3} parent=5 // pred_region
        %s6397 = ssub.s32 %s13, 2
        // Predicated region
        $region49: #{gen_gate_gru.3} parent=47 // pred_check
          %p6398 = pneg %p152
        $region50: #{gen_gate_gru.3} parent=47 // pred_check_branch
          %6400 = sbr.rel (%p6398) target = $region52
        $region51: #{gen_gate_gru.3} parent=47 // pred_region
          %s6401 = sand.u32 %s137, 1
          %s6402 = scalar_lea.sflag [#allocation4], %s6401
          %s6403 = sand.u32 %s137, 1
          %s6404 = smul.addr %s6403, 256
          %s6405 = scalar_lea.vmem [#allocation3], %s6404
          %6406 = dma.done %s6402, 4096
        $region52: #{gen_gate_gru.3} parent=47 // pred_fallthru
          _
      $region48: #{gen_gate_gru.3} parent=5 // pred_fallthru
        _
    $region6: #{gen_gate_gru.3} parent=1 // loop_footer
      %s17 = sadd.s32 1, %s13
    $region7: #{gen_gate_gru.3} parent=1 // loop_footer_branch
      %12 = sbr.rel target = $region3
    $region8: #{gen_gate_gru.3} parent=1 // loop_exit
      _
    %6407 = vsyncpa [#allocation4], 1
    %s6408 = scalar_lea.sflag [#allocation4], 1
    %6409 = vsyncpa %s6408, 1

</llo_original>
